<compile_context>
chip_gen: v5e
topology: v5e:2x2
jax: 0.10.0
libtpu: 0.0.40
codegen_flags: <defaults>
</compile_context>

<pallas_src>
import numpy as np
import jax
import jax.numpy as jnp
from jax.experimental import pallas as pl
from jax.experimental.pallas import tpu as pltpu

GRID_SIZE = 10          # forced by fc_in = 10 * 6 * C_out in the module
NUM_CLASSES = 12        # forced by the final .view(-1, 10, 6, 12)
SUB_W = GRID_SIZE - 4   # width after x[..., 2:-2]  (= 6)
NB_MAX = 128            # max batch rows per grid step (fills the MXU M axis)


def _round_up(x, m):
    return (x + m - 1) // m * m


# ----------------------------------------------------------------------------
# host-side construction of the folded affine operators (runs once per head)
# ----------------------------------------------------------------------------
def _interp_matrix(in_size, out_size):
    """Rows of bilinear interpolation weights, matching
    F.interpolate(mode='bilinear', align_corners=False)."""
    M = np.zeros((out_size, in_size), dtype=np.float32)
    scale = in_size / out_size
    for i in range(out_size):
        src = max((i + 0.5) * scale - 0.5, 0.0)
        i0 = min(int(np.floor(src)), in_size - 1)
        i1 = min(i0 + 1, in_size - 1)
        w1 = src - i0
        M[i, i0] += 1.0 - w1
        M[i, i1] += w1
    return M


def _build_operators(params, C_in, H, W):
    """Fold resize + conv(+bias) + slice + flatten + linear into
    (Op1, Op2, bias_eff), all as lane-padded numpy arrays."""
    conv_w = np.asarray(params["conv_w"], np.float32)        # (C_out, C_in, 3, 3)
    conv_b = np.asarray(params["conv_b"], np.float32)        # (C_out,)
    fc_w = np.asarray(params["fc_w"], np.float32)            # (FC_OUT, C_out*60)
    fc_b = np.asarray(params["fc_b"], np.float32)            # (FC_OUT,)
    C_out = conv_w.shape[0]

    CHW = C_in * H * W
    SEL = C_out * GRID_SIZE * SUB_W                          # C_out * 60
    FC_OUT = GRID_SIZE * SUB_W * NUM_CLASSES                 # 720
    SEL_P = _round_up(SEL, 128)
    FC_OUT_P = _round_up(FC_OUT, 128)

    # bilinear resize operator: resized[c, i, j] = sum_{h,w} R4[i,j,h,w] x[c,h,w]
    A = _interp_matrix(H, GRID_SIZE)                         # (10, H)
    B = _interp_matrix(W, GRID_SIZE)                         # (10, W)
    R4 = np.einsum("ih,jw->ijhw", A, B).astype(np.float32)   # (10, 10, H, W)
    Rp = np.zeros((GRID_SIZE + 2, GRID_SIZE + 2, H, W), np.float32)
    Rp[1:-1, 1:-1] = R4                                      # zero-padded (pad=1)

    # fold 3x3 conv (pad=1) and the x[..., 2:-2] slice into the resize operator
    Kop = np.zeros((C_out, C_in, GRID_SIZE, SUB_W, H, W), np.float32)
    for dy in range(3):
        for dx in range(3):
            # output (i, j), j in [2, 8): resized[i+dy-1, j+dx-1] -> Rp[i+dy, j+dx]
            win = Rp[dy:dy + GRID_SIZE, 2 + dx:2 + dx + SUB_W]     # (10, 6, H, W)
            Kop += np.einsum("oi,abhw->oiabhw", conv_w[:, :, dy, dx], win)
    # rows in PyTorch x-flatten order (ci, h, w); cols in flatten order (co, y, x)
    op1 = Kop.transpose(1, 4, 5, 0, 2, 3).reshape(CHW, SEL)

    op1_p = np.zeros((CHW, SEL_P), np.float32)
    op1_p[:, :SEL] = op1

    op2_p = np.zeros((SEL_P, FC_OUT_P), np.float32)
    op2_p[:SEL, :FC_OUT] = fc_w.T

    # fold the conv bias into the FC bias
    bias_eff = fc_b + fc_w @ np.repeat(conv_b, GRID_SIZE * SUB_W)
    bias_p = np.zeros((1, FC_OUT_P), np.float32)
    bias_p[0, :FC_OUT] = bias_eff

    return op1_p, op2_p, bias_p, CHW, SEL_P, FC_OUT, FC_OUT_P


# ----------------------------------------------------------------------------
# Pallas kernel: two GEMMs per batch block; the bf16 casts happen in-VMEM
# ----------------------------------------------------------------------------
def _head_kernel(x_ref, op1_ref, op2_ref, b_ref, out_ref):
    # (NB, CHW) f32 -> bf16 in-register, then MXU GEMM with f32 accumulation.
    x_lo = x_ref[...].astype(op1_ref.dtype)
    feat = jnp.dot(x_lo, op1_ref[...], preferred_element_type=jnp.float32)
    # Second GEMM also runs in the MXU's native bf16 datapath.
    out = jnp.dot(feat.astype(op2_ref.dtype), op2_ref[...],
                  preferred_element_type=jnp.float32)
    out_ref[...] = out + b_ref[...]


# ----------------------------------------------------------------------------
# factory: folds operators once, returns a jitted forward
# ----------------------------------------------------------------------------
def make_grid_detection_head(params, feature_map_shape,
                             operator_dtype=jnp.bfloat16):
    """feature_map_shape = (C_in, H, W). Returns forward(x) -> [N, 10, 6, 12]."""
    C_in, H, W = feature_map_shape
    op1_np, op2_np, bias_np, CHW, SEL_P, FC_OUT, FC_OUT_P = _build_operators(
        params, C_in, H, W)
    op1 = jnp.asarray(op1_np, operator_dtype)
    op2 = jnp.asarray(op2_np, operator_dtype)
    bias = jnp.asarray(bias_np, jnp.float32)
    op_bytes = jnp.dtype(operator_dtype).itemsize

    @jax.jit
    def forward(x):
        assert x.shape[1:] == (C_in, H, W), x.shape
        N = x.shape[0]
        # Batch rows per grid step: multiple of 16, up to the MXU M height.
        nb = min(NB_MAX, _round_up(max(N, 1), 16))
        n_pad = _round_up(max(N, 1), nb)

        x_flat = x.reshape(N, CHW).astype(jnp.float32)
        if n_pad != N:
            x_flat = jnp.pad(x_flat, ((0, n_pad - N), (0, 0)))

        # Footprint: double-buffered x/out blocks + resident operators + bias.
        vmem_bytes = 2 * (nb * CHW * 4
                          + CHW * SEL_P * op_bytes
                          + SEL_P * FC_OUT_P * op_bytes
                          + FC_OUT_P * 4
                          + nb * FC_OUT_P * 4)
        vmem_limit = int(min(vmem_bytes + (8 << 20), 64 << 20))

        out = pl.pallas_call(
            _head_kernel,
            out_shape=jax.ShapeDtypeStruct((n_pad, FC_OUT_P), jnp.float32),
            grid=(n_pad // nb,),
            in_specs=[
                pl.BlockSpec((nb, CHW), lambda n: (n, 0)),          # batch block
                pl.BlockSpec((CHW, SEL_P), lambda n: (0, 0)),       # Op1 (resident)
                pl.BlockSpec((SEL_P, FC_OUT_P), lambda n: (0, 0)),  # Op2 (resident)
                pl.BlockSpec((1, FC_OUT_P), lambda n: (0, 0)),      # bias
            ],
            out_specs=pl.BlockSpec((nb, FC_OUT_P), lambda n: (n, 0)),
            compiler_params=pltpu.CompilerParams(
                dimension_semantics=("parallel",),
                vmem_limit_bytes=vmem_limit),
        )(x_flat, op1, op2, bias)

        return out[:N, :FC_OUT].reshape(N, GRID_SIZE, SUB_W, NUM_CLASSES)

    return forward


# ----------------------------------------------------------------------------
# pure-JAX reference (for correctness check only)
# ----------------------------------------------------------------------------
def reference(x, params):
    N, C_in, H, W = x.shape
    A = jnp.asarray(_interp_matrix(H, GRID_SIZE))
    B = jnp.asarray(_interp_matrix(W, GRID_SIZE))
    r = jnp.einsum("nchw,ih,jw->ncij", x, A, B,
                   precision=jax.lax.Precision.HIGHEST)
    y = jax.lax.conv_general_dilated(
        r, params["conv_w"], (1, 1), ((1, 1), (1, 1)),
        dimension_numbers=("NCHW", "OIHW", "NCHW"),
        precision=jax.lax.Precision.HIGHEST)
    y = y + params["conv_b"][None, :, None, None]
    y = y[:, :, :, 2:-2]
    f = y.reshape(N, -1)
    out = jnp.dot(f, params["fc_w"].T,
                  precision=jax.lax.Precision.HIGHEST) + params["fc_b"]
    return out.reshape(N, GRID_SIZE, SUB_W, NUM_CLASSES)


# ----------------------------------------------------------------------------
if __name__ == "__main__":
    # feature_map_shape = (32, 16, 16) -> C_in=32, C_out=32//8=4, fm 16 >= grid 10
    N, C_in, H, W = 2, 32, 16, 16
    C_out = C_in // 8
    FC_IN = GRID_SIZE * SUB_W * C_out                    # 240
    FC_OUT = GRID_SIZE * SUB_W * NUM_CLASSES             # 720

    key = jax.random.PRNGKey(0)
    k1, k2, k3, k4, k5 = jax.random.split(key, 5)
    params = {
        "conv_w": 0.05 * jax.random.normal(k1, (C_out, C_in, 3, 3), jnp.float32),
        "conv_b": 0.05 * jax.random.normal(k2, (C_out,), jnp.float32),
        "fc_w": 0.05 * jax.random.normal(k3, (FC_OUT, FC_IN), jnp.float32),
        "fc_b": 0.05 * jax.random.normal(k4, (FC_OUT,), jnp.float32),
    }
    x = jax.random.normal(k5, (N, C_in, H, W), jnp.float32)

    head = make_grid_detection_head(params, (C_in, H, W))
    out = jax.block_until_ready(head(x))
    assert out.shape == (N, GRID_SIZE, SUB_W, NUM_CLASSES)

    ref = jax.block_until_ready(reference(x, params))
    np.testing.assert_allclose(np.asarray(out), np.asarray(ref),
                               rtol=5e-2, atol=5e-2)

    print("KERNEL_OK")
</pallas_src>

<mosaic_0001>
module attributes {stable_mosaic.version = 11 : i64} {
  func.func @_head_kernel(%arg0: i32, %arg1: memref<16x8192xf32, #tpu.memory_space<vmem>>, %arg2: memref<8192x256xbf16, #tpu.memory_space<vmem>>, %arg3: memref<256x768xbf16, #tpu.memory_space<vmem>>, %arg4: memref<1x768xf32, #tpu.memory_space<vmem>>, %arg5: memref<16x768xf32, #tpu.memory_space<vmem>>) attributes {dimension_semantics = [#tpu.dimension_semantics<parallel>], iteration_bounds = array<i64: 1>, scalar_prefetch = 0 : i64, scratch_operands = 0 : i64, tpu.core_type = #tpu.core_type<tc>, window_params = [{transform_indices = @transform_0, window_bounds = array<i64: 16, 8192>}, {pipeline_mode = #tpu.pipeline_mode<synchronous>, transform_indices = @transform_1, window_bounds = array<i64: 8192, 256>}, {pipeline_mode = #tpu.pipeline_mode<synchronous>, transform_indices = @transform_2, window_bounds = array<i64: 256, 768>}, {pipeline_mode = #tpu.pipeline_mode<synchronous>, transform_indices = @transform_3, window_bounds = array<i64: 1, 768>}, {transform_indices = @transform_4, window_bounds = array<i64: 16, 768>}]} {
    %c0 = arith.constant 0 : index
    %c0_0 = arith.constant 0 : index
    %0 = vector.load %arg1[%c0, %c0_0] : memref<16x8192xf32, #tpu.memory_space<vmem>>, vector<16x8192xf32>
    %1 = arith.truncf %0 : vector<16x8192xf32> to vector<16x8192xbf16>
    %c0_1 = arith.constant 0 : index
    %c0_2 = arith.constant 0 : index
    %2 = vector.load %arg2[%c0_1, %c0_2] : memref<8192x256xbf16, #tpu.memory_space<vmem>>, vector<8192x256xbf16>
    %cst = arith.constant dense<0.000000e+00> : vector<16x256xf32>
    %3 = tpu.matmul %1, %2, %cst {dimension_numbers = #tpu.dot_dimension_numbers<[1], [0], [0], [1], [0, 0, 1, 1], [], []>} : vector<16x8192xbf16>, vector<8192x256xbf16>, vector<16x256xf32> -> vector<16x256xf32>
    %4 = arith.truncf %3 : vector<16x256xf32> to vector<16x256xbf16>
    %c0_3 = arith.constant 0 : index
    %c0_4 = arith.constant 0 : index
    %5 = vector.load %arg3[%c0_3, %c0_4] : memref<256x768xbf16, #tpu.memory_space<vmem>>, vector<256x768xbf16>
    %cst_5 = arith.constant dense<0.000000e+00> : vector<16x768xf32>
    %6 = tpu.matmul %4, %5, %cst_5 {dimension_numbers = #tpu.dot_dimension_numbers<[1], [0], [0], [1], [0, 0, 1, 1], [], []>} : vector<16x256xbf16>, vector<256x768xbf16>, vector<16x768xf32> -> vector<16x768xf32>
    %c0_6 = arith.constant 0 : index
    %c0_7 = arith.constant 0 : index
    %7 = vector.load %arg4[%c0_6, %c0_7] : memref<1x768xf32, #tpu.memory_space<vmem>>, vector<1x768xf32>
    %8 = vector.broadcast %7 : vector<1x768xf32> to vector<16x768xf32>
    %9 = arith.addf %6, %8 : vector<16x768xf32>
    %c0_8 = arith.constant 0 : index
    %c0_9 = arith.constant 0 : index
    %10 = vector.load %arg5[%c0_8, %c0_9] : memref<16x768xf32, #tpu.memory_space<vmem>>, vector<16x768xf32>
    tpu.vector_store %arg5[%c0_8, %c0_9], %9 {strides = array<i32>} : memref<16x768xf32, #tpu.memory_space<vmem>>, vector<16x768xf32>,
    return
  }
  func.func @transform_0(%arg0: i32) -> (i32, i32) {
    %c0_i32 = arith.constant 0 : i32
    %c0_i32_0 = arith.constant 0 : i32
    return %arg0, %c0_i32 : i32, i32
  }
  func.func @transform_1(%arg0: i32) -> (i32, i32) {
    %c0_i32 = arith.constant 0 : i32
    %c0_i32_0 = arith.constant 0 : i32
    %c0_i32_1 = arith.constant 0 : i32
    return %c0_i32, %c0_i32_0 : i32, i32
  }
  func.func @transform_2(%arg0: i32) -> (i32, i32) {
    %c0_i32 = arith.constant 0 : i32
    %c0_i32_0 = arith.constant 0 : i32
    %c0_i32_1 = arith.constant 0 : i32
    return %c0_i32, %c0_i32_0 : i32, i32
  }
  func.func @transform_3(%arg0: i32) -> (i32, i32) {
    %c0_i32 = arith.constant 0 : i32
    %c0_i32_0 = arith.constant 0 : i32
    %c0_i32_1 = arith.constant 0 : i32
    return %c0_i32, %c0_i32_0 : i32, i32
  }
  func.func @transform_4(%arg0: i32) -> (i32, i32) {
    %c0_i32 = arith.constant 0 : i32
    %c0_i32_0 = arith.constant 0 : i32
    return %arg0, %c0_i32 : i32, i32
  }
}

</mosaic_0001>

<llo_original>
// kernel: forward.1
$region0: #{forward.1}
  #allocation0 [shape = 'u32[]', space=smem, size = 0x4, offset = 0x4, fixed_abs, tag = 'smem constant byte address 0x4 - core index']
  #allocation1 [shape = 'u32[72,128]{1,0:T(1,128)}', space=vmem, size = 0x9000, scoped, tag = 'internal scratch']
  %s0 = inlined_call_operand.vmem [shape: f32[16,8192], index: 0, kind: input, shape index: {}]
  %s1 = inlined_call_operand.hbm [shape: bf16[8192,256], index: 1, kind: input, shape index: {}]
  %s2 = inlined_call_operand.hbm [shape: bf16[256,768], index: 2, kind: input, shape index: {}]
  %s3 = inlined_call_operand.hbm [shape: f32[1,768], index: 3, kind: input, shape index: {}]
  %s4 = inlined_call_operand.vmem [shape: f32[16,768], index: 4, kind: output, shape index: {}]
  %s5 = sld [smem:[#allocation0]]
  $region38: #{forward.1} parent=0
    _
  %s7 = ssub.s32 1, %s5
  %s8 = scalar_select 0, %s7, %s5
  $region1: #{forward.1} parent=0
    #allocation2 [shape = 'u8[4194304]{0}', space=vmem, size = 0x400000, scoped, tag = 'input window, operand 1, single buffered']
    #allocation3 [shape = 's32[1]{0}', space=sflag, size = 0x4, scoped, tag = 'scoped memory for forward.1']
    #allocation4 [shape = 'u8[393216]{0}', space=vmem, size = 0x60000, scoped, tag = 'input window, operand 2, single buffered']
    #allocation5 [shape = 's32[1]{0}', space=sflag, size = 0x4, scoped, tag = 'scoped memory for forward.1']
    #allocation6 [shape = 'u8[3072]{0}', space=vmem, size = 0xc00, scoped, tag = 'input window, operand 3, single buffered']
    %9 = vsyncpa [#allocation3], 0
    %10 = vsyncpa [#allocation5], 0
    // Predicated region
    $region2: #{forward.1} parent=1 // pred_check
      _
    $region3: #{forward.1} parent=1 // pred_check_branch
      %12 = sbr.rel (0) target = $region5
    $region4: #{forward.1} parent=1 // pred_region
      _
    $region5: #{forward.1} parent=1 // pred_fallthru
      _
    // Predicated region
    $region6: #{forward.1} parent=1 // pred_check
      _
    $region7: #{forward.1} parent=1 // pred_check_branch
      %14 = sbr.rel (0) target = $region9
    $region8: #{forward.1} parent=1 // pred_region
      %16 = vsyncadd [#allocation3], 0
      %s17 = sshll.u32 %s1, 4
      %s18 = int_to_ptr.hbm [resolvable:$true] %s17
      %s19 = sshll.u32 [#allocation2], 4
      %s20 = int_to_ptr.vmem [resolvable:$true] %s19
      %25 = dma.hbm_to_vmem [thread:$0]  %s18, 131072, %s20, [#allocation3], 128, 128, 8
    $region9: #{forward.1} parent=1 // pred_fallthru
      _
    // Predicated region
    $region10: #{forward.1} parent=1 // pred_check
      _
    $region11: #{forward.1} parent=1 // pred_check_branch
      %27 = sbr.rel (0) target = $region13
    $region12: #{forward.1} parent=1 // pred_region
      %29 = vsyncadd [#allocation5], 0
      %s30 = sshll.u32 %s2, 4
      %s31 = int_to_ptr.hbm [resolvable:$true] %s30
      %s32 = sshll.u32 [#allocation4], 4
      %s33 = int_to_ptr.vmem [resolvable:$true] %s32
      %38 = dma.hbm_to_vmem [thread:$0]  %s31, 12288, %s33, [#allocation5], 384, 384, 24
    $region13: #{forward.1} parent=1 // pred_fallthru
      _
    // Predicated region
    $region14: #{forward.1} parent=1 // pred_check
      _
    $region15: #{forward.1} parent=1 // pred_check_branch
      %40 = sbr.rel (0) target = $region17
    $region16: #{forward.1} parent=1 // pred_region
      %42 = vsyncadd [#allocation5], 0
      %s44 = sshll.u32 %s3, 4
      %s45 = int_to_ptr.hbm [resolvable:$true] %s44
      %s46 = sshll.u32 [#allocation6], 4
      %s47 = int_to_ptr.vmem [resolvable:$true] %s46
      %49 = dma.hbm_to_vmem [thread:$0]  %s45, 96, %s47, [#allocation5]
    $region17: #{forward.1} parent=1 // pred_fallthru
      _
    // Predicated region
    $region18: #{forward.1} parent=1 // pred_check
      _
    $region19: #{forward.1} parent=1 // pred_check_branch
      %51 = sbr.rel (0) target = $region21
    $region20: #{forward.1} parent=1 // pred_region
      %53 = dma.done [#allocation3], 131072
    $region21: #{forward.1} parent=1 // pred_fallthru
      _
    // Predicated region
    $region22: #{forward.1} parent=1 // pred_check
      _
    $region23: #{forward.1} parent=1 // pred_check_branch
      %55 = sbr.rel (0) target = $region25
    $region24: #{forward.1} parent=1 // pred_region
      %57 = dma.done [#allocation5], 12288
    $region25: #{forward.1} parent=1 // pred_fallthru
      _
    // Predicated region
    $region26: #{forward.1} parent=1 // pred_check
      _
    $region27: #{forward.1} parent=1 // pred_check_branch
      %59 = sbr.rel (0) target = $region29
    $region28: #{forward.1} parent=1 // pred_region
      %61 = dma.done [#allocation5], 96
    $region29: #{forward.1} parent=1 // pred_fallthru
      _
    %v62 = vld [vmem:[%s0] sm:$0xff]
    %v63 = vld [vmem:[%s0 + $0x8] sm:$0xff]
    %v64 = vld [vmem:[%s0 + $0x10] sm:$0xff]
    %v65 = vld [vmem:[%s0 + $0x18] sm:$0xff]
    %v66 = vld [vmem:[%s0 + $0x20] sm:$0xff]
    %v67 = vld [vmem:[%s0 + $0x28] sm:$0xff]
    %v68 = vld [vmem:[%s0 + $0x30] sm:$0xff]
    %v69 = vld [vmem:[%s0 + $0x38] sm:$0xff]
    %v70 = vld [vmem:[%s0 + $0x40] sm:$0xff]
    %v71 = vld [vmem:[%s0 + $0x48] sm:$0xff]
    %v72 = vld [vmem:[%s0 + $0x50] sm:$0xff]
    %v73 = vld [vmem:[%s0 + $0x58] sm:$0xff]
    %v74 = vld [vmem:[%s0 + $0x60] sm:$0xff]
    %v75 = vld [vmem:[%s0 + $0x68] sm:$0xff]
    %v76 = vld [vmem:[%s0 + $0x70] sm:$0xff]
    %v77 = vld [vmem:[%s0 + $0x78] sm:$0xff]
    %v78 = vld [vmem:[%s0 + $0x80] sm:$0xff]
    %v79 = vld [vmem:[%s0 + $0x88] sm:$0xff]
    %v80 = vld [vmem:[%s0 + $0x90] sm:$0xff]
    %v81 = vld [vmem:[%s0 + $0x98] sm:$0xff]
    %v82 = vld [vmem:[%s0 + $0xa0] sm:$0xff]
    %v83 = vld [vmem:[%s0 + $0xa8] sm:$0xff]
    %v84 = vld [vmem:[%s0 + $0xb0] sm:$0xff]
    %v85 = vld [vmem:[%s0 + $0xb8] sm:$0xff]
    %v86 = vld [vmem:[%s0 + $0xc0] sm:$0xff]
    %v87 = vld [vmem:[%s0 + $0xc8] sm:$0xff]
    %v88 = vld [vmem:[%s0 + $0xd0] sm:$0xff]
    %v89 = vld [vmem:[%s0 + $0xd8] sm:$0xff]
    %v90 = vld [vmem:[%s0 + $0xe0] sm:$0xff]
    %v91 = vld [vmem:[%s0 + $0xe8] sm:$0xff]
    %v92 = vld [vmem:[%s0 + $0xf0] sm:$0xff]
    %v93 = vld [vmem:[%s0 + $0xf8] sm:$0xff]
    %v94 = vld [vmem:[%s0 + $0x100] sm:$0xff]
    %v95 = vld [vmem:[%s0 + $0x108] sm:$0xff]
    %v96 = vld [vmem:[%s0 + $0x110] sm:$0xff]
    %v97 = vld [vmem:[%s0 + $0x118] sm:$0xff]
    %v98 = vld [vmem:[%s0 + $0x120] sm:$0xff]
    %v99 = vld [vmem:[%s0 + $0x128] sm:$0xff]
    %v100 = vld [vmem:[%s0 + $0x130] sm:$0xff]
    %v101 = vld [vmem:[%s0 + $0x138] sm:$0xff]
    %v102 = vld [vmem:[%s0 + $0x140] sm:$0xff]
    %v103 = vld [vmem:[%s0 + $0x148] sm:$0xff]
    %v104 = vld [vmem:[%s0 + $0x150] sm:$0xff]
    %v105 = vld [vmem:[%s0 + $0x158] sm:$0xff]
    %v106 = vld [vmem:[%s0 + $0x160] sm:$0xff]
    %v107 = vld [vmem:[%s0 + $0x168] sm:$0xff]
    %v108 = vld [vmem:[%s0 + $0x170] sm:$0xff]
    %v109 = vld [vmem:[%s0 + $0x178] sm:$0xff]
    %v110 = vld [vmem:[%s0 + $0x180] sm:$0xff]
    %v111 = vld [vmem:[%s0 + $0x188] sm:$0xff]
    %v112 = vld [vmem:[%s0 + $0x190] sm:$0xff]
    %v113 = vld [vmem:[%s0 + $0x198] sm:$0xff]
    %v114 = vld [vmem:[%s0 + $0x1a0] sm:$0xff]
    %v115 = vld [vmem:[%s0 + $0x1a8] sm:$0xff]
    %v116 = vld [vmem:[%s0 + $0x1b0] sm:$0xff]
    %v117 = vld [vmem:[%s0 + $0x1b8] sm:$0xff]
    %v118 = vld [vmem:[%s0 + $0x1c0] sm:$0xff]
    %v119 = vld [vmem:[%s0 + $0x1c8] sm:$0xff]
    %v120 = vld [vmem:[%s0 + $0x1d0] sm:$0xff]
    %v121 = vld [vmem:[%s0 + $0x1d8] sm:$0xff]
    %v122 = vld [vmem:[%s0 + $0x1e0] sm:$0xff]
    %v123 = vld [vmem:[%s0 + $0x1e8] sm:$0xff]
    %v124 = vld [vmem:[%s0 + $0x1f0] sm:$0xff]
    %v125 = vld [vmem:[%s0 + $0x1f8] sm:$0xff]
    %v126 = vld [vmem:[%s0 + $0x200] sm:$0xff]
    %v127 = vld [vmem:[%s0 + $0x208] sm:$0xff]
    %v128 = vld [vmem:[%s0 + $0x210] sm:$0xff]
    %v129 = vld [vmem:[%s0 + $0x218] sm:$0xff]
    %v130 = vld [vmem:[%s0 + $0x220] sm:$0xff]
    %v131 = vld [vmem:[%s0 + $0x228] sm:$0xff]
    %v132 = vld [vmem:[%s0 + $0x230] sm:$0xff]
    %v133 = vld [vmem:[%s0 + $0x238] sm:$0xff]
    %v134 = vld [vmem:[%s0 + $0x240] sm:$0xff]
    %v135 = vld [vmem:[%s0 + $0x248] sm:$0xff]
    %v136 = vld [vmem:[%s0 + $0x250] sm:$0xff]
    %v137 = vld [vmem:[%s0 + $0x258] sm:$0xff]
    %v138 = vld [vmem:[%s0 + $0x260] sm:$0xff]
    %v139 = vld [vmem:[%s0 + $0x268] sm:$0xff]
    %v140 = vld [vmem:[%s0 + $0x270] sm:$0xff]
    %v141 = vld [vmem:[%s0 + $0x278] sm:$0xff]
    %v142 = vld [vmem:[%s0 + $0x280] sm:$0xff]
    %v143 = vld [vmem:[%s0 + $0x288] sm:$0xff]
    %v144 = vld [vmem:[%s0 + $0x290] sm:$0xff]
    %v145 = vld [vmem:[%s0 + $0x298] sm:$0xff]
    %v146 = vld [vmem:[%s0 + $0x2a0] sm:$0xff]
    %v147 = vld [vmem:[%s0 + $0x2a8] sm:$0xff]
    %v148 = vld [vmem:[%s0 + $0x2b0] sm:$0xff]
    %v149 = vld [vmem:[%s0 + $0x2b8] sm:$0xff]
    %v150 = vld [vmem:[%s0 + $0x2c0] sm:$0xff]
    %v151 = vld [vmem:[%s0 + $0x2c8] sm:$0xff]
    %v152 = vld [vmem:[%s0 + $0x2d0] sm:$0xff]
    %v153 = vld [vmem:[%s0 + $0x2d8] sm:$0xff]
    %v154 = vld [vmem:[%s0 + $0x2e0] sm:$0xff]
    %v155 = vld [vmem:[%s0 + $0x2e8] sm:$0xff]
    %v156 = vld [vmem:[%s0 + $0x2f0] sm:$0xff]
    %v157 = vld [vmem:[%s0 + $0x2f8] sm:$0xff]
    %v158 = vld [vmem:[%s0 + $0x300] sm:$0xff]
    %v159 = vld [vmem:[%s0 + $0x308] sm:$0xff]
    %v160 = vld [vmem:[%s0 + $0x310] sm:$0xff]
    %v161 = vld [vmem:[%s0 + $0x318] sm:$0xff]
    %v162 = vld [vmem:[%s0 + $0x320] sm:$0xff]
    %v163 = vld [vmem:[%s0 + $0x328] sm:$0xff]
    %v164 = vld [vmem:[%s0 + $0x330] sm:$0xff]
    %v165 = vld [vmem:[%s0 + $0x338] sm:$0xff]
    %v166 = vld [vmem:[%s0 + $0x340] sm:$0xff]
    %v167 = vld [vmem:[%s0 + $0x348] sm:$0xff]
    %v168 = vld [vmem:[%s0 + $0x350] sm:$0xff]
    %v169 = vld [vmem:[%s0 + $0x358] sm:$0xff]
    %v170 = vld [vmem:[%s0 + $0x360] sm:$0xff]
    %v171 = vld [vmem:[%s0 + $0x368] sm:$0xff]
    %v172 = vld [vmem:[%s0 + $0x370] sm:$0xff]
    %v173 = vld [vmem:[%s0 + $0x378] sm:$0xff]
    %v174 = vld [vmem:[%s0 + $0x380] sm:$0xff]
    %v175 = vld [vmem:[%s0 + $0x388] sm:$0xff]
    %v176 = vld [vmem:[%s0 + $0x390] sm:$0xff]
    %v177 = vld [vmem:[%s0 + $0x398] sm:$0xff]
    %v178 = vld [vmem:[%s0 + $0x3a0] sm:$0xff]
    %v179 = vld [vmem:[%s0 + $0x3a8] sm:$0xff]
    %v180 = vld [vmem:[%s0 + $0x3b0] sm:$0xff]
    %v181 = vld [vmem:[%s0 + $0x3b8] sm:$0xff]
    %v182 = vld [vmem:[%s0 + $0x3c0] sm:$0xff]
    %v183 = vld [vmem:[%s0 + $0x3c8] sm:$0xff]
    %v184 = vld [vmem:[%s0 + $0x3d0] sm:$0xff]
    %v185 = vld [vmem:[%s0 + $0x3d8] sm:$0xff]
    %v186 = vld [vmem:[%s0 + $0x3e0] sm:$0xff]
    %v187 = vld [vmem:[%s0 + $0x3e8] sm:$0xff]
    %v188 = vld [vmem:[%s0 + $0x3f0] sm:$0xff]
    %v189 = vld [vmem:[%s0 + $0x3f8] sm:$0xff]
    %v190 = vpack.c.bf16 %v126, %v62
    %v191 = vpack.c.bf16 %v127, %v63
    %v192 = vpack.c.bf16 %v128, %v64
    %v193 = vpack.c.bf16 %v129, %v65
    %v194 = vpack.c.bf16 %v130, %v66
    %v195 = vpack.c.bf16 %v131, %v67
    %v196 = vpack.c.bf16 %v132, %v68
    %v197 = vpack.c.bf16 %v133, %v69
    %v198 = vpack.c.bf16 %v134, %v70
    %v199 = vpack.c.bf16 %v135, %v71
    %v200 = vpack.c.bf16 %v136, %v72
    %v201 = vpack.c.bf16 %v137, %v73
    %v202 = vpack.c.bf16 %v138, %v74
    %v203 = vpack.c.bf16 %v139, %v75
    %v204 = vpack.c.bf16 %v140, %v76
    %v205 = vpack.c.bf16 %v141, %v77
    %v206 = vpack.c.bf16 %v142, %v78
    %v207 = vpack.c.bf16 %v143, %v79
    %v208 = vpack.c.bf16 %v144, %v80
    %v209 = vpack.c.bf16 %v145, %v81
    %v210 = vpack.c.bf16 %v146, %v82
    %v211 = vpack.c.bf16 %v147, %v83
    %v212 = vpack.c.bf16 %v148, %v84
    %v213 = vpack.c.bf16 %v149, %v85
    %v214 = vpack.c.bf16 %v150, %v86
    %v215 = vpack.c.bf16 %v151, %v87
    %v216 = vpack.c.bf16 %v152, %v88
    %v217 = vpack.c.bf16 %v153, %v89
    %v218 = vpack.c.bf16 %v154, %v90
    %v219 = vpack.c.bf16 %v155, %v91
    %v220 = vpack.c.bf16 %v156, %v92
    %v221 = vpack.c.bf16 %v157, %v93
    %v222 = vpack.c.bf16 %v158, %v94
    %v223 = vpack.c.bf16 %v159, %v95
    %v224 = vpack.c.bf16 %v160, %v96
    %v225 = vpack.c.bf16 %v161, %v97
    %v226 = vpack.c.bf16 %v162, %v98
    %v227 = vpack.c.bf16 %v163, %v99
    %v228 = vpack.c.bf16 %v164, %v100
    %v229 = vpack.c.bf16 %v165, %v101
    %v230 = vpack.c.bf16 %v166, %v102
    %v231 = vpack.c.bf16 %v167, %v103
    %v232 = vpack.c.bf16 %v168, %v104
    %v233 = vpack.c.bf16 %v169, %v105
    %v234 = vpack.c.bf16 %v170, %v106
    %v235 = vpack.c.bf16 %v171, %v107
    %v236 = vpack.c.bf16 %v172, %v108
    %v237 = vpack.c.bf16 %v173, %v109
    %v238 = vpack.c.bf16 %v174, %v110
    %v239 = vpack.c.bf16 %v175, %v111
    %v240 = vpack.c.bf16 %v176, %v112
    %v241 = vpack.c.bf16 %v177, %v113
    %v242 = vpack.c.bf16 %v178, %v114
    %v243 = vpack.c.bf16 %v179, %v115
    %v244 = vpack.c.bf16 %v180, %v116
    %v245 = vpack.c.bf16 %v181, %v117
    %v246 = vpack.c.bf16 %v182, %v118
    %v247 = vpack.c.bf16 %v183, %v119
    %v248 = vpack.c.bf16 %v184, %v120
    %v249 = vpack.c.bf16 %v185, %v121
    %v250 = vpack.c.bf16 %v186, %v122
    %v251 = vpack.c.bf16 %v187, %v123
    %v252 = vpack.c.bf16 %v188, %v124
    %v253 = vpack.c.bf16 %v189, %v125
    %v254 = vld [vmem:[#allocation2] sm:$0xff]
    %v255 = vld [vmem:[#allocation2 + $0x8] sm:$0xff]
    %v256 = vld [vmem:[#allocation2 + $0x10] sm:$0xff]
    %v257 = vld [vmem:[#allocation2 + $0x18] sm:$0xff]
    %v258 = vld [vmem:[#allocation2 + $0x20] sm:$0xff]
    %v259 = vld [vmem:[#allocation2 + $0x28] sm:$0xff]
    %v260 = vld [vmem:[#allocation2 + $0x30] sm:$0xff]
    %v261 = vld [vmem:[#allocation2 + $0x38] sm:$0xff]
    %v262 = vld [vmem:[#allocation2 + $0x40] sm:$0xff]
    %v263 = vld [vmem:[#allocation2 + $0x48] sm:$0xff]
    %v264 = vld [vmem:[#allocation2 + $0x50] sm:$0xff]
    %v265 = vld [vmem:[#allocation2 + $0x58] sm:$0xff]
    %v266 = vld [vmem:[#allocation2 + $0x60] sm:$0xff]
    %v267 = vld [vmem:[#allocation2 + $0x68] sm:$0xff]
    %v268 = vld [vmem:[#allocation2 + $0x70] sm:$0xff]
    %v269 = vld [vmem:[#allocation2 + $0x78] sm:$0xff]
    %v270 = vld [vmem:[#allocation2 + $0x80] sm:$0xff]
    %v271 = vld [vmem:[#allocation2 + $0x88] sm:$0xff]
    %v272 = vld [vmem:[#allocation2 + $0x90] sm:$0xff]
    %v273 = vld [vmem:[#allocation2 + $0x98] sm:$0xff]
    %v274 = vld [vmem:[#allocation2 + $0xa0] sm:$0xff]
    %v275 = vld [vmem:[#allocation2 + $0xa8] sm:$0xff]
    %v276 = vld [vmem:[#allocation2 + $0xb0] sm:$0xff]
    %v277 = vld [vmem:[#allocation2 + $0xb8] sm:$0xff]
    %v278 = vld [vmem:[#allocation2 + $0xc0] sm:$0xff]
    %v279 = vld [vmem:[#allocation2 + $0xc8] sm:$0xff]
    %v280 = vld [vmem:[#allocation2 + $0xd0] sm:$0xff]
    %v281 = vld [vmem:[#allocation2 + $0xd8] sm:$0xff]
    %v282 = vld [vmem:[#allocation2 + $0xe0] sm:$0xff]
    %v283 = vld [vmem:[#allocation2 + $0xe8] sm:$0xff]
    %v284 = vld [vmem:[#allocation2 + $0xf0] sm:$0xff]
    %v285 = vld [vmem:[#allocation2 + $0xf8] sm:$0xff]
    %v286 = vld [vmem:[#allocation2 + $0x100] sm:$0xff]
    %v287 = vld [vmem:[#allocation2 + $0x108] sm:$0xff]
    %v288 = vld [vmem:[#allocation2 + $0x110] sm:$0xff]
    %v289 = vld [vmem:[#allocation2 + $0x118] sm:$0xff]
    %v290 = vld [vmem:[#allocation2 + $0x120] sm:$0xff]
    %v291 = vld [vmem:[#allocation2 + $0x128] sm:$0xff]
    %v292 = vld [vmem:[#allocation2 + $0x130] sm:$0xff]
    %v293 = vld [vmem:[#allocation2 + $0x138] sm:$0xff]
    %v294 = vld [vmem:[#allocation2 + $0x140] sm:$0xff]
    %v295 = vld [vmem:[#allocation2 + $0x148] sm:$0xff]
    %v296 = vld [vmem:[#allocation2 + $0x150] sm:$0xff]
    %v297 = vld [vmem:[#allocation2 + $0x158] sm:$0xff]
    %v298 = vld [vmem:[#allocation2 + $0x160] sm:$0xff]
    %v299 = vld [vmem:[#allocation2 + $0x168] sm:$0xff]
    %v300 = vld [vmem:[#allocation2 + $0x170] sm:$0xff]
    %v301 = vld [vmem:[#allocation2 + $0x178] sm:$0xff]
    %v302 = vld [vmem:[#allocation2 + $0x180] sm:$0xff]
    %v303 = vld [vmem:[#allocation2 + $0x188] sm:$0xff]
    %v304 = vld [vmem:[#allocation2 + $0x190] sm:$0xff]
    %v305 = vld [vmem:[#allocation2 + $0x198] sm:$0xff]
    %v306 = vld [vmem:[#allocation2 + $0x1a0] sm:$0xff]
    %v307 = vld [vmem:[#allocation2 + $0x1a8] sm:$0xff]
    %v308 = vld [vmem:[#allocation2 + $0x1b0] sm:$0xff]
    %v309 = vld [vmem:[#allocation2 + $0x1b8] sm:$0xff]
    %v310 = vld [vmem:[#allocation2 + $0x1c0] sm:$0xff]
    %v311 = vld [vmem:[#allocation2 + $0x1c8] sm:$0xff]
    %v312 = vld [vmem:[#allocation2 + $0x1d0] sm:$0xff]
    %v313 = vld [vmem:[#allocation2 + $0x1d8] sm:$0xff]
    %v314 = vld [vmem:[#allocation2 + $0x1e0] sm:$0xff]
    %v315 = vld [vmem:[#allocation2 + $0x1e8] sm:$0xff]
    %v316 = vld [vmem:[#allocation2 + $0x1f0] sm:$0xff]
    %v317 = vld [vmem:[#allocation2 + $0x1f8] sm:$0xff]
    %v318 = vld [vmem:[#allocation2 + $0x200] sm:$0xff]
    %v319 = vld [vmem:[#allocation2 + $0x208] sm:$0xff]
    %v320 = vld [vmem:[#allocation2 + $0x210] sm:$0xff]
    %v321 = vld [vmem:[#allocation2 + $0x218] sm:$0xff]
    %v322 = vld [vmem:[#allocation2 + $0x220] sm:$0xff]
    %v323 = vld [vmem:[#allocation2 + $0x228] sm:$0xff]
    %v324 = vld [vmem:[#allocation2 + $0x230] sm:$0xff]
    %v325 = vld [vmem:[#allocation2 + $0x238] sm:$0xff]
    %v326 = vld [vmem:[#allocation2 + $0x240] sm:$0xff]
    %v327 = vld [vmem:[#allocation2 + $0x248] sm:$0xff]
    %v328 = vld [vmem:[#allocation2 + $0x250] sm:$0xff]
    %v329 = vld [vmem:[#allocation2 + $0x258] sm:$0xff]
    %v330 = vld [vmem:[#allocation2 + $0x260] sm:$0xff]
    %v331 = vld [vmem:[#allocation2 + $0x268] sm:$0xff]
    %v332 = vld [vmem:[#allocation2 + $0x270] sm:$0xff]
    %v333 = vld [vmem:[#allocation2 + $0x278] sm:$0xff]
    %v334 = vld [vmem:[#allocation2 + $0x280] sm:$0xff]
    %v335 = vld [vmem:[#allocation2 + $0x288] sm:$0xff]
    %v336 = vld [vmem:[#allocation2 + $0x290] sm:$0xff]
    %v337 = vld [vmem:[#allocation2 + $0x298] sm:$0xff]
    %v338 = vld [vmem:[#allocation2 + $0x2a0] sm:$0xff]
    %v339 = vld [vmem:[#allocation2 + $0x2a8] sm:$0xff]
    %v340 = vld [vmem:[#allocation2 + $0x2b0] sm:$0xff]
    %v341 = vld [vmem:[#allocation2 + $0x2b8] sm:$0xff]
    %v342 = vld [vmem:[#allocation2 + $0x2c0] sm:$0xff]
    %v343 = vld [vmem:[#allocation2 + $0x2c8] sm:$0xff]
    %v344 = vld [vmem:[#allocation2 + $0x2d0] sm:$0xff]
    %v345 = vld [vmem:[#allocation2 + $0x2d8] sm:$0xff]
    %v346 = vld [vmem:[#allocation2 + $0x2e0] sm:$0xff]
    %v347 = vld [vmem:[#allocation2 + $0x2e8] sm:$0xff]
    %v348 = vld [vmem:[#allocation2 + $0x2f0] sm:$0xff]
    %v349 = vld [vmem:[#allocation2 + $0x2f8] sm:$0xff]
    %v350 = vld [vmem:[#allocation2 + $0x300] sm:$0xff]
    %v351 = vld [vmem:[#allocation2 + $0x308] sm:$0xff]
    %v352 = vld [vmem:[#allocation2 + $0x310] sm:$0xff]
    %v353 = vld [vmem:[#allocation2 + $0x318] sm:$0xff]
    %v354 = vld [vmem:[#allocation2 + $0x320] sm:$0xff]
    %v355 = vld [vmem:[#allocation2 + $0x328] sm:$0xff]
    %v356 = vld [vmem:[#allocation2 + $0x330] sm:$0xff]
    %v357 = vld [vmem:[#allocation2 + $0x338] sm:$0xff]
    %v358 = vld [vmem:[#allocation2 + $0x340] sm:$0xff]
    %v359 = vld [vmem:[#allocation2 + $0x348] sm:$0xff]
    %v360 = vld [vmem:[#allocation2 + $0x350] sm:$0xff]
    %v361 = vld [vmem:[#allocation2 + $0x358] sm:$0xff]
    %v362 = vld [vmem:[#allocation2 + $0x360] sm:$0xff]
    %v363 = vld [vmem:[#allocation2 + $0x368] sm:$0xff]
    %v364 = vld [vmem:[#allocation2 + $0x370] sm:$0xff]
    %v365 = vld [vmem:[#allocation2 + $0x378] sm:$0xff]
    %v366 = vld [vmem:[#allocation2 + $0x380] sm:$0xff]
    %v367 = vld [vmem:[#allocation2 + $0x388] sm:$0xff]
    %v368 = vld [vmem:[#allocation2 + $0x390] sm:$0xff]
    %v369 = vld [vmem:[#allocation2 + $0x398] sm:$0xff]
    %v370 = vld [vmem:[#allocation2 + $0x3a0] sm:$0xff]
    %v371 = vld [vmem:[#allocation2 + $0x3a8] sm:$0xff]
    %v372 = vld [vmem:[#allocation2 + $0x3b0] sm:$0xff]
    %v373 = vld [vmem:[#allocation2 + $0x3b8] sm:$0xff]
    %v374 = vld [vmem:[#allocation2 + $0x3c0] sm:$0xff]
    %v375 = vld [vmem:[#allocation2 + $0x3c8] sm:$0xff]
    %v376 = vld [vmem:[#allocation2 + $0x3d0] sm:$0xff]
    %v377 = vld [vmem:[#allocation2 + $0x3d8] sm:$0xff]
    %v378 = vld [vmem:[#allocation2 + $0x3e0] sm:$0xff]
    %v379 = vld [vmem:[#allocation2 + $0x3e8] sm:$0xff]
    %v380 = vld [vmem:[#allocation2 + $0x3f0] sm:$0xff]
    %v381 = vld [vmem:[#allocation2 + $0x3f8] sm:$0xff]
    %v382 = vld [vmem:[#allocation2 + $0x400] sm:$0xff]
    %v383 = vld [vmem:[#allocation2 + $0x408] sm:$0xff]
    %v384 = vld [vmem:[#allocation2 + $0x410] sm:$0xff]
    %v385 = vld [vmem:[#allocation2 + $0x418] sm:$0xff]
    %v386 = vld [vmem:[#allocation2 + $0x420] sm:$0xff]
    %v387 = vld [vmem:[#allocation2 + $0x428] sm:$0xff]
    %v388 = vld [vmem:[#allocation2 + $0x430] sm:$0xff]
    %v389 = vld [vmem:[#allocation2 + $0x438] sm:$0xff]
    %v390 = vld [vmem:[#allocation2 + $0x440] sm:$0xff]
    %v391 = vld [vmem:[#allocation2 + $0x448] sm:$0xff]
    %v392 = vld [vmem:[#allocation2 + $0x450] sm:$0xff]
    %v393 = vld [vmem:[#allocation2 + $0x458] sm:$0xff]
    %v394 = vld [vmem:[#allocation2 + $0x460] sm:$0xff]
    %v395 = vld [vmem:[#allocation2 + $0x468] sm:$0xff]
    %v396 = vld [vmem:[#allocation2 + $0x470] sm:$0xff]
    %v397 = vld [vmem:[#allocation2 + $0x478] sm:$0xff]
    %v398 = vld [vmem:[#allocation2 + $0x480] sm:$0xff]
    %v399 = vld [vmem:[#allocation2 + $0x488] sm:$0xff]
    %v400 = vld [vmem:[#allocation2 + $0x490] sm:$0xff]
    %v401 = vld [vmem:[#allocation2 + $0x498] sm:$0xff]
    %v402 = vld [vmem:[#allocation2 + $0x4a0] sm:$0xff]
    %v403 = vld [vmem:[#allocation2 + $0x4a8] sm:$0xff]
    %v404 = vld [vmem:[#allocation2 + $0x4b0] sm:$0xff]
    %v405 = vld [vmem:[#allocation2 + $0x4b8] sm:$0xff]
    %v406 = vld [vmem:[#allocation2 + $0x4c0] sm:$0xff]
    %v407 = vld [vmem:[#allocation2 + $0x4c8] sm:$0xff]
    %v408 = vld [vmem:[#allocation2 + $0x4d0] sm:$0xff]
    %v409 = vld [vmem:[#allocation2 + $0x4d8] sm:$0xff]
    %v410 = vld [vmem:[#allocation2 + $0x4e0] sm:$0xff]
    %v411 = vld [vmem:[#allocation2 + $0x4e8] sm:$0xff]
    %v412 = vld [vmem:[#allocation2 + $0x4f0] sm:$0xff]
    %v413 = vld [vmem:[#allocation2 + $0x4f8] sm:$0xff]
    %v414 = vld [vmem:[#allocation2 + $0x500] sm:$0xff]
    %v415 = vld [vmem:[#allocation2 + $0x508] sm:$0xff]
    %v416 = vld [vmem:[#allocation2 + $0x510] sm:$0xff]
    %v417 = vld [vmem:[#allocation2 + $0x518] sm:$0xff]
    %v418 = vld [vmem:[#allocation2 + $0x520] sm:$0xff]
    %v419 = vld [vmem:[#allocation2 + $0x528] sm:$0xff]
    %v420 = vld [vmem:[#allocation2 + $0x530] sm:$0xff]
    %v421 = vld [vmem:[#allocation2 + $0x538] sm:$0xff]
    %v422 = vld [vmem:[#allocation2 + $0x540] sm:$0xff]
    %v423 = vld [vmem:[#allocation2 + $0x548] sm:$0xff]
    %v424 = vld [vmem:[#allocation2 + $0x550] sm:$0xff]
    %v425 = vld [vmem:[#allocation2 + $0x558] sm:$0xff]
    %v426 = vld [vmem:[#allocation2 + $0x560] sm:$0xff]
    %v427 = vld [vmem:[#allocation2 + $0x568] sm:$0xff]
    %v428 = vld [vmem:[#allocation2 + $0x570] sm:$0xff]
    %v429 = vld [vmem:[#allocation2 + $0x578] sm:$0xff]
    %v430 = vld [vmem:[#allocation2 + $0x580] sm:$0xff]
    %v431 = vld [vmem:[#allocation2 + $0x588] sm:$0xff]
    %v432 = vld [vmem:[#allocation2 + $0x590] sm:$0xff]
    %v433 = vld [vmem:[#allocation2 + $0x598] sm:$0xff]
    %v434 = vld [vmem:[#allocation2 + $0x5a0] sm:$0xff]
    %v435 = vld [vmem:[#allocation2 + $0x5a8] sm:$0xff]
    %v436 = vld [vmem:[#allocation2 + $0x5b0] sm:$0xff]
    %v437 = vld [vmem:[#allocation2 + $0x5b8] sm:$0xff]
    %v438 = vld [vmem:[#allocation2 + $0x5c0] sm:$0xff]
    %v439 = vld [vmem:[#allocation2 + $0x5c8] sm:$0xff]
    %v440 = vld [vmem:[#allocation2 + $0x5d0] sm:$0xff]
    %v441 = vld [vmem:[#allocation2 + $0x5d8] sm:$0xff]
    %v442 = vld [vmem:[#allocation2 + $0x5e0] sm:$0xff]
    %v443 = vld [vmem:[#allocation2 + $0x5e8] sm:$0xff]
    %v444 = vld [vmem:[#allocation2 + $0x5f0] sm:$0xff]
    %v445 = vld [vmem:[#allocation2 + $0x5f8] sm:$0xff]
    %v446 = vld [vmem:[#allocation2 + $0x600] sm:$0xff]
    %v447 = vld [vmem:[#allocation2 + $0x608] sm:$0xff]
    %v448 = vld [vmem:[#allocation2 + $0x610] sm:$0xff]
    %v449 = vld [vmem:[#allocation2 + $0x618] sm:$0xff]
    %v450 = vld [vmem:[#allocation2 + $0x620] sm:$0xff]
    %v451 = vld [vmem:[#allocation2 + $0x628] sm:$0xff]
    %v452 = vld [vmem:[#allocation2 + $0x630] sm:$0xff]
    %v453 = vld [vmem:[#allocation2 + $0x638] sm:$0xff]
    %v454 = vld [vmem:[#allocation2 + $0x640] sm:$0xff]
    %v455 = vld [vmem:[#allocation2 + $0x648] sm:$0xff]
    %v456 = vld [vmem:[#allocation2 + $0x650] sm:$0xff]
    %v457 = vld [vmem:[#allocation2 + $0x658] sm:$0xff]
    %v458 = vld [vmem:[#allocation2 + $0x660] sm:$0xff]
    %v459 = vld [vmem:[#allocation2 + $0x668] sm:$0xff]
    %v460 = vld [vmem:[#allocation2 + $0x670] sm:$0xff]
    %v461 = vld [vmem:[#allocation2 + $0x678] sm:$0xff]
    %v462 = vld [vmem:[#allocation2 + $0x680] sm:$0xff]
    %v463 = vld [vmem:[#allocation2 + $0x688] sm:$0xff]
    %v464 = vld [vmem:[#allocation2 + $0x690] sm:$0xff]
    %v465 = vld [vmem:[#allocation2 + $0x698] sm:$0xff]
    %v466 = vld [vmem:[#allocation2 + $0x6a0] sm:$0xff]
    %v467 = vld [vmem:[#allocation2 + $0x6a8] sm:$0xff]
    %v468 = vld [vmem:[#allocation2 + $0x6b0] sm:$0xff]
    %v469 = vld [vmem:[#allocation2 + $0x6b8] sm:$0xff]
    %v470 = vld [vmem:[#allocation2 + $0x6c0] sm:$0xff]
    %v471 = vld [vmem:[#allocation2 + $0x6c8] sm:$0xff]
    %v472 = vld [vmem:[#allocation2 + $0x6d0] sm:$0xff]
    %v473 = vld [vmem:[#allocation2 + $0x6d8] sm:$0xff]
    %v474 = vld [vmem:[#allocation2 + $0x6e0] sm:$0xff]
    %v475 = vld [vmem:[#allocation2 + $0x6e8] sm:$0xff]
    %v476 = vld [vmem:[#allocation2 + $0x6f0] sm:$0xff]
    %v477 = vld [vmem:[#allocation2 + $0x6f8] sm:$0xff]
    %v478 = vld [vmem:[#allocation2 + $0x700] sm:$0xff]
    %v479 = vld [vmem:[#allocation2 + $0x708] sm:$0xff]
    %v480 = vld [vmem:[#allocation2 + $0x710] sm:$0xff]
    %v481 = vld [vmem:[#allocation2 + $0x718] sm:$0xff]
    %v482 = vld [vmem:[#allocation2 + $0x720] sm:$0xff]
    %v483 = vld [vmem:[#allocation2 + $0x728] sm:$0xff]
    %v484 = vld [vmem:[#allocation2 + $0x730] sm:$0xff]
    %v485 = vld [vmem:[#allocation2 + $0x738] sm:$0xff]
    %v486 = vld [vmem:[#allocation2 + $0x740] sm:$0xff]
    %v487 = vld [vmem:[#allocation2 + $0x748] sm:$0xff]
    %v488 = vld [vmem:[#allocation2 + $0x750] sm:$0xff]
    %v489 = vld [vmem:[#allocation2 + $0x758] sm:$0xff]
    %v490 = vld [vmem:[#allocation2 + $0x760] sm:$0xff]
    %v491 = vld [vmem:[#allocation2 + $0x768] sm:$0xff]
    %v492 = vld [vmem:[#allocation2 + $0x770] sm:$0xff]
    %v493 = vld [vmem:[#allocation2 + $0x778] sm:$0xff]
    %v494 = vld [vmem:[#allocation2 + $0x780] sm:$0xff]
    %v495 = vld [vmem:[#allocation2 + $0x788] sm:$0xff]
    %v496 = vld [vmem:[#allocation2 + $0x790] sm:$0xff]
    %v497 = vld [vmem:[#allocation2 + $0x798] sm:$0xff]
    %v498 = vld [vmem:[#allocation2 + $0x7a0] sm:$0xff]
    %v499 = vld [vmem:[#allocation2 + $0x7a8] sm:$0xff]
    %v500 = vld [vmem:[#allocation2 + $0x7b0] sm:$0xff]
    %v501 = vld [vmem:[#allocation2 + $0x7b8] sm:$0xff]
    %v502 = vld [vmem:[#allocation2 + $0x7c0] sm:$0xff]
    %v503 = vld [vmem:[#allocation2 + $0x7c8] sm:$0xff]
    %v504 = vld [vmem:[#allocation2 + $0x7d0] sm:$0xff]
    %v505 = vld [vmem:[#allocation2 + $0x7d8] sm:$0xff]
    %v506 = vld [vmem:[#allocation2 + $0x7e0] sm:$0xff]
    %v507 = vld [vmem:[#allocation2 + $0x7e8] sm:$0xff]
    %v508 = vld [vmem:[#allocation2 + $0x7f0] sm:$0xff]
    %v509 = vld [vmem:[#allocation2 + $0x7f8] sm:$0xff]
    %v510 = vld [vmem:[#allocation2 + $0x800] sm:$0xff]
    %v511 = vld [vmem:[#allocation2 + $0x808] sm:$0xff]
    %v512 = vld [vmem:[#allocation2 + $0x810] sm:$0xff]
    %v513 = vld [vmem:[#allocation2 + $0x818] sm:$0xff]
    %v514 = vld [vmem:[#allocation2 + $0x820] sm:$0xff]
    %v515 = vld [vmem:[#allocation2 + $0x828] sm:$0xff]
    %v516 = vld [vmem:[#allocation2 + $0x830] sm:$0xff]
    %v517 = vld [vmem:[#allocation2 + $0x838] sm:$0xff]
    %v518 = vld [vmem:[#allocation2 + $0x840] sm:$0xff]
    %v519 = vld [vmem:[#allocation2 + $0x848] sm:$0xff]
    %v520 = vld [vmem:[#allocation2 + $0x850] sm:$0xff]
    %v521 = vld [vmem:[#allocation2 + $0x858] sm:$0xff]
    %v522 = vld [vmem:[#allocation2 + $0x860] sm:$0xff]
    %v523 = vld [vmem:[#allocation2 + $0x868] sm:$0xff]
    %v524 = vld [vmem:[#allocation2 + $0x870] sm:$0xff]
    %v525 = vld [vmem:[#allocation2 + $0x878] sm:$0xff]
    %v526 = vld [vmem:[#allocation2 + $0x880] sm:$0xff]
    %v527 = vld [vmem:[#allocation2 + $0x888] sm:$0xff]
    %v528 = vld [vmem:[#allocation2 + $0x890] sm:$0xff]
    %v529 = vld [vmem:[#allocation2 + $0x898] sm:$0xff]
    %v530 = vld [vmem:[#allocation2 + $0x8a0] sm:$0xff]
    %v531 = vld [vmem:[#allocation2 + $0x8a8] sm:$0xff]
    %v532 = vld [vmem:[#allocation2 + $0x8b0] sm:$0xff]
    %v533 = vld [vmem:[#allocation2 + $0x8b8] sm:$0xff]
    %v534 = vld [vmem:[#allocation2 + $0x8c0] sm:$0xff]
    %v535 = vld [vmem:[#allocation2 + $0x8c8] sm:$0xff]
    %v536 = vld [vmem:[#allocation2 + $0x8d0] sm:$0xff]
    %v537 = vld [vmem:[#allocation2 + $0x8d8] sm:$0xff]
    %v538 = vld [vmem:[#allocation2 + $0x8e0] sm:$0xff]
    %v539 = vld [vmem:[#allocation2 + $0x8e8] sm:$0xff]
    %v540 = vld [vmem:[#allocation2 + $0x8f0] sm:$0xff]
    %v541 = vld [vmem:[#allocation2 + $0x8f8] sm:$0xff]
    %v542 = vld [vmem:[#allocation2 + $0x900] sm:$0xff]
    %v543 = vld [vmem:[#allocation2 + $0x908] sm:$0xff]
    %v544 = vld [vmem:[#allocation2 + $0x910] sm:$0xff]
    %v545 = vld [vmem:[#allocation2 + $0x918] sm:$0xff]
    %v546 = vld [vmem:[#allocation2 + $0x920] sm:$0xff]
    %v547 = vld [vmem:[#allocation2 + $0x928] sm:$0xff]
    %v548 = vld [vmem:[#allocation2 + $0x930] sm:$0xff]
    %v549 = vld [vmem:[#allocation2 + $0x938] sm:$0xff]
    %v550 = vld [vmem:[#allocation2 + $0x940] sm:$0xff]
    %v551 = vld [vmem:[#allocation2 + $0x948] sm:$0xff]
    %v552 = vld [vmem:[#allocation2 + $0x950] sm:$0xff]
    %v553 = vld [vmem:[#allocation2 + $0x958] sm:$0xff]
    %v554 = vld [vmem:[#allocation2 + $0x960] sm:$0xff]
    %v555 = vld [vmem:[#allocation2 + $0x968] sm:$0xff]
    %v556 = vld [vmem:[#allocation2 + $0x970] sm:$0xff]
    %v557 = vld [vmem:[#allocation2 + $0x978] sm:$0xff]
    %v558 = vld [vmem:[#allocation2 + $0x980] sm:$0xff]
    %v559 = vld [vmem:[#allocation2 + $0x988] sm:$0xff]
    %v560 = vld [vmem:[#allocation2 + $0x990] sm:$0xff]
    %v561 = vld [vmem:[#allocation2 + $0x998] sm:$0xff]
    %v562 = vld [vmem:[#allocation2 + $0x9a0] sm:$0xff]
    %v563 = vld [vmem:[#allocation2 + $0x9a8] sm:$0xff]
    %v564 = vld [vmem:[#allocation2 + $0x9b0] sm:$0xff]
    %v565 = vld [vmem:[#allocation2 + $0x9b8] sm:$0xff]
    %v566 = vld [vmem:[#allocation2 + $0x9c0] sm:$0xff]
    %v567 = vld [vmem:[#allocation2 + $0x9c8] sm:$0xff]
    %v568 = vld [vmem:[#allocation2 + $0x9d0] sm:$0xff]
    %v569 = vld [vmem:[#allocation2 + $0x9d8] sm:$0xff]
    %v570 = vld [vmem:[#allocation2 + $0x9e0] sm:$0xff]
    %v571 = vld [vmem:[#allocation2 + $0x9e8] sm:$0xff]
    %v572 = vld [vmem:[#allocation2 + $0x9f0] sm:$0xff]
    %v573 = vld [vmem:[#allocation2 + $0x9f8] sm:$0xff]
    %v574 = vld [vmem:[#allocation2 + $0xa00] sm:$0xff]
    %v575 = vld [vmem:[#allocation2 + $0xa08] sm:$0xff]
    %v576 = vld [vmem:[#allocation2 + $0xa10] sm:$0xff]
    %v577 = vld [vmem:[#allocation2 + $0xa18] sm:$0xff]
    %v578 = vld [vmem:[#allocation2 + $0xa20] sm:$0xff]
    %v579 = vld [vmem:[#allocation2 + $0xa28] sm:$0xff]
    %v580 = vld [vmem:[#allocation2 + $0xa30] sm:$0xff]
    %v581 = vld [vmem:[#allocation2 + $0xa38] sm:$0xff]
    %v582 = vld [vmem:[#allocation2 + $0xa40] sm:$0xff]
    %v583 = vld [vmem:[#allocation2 + $0xa48] sm:$0xff]
    %v584 = vld [vmem:[#allocation2 + $0xa50] sm:$0xff]
    %v585 = vld [vmem:[#allocation2 + $0xa58] sm:$0xff]
    %v586 = vld [vmem:[#allocation2 + $0xa60] sm:$0xff]
    %v587 = vld [vmem:[#allocation2 + $0xa68] sm:$0xff]
    %v588 = vld [vmem:[#allocation2 + $0xa70] sm:$0xff]
    %v589 = vld [vmem:[#allocation2 + $0xa78] sm:$0xff]
    %v590 = vld [vmem:[#allocation2 + $0xa80] sm:$0xff]
    %v591 = vld [vmem:[#allocation2 + $0xa88] sm:$0xff]
    %v592 = vld [vmem:[#allocation2 + $0xa90] sm:$0xff]
    %v593 = vld [vmem:[#allocation2 + $0xa98] sm:$0xff]
    %v594 = vld [vmem:[#allocation2 + $0xaa0] sm:$0xff]
    %v595 = vld [vmem:[#allocation2 + $0xaa8] sm:$0xff]
    %v596 = vld [vmem:[#allocation2 + $0xab0] sm:$0xff]
    %v597 = vld [vmem:[#allocation2 + $0xab8] sm:$0xff]
    %v598 = vld [vmem:[#allocation2 + $0xac0] sm:$0xff]
    %v599 = vld [vmem:[#allocation2 + $0xac8] sm:$0xff]
    %v600 = vld [vmem:[#allocation2 + $0xad0] sm:$0xff]
    %v601 = vld [vmem:[#allocation2 + $0xad8] sm:$0xff]
    %v602 = vld [vmem:[#allocation2 + $0xae0] sm:$0xff]
    %v603 = vld [vmem:[#allocation2 + $0xae8] sm:$0xff]
    %v604 = vld [vmem:[#allocation2 + $0xaf0] sm:$0xff]
    %v605 = vld [vmem:[#allocation2 + $0xaf8] sm:$0xff]
    %v606 = vld [vmem:[#allocation2 + $0xb00] sm:$0xff]
    %v607 = vld [vmem:[#allocation2 + $0xb08] sm:$0xff]
    %v608 = vld [vmem:[#allocation2 + $0xb10] sm:$0xff]
    %v609 = vld [vmem:[#allocation2 + $0xb18] sm:$0xff]
    %v610 = vld [vmem:[#allocation2 + $0xb20] sm:$0xff]
    %v611 = vld [vmem:[#allocation2 + $0xb28] sm:$0xff]
    %v612 = vld [vmem:[#allocation2 + $0xb30] sm:$0xff]
    %v613 = vld [vmem:[#allocation2 + $0xb38] sm:$0xff]
    %v614 = vld [vmem:[#allocation2 + $0xb40] sm:$0xff]
    %v615 = vld [vmem:[#allocation2 + $0xb48] sm:$0xff]
    %v616 = vld [vmem:[#allocation2 + $0xb50] sm:$0xff]
    %v617 = vld [vmem:[#allocation2 + $0xb58] sm:$0xff]
    %v618 = vld [vmem:[#allocation2 + $0xb60] sm:$0xff]
    %v619 = vld [vmem:[#allocation2 + $0xb68] sm:$0xff]
    %v620 = vld [vmem:[#allocation2 + $0xb70] sm:$0xff]
    %v621 = vld [vmem:[#allocation2 + $0xb78] sm:$0xff]
    %v622 = vld [vmem:[#allocation2 + $0xb80] sm:$0xff]
    %v623 = vld [vmem:[#allocation2 + $0xb88] sm:$0xff]
    %v624 = vld [vmem:[#allocation2 + $0xb90] sm:$0xff]
    %v625 = vld [vmem:[#allocation2 + $0xb98] sm:$0xff]
    %v626 = vld [vmem:[#allocation2 + $0xba0] sm:$0xff]
    %v627 = vld [vmem:[#allocation2 + $0xba8] sm:$0xff]
    %v628 = vld [vmem:[#allocation2 + $0xbb0] sm:$0xff]
    %v629 = vld [vmem:[#allocation2 + $0xbb8] sm:$0xff]
    %v630 = vld [vmem:[#allocation2 + $0xbc0] sm:$0xff]
    %v631 = vld [vmem:[#allocation2 + $0xbc8] sm:$0xff]
    %v632 = vld [vmem:[#allocation2 + $0xbd0] sm:$0xff]
    %v633 = vld [vmem:[#allocation2 + $0xbd8] sm:$0xff]
    %v634 = vld [vmem:[#allocation2 + $0xbe0] sm:$0xff]
    %v635 = vld [vmem:[#allocation2 + $0xbe8] sm:$0xff]
    %v636 = vld [vmem:[#allocation2 + $0xbf0] sm:$0xff]
    %v637 = vld [vmem:[#allocation2 + $0xbf8] sm:$0xff]
    %v638 = vld [vmem:[#allocation2 + $0xc00] sm:$0xff]
    %v639 = vld [vmem:[#allocation2 + $0xc08] sm:$0xff]
    %v640 = vld [vmem:[#allocation2 + $0xc10] sm:$0xff]
    %v641 = vld [vmem:[#allocation2 + $0xc18] sm:$0xff]
    %v642 = vld [vmem:[#allocation2 + $0xc20] sm:$0xff]
    %v643 = vld [vmem:[#allocation2 + $0xc28] sm:$0xff]
    %v644 = vld [vmem:[#allocation2 + $0xc30] sm:$0xff]
    %v645 = vld [vmem:[#allocation2 + $0xc38] sm:$0xff]
    %v646 = vld [vmem:[#allocation2 + $0xc40] sm:$0xff]
    %v647 = vld [vmem:[#allocation2 + $0xc48] sm:$0xff]
    %v648 = vld [vmem:[#allocation2 + $0xc50] sm:$0xff]
    %v649 = vld [vmem:[#allocation2 + $0xc58] sm:$0xff]
    %v650 = vld [vmem:[#allocation2 + $0xc60] sm:$0xff]
    %v651 = vld [vmem:[#allocation2 + $0xc68] sm:$0xff]
    %v652 = vld [vmem:[#allocation2 + $0xc70] sm:$0xff]
    %v653 = vld [vmem:[#allocation2 + $0xc78] sm:$0xff]
    %v654 = vld [vmem:[#allocation2 + $0xc80] sm:$0xff]
    %v655 = vld [vmem:[#allocation2 + $0xc88] sm:$0xff]
    %v656 = vld [vmem:[#allocation2 + $0xc90] sm:$0xff]
    %v657 = vld [vmem:[#allocation2 + $0xc98] sm:$0xff]
    %v658 = vld [vmem:[#allocation2 + $0xca0] sm:$0xff]
    %v659 = vld [vmem:[#allocation2 + $0xca8] sm:$0xff]
    %v660 = vld [vmem:[#allocation2 + $0xcb0] sm:$0xff]
    %v661 = vld [vmem:[#allocation2 + $0xcb8] sm:$0xff]
    %v662 = vld [vmem:[#allocation2 + $0xcc0] sm:$0xff]
    %v663 = vld [vmem:[#allocation2 + $0xcc8] sm:$0xff]
    %v664 = vld [vmem:[#allocation2 + $0xcd0] sm:$0xff]
    %v665 = vld [vmem:[#allocation2 + $0xcd8] sm:$0xff]
    %v666 = vld [vmem:[#allocation2 + $0xce0] sm:$0xff]
    %v667 = vld [vmem:[#allocation2 + $0xce8] sm:$0xff]
    %v668 = vld [vmem:[#allocation2 + $0xcf0] sm:$0xff]
    %v669 = vld [vmem:[#allocation2 + $0xcf8] sm:$0xff]
    %v670 = vld [vmem:[#allocation2 + $0xd00] sm:$0xff]
    %v671 = vld [vmem:[#allocation2 + $0xd08] sm:$0xff]
    %v672 = vld [vmem:[#allocation2 + $0xd10] sm:$0xff]
    %v673 = vld [vmem:[#allocation2 + $0xd18] sm:$0xff]
    %v674 = vld [vmem:[#allocation2 + $0xd20] sm:$0xff]
    %v675 = vld [vmem:[#allocation2 + $0xd28] sm:$0xff]
    %v676 = vld [vmem:[#allocation2 + $0xd30] sm:$0xff]
    %v677 = vld [vmem:[#allocation2 + $0xd38] sm:$0xff]
    %v678 = vld [vmem:[#allocation2 + $0xd40] sm:$0xff]
    %v679 = vld [vmem:[#allocation2 + $0xd48] sm:$0xff]
    %v680 = vld [vmem:[#allocation2 + $0xd50] sm:$0xff]
    %v681 = vld [vmem:[#allocation2 + $0xd58] sm:$0xff]
    %v682 = vld [vmem:[#allocation2 + $0xd60] sm:$0xff]
    %v683 = vld [vmem:[#allocation2 + $0xd68] sm:$0xff]
    %v684 = vld [vmem:[#allocation2 + $0xd70] sm:$0xff]
    %v685 = vld [vmem:[#allocation2 + $0xd78] sm:$0xff]
    %v686 = vld [vmem:[#allocation2 + $0xd80] sm:$0xff]
    %v687 = vld [vmem:[#allocation2 + $0xd88] sm:$0xff]
    %v688 = vld [vmem:[#allocation2 + $0xd90] sm:$0xff]
    %v689 = vld [vmem:[#allocation2 + $0xd98] sm:$0xff]
    %v690 = vld [vmem:[#allocation2 + $0xda0] sm:$0xff]
    %v691 = vld [vmem:[#allocation2 + $0xda8] sm:$0xff]
    %v692 = vld [vmem:[#allocation2 + $0xdb0] sm:$0xff]
    %v693 = vld [vmem:[#allocation2 + $0xdb8] sm:$0xff]
    %v694 = vld [vmem:[#allocation2 + $0xdc0] sm:$0xff]
    %v695 = vld [vmem:[#allocation2 + $0xdc8] sm:$0xff]
    %v696 = vld [vmem:[#allocation2 + $0xdd0] sm:$0xff]
    %v697 = vld [vmem:[#allocation2 + $0xdd8] sm:$0xff]
    %v698 = vld [vmem:[#allocation2 + $0xde0] sm:$0xff]
    %v699 = vld [vmem:[#allocation2 + $0xde8] sm:$0xff]
    %v700 = vld [vmem:[#allocation2 + $0xdf0] sm:$0xff]
    %v701 = vld [vmem:[#allocation2 + $0xdf8] sm:$0xff]
    %v702 = vld [vmem:[#allocation2 + $0xe00] sm:$0xff]
    %v703 = vld [vmem:[#allocation2 + $0xe08] sm:$0xff]
    %v704 = vld [vmem:[#allocation2 + $0xe10] sm:$0xff]
    %v705 = vld [vmem:[#allocation2 + $0xe18] sm:$0xff]
    %v706 = vld [vmem:[#allocation2 + $0xe20] sm:$0xff]
    %v707 = vld [vmem:[#allocation2 + $0xe28] sm:$0xff]
    %v708 = vld [vmem:[#allocation2 + $0xe30] sm:$0xff]
    %v709 = vld [vmem:[#allocation2 + $0xe38] sm:$0xff]
    %v710 = vld [vmem:[#allocation2 + $0xe40] sm:$0xff]
    %v711 = vld [vmem:[#allocation2 + $0xe48] sm:$0xff]
    %v712 = vld [vmem:[#allocation2 + $0xe50] sm:$0xff]
    %v713 = vld [vmem:[#allocation2 + $0xe58] sm:$0xff]
    %v714 = vld [vmem:[#allocation2 + $0xe60] sm:$0xff]
    %v715 = vld [vmem:[#allocation2 + $0xe68] sm:$0xff]
    %v716 = vld [vmem:[#allocation2 + $0xe70] sm:$0xff]
    %v717 = vld [vmem:[#allocation2 + $0xe78] sm:$0xff]
    %v718 = vld [vmem:[#allocation2 + $0xe80] sm:$0xff]
    %v719 = vld [vmem:[#allocation2 + $0xe88] sm:$0xff]
    %v720 = vld [vmem:[#allocation2 + $0xe90] sm:$0xff]
    %v721 = vld [vmem:[#allocation2 + $0xe98] sm:$0xff]
    %v722 = vld [vmem:[#allocation2 + $0xea0] sm:$0xff]
    %v723 = vld [vmem:[#allocation2 + $0xea8] sm:$0xff]
    %v724 = vld [vmem:[#allocation2 + $0xeb0] sm:$0xff]
    %v725 = vld [vmem:[#allocation2 + $0xeb8] sm:$0xff]
    %v726 = vld [vmem:[#allocation2 + $0xec0] sm:$0xff]
    %v727 = vld [vmem:[#allocation2 + $0xec8] sm:$0xff]
    %v728 = vld [vmem:[#allocation2 + $0xed0] sm:$0xff]
    %v729 = vld [vmem:[#allocation2 + $0xed8] sm:$0xff]
    %v730 = vld [vmem:[#allocation2 + $0xee0] sm:$0xff]
    %v731 = vld [vmem:[#allocation2 + $0xee8] sm:$0xff]
    %v732 = vld [vmem:[#allocation2 + $0xef0] sm:$0xff]
    %v733 = vld [vmem:[#allocation2 + $0xef8] sm:$0xff]
    %v734 = vld [vmem:[#allocation2 + $0xf00] sm:$0xff]
    %v735 = vld [vmem:[#allocation2 + $0xf08] sm:$0xff]
    %v736 = vld [vmem:[#allocation2 + $0xf10] sm:$0xff]
    %v737 = vld [vmem:[#allocation2 + $0xf18] sm:$0xff]
    %v738 = vld [vmem:[#allocation2 + $0xf20] sm:$0xff]
    %v739 = vld [vmem:[#allocation2 + $0xf28] sm:$0xff]
    %v740 = vld [vmem:[#allocation2 + $0xf30] sm:$0xff]
    %v741 = vld [vmem:[#allocation2 + $0xf38] sm:$0xff]
    %v742 = vld [vmem:[#allocation2 + $0xf40] sm:$0xff]
    %v743 = vld [vmem:[#allocation2 + $0xf48] sm:$0xff]
    %v744 = vld [vmem:[#allocation2 + $0xf50] sm:$0xff]
    %v745 = vld [vmem:[#allocation2 + $0xf58] sm:$0xff]
    %v746 = vld [vmem:[#allocation2 + $0xf60] sm:$0xff]
    %v747 = vld [vmem:[#allocation2 + $0xf68] sm:$0xff]
    %v748 = vld [vmem:[#allocation2 + $0xf70] sm:$0xff]
    %v749 = vld [vmem:[#allocation2 + $0xf78] sm:$0xff]
    %v750 = vld [vmem:[#allocation2 + $0xf80] sm:$0xff]
    %v751 = vld [vmem:[#allocation2 + $0xf88] sm:$0xff]
    %v752 = vld [vmem:[#allocation2 + $0xf90] sm:$0xff]
    %v753 = vld [vmem:[#allocation2 + $0xf98] sm:$0xff]
    %v754 = vld [vmem:[#allocation2 + $0xfa0] sm:$0xff]
    %v755 = vld [vmem:[#allocation2 + $0xfa8] sm:$0xff]
    %v756 = vld [vmem:[#allocation2 + $0xfb0] sm:$0xff]
    %v757 = vld [vmem:[#allocation2 + $0xfb8] sm:$0xff]
    %v758 = vld [vmem:[#allocation2 + $0xfc0] sm:$0xff]
    %v759 = vld [vmem:[#allocation2 + $0xfc8] sm:$0xff]
    %v760 = vld [vmem:[#allocation2 + $0xfd0] sm:$0xff]
    %v761 = vld [vmem:[#allocation2 + $0xfd8] sm:$0xff]
    %v762 = vld [vmem:[#allocation2 + $0xfe0] sm:$0xff]
    %v763 = vld [vmem:[#allocation2 + $0xfe8] sm:$0xff]
    %v764 = vld [vmem:[#allocation2 + $0xff0] sm:$0xff]
    %v765 = vld [vmem:[#allocation2 + $0xff8] sm:$0xff]
    %v766 = vld [vmem:[#allocation2 + $0x1000] sm:$0xff]
    %v767 = vld [vmem:[#allocation2 + $0x1008] sm:$0xff]
    %v768 = vld [vmem:[#allocation2 + $0x1010] sm:$0xff]
    %v769 = vld [vmem:[#allocation2 + $0x1018] sm:$0xff]
    %v770 = vld [vmem:[#allocation2 + $0x1020] sm:$0xff]
    %v771 = vld [vmem:[#allocation2 + $0x1028] sm:$0xff]
    %v772 = vld [vmem:[#allocation2 + $0x1030] sm:$0xff]
    %v773 = vld [vmem:[#allocation2 + $0x1038] sm:$0xff]
    %v774 = vld [vmem:[#allocation2 + $0x1040] sm:$0xff]
    %v775 = vld [vmem:[#allocation2 + $0x1048] sm:$0xff]
    %v776 = vld [vmem:[#allocation2 + $0x1050] sm:$0xff]
    %v777 = vld [vmem:[#allocation2 + $0x1058] sm:$0xff]
    %v778 = vld [vmem:[#allocation2 + $0x1060] sm:$0xff]
    %v779 = vld [vmem:[#allocation2 + $0x1068] sm:$0xff]
    %v780 = vld [vmem:[#allocation2 + $0x1070] sm:$0xff]
    %v781 = vld [vmem:[#allocation2 + $0x1078] sm:$0xff]
    %v782 = vld [vmem:[#allocation2 + $0x1080] sm:$0xff]
    %v783 = vld [vmem:[#allocation2 + $0x1088] sm:$0xff]
    %v784 = vld [vmem:[#allocation2 + $0x1090] sm:$0xff]
    %v785 = vld [vmem:[#allocation2 + $0x1098] sm:$0xff]
    %v786 = vld [vmem:[#allocation2 + $0x10a0] sm:$0xff]
    %v787 = vld [vmem:[#allocation2 + $0x10a8] sm:$0xff]
    %v788 = vld [vmem:[#allocation2 + $0x10b0] sm:$0xff]
    %v789 = vld [vmem:[#allocation2 + $0x10b8] sm:$0xff]
    %v790 = vld [vmem:[#allocation2 + $0x10c0] sm:$0xff]
    %v791 = vld [vmem:[#allocation2 + $0x10c8] sm:$0xff]
    %v792 = vld [vmem:[#allocation2 + $0x10d0] sm:$0xff]
    %v793 = vld [vmem:[#allocation2 + $0x10d8] sm:$0xff]
    %v794 = vld [vmem:[#allocation2 + $0x10e0] sm:$0xff]
    %v795 = vld [vmem:[#allocation2 + $0x10e8] sm:$0xff]
    %v796 = vld [vmem:[#allocation2 + $0x10f0] sm:$0xff]
    %v797 = vld [vmem:[#allocation2 + $0x10f8] sm:$0xff]
    %v798 = vld [vmem:[#allocation2 + $0x1100] sm:$0xff]
    %v799 = vld [vmem:[#allocation2 + $0x1108] sm:$0xff]
    %v800 = vld [vmem:[#allocation2 + $0x1110] sm:$0xff]
    %v801 = vld [vmem:[#allocation2 + $0x1118] sm:$0xff]
    %v802 = vld [vmem:[#allocation2 + $0x1120] sm:$0xff]
    %v803 = vld [vmem:[#allocation2 + $0x1128] sm:$0xff]
    %v804 = vld [vmem:[#allocation2 + $0x1130] sm:$0xff]
    %v805 = vld [vmem:[#allocation2 + $0x1138] sm:$0xff]
    %v806 = vld [vmem:[#allocation2 + $0x1140] sm:$0xff]
    %v807 = vld [vmem:[#allocation2 + $0x1148] sm:$0xff]
    %v808 = vld [vmem:[#allocation2 + $0x1150] sm:$0xff]
    %v809 = vld [vmem:[#allocation2 + $0x1158] sm:$0xff]
    %v810 = vld [vmem:[#allocation2 + $0x1160] sm:$0xff]
    %v811 = vld [vmem:[#allocation2 + $0x1168] sm:$0xff]
    %v812 = vld [vmem:[#allocation2 + $0x1170] sm:$0xff]
    %v813 = vld [vmem:[#allocation2 + $0x1178] sm:$0xff]
    %v814 = vld [vmem:[#allocation2 + $0x1180] sm:$0xff]
    %v815 = vld [vmem:[#allocation2 + $0x1188] sm:$0xff]
    %v816 = vld [vmem:[#allocation2 + $0x1190] sm:$0xff]
    %v817 = vld [vmem:[#allocation2 + $0x1198] sm:$0xff]
    %v818 = vld [vmem:[#allocation2 + $0x11a0] sm:$0xff]
    %v819 = vld [vmem:[#allocation2 + $0x11a8] sm:$0xff]
    %v820 = vld [vmem:[#allocation2 + $0x11b0] sm:$0xff]
    %v821 = vld [vmem:[#allocation2 + $0x11b8] sm:$0xff]
    %v822 = vld [vmem:[#allocation2 + $0x11c0] sm:$0xff]
    %v823 = vld [vmem:[#allocation2 + $0x11c8] sm:$0xff]
    %v824 = vld [vmem:[#allocation2 + $0x11d0] sm:$0xff]
    %v825 = vld [vmem:[#allocation2 + $0x11d8] sm:$0xff]
    %v826 = vld [vmem:[#allocation2 + $0x11e0] sm:$0xff]
    %v827 = vld [vmem:[#allocation2 + $0x11e8] sm:$0xff]
    %v828 = vld [vmem:[#allocation2 + $0x11f0] sm:$0xff]
    %v829 = vld [vmem:[#allocation2 + $0x11f8] sm:$0xff]
    %v830 = vld [vmem:[#allocation2 + $0x1200] sm:$0xff]
    %v831 = vld [vmem:[#allocation2 + $0x1208] sm:$0xff]
    %v832 = vld [vmem:[#allocation2 + $0x1210] sm:$0xff]
    %v833 = vld [vmem:[#allocation2 + $0x1218] sm:$0xff]
    %v834 = vld [vmem:[#allocation2 + $0x1220] sm:$0xff]
    %v835 = vld [vmem:[#allocation2 + $0x1228] sm:$0xff]
    %v836 = vld [vmem:[#allocation2 + $0x1230] sm:$0xff]
    %v837 = vld [vmem:[#allocation2 + $0x1238] sm:$0xff]
    %v838 = vld [vmem:[#allocation2 + $0x1240] sm:$0xff]
    %v839 = vld [vmem:[#allocation2 + $0x1248] sm:$0xff]
    %v840 = vld [vmem:[#allocation2 + $0x1250] sm:$0xff]
    %v841 = vld [vmem:[#allocation2 + $0x1258] sm:$0xff]
    %v842 = vld [vmem:[#allocation2 + $0x1260] sm:$0xff]
    %v843 = vld [vmem:[#allocation2 + $0x1268] sm:$0xff]
    %v844 = vld [vmem:[#allocation2 + $0x1270] sm:$0xff]
    %v845 = vld [vmem:[#allocation2 + $0x1278] sm:$0xff]
    %v846 = vld [vmem:[#allocation2 + $0x1280] sm:$0xff]
    %v847 = vld [vmem:[#allocation2 + $0x1288] sm:$0xff]
    %v848 = vld [vmem:[#allocation2 + $0x1290] sm:$0xff]
    %v849 = vld [vmem:[#allocation2 + $0x1298] sm:$0xff]
    %v850 = vld [vmem:[#allocation2 + $0x12a0] sm:$0xff]
    %v851 = vld [vmem:[#allocation2 + $0x12a8] sm:$0xff]
    %v852 = vld [vmem:[#allocation2 + $0x12b0] sm:$0xff]
    %v853 = vld [vmem:[#allocation2 + $0x12b8] sm:$0xff]
    %v854 = vld [vmem:[#allocation2 + $0x12c0] sm:$0xff]
    %v855 = vld [vmem:[#allocation2 + $0x12c8] sm:$0xff]
    %v856 = vld [vmem:[#allocation2 + $0x12d0] sm:$0xff]
    %v857 = vld [vmem:[#allocation2 + $0x12d8] sm:$0xff]
    %v858 = vld [vmem:[#allocation2 + $0x12e0] sm:$0xff]
    %v859 = vld [vmem:[#allocation2 + $0x12e8] sm:$0xff]
    %v860 = vld [vmem:[#allocation2 + $0x12f0] sm:$0xff]
    %v861 = vld [vmem:[#allocation2 + $0x12f8] sm:$0xff]
    %v862 = vld [vmem:[#allocation2 + $0x1300] sm:$0xff]
    %v863 = vld [vmem:[#allocation2 + $0x1308] sm:$0xff]
    %v864 = vld [vmem:[#allocation2 + $0x1310] sm:$0xff]
    %v865 = vld [vmem:[#allocation2 + $0x1318] sm:$0xff]
    %v866 = vld [vmem:[#allocation2 + $0x1320] sm:$0xff]
    %v867 = vld [vmem:[#allocation2 + $0x1328] sm:$0xff]
    %v868 = vld [vmem:[#allocation2 + $0x1330] sm:$0xff]
    %v869 = vld [vmem:[#allocation2 + $0x1338] sm:$0xff]
    %v870 = vld [vmem:[#allocation2 + $0x1340] sm:$0xff]
    %v871 = vld [vmem:[#allocation2 + $0x1348] sm:$0xff]
    %v872 = vld [vmem:[#allocation2 + $0x1350] sm:$0xff]
    %v873 = vld [vmem:[#allocation2 + $0x1358] sm:$0xff]
    %v874 = vld [vmem:[#allocation2 + $0x1360] sm:$0xff]
    %v875 = vld [vmem:[#allocation2 + $0x1368] sm:$0xff]
    %v876 = vld [vmem:[#allocation2 + $0x1370] sm:$0xff]
    %v877 = vld [vmem:[#allocation2 + $0x1378] sm:$0xff]
    %v878 = vld [vmem:[#allocation2 + $0x1380] sm:$0xff]
    %v879 = vld [vmem:[#allocation2 + $0x1388] sm:$0xff]
    %v880 = vld [vmem:[#allocation2 + $0x1390] sm:$0xff]
    %v881 = vld [vmem:[#allocation2 + $0x1398] sm:$0xff]
    %v882 = vld [vmem:[#allocation2 + $0x13a0] sm:$0xff]
    %v883 = vld [vmem:[#allocation2 + $0x13a8] sm:$0xff]
    %v884 = vld [vmem:[#allocation2 + $0x13b0] sm:$0xff]
    %v885 = vld [vmem:[#allocation2 + $0x13b8] sm:$0xff]
    %v886 = vld [vmem:[#allocation2 + $0x13c0] sm:$0xff]
    %v887 = vld [vmem:[#allocation2 + $0x13c8] sm:$0xff]
    %v888 = vld [vmem:[#allocation2 + $0x13d0] sm:$0xff]
    %v889 = vld [vmem:[#allocation2 + $0x13d8] sm:$0xff]
    %v890 = vld [vmem:[#allocation2 + $0x13e0] sm:$0xff]
    %v891 = vld [vmem:[#allocation2 + $0x13e8] sm:$0xff]
    %v892 = vld [vmem:[#allocation2 + $0x13f0] sm:$0xff]
    %v893 = vld [vmem:[#allocation2 + $0x13f8] sm:$0xff]
    %v894 = vld [vmem:[#allocation2 + $0x1400] sm:$0xff]
    %v895 = vld [vmem:[#allocation2 + $0x1408] sm:$0xff]
    %v896 = vld [vmem:[#allocation2 + $0x1410] sm:$0xff]
    %v897 = vld [vmem:[#allocation2 + $0x1418] sm:$0xff]
    %v898 = vld [vmem:[#allocation2 + $0x1420] sm:$0xff]
    %v899 = vld [vmem:[#allocation2 + $0x1428] sm:$0xff]
    %v900 = vld [vmem:[#allocation2 + $0x1430] sm:$0xff]
    %v901 = vld [vmem:[#allocation2 + $0x1438] sm:$0xff]
    %v902 = vld [vmem:[#allocation2 + $0x1440] sm:$0xff]
    %v903 = vld [vmem:[#allocation2 + $0x1448] sm:$0xff]
    %v904 = vld [vmem:[#allocation2 + $0x1450] sm:$0xff]
    %v905 = vld [vmem:[#allocation2 + $0x1458] sm:$0xff]
    %v906 = vld [vmem:[#allocation2 + $0x1460] sm:$0xff]
    %v907 = vld [vmem:[#allocation2 + $0x1468] sm:$0xff]
    %v908 = vld [vmem:[#allocation2 + $0x1470] sm:$0xff]
    %v909 = vld [vmem:[#allocation2 + $0x1478] sm:$0xff]
    %v910 = vld [vmem:[#allocation2 + $0x1480] sm:$0xff]
    %v911 = vld [vmem:[#allocation2 + $0x1488] sm:$0xff]
    %v912 = vld [vmem:[#allocation2 + $0x1490] sm:$0xff]
    %v913 = vld [vmem:[#allocation2 + $0x1498] sm:$0xff]
    %v914 = vld [vmem:[#allocation2 + $0x14a0] sm:$0xff]
    %v915 = vld [vmem:[#allocation2 + $0x14a8] sm:$0xff]
    %v916 = vld [vmem:[#allocation2 + $0x14b0] sm:$0xff]
    %v917 = vld [vmem:[#allocation2 + $0x14b8] sm:$0xff]
    %v918 = vld [vmem:[#allocation2 + $0x14c0] sm:$0xff]
    %v919 = vld [vmem:[#allocation2 + $0x14c8] sm:$0xff]
    %v920 = vld [vmem:[#allocation2 + $0x14d0] sm:$0xff]
    %v921 = vld [vmem:[#allocation2 + $0x14d8] sm:$0xff]
    %v922 = vld [vmem:[#allocation2 + $0x14e0] sm:$0xff]
    %v923 = vld [vmem:[#allocation2 + $0x14e8] sm:$0xff]
    %v924 = vld [vmem:[#allocation2 + $0x14f0] sm:$0xff]
    %v925 = vld [vmem:[#allocation2 + $0x14f8] sm:$0xff]
    %v926 = vld [vmem:[#allocation2 + $0x1500] sm:$0xff]
    %v927 = vld [vmem:[#allocation2 + $0x1508] sm:$0xff]
    %v928 = vld [vmem:[#allocation2 + $0x1510] sm:$0xff]
    %v929 = vld [vmem:[#allocation2 + $0x1518] sm:$0xff]
    %v930 = vld [vmem:[#allocation2 + $0x1520] sm:$0xff]
    %v931 = vld [vmem:[#allocation2 + $0x1528] sm:$0xff]
    %v932 = vld [vmem:[#allocation2 + $0x1530] sm:$0xff]
    %v933 = vld [vmem:[#allocation2 + $0x1538] sm:$0xff]
    %v934 = vld [vmem:[#allocation2 + $0x1540] sm:$0xff]
    %v935 = vld [vmem:[#allocation2 + $0x1548] sm:$0xff]
    %v936 = vld [vmem:[#allocation2 + $0x1550] sm:$0xff]
    %v937 = vld [vmem:[#allocation2 + $0x1558] sm:$0xff]
    %v938 = vld [vmem:[#allocation2 + $0x1560] sm:$0xff]
    %v939 = vld [vmem:[#allocation2 + $0x1568] sm:$0xff]
    %v940 = vld [vmem:[#allocation2 + $0x1570] sm:$0xff]
    %v941 = vld [vmem:[#allocation2 + $0x1578] sm:$0xff]
    %v942 = vld [vmem:[#allocation2 + $0x1580] sm:$0xff]
    %v943 = vld [vmem:[#allocation2 + $0x1588] sm:$0xff]
    %v944 = vld [vmem:[#allocation2 + $0x1590] sm:$0xff]
    %v945 = vld [vmem:[#allocation2 + $0x1598] sm:$0xff]
    %v946 = vld [vmem:[#allocation2 + $0x15a0] sm:$0xff]
    %v947 = vld [vmem:[#allocation2 + $0x15a8] sm:$0xff]
    %v948 = vld [vmem:[#allocation2 + $0x15b0] sm:$0xff]
    %v949 = vld [vmem:[#allocation2 + $0x15b8] sm:$0xff]
    %v950 = vld [vmem:[#allocation2 + $0x15c0] sm:$0xff]
    %v951 = vld [vmem:[#allocation2 + $0x15c8] sm:$0xff]
    %v952 = vld [vmem:[#allocation2 + $0x15d0] sm:$0xff]
    %v953 = vld [vmem:[#allocation2 + $0x15d8] sm:$0xff]
    %v954 = vld [vmem:[#allocation2 + $0x15e0] sm:$0xff]
    %v955 = vld [vmem:[#allocation2 + $0x15e8] sm:$0xff]
    %v956 = vld [vmem:[#allocation2 + $0x15f0] sm:$0xff]
    %v957 = vld [vmem:[#allocation2 + $0x15f8] sm:$0xff]
    %v958 = vld [vmem:[#allocation2 + $0x1600] sm:$0xff]
    %v959 = vld [vmem:[#allocation2 + $0x1608] sm:$0xff]
    %v960 = vld [vmem:[#allocation2 + $0x1610] sm:$0xff]
    %v961 = vld [vmem:[#allocation2 + $0x1618] sm:$0xff]
    %v962 = vld [vmem:[#allocation2 + $0x1620] sm:$0xff]
    %v963 = vld [vmem:[#allocation2 + $0x1628] sm:$0xff]
    %v964 = vld [vmem:[#allocation2 + $0x1630] sm:$0xff]
    %v965 = vld [vmem:[#allocation2 + $0x1638] sm:$0xff]
    %v966 = vld [vmem:[#allocation2 + $0x1640] sm:$0xff]
    %v967 = vld [vmem:[#allocation2 + $0x1648] sm:$0xff]
    %v968 = vld [vmem:[#allocation2 + $0x1650] sm:$0xff]
    %v969 = vld [vmem:[#allocation2 + $0x1658] sm:$0xff]
    %v970 = vld [vmem:[#allocation2 + $0x1660] sm:$0xff]
    %v971 = vld [vmem:[#allocation2 + $0x1668] sm:$0xff]
    %v972 = vld [vmem:[#allocation2 + $0x1670] sm:$0xff]
    %v973 = vld [vmem:[#allocation2 + $0x1678] sm:$0xff]
    %v974 = vld [vmem:[#allocation2 + $0x1680] sm:$0xff]
    %v975 = vld [vmem:[#allocation2 + $0x1688] sm:$0xff]
    %v976 = vld [vmem:[#allocation2 + $0x1690] sm:$0xff]
    %v977 = vld [vmem:[#allocation2 + $0x1698] sm:$0xff]
    %v978 = vld [vmem:[#allocation2 + $0x16a0] sm:$0xff]
    %v979 = vld [vmem:[#allocation2 + $0x16a8] sm:$0xff]
    %v980 = vld [vmem:[#allocation2 + $0x16b0] sm:$0xff]
    %v981 = vld [vmem:[#allocation2 + $0x16b8] sm:$0xff]
    %v982 = vld [vmem:[#allocation2 + $0x16c0] sm:$0xff]
    %v983 = vld [vmem:[#allocation2 + $0x16c8] sm:$0xff]
    %v984 = vld [vmem:[#allocation2 + $0x16d0] sm:$0xff]
    %v985 = vld [vmem:[#allocation2 + $0x16d8] sm:$0xff]
    %v986 = vld [vmem:[#allocation2 + $0x16e0] sm:$0xff]
    %v987 = vld [vmem:[#allocation2 + $0x16e8] sm:$0xff]
    %v988 = vld [vmem:[#allocation2 + $0x16f0] sm:$0xff]
    %v989 = vld [vmem:[#allocation2 + $0x16f8] sm:$0xff]
    %v990 = vld [vmem:[#allocation2 + $0x1700] sm:$0xff]
    %v991 = vld [vmem:[#allocation2 + $0x1708] sm:$0xff]
    %v992 = vld [vmem:[#allocation2 + $0x1710] sm:$0xff]
    %v993 = vld [vmem:[#allocation2 + $0x1718] sm:$0xff]
    %v994 = vld [vmem:[#allocation2 + $0x1720] sm:$0xff]
    %v995 = vld [vmem:[#allocation2 + $0x1728] sm:$0xff]
    %v996 = vld [vmem:[#allocation2 + $0x1730] sm:$0xff]
    %v997 = vld [vmem:[#allocation2 + $0x1738] sm:$0xff]
    %v998 = vld [vmem:[#allocation2 + $0x1740] sm:$0xff]
    %v999 = vld [vmem:[#allocation2 + $0x1748] sm:$0xff]
    %v1000 = vld [vmem:[#allocation2 + $0x1750] sm:$0xff]
    %v1001 = vld [vmem:[#allocation2 + $0x1758] sm:$0xff]
    %v1002 = vld [vmem:[#allocation2 + $0x1760] sm:$0xff]
    %v1003 = vld [vmem:[#allocation2 + $0x1768] sm:$0xff]
    %v1004 = vld [vmem:[#allocation2 + $0x1770] sm:$0xff]
    %v1005 = vld [vmem:[#allocation2 + $0x1778] sm:$0xff]
    %v1006 = vld [vmem:[#allocation2 + $0x1780] sm:$0xff]
    %v1007 = vld [vmem:[#allocation2 + $0x1788] sm:$0xff]
    %v1008 = vld [vmem:[#allocation2 + $0x1790] sm:$0xff]
    %v1009 = vld [vmem:[#allocation2 + $0x1798] sm:$0xff]
    %v1010 = vld [vmem:[#allocation2 + $0x17a0] sm:$0xff]
    %v1011 = vld [vmem:[#allocation2 + $0x17a8] sm:$0xff]
    %v1012 = vld [vmem:[#allocation2 + $0x17b0] sm:$0xff]
    %v1013 = vld [vmem:[#allocation2 + $0x17b8] sm:$0xff]
    %v1014 = vld [vmem:[#allocation2 + $0x17c0] sm:$0xff]
    %v1015 = vld [vmem:[#allocation2 + $0x17c8] sm:$0xff]
    %v1016 = vld [vmem:[#allocation2 + $0x17d0] sm:$0xff]
    %v1017 = vld [vmem:[#allocation2 + $0x17d8] sm:$0xff]
    %v1018 = vld [vmem:[#allocation2 + $0x17e0] sm:$0xff]
    %v1019 = vld [vmem:[#allocation2 + $0x17e8] sm:$0xff]
    %v1020 = vld [vmem:[#allocation2 + $0x17f0] sm:$0xff]
    %v1021 = vld [vmem:[#allocation2 + $0x17f8] sm:$0xff]
    %v1022 = vld [vmem:[#allocation2 + $0x1800] sm:$0xff]
    %v1023 = vld [vmem:[#allocation2 + $0x1808] sm:$0xff]
    %v1024 = vld [vmem:[#allocation2 + $0x1810] sm:$0xff]
    %v1025 = vld [vmem:[#allocation2 + $0x1818] sm:$0xff]
    %v1026 = vld [vmem:[#allocation2 + $0x1820] sm:$0xff]
    %v1027 = vld [vmem:[#allocation2 + $0x1828] sm:$0xff]
    %v1028 = vld [vmem:[#allocation2 + $0x1830] sm:$0xff]
    %v1029 = vld [vmem:[#allocation2 + $0x1838] sm:$0xff]
    %v1030 = vld [vmem:[#allocation2 + $0x1840] sm:$0xff]
    %v1031 = vld [vmem:[#allocation2 + $0x1848] sm:$0xff]
    %v1032 = vld [vmem:[#allocation2 + $0x1850] sm:$0xff]
    %v1033 = vld [vmem:[#allocation2 + $0x1858] sm:$0xff]
    %v1034 = vld [vmem:[#allocation2 + $0x1860] sm:$0xff]
    %v1035 = vld [vmem:[#allocation2 + $0x1868] sm:$0xff]
    %v1036 = vld [vmem:[#allocation2 + $0x1870] sm:$0xff]
    %v1037 = vld [vmem:[#allocation2 + $0x1878] sm:$0xff]
    %v1038 = vld [vmem:[#allocation2 + $0x1880] sm:$0xff]
    %v1039 = vld [vmem:[#allocation2 + $0x1888] sm:$0xff]
    %v1040 = vld [vmem:[#allocation2 + $0x1890] sm:$0xff]
    %v1041 = vld [vmem:[#allocation2 + $0x1898] sm:$0xff]
    %v1042 = vld [vmem:[#allocation2 + $0x18a0] sm:$0xff]
    %v1043 = vld [vmem:[#allocation2 + $0x18a8] sm:$0xff]
    %v1044 = vld [vmem:[#allocation2 + $0x18b0] sm:$0xff]
    %v1045 = vld [vmem:[#allocation2 + $0x18b8] sm:$0xff]
    %v1046 = vld [vmem:[#allocation2 + $0x18c0] sm:$0xff]
    %v1047 = vld [vmem:[#allocation2 + $0x18c8] sm:$0xff]
    %v1048 = vld [vmem:[#allocation2 + $0x18d0] sm:$0xff]
    %v1049 = vld [vmem:[#allocation2 + $0x18d8] sm:$0xff]
    %v1050 = vld [vmem:[#allocation2 + $0x18e0] sm:$0xff]
    %v1051 = vld [vmem:[#allocation2 + $0x18e8] sm:$0xff]
    %v1052 = vld [vmem:[#allocation2 + $0x18f0] sm:$0xff]
    %v1053 = vld [vmem:[#allocation2 + $0x18f8] sm:$0xff]
    %v1054 = vld [vmem:[#allocation2 + $0x1900] sm:$0xff]
    %v1055 = vld [vmem:[#allocation2 + $0x1908] sm:$0xff]
    %v1056 = vld [vmem:[#allocation2 + $0x1910] sm:$0xff]
    %v1057 = vld [vmem:[#allocation2 + $0x1918] sm:$0xff]
    %v1058 = vld [vmem:[#allocation2 + $0x1920] sm:$0xff]
    %v1059 = vld [vmem:[#allocation2 + $0x1928] sm:$0xff]
    %v1060 = vld [vmem:[#allocation2 + $0x1930] sm:$0xff]
    %v1061 = vld [vmem:[#allocation2 + $0x1938] sm:$0xff]
    %v1062 = vld [vmem:[#allocation2 + $0x1940] sm:$0xff]
    %v1063 = vld [vmem:[#allocation2 + $0x1948] sm:$0xff]
    %v1064 = vld [vmem:[#allocation2 + $0x1950] sm:$0xff]
    %v1065 = vld [vmem:[#allocation2 + $0x1958] sm:$0xff]
    %v1066 = vld [vmem:[#allocation2 + $0x1960] sm:$0xff]
    %v1067 = vld [vmem:[#allocation2 + $0x1968] sm:$0xff]
    %v1068 = vld [vmem:[#allocation2 + $0x1970] sm:$0xff]
    %v1069 = vld [vmem:[#allocation2 + $0x1978] sm:$0xff]
    %v1070 = vld [vmem:[#allocation2 + $0x1980] sm:$0xff]
    %v1071 = vld [vmem:[#allocation2 + $0x1988] sm:$0xff]
    %v1072 = vld [vmem:[#allocation2 + $0x1990] sm:$0xff]
    %v1073 = vld [vmem:[#allocation2 + $0x1998] sm:$0xff]
    %v1074 = vld [vmem:[#allocation2 + $0x19a0] sm:$0xff]
    %v1075 = vld [vmem:[#allocation2 + $0x19a8] sm:$0xff]
    %v1076 = vld [vmem:[#allocation2 + $0x19b0] sm:$0xff]
    %v1077 = vld [vmem:[#allocation2 + $0x19b8] sm:$0xff]
    %v1078 = vld [vmem:[#allocation2 + $0x19c0] sm:$0xff]
    %v1079 = vld [vmem:[#allocation2 + $0x19c8] sm:$0xff]
    %v1080 = vld [vmem:[#allocation2 + $0x19d0] sm:$0xff]
    %v1081 = vld [vmem:[#allocation2 + $0x19d8] sm:$0xff]
    %v1082 = vld [vmem:[#allocation2 + $0x19e0] sm:$0xff]
    %v1083 = vld [vmem:[#allocation2 + $0x19e8] sm:$0xff]
    %v1084 = vld [vmem:[#allocation2 + $0x19f0] sm:$0xff]
    %v1085 = vld [vmem:[#allocation2 + $0x19f8] sm:$0xff]
    %v1086 = vld [vmem:[#allocation2 + $0x1a00] sm:$0xff]
    %v1087 = vld [vmem:[#allocation2 + $0x1a08] sm:$0xff]
    %v1088 = vld [vmem:[#allocation2 + $0x1a10] sm:$0xff]
    %v1089 = vld [vmem:[#allocation2 + $0x1a18] sm:$0xff]
    %v1090 = vld [vmem:[#allocation2 + $0x1a20] sm:$0xff]
    %v1091 = vld [vmem:[#allocation2 + $0x1a28] sm:$0xff]
    %v1092 = vld [vmem:[#allocation2 + $0x1a30] sm:$0xff]
    %v1093 = vld [vmem:[#allocation2 + $0x1a38] sm:$0xff]
    %v1094 = vld [vmem:[#allocation2 + $0x1a40] sm:$0xff]
    %v1095 = vld [vmem:[#allocation2 + $0x1a48] sm:$0xff]
    %v1096 = vld [vmem:[#allocation2 + $0x1a50] sm:$0xff]
    %v1097 = vld [vmem:[#allocation2 + $0x1a58] sm:$0xff]
    %v1098 = vld [vmem:[#allocation2 + $0x1a60] sm:$0xff]
    %v1099 = vld [vmem:[#allocation2 + $0x1a68] sm:$0xff]
    %v1100 = vld [vmem:[#allocation2 + $0x1a70] sm:$0xff]
    %v1101 = vld [vmem:[#allocation2 + $0x1a78] sm:$0xff]
    %v1102 = vld [vmem:[#allocation2 + $0x1a80] sm:$0xff]
    %v1103 = vld [vmem:[#allocation2 + $0x1a88] sm:$0xff]
    %v1104 = vld [vmem:[#allocation2 + $0x1a90] sm:$0xff]
    %v1105 = vld [vmem:[#allocation2 + $0x1a98] sm:$0xff]
    %v1106 = vld [vmem:[#allocation2 + $0x1aa0] sm:$0xff]
    %v1107 = vld [vmem:[#allocation2 + $0x1aa8] sm:$0xff]
    %v1108 = vld [vmem:[#allocation2 + $0x1ab0] sm:$0xff]
    %v1109 = vld [vmem:[#allocation2 + $0x1ab8] sm:$0xff]
    %v1110 = vld [vmem:[#allocation2 + $0x1ac0] sm:$0xff]
    %v1111 = vld [vmem:[#allocation2 + $0x1ac8] sm:$0xff]
    %v1112 = vld [vmem:[#allocation2 + $0x1ad0] sm:$0xff]
    %v1113 = vld [vmem:[#allocation2 + $0x1ad8] sm:$0xff]
    %v1114 = vld [vmem:[#allocation2 + $0x1ae0] sm:$0xff]
    %v1115 = vld [vmem:[#allocation2 + $0x1ae8] sm:$0xff]
    %v1116 = vld [vmem:[#allocation2 + $0x1af0] sm:$0xff]
    %v1117 = vld [vmem:[#allocation2 + $0x1af8] sm:$0xff]
    %v1118 = vld [vmem:[#allocation2 + $0x1b00] sm:$0xff]
    %v1119 = vld [vmem:[#allocation2 + $0x1b08] sm:$0xff]
    %v1120 = vld [vmem:[#allocation2 + $0x1b10] sm:$0xff]
    %v1121 = vld [vmem:[#allocation2 + $0x1b18] sm:$0xff]
    %v1122 = vld [vmem:[#allocation2 + $0x1b20] sm:$0xff]
    %v1123 = vld [vmem:[#allocation2 + $0x1b28] sm:$0xff]
    %v1124 = vld [vmem:[#allocation2 + $0x1b30] sm:$0xff]
    %v1125 = vld [vmem:[#allocation2 + $0x1b38] sm:$0xff]
    %v1126 = vld [vmem:[#allocation2 + $0x1b40] sm:$0xff]
    %v1127 = vld [vmem:[#allocation2 + $0x1b48] sm:$0xff]
    %v1128 = vld [vmem:[#allocation2 + $0x1b50] sm:$0xff]
    %v1129 = vld [vmem:[#allocation2 + $0x1b58] sm:$0xff]
    %v1130 = vld [vmem:[#allocation2 + $0x1b60] sm:$0xff]
    %v1131 = vld [vmem:[#allocation2 + $0x1b68] sm:$0xff]
    %v1132 = vld [vmem:[#allocation2 + $0x1b70] sm:$0xff]
    %v1133 = vld [vmem:[#allocation2 + $0x1b78] sm:$0xff]
    %v1134 = vld [vmem:[#allocation2 + $0x1b80] sm:$0xff]
    %v1135 = vld [vmem:[#allocation2 + $0x1b88] sm:$0xff]
    %v1136 = vld [vmem:[#allocation2 + $0x1b90] sm:$0xff]
    %v1137 = vld [vmem:[#allocation2 + $0x1b98] sm:$0xff]
    %v1138 = vld [vmem:[#allocation2 + $0x1ba0] sm:$0xff]
    %v1139 = vld [vmem:[#allocation2 + $0x1ba8] sm:$0xff]
    %v1140 = vld [vmem:[#allocation2 + $0x1bb0] sm:$0xff]
    %v1141 = vld [vmem:[#allocation2 + $0x1bb8] sm:$0xff]
    %v1142 = vld [vmem:[#allocation2 + $0x1bc0] sm:$0xff]
    %v1143 = vld [vmem:[#allocation2 + $0x1bc8] sm:$0xff]
    %v1144 = vld [vmem:[#allocation2 + $0x1bd0] sm:$0xff]
    %v1145 = vld [vmem:[#allocation2 + $0x1bd8] sm:$0xff]
    %v1146 = vld [vmem:[#allocation2 + $0x1be0] sm:$0xff]
    %v1147 = vld [vmem:[#allocation2 + $0x1be8] sm:$0xff]
    %v1148 = vld [vmem:[#allocation2 + $0x1bf0] sm:$0xff]
    %v1149 = vld [vmem:[#allocation2 + $0x1bf8] sm:$0xff]
    %v1150 = vld [vmem:[#allocation2 + $0x1c00] sm:$0xff]
    %v1151 = vld [vmem:[#allocation2 + $0x1c08] sm:$0xff]
    %v1152 = vld [vmem:[#allocation2 + $0x1c10] sm:$0xff]
    %v1153 = vld [vmem:[#allocation2 + $0x1c18] sm:$0xff]
    %v1154 = vld [vmem:[#allocation2 + $0x1c20] sm:$0xff]
    %v1155 = vld [vmem:[#allocation2 + $0x1c28] sm:$0xff]
    %v1156 = vld [vmem:[#allocation2 + $0x1c30] sm:$0xff]
    %v1157 = vld [vmem:[#allocation2 + $0x1c38] sm:$0xff]
    %v1158 = vld [vmem:[#allocation2 + $0x1c40] sm:$0xff]
    %v1159 = vld [vmem:[#allocation2 + $0x1c48] sm:$0xff]
    %v1160 = vld [vmem:[#allocation2 + $0x1c50] sm:$0xff]
    %v1161 = vld [vmem:[#allocation2 + $0x1c58] sm:$0xff]
    %v1162 = vld [vmem:[#allocation2 + $0x1c60] sm:$0xff]
    %v1163 = vld [vmem:[#allocation2 + $0x1c68] sm:$0xff]
    %v1164 = vld [vmem:[#allocation2 + $0x1c70] sm:$0xff]
    %v1165 = vld [vmem:[#allocation2 + $0x1c78] sm:$0xff]
    %v1166 = vld [vmem:[#allocation2 + $0x1c80] sm:$0xff]
    %v1167 = vld [vmem:[#allocation2 + $0x1c88] sm:$0xff]
    %v1168 = vld [vmem:[#allocation2 + $0x1c90] sm:$0xff]
    %v1169 = vld [vmem:[#allocation2 + $0x1c98] sm:$0xff]
    %v1170 = vld [vmem:[#allocation2 + $0x1ca0] sm:$0xff]
    %v1171 = vld [vmem:[#allocation2 + $0x1ca8] sm:$0xff]
    %v1172 = vld [vmem:[#allocation2 + $0x1cb0] sm:$0xff]
    %v1173 = vld [vmem:[#allocation2 + $0x1cb8] sm:$0xff]
    %v1174 = vld [vmem:[#allocation2 + $0x1cc0] sm:$0xff]
    %v1175 = vld [vmem:[#allocation2 + $0x1cc8] sm:$0xff]
    %v1176 = vld [vmem:[#allocation2 + $0x1cd0] sm:$0xff]
    %v1177 = vld [vmem:[#allocation2 + $0x1cd8] sm:$0xff]
    %v1178 = vld [vmem:[#allocation2 + $0x1ce0] sm:$0xff]
    %v1179 = vld [vmem:[#allocation2 + $0x1ce8] sm:$0xff]
    %v1180 = vld [vmem:[#allocation2 + $0x1cf0] sm:$0xff]
    %v1181 = vld [vmem:[#allocation2 + $0x1cf8] sm:$0xff]
    %v1182 = vld [vmem:[#allocation2 + $0x1d00] sm:$0xff]
    %v1183 = vld [vmem:[#allocation2 + $0x1d08] sm:$0xff]
    %v1184 = vld [vmem:[#allocation2 + $0x1d10] sm:$0xff]
    %v1185 = vld [vmem:[#allocation2 + $0x1d18] sm:$0xff]
    %v1186 = vld [vmem:[#allocation2 + $0x1d20] sm:$0xff]
    %v1187 = vld [vmem:[#allocation2 + $0x1d28] sm:$0xff]
    %v1188 = vld [vmem:[#allocation2 + $0x1d30] sm:$0xff]
    %v1189 = vld [vmem:[#allocation2 + $0x1d38] sm:$0xff]
    %v1190 = vld [vmem:[#allocation2 + $0x1d40] sm:$0xff]
    %v1191 = vld [vmem:[#allocation2 + $0x1d48] sm:$0xff]
    %v1192 = vld [vmem:[#allocation2 + $0x1d50] sm:$0xff]
    %v1193 = vld [vmem:[#allocation2 + $0x1d58] sm:$0xff]
    %v1194 = vld [vmem:[#allocation2 + $0x1d60] sm:$0xff]
    %v1195 = vld [vmem:[#allocation2 + $0x1d68] sm:$0xff]
    %v1196 = vld [vmem:[#allocation2 + $0x1d70] sm:$0xff]
    %v1197 = vld [vmem:[#allocation2 + $0x1d78] sm:$0xff]
    %v1198 = vld [vmem:[#allocation2 + $0x1d80] sm:$0xff]
    %v1199 = vld [vmem:[#allocation2 + $0x1d88] sm:$0xff]
    %v1200 = vld [vmem:[#allocation2 + $0x1d90] sm:$0xff]
    %v1201 = vld [vmem:[#allocation2 + $0x1d98] sm:$0xff]
    %v1202 = vld [vmem:[#allocation2 + $0x1da0] sm:$0xff]
    %v1203 = vld [vmem:[#allocation2 + $0x1da8] sm:$0xff]
    %v1204 = vld [vmem:[#allocation2 + $0x1db0] sm:$0xff]
    %v1205 = vld [vmem:[#allocation2 + $0x1db8] sm:$0xff]
    %v1206 = vld [vmem:[#allocation2 + $0x1dc0] sm:$0xff]
    %v1207 = vld [vmem:[#allocation2 + $0x1dc8] sm:$0xff]
    %v1208 = vld [vmem:[#allocation2 + $0x1dd0] sm:$0xff]
    %v1209 = vld [vmem:[#allocation2 + $0x1dd8] sm:$0xff]
    %v1210 = vld [vmem:[#allocation2 + $0x1de0] sm:$0xff]
    %v1211 = vld [vmem:[#allocation2 + $0x1de8] sm:$0xff]
    %v1212 = vld [vmem:[#allocation2 + $0x1df0] sm:$0xff]
    %v1213 = vld [vmem:[#allocation2 + $0x1df8] sm:$0xff]
    %v1214 = vld [vmem:[#allocation2 + $0x1e00] sm:$0xff]
    %v1215 = vld [vmem:[#allocation2 + $0x1e08] sm:$0xff]
    %v1216 = vld [vmem:[#allocation2 + $0x1e10] sm:$0xff]
    %v1217 = vld [vmem:[#allocation2 + $0x1e18] sm:$0xff]
    %v1218 = vld [vmem:[#allocation2 + $0x1e20] sm:$0xff]
    %v1219 = vld [vmem:[#allocation2 + $0x1e28] sm:$0xff]
    %v1220 = vld [vmem:[#allocation2 + $0x1e30] sm:$0xff]
    %v1221 = vld [vmem:[#allocation2 + $0x1e38] sm:$0xff]
    %v1222 = vld [vmem:[#allocation2 + $0x1e40] sm:$0xff]
    %v1223 = vld [vmem:[#allocation2 + $0x1e48] sm:$0xff]
    %v1224 = vld [vmem:[#allocation2 + $0x1e50] sm:$0xff]
    %v1225 = vld [vmem:[#allocation2 + $0x1e58] sm:$0xff]
    %v1226 = vld [vmem:[#allocation2 + $0x1e60] sm:$0xff]
    %v1227 = vld [vmem:[#allocation2 + $0x1e68] sm:$0xff]
    %v1228 = vld [vmem:[#allocation2 + $0x1e70] sm:$0xff]
    %v1229 = vld [vmem:[#allocation2 + $0x1e78] sm:$0xff]
    %v1230 = vld [vmem:[#allocation2 + $0x1e80] sm:$0xff]
    %v1231 = vld [vmem:[#allocation2 + $0x1e88] sm:$0xff]
    %v1232 = vld [vmem:[#allocation2 + $0x1e90] sm:$0xff]
    %v1233 = vld [vmem:[#allocation2 + $0x1e98] sm:$0xff]
    %v1234 = vld [vmem:[#allocation2 + $0x1ea0] sm:$0xff]
    %v1235 = vld [vmem:[#allocation2 + $0x1ea8] sm:$0xff]
    %v1236 = vld [vmem:[#allocation2 + $0x1eb0] sm:$0xff]
    %v1237 = vld [vmem:[#allocation2 + $0x1eb8] sm:$0xff]
    %v1238 = vld [vmem:[#allocation2 + $0x1ec0] sm:$0xff]
    %v1239 = vld [vmem:[#allocation2 + $0x1ec8] sm:$0xff]
    %v1240 = vld [vmem:[#allocation2 + $0x1ed0] sm:$0xff]
    %v1241 = vld [vmem:[#allocation2 + $0x1ed8] sm:$0xff]
    %v1242 = vld [vmem:[#allocation2 + $0x1ee0] sm:$0xff]
    %v1243 = vld [vmem:[#allocation2 + $0x1ee8] sm:$0xff]
    %v1244 = vld [vmem:[#allocation2 + $0x1ef0] sm:$0xff]
    %v1245 = vld [vmem:[#allocation2 + $0x1ef8] sm:$0xff]
    %v1246 = vld [vmem:[#allocation2 + $0x1f00] sm:$0xff]
    %v1247 = vld [vmem:[#allocation2 + $0x1f08] sm:$0xff]
    %v1248 = vld [vmem:[#allocation2 + $0x1f10] sm:$0xff]
    %v1249 = vld [vmem:[#allocation2 + $0x1f18] sm:$0xff]
    %v1250 = vld [vmem:[#allocation2 + $0x1f20] sm:$0xff]
    %v1251 = vld [vmem:[#allocation2 + $0x1f28] sm:$0xff]
    %v1252 = vld [vmem:[#allocation2 + $0x1f30] sm:$0xff]
    %v1253 = vld [vmem:[#allocation2 + $0x1f38] sm:$0xff]
    %v1254 = vld [vmem:[#allocation2 + $0x1f40] sm:$0xff]
    %v1255 = vld [vmem:[#allocation2 + $0x1f48] sm:$0xff]
    %v1256 = vld [vmem:[#allocation2 + $0x1f50] sm:$0xff]
    %v1257 = vld [vmem:[#allocation2 + $0x1f58] sm:$0xff]
    %v1258 = vld [vmem:[#allocation2 + $0x1f60] sm:$0xff]
    %v1259 = vld [vmem:[#allocation2 + $0x1f68] sm:$0xff]
    %v1260 = vld [vmem:[#allocation2 + $0x1f70] sm:$0xff]
    %v1261 = vld [vmem:[#allocation2 + $0x1f78] sm:$0xff]
    %v1262 = vld [vmem:[#allocation2 + $0x1f80] sm:$0xff]
    %v1263 = vld [vmem:[#allocation2 + $0x1f88] sm:$0xff]
    %v1264 = vld [vmem:[#allocation2 + $0x1f90] sm:$0xff]
    %v1265 = vld [vmem:[#allocation2 + $0x1f98] sm:$0xff]
    %v1266 = vld [vmem:[#allocation2 + $0x1fa0] sm:$0xff]
    %v1267 = vld [vmem:[#allocation2 + $0x1fa8] sm:$0xff]
    %v1268 = vld [vmem:[#allocation2 + $0x1fb0] sm:$0xff]
    %v1269 = vld [vmem:[#allocation2 + $0x1fb8] sm:$0xff]
    %v1270 = vld [vmem:[#allocation2 + $0x1fc0] sm:$0xff]
    %v1271 = vld [vmem:[#allocation2 + $0x1fc8] sm:$0xff]
    %v1272 = vld [vmem:[#allocation2 + $0x1fd0] sm:$0xff]
    %v1273 = vld [vmem:[#allocation2 + $0x1fd8] sm:$0xff]
    %v1274 = vld [vmem:[#allocation2 + $0x1fe0] sm:$0xff]
    %v1275 = vld [vmem:[#allocation2 + $0x1fe8] sm:$0xff]
    %v1276 = vld [vmem:[#allocation2 + $0x1ff0] sm:$0xff]
    %v1277 = vld [vmem:[#allocation2 + $0x1ff8] sm:$0xff]
    %v2302 = vunpack.c.l.b16 %v254
    %v2303 = vunpack.c.h.b16 %v254
    %v2304 = vunpack.c.l.b16 %v255
    %v2305 = vunpack.c.h.b16 %v255
    %v2306 = vunpack.c.l.b16 %v256
    %v2307 = vunpack.c.h.b16 %v256
    %v2308 = vunpack.c.l.b16 %v257
    %v2309 = vunpack.c.h.b16 %v257
    %v2310 = vunpack.c.l.b16 %v258
    %v2311 = vunpack.c.h.b16 %v258
    %v2312 = vunpack.c.l.b16 %v259
    %v2313 = vunpack.c.h.b16 %v259
    %v2314 = vunpack.c.l.b16 %v260
    %v2315 = vunpack.c.h.b16 %v260
    %v2316 = vunpack.c.l.b16 %v261
    %v2317 = vunpack.c.h.b16 %v261
    %v2318 = vunpack.c.l.b16 %v262
    %v2319 = vunpack.c.h.b16 %v262
    %v2320 = vunpack.c.l.b16 %v263
    %v2321 = vunpack.c.h.b16 %v263
    %v2322 = vunpack.c.l.b16 %v264
    %v2323 = vunpack.c.h.b16 %v264
    %v2324 = vunpack.c.l.b16 %v265
    %v2325 = vunpack.c.h.b16 %v265
    %v2326 = vunpack.c.l.b16 %v266
    %v2327 = vunpack.c.h.b16 %v266
    %v2328 = vunpack.c.l.b16 %v267
    %v2329 = vunpack.c.h.b16 %v267
    %v2330 = vunpack.c.l.b16 %v268
    %v2331 = vunpack.c.h.b16 %v268
    %v2332 = vunpack.c.l.b16 %v269
    %v2333 = vunpack.c.h.b16 %v269
    %v2334 = vunpack.c.l.b16 %v270
    %v2335 = vunpack.c.h.b16 %v270
    %v2336 = vunpack.c.l.b16 %v271
    %v2337 = vunpack.c.h.b16 %v271
    %v2338 = vunpack.c.l.b16 %v272
    %v2339 = vunpack.c.h.b16 %v272
    %v2340 = vunpack.c.l.b16 %v273
    %v2341 = vunpack.c.h.b16 %v273
    %v2342 = vunpack.c.l.b16 %v274
    %v2343 = vunpack.c.h.b16 %v274
    %v2344 = vunpack.c.l.b16 %v275
    %v2345 = vunpack.c.h.b16 %v275
    %v2346 = vunpack.c.l.b16 %v276
    %v2347 = vunpack.c.h.b16 %v276
    %v2348 = vunpack.c.l.b16 %v277
    %v2349 = vunpack.c.h.b16 %v277
    %v2350 = vunpack.c.l.b16 %v278
    %v2351 = vunpack.c.h.b16 %v278
    %v2352 = vunpack.c.l.b16 %v279
    %v2353 = vunpack.c.h.b16 %v279
    %v2354 = vunpack.c.l.b16 %v280
    %v2355 = vunpack.c.h.b16 %v280
    %v2356 = vunpack.c.l.b16 %v281
    %v2357 = vunpack.c.h.b16 %v281
    %v2358 = vunpack.c.l.b16 %v282
    %v2359 = vunpack.c.h.b16 %v282
    %v2360 = vunpack.c.l.b16 %v283
    %v2361 = vunpack.c.h.b16 %v283
    %v2362 = vunpack.c.l.b16 %v284
    %v2363 = vunpack.c.h.b16 %v284
    %v2364 = vunpack.c.l.b16 %v285
    %v2365 = vunpack.c.h.b16 %v285
    %v2366 = vunpack.c.l.b16 %v286
    %v2367 = vunpack.c.h.b16 %v286
    %v2368 = vunpack.c.l.b16 %v287
    %v2369 = vunpack.c.h.b16 %v287
    %v2370 = vunpack.c.l.b16 %v288
    %v2371 = vunpack.c.h.b16 %v288
    %v2372 = vunpack.c.l.b16 %v289
    %v2373 = vunpack.c.h.b16 %v289
    %v2374 = vunpack.c.l.b16 %v290
    %v2375 = vunpack.c.h.b16 %v290
    %v2376 = vunpack.c.l.b16 %v291
    %v2377 = vunpack.c.h.b16 %v291
    %v2378 = vunpack.c.l.b16 %v292
    %v2379 = vunpack.c.h.b16 %v292
    %v2380 = vunpack.c.l.b16 %v293
    %v2381 = vunpack.c.h.b16 %v293
    %v2382 = vunpack.c.l.b16 %v294
    %v2383 = vunpack.c.h.b16 %v294
    %v2384 = vunpack.c.l.b16 %v295
    %v2385 = vunpack.c.h.b16 %v295
    %v2386 = vunpack.c.l.b16 %v296
    %v2387 = vunpack.c.h.b16 %v296
    %v2388 = vunpack.c.l.b16 %v297
    %v2389 = vunpack.c.h.b16 %v297
    %v2390 = vunpack.c.l.b16 %v298
    %v2391 = vunpack.c.h.b16 %v298
    %v2392 = vunpack.c.l.b16 %v299
    %v2393 = vunpack.c.h.b16 %v299
    %v2394 = vunpack.c.l.b16 %v300
    %v2395 = vunpack.c.h.b16 %v300
    %v2396 = vunpack.c.l.b16 %v301
    %v2397 = vunpack.c.h.b16 %v301
    %v2398 = vunpack.c.l.b16 %v302
    %v2399 = vunpack.c.h.b16 %v302
    %v2400 = vunpack.c.l.b16 %v303
    %v2401 = vunpack.c.h.b16 %v303
    %v2402 = vunpack.c.l.b16 %v304
    %v2403 = vunpack.c.h.b16 %v304
    %v2404 = vunpack.c.l.b16 %v305
    %v2405 = vunpack.c.h.b16 %v305
    %v2406 = vunpack.c.l.b16 %v306
    %v2407 = vunpack.c.h.b16 %v306
    %v2408 = vunpack.c.l.b16 %v307
    %v2409 = vunpack.c.h.b16 %v307
    %v2410 = vunpack.c.l.b16 %v308
    %v2411 = vunpack.c.h.b16 %v308
    %v2412 = vunpack.c.l.b16 %v309
    %v2413 = vunpack.c.h.b16 %v309
    %v2414 = vunpack.c.l.b16 %v310
    %v2415 = vunpack.c.h.b16 %v310
    %v2416 = vunpack.c.l.b16 %v311
    %v2417 = vunpack.c.h.b16 %v311
    %v2418 = vunpack.c.l.b16 %v312
    %v2419 = vunpack.c.h.b16 %v312
    %v2420 = vunpack.c.l.b16 %v313
    %v2421 = vunpack.c.h.b16 %v313
    %v2422 = vunpack.c.l.b16 %v314
    %v2423 = vunpack.c.h.b16 %v314
    %v2424 = vunpack.c.l.b16 %v315
    %v2425 = vunpack.c.h.b16 %v315
    %v2426 = vunpack.c.l.b16 %v316
    %v2427 = vunpack.c.h.b16 %v316
    %v2428 = vunpack.c.l.b16 %v317
    %v2429 = vunpack.c.h.b16 %v317
    %v2430 = vunpack.c.l.b16 %v318
    %v2431 = vunpack.c.h.b16 %v318
    %v2432 = vunpack.c.l.b16 %v319
    %v2433 = vunpack.c.h.b16 %v319
    %v2434 = vunpack.c.l.b16 %v320
    %v2435 = vunpack.c.h.b16 %v320
    %v2436 = vunpack.c.l.b16 %v321
    %v2437 = vunpack.c.h.b16 %v321
    %v2438 = vunpack.c.l.b16 %v322
    %v2439 = vunpack.c.h.b16 %v322
    %v2440 = vunpack.c.l.b16 %v323
    %v2441 = vunpack.c.h.b16 %v323
    %v2442 = vunpack.c.l.b16 %v324
    %v2443 = vunpack.c.h.b16 %v324
    %v2444 = vunpack.c.l.b16 %v325
    %v2445 = vunpack.c.h.b16 %v325
    %v2446 = vunpack.c.l.b16 %v326
    %v2447 = vunpack.c.h.b16 %v326
    %v2448 = vunpack.c.l.b16 %v327
    %v2449 = vunpack.c.h.b16 %v327
    %v2450 = vunpack.c.l.b16 %v328
    %v2451 = vunpack.c.h.b16 %v328
    %v2452 = vunpack.c.l.b16 %v329
    %v2453 = vunpack.c.h.b16 %v329
    %v2454 = vunpack.c.l.b16 %v330
    %v2455 = vunpack.c.h.b16 %v330
    %v2456 = vunpack.c.l.b16 %v331
    %v2457 = vunpack.c.h.b16 %v331
    %v2458 = vunpack.c.l.b16 %v332
    %v2459 = vunpack.c.h.b16 %v332
    %v2460 = vunpack.c.l.b16 %v333
    %v2461 = vunpack.c.h.b16 %v333
    %v2462 = vunpack.c.l.b16 %v334
    %v2463 = vunpack.c.h.b16 %v334
    %v2464 = vunpack.c.l.b16 %v335
    %v2465 = vunpack.c.h.b16 %v335
    %v2466 = vunpack.c.l.b16 %v336
    %v2467 = vunpack.c.h.b16 %v336
    %v2468 = vunpack.c.l.b16 %v337
    %v2469 = vunpack.c.h.b16 %v337
    %v2470 = vunpack.c.l.b16 %v338
    %v2471 = vunpack.c.h.b16 %v338
    %v2472 = vunpack.c.l.b16 %v339
    %v2473 = vunpack.c.h.b16 %v339
    %v2474 = vunpack.c.l.b16 %v340
    %v2475 = vunpack.c.h.b16 %v340
    %v2476 = vunpack.c.l.b16 %v341
    %v2477 = vunpack.c.h.b16 %v341
    %v2478 = vunpack.c.l.b16 %v342
    %v2479 = vunpack.c.h.b16 %v342
    %v2480 = vunpack.c.l.b16 %v343
    %v2481 = vunpack.c.h.b16 %v343
    %v2482 = vunpack.c.l.b16 %v344
    %v2483 = vunpack.c.h.b16 %v344
    %v2484 = vunpack.c.l.b16 %v345
    %v2485 = vunpack.c.h.b16 %v345
    %v2486 = vunpack.c.l.b16 %v346
    %v2487 = vunpack.c.h.b16 %v346
    %v2488 = vunpack.c.l.b16 %v347
    %v2489 = vunpack.c.h.b16 %v347
    %v2490 = vunpack.c.l.b16 %v348
    %v2491 = vunpack.c.h.b16 %v348
    %v2492 = vunpack.c.l.b16 %v349
    %v2493 = vunpack.c.h.b16 %v349
    %v2494 = vunpack.c.l.b16 %v350
    %v2495 = vunpack.c.h.b16 %v350
    %v2496 = vunpack.c.l.b16 %v351
    %v2497 = vunpack.c.h.b16 %v351
    %v2498 = vunpack.c.l.b16 %v352
    %v2499 = vunpack.c.h.b16 %v352
    %v2500 = vunpack.c.l.b16 %v353
    %v2501 = vunpack.c.h.b16 %v353
    %v2502 = vunpack.c.l.b16 %v354
    %v2503 = vunpack.c.h.b16 %v354
    %v2504 = vunpack.c.l.b16 %v355
    %v2505 = vunpack.c.h.b16 %v355
    %v2506 = vunpack.c.l.b16 %v356
    %v2507 = vunpack.c.h.b16 %v356
    %v2508 = vunpack.c.l.b16 %v357
    %v2509 = vunpack.c.h.b16 %v357
    %v2510 = vunpack.c.l.b16 %v358
    %v2511 = vunpack.c.h.b16 %v358
    %v2512 = vunpack.c.l.b16 %v359
    %v2513 = vunpack.c.h.b16 %v359
    %v2514 = vunpack.c.l.b16 %v360
    %v2515 = vunpack.c.h.b16 %v360
    %v2516 = vunpack.c.l.b16 %v361
    %v2517 = vunpack.c.h.b16 %v361
    %v2518 = vunpack.c.l.b16 %v362
    %v2519 = vunpack.c.h.b16 %v362
    %v2520 = vunpack.c.l.b16 %v363
    %v2521 = vunpack.c.h.b16 %v363
    %v2522 = vunpack.c.l.b16 %v364
    %v2523 = vunpack.c.h.b16 %v364
    %v2524 = vunpack.c.l.b16 %v365
    %v2525 = vunpack.c.h.b16 %v365
    %v2526 = vunpack.c.l.b16 %v366
    %v2527 = vunpack.c.h.b16 %v366
    %v2528 = vunpack.c.l.b16 %v367
    %v2529 = vunpack.c.h.b16 %v367
    %v2530 = vunpack.c.l.b16 %v368
    %v2531 = vunpack.c.h.b16 %v368
    %v2532 = vunpack.c.l.b16 %v369
    %v2533 = vunpack.c.h.b16 %v369
    %v2534 = vunpack.c.l.b16 %v370
    %v2535 = vunpack.c.h.b16 %v370
    %v2536 = vunpack.c.l.b16 %v371
    %v2537 = vunpack.c.h.b16 %v371
    %v2538 = vunpack.c.l.b16 %v372
    %v2539 = vunpack.c.h.b16 %v372
    %v2540 = vunpack.c.l.b16 %v373
    %v2541 = vunpack.c.h.b16 %v373
    %v2542 = vunpack.c.l.b16 %v374
    %v2543 = vunpack.c.h.b16 %v374
    %v2544 = vunpack.c.l.b16 %v375
    %v2545 = vunpack.c.h.b16 %v375
    %v2546 = vunpack.c.l.b16 %v376
    %v2547 = vunpack.c.h.b16 %v376
    %v2548 = vunpack.c.l.b16 %v377
    %v2549 = vunpack.c.h.b16 %v377
    %v2550 = vunpack.c.l.b16 %v378
    %v2551 = vunpack.c.h.b16 %v378
    %v2552 = vunpack.c.l.b16 %v379
    %v2553 = vunpack.c.h.b16 %v379
    %v2554 = vunpack.c.l.b16 %v380
    %v2555 = vunpack.c.h.b16 %v380
    %v2556 = vunpack.c.l.b16 %v381
    %v2557 = vunpack.c.h.b16 %v381
    %v2558 = vunpack.c.l.b16 %v382
    %v2559 = vunpack.c.h.b16 %v382
    %v2560 = vunpack.c.l.b16 %v383
    %v2561 = vunpack.c.h.b16 %v383
    %v2562 = vunpack.c.l.b16 %v384
    %v2563 = vunpack.c.h.b16 %v384
    %v2564 = vunpack.c.l.b16 %v385
    %v2565 = vunpack.c.h.b16 %v385
    %v2566 = vunpack.c.l.b16 %v386
    %v2567 = vunpack.c.h.b16 %v386
    %v2568 = vunpack.c.l.b16 %v387
    %v2569 = vunpack.c.h.b16 %v387
    %v2570 = vunpack.c.l.b16 %v388
    %v2571 = vunpack.c.h.b16 %v388
    %v2572 = vunpack.c.l.b16 %v389
    %v2573 = vunpack.c.h.b16 %v389
    %v2574 = vunpack.c.l.b16 %v390
    %v2575 = vunpack.c.h.b16 %v390
    %v2576 = vunpack.c.l.b16 %v391
    %v2577 = vunpack.c.h.b16 %v391
    %v2578 = vunpack.c.l.b16 %v392
    %v2579 = vunpack.c.h.b16 %v392
    %v2580 = vunpack.c.l.b16 %v393
    %v2581 = vunpack.c.h.b16 %v393
    %v2582 = vunpack.c.l.b16 %v394
    %v2583 = vunpack.c.h.b16 %v394
    %v2584 = vunpack.c.l.b16 %v395
    %v2585 = vunpack.c.h.b16 %v395
    %v2586 = vunpack.c.l.b16 %v396
    %v2587 = vunpack.c.h.b16 %v396
    %v2588 = vunpack.c.l.b16 %v397
    %v2589 = vunpack.c.h.b16 %v397
    %v2590 = vunpack.c.l.b16 %v398
    %v2591 = vunpack.c.h.b16 %v398
    %v2592 = vunpack.c.l.b16 %v399
    %v2593 = vunpack.c.h.b16 %v399
    %v2594 = vunpack.c.l.b16 %v400
    %v2595 = vunpack.c.h.b16 %v400
    %v2596 = vunpack.c.l.b16 %v401
    %v2597 = vunpack.c.h.b16 %v401
    %v2598 = vunpack.c.l.b16 %v402
    %v2599 = vunpack.c.h.b16 %v402
    %v2600 = vunpack.c.l.b16 %v403
    %v2601 = vunpack.c.h.b16 %v403
    %v2602 = vunpack.c.l.b16 %v404
    %v2603 = vunpack.c.h.b16 %v404
    %v2604 = vunpack.c.l.b16 %v405
    %v2605 = vunpack.c.h.b16 %v405
    %v2606 = vunpack.c.l.b16 %v406
    %v2607 = vunpack.c.h.b16 %v406
    %v2608 = vunpack.c.l.b16 %v407
    %v2609 = vunpack.c.h.b16 %v407
    %v2610 = vunpack.c.l.b16 %v408
    %v2611 = vunpack.c.h.b16 %v408
    %v2612 = vunpack.c.l.b16 %v409
    %v2613 = vunpack.c.h.b16 %v409
    %v2614 = vunpack.c.l.b16 %v410
    %v2615 = vunpack.c.h.b16 %v410
    %v2616 = vunpack.c.l.b16 %v411
    %v2617 = vunpack.c.h.b16 %v411
    %v2618 = vunpack.c.l.b16 %v412
    %v2619 = vunpack.c.h.b16 %v412
    %v2620 = vunpack.c.l.b16 %v413
    %v2621 = vunpack.c.h.b16 %v413
    %v2622 = vunpack.c.l.b16 %v414
    %v2623 = vunpack.c.h.b16 %v414
    %v2624 = vunpack.c.l.b16 %v415
    %v2625 = vunpack.c.h.b16 %v415
    %v2626 = vunpack.c.l.b16 %v416
    %v2627 = vunpack.c.h.b16 %v416
    %v2628 = vunpack.c.l.b16 %v417
    %v2629 = vunpack.c.h.b16 %v417
    %v2630 = vunpack.c.l.b16 %v418
    %v2631 = vunpack.c.h.b16 %v418
    %v2632 = vunpack.c.l.b16 %v419
    %v2633 = vunpack.c.h.b16 %v419
    %v2634 = vunpack.c.l.b16 %v420
    %v2635 = vunpack.c.h.b16 %v420
    %v2636 = vunpack.c.l.b16 %v421
    %v2637 = vunpack.c.h.b16 %v421
    %v2638 = vunpack.c.l.b16 %v422
    %v2639 = vunpack.c.h.b16 %v422
    %v2640 = vunpack.c.l.b16 %v423
    %v2641 = vunpack.c.h.b16 %v423
    %v2642 = vunpack.c.l.b16 %v424
    %v2643 = vunpack.c.h.b16 %v424
    %v2644 = vunpack.c.l.b16 %v425
    %v2645 = vunpack.c.h.b16 %v425
    %v2646 = vunpack.c.l.b16 %v426
    %v2647 = vunpack.c.h.b16 %v426
    %v2648 = vunpack.c.l.b16 %v427
    %v2649 = vunpack.c.h.b16 %v427
    %v2650 = vunpack.c.l.b16 %v428
    %v2651 = vunpack.c.h.b16 %v428
    %v2652 = vunpack.c.l.b16 %v429
    %v2653 = vunpack.c.h.b16 %v429
    %v2654 = vunpack.c.l.b16 %v430
    %v2655 = vunpack.c.h.b16 %v430
    %v2656 = vunpack.c.l.b16 %v431
    %v2657 = vunpack.c.h.b16 %v431
    %v2658 = vunpack.c.l.b16 %v432
    %v2659 = vunpack.c.h.b16 %v432
    %v2660 = vunpack.c.l.b16 %v433
    %v2661 = vunpack.c.h.b16 %v433
    %v2662 = vunpack.c.l.b16 %v434
    %v2663 = vunpack.c.h.b16 %v434
    %v2664 = vunpack.c.l.b16 %v435
    %v2665 = vunpack.c.h.b16 %v435
    %v2666 = vunpack.c.l.b16 %v436
    %v2667 = vunpack.c.h.b16 %v436
    %v2668 = vunpack.c.l.b16 %v437
    %v2669 = vunpack.c.h.b16 %v437
    %v2670 = vunpack.c.l.b16 %v438
    %v2671 = vunpack.c.h.b16 %v438
    %v2672 = vunpack.c.l.b16 %v439
    %v2673 = vunpack.c.h.b16 %v439
    %v2674 = vunpack.c.l.b16 %v440
    %v2675 = vunpack.c.h.b16 %v440
    %v2676 = vunpack.c.l.b16 %v441
    %v2677 = vunpack.c.h.b16 %v441
    %v2678 = vunpack.c.l.b16 %v442
    %v2679 = vunpack.c.h.b16 %v442
    %v2680 = vunpack.c.l.b16 %v443
    %v2681 = vunpack.c.h.b16 %v443
    %v2682 = vunpack.c.l.b16 %v444
    %v2683 = vunpack.c.h.b16 %v444
    %v2684 = vunpack.c.l.b16 %v445
    %v2685 = vunpack.c.h.b16 %v445
    %v2686 = vunpack.c.l.b16 %v446
    %v2687 = vunpack.c.h.b16 %v446
    %v2688 = vunpack.c.l.b16 %v447
    %v2689 = vunpack.c.h.b16 %v447
    %v2690 = vunpack.c.l.b16 %v448
    %v2691 = vunpack.c.h.b16 %v448
    %v2692 = vunpack.c.l.b16 %v449
    %v2693 = vunpack.c.h.b16 %v449
    %v2694 = vunpack.c.l.b16 %v450
    %v2695 = vunpack.c.h.b16 %v450
    %v2696 = vunpack.c.l.b16 %v451
    %v2697 = vunpack.c.h.b16 %v451
    %v2698 = vunpack.c.l.b16 %v452
    %v2699 = vunpack.c.h.b16 %v452
    %v2700 = vunpack.c.l.b16 %v453
    %v2701 = vunpack.c.h.b16 %v453
    %v2702 = vunpack.c.l.b16 %v454
    %v2703 = vunpack.c.h.b16 %v454
    %v2704 = vunpack.c.l.b16 %v455
    %v2705 = vunpack.c.h.b16 %v455
    %v2706 = vunpack.c.l.b16 %v456
    %v2707 = vunpack.c.h.b16 %v456
    %v2708 = vunpack.c.l.b16 %v457
    %v2709 = vunpack.c.h.b16 %v457
    %v2710 = vunpack.c.l.b16 %v458
    %v2711 = vunpack.c.h.b16 %v458
    %v2712 = vunpack.c.l.b16 %v459
    %v2713 = vunpack.c.h.b16 %v459
    %v2714 = vunpack.c.l.b16 %v460
    %v2715 = vunpack.c.h.b16 %v460
    %v2716 = vunpack.c.l.b16 %v461
    %v2717 = vunpack.c.h.b16 %v461
    %v2718 = vunpack.c.l.b16 %v462
    %v2719 = vunpack.c.h.b16 %v462
    %v2720 = vunpack.c.l.b16 %v463
    %v2721 = vunpack.c.h.b16 %v463
    %v2722 = vunpack.c.l.b16 %v464
    %v2723 = vunpack.c.h.b16 %v464
    %v2724 = vunpack.c.l.b16 %v465
    %v2725 = vunpack.c.h.b16 %v465
    %v2726 = vunpack.c.l.b16 %v466
    %v2727 = vunpack.c.h.b16 %v466
    %v2728 = vunpack.c.l.b16 %v467
    %v2729 = vunpack.c.h.b16 %v467
    %v2730 = vunpack.c.l.b16 %v468
    %v2731 = vunpack.c.h.b16 %v468
    %v2732 = vunpack.c.l.b16 %v469
    %v2733 = vunpack.c.h.b16 %v469
    %v2734 = vunpack.c.l.b16 %v470
    %v2735 = vunpack.c.h.b16 %v470
    %v2736 = vunpack.c.l.b16 %v471
    %v2737 = vunpack.c.h.b16 %v471
    %v2738 = vunpack.c.l.b16 %v472
    %v2739 = vunpack.c.h.b16 %v472
    %v2740 = vunpack.c.l.b16 %v473
    %v2741 = vunpack.c.h.b16 %v473
    %v2742 = vunpack.c.l.b16 %v474
    %v2743 = vunpack.c.h.b16 %v474
    %v2744 = vunpack.c.l.b16 %v475
    %v2745 = vunpack.c.h.b16 %v475
    %v2746 = vunpack.c.l.b16 %v476
    %v2747 = vunpack.c.h.b16 %v476
    %v2748 = vunpack.c.l.b16 %v477
    %v2749 = vunpack.c.h.b16 %v477
    %v2750 = vunpack.c.l.b16 %v478
    %v2751 = vunpack.c.h.b16 %v478
    %v2752 = vunpack.c.l.b16 %v479
    %v2753 = vunpack.c.h.b16 %v479
    %v2754 = vunpack.c.l.b16 %v480
    %v2755 = vunpack.c.h.b16 %v480
    %v2756 = vunpack.c.l.b16 %v481
    %v2757 = vunpack.c.h.b16 %v481
    %v2758 = vunpack.c.l.b16 %v482
    %v2759 = vunpack.c.h.b16 %v482
    %v2760 = vunpack.c.l.b16 %v483
    %v2761 = vunpack.c.h.b16 %v483
    %v2762 = vunpack.c.l.b16 %v484
    %v2763 = vunpack.c.h.b16 %v484
    %v2764 = vunpack.c.l.b16 %v485
    %v2765 = vunpack.c.h.b16 %v485
    %v2766 = vunpack.c.l.b16 %v486
    %v2767 = vunpack.c.h.b16 %v486
    %v2768 = vunpack.c.l.b16 %v487
    %v2769 = vunpack.c.h.b16 %v487
    %v2770 = vunpack.c.l.b16 %v488
    %v2771 = vunpack.c.h.b16 %v488
    %v2772 = vunpack.c.l.b16 %v489
    %v2773 = vunpack.c.h.b16 %v489
    %v2774 = vunpack.c.l.b16 %v490
    %v2775 = vunpack.c.h.b16 %v490
    %v2776 = vunpack.c.l.b16 %v491
    %v2777 = vunpack.c.h.b16 %v491
    %v2778 = vunpack.c.l.b16 %v492
    %v2779 = vunpack.c.h.b16 %v492
    %v2780 = vunpack.c.l.b16 %v493
    %v2781 = vunpack.c.h.b16 %v493
    %v2782 = vunpack.c.l.b16 %v494
    %v2783 = vunpack.c.h.b16 %v494
    %v2784 = vunpack.c.l.b16 %v495
    %v2785 = vunpack.c.h.b16 %v495
    %v2786 = vunpack.c.l.b16 %v496
    %v2787 = vunpack.c.h.b16 %v496
    %v2788 = vunpack.c.l.b16 %v497
    %v2789 = vunpack.c.h.b16 %v497
    %v2790 = vunpack.c.l.b16 %v498
    %v2791 = vunpack.c.h.b16 %v498
    %v2792 = vunpack.c.l.b16 %v499
    %v2793 = vunpack.c.h.b16 %v499
    %v2794 = vunpack.c.l.b16 %v500
    %v2795 = vunpack.c.h.b16 %v500
    %v2796 = vunpack.c.l.b16 %v501
    %v2797 = vunpack.c.h.b16 %v501
    %v2798 = vunpack.c.l.b16 %v502
    %v2799 = vunpack.c.h.b16 %v502
    %v2800 = vunpack.c.l.b16 %v503
    %v2801 = vunpack.c.h.b16 %v503
    %v2802 = vunpack.c.l.b16 %v504
    %v2803 = vunpack.c.h.b16 %v504
    %v2804 = vunpack.c.l.b16 %v505
    %v2805 = vunpack.c.h.b16 %v505
    %v2806 = vunpack.c.l.b16 %v506
    %v2807 = vunpack.c.h.b16 %v506
    %v2808 = vunpack.c.l.b16 %v507
    %v2809 = vunpack.c.h.b16 %v507
    %v2810 = vunpack.c.l.b16 %v508
    %v2811 = vunpack.c.h.b16 %v508
    %v2812 = vunpack.c.l.b16 %v509
    %v2813 = vunpack.c.h.b16 %v509
    %v2814 = vunpack.c.l.b16 %v510
    %v2815 = vunpack.c.h.b16 %v510
    %v2816 = vunpack.c.l.b16 %v511
    %v2817 = vunpack.c.h.b16 %v511
    %v2818 = vunpack.c.l.b16 %v512
    %v2819 = vunpack.c.h.b16 %v512
    %v2820 = vunpack.c.l.b16 %v513
    %v2821 = vunpack.c.h.b16 %v513
    %v2822 = vunpack.c.l.b16 %v514
    %v2823 = vunpack.c.h.b16 %v514
    %v2824 = vunpack.c.l.b16 %v515
    %v2825 = vunpack.c.h.b16 %v515
    %v2826 = vunpack.c.l.b16 %v516
    %v2827 = vunpack.c.h.b16 %v516
    %v2828 = vunpack.c.l.b16 %v517
    %v2829 = vunpack.c.h.b16 %v517
    %v2830 = vunpack.c.l.b16 %v518
    %v2831 = vunpack.c.h.b16 %v518
    %v2832 = vunpack.c.l.b16 %v519
    %v2833 = vunpack.c.h.b16 %v519
    %v2834 = vunpack.c.l.b16 %v520
    %v2835 = vunpack.c.h.b16 %v520
    %v2836 = vunpack.c.l.b16 %v521
    %v2837 = vunpack.c.h.b16 %v521
    %v2838 = vunpack.c.l.b16 %v522
    %v2839 = vunpack.c.h.b16 %v522
    %v2840 = vunpack.c.l.b16 %v523
    %v2841 = vunpack.c.h.b16 %v523
    %v2842 = vunpack.c.l.b16 %v524
    %v2843 = vunpack.c.h.b16 %v524
    %v2844 = vunpack.c.l.b16 %v525
    %v2845 = vunpack.c.h.b16 %v525
    %v2846 = vunpack.c.l.b16 %v526
    %v2847 = vunpack.c.h.b16 %v526
    %v2848 = vunpack.c.l.b16 %v527
    %v2849 = vunpack.c.h.b16 %v527
    %v2850 = vunpack.c.l.b16 %v528
    %v2851 = vunpack.c.h.b16 %v528
    %v2852 = vunpack.c.l.b16 %v529
    %v2853 = vunpack.c.h.b16 %v529
    %v2854 = vunpack.c.l.b16 %v530
    %v2855 = vunpack.c.h.b16 %v530
    %v2856 = vunpack.c.l.b16 %v531
    %v2857 = vunpack.c.h.b16 %v531
    %v2858 = vunpack.c.l.b16 %v532
    %v2859 = vunpack.c.h.b16 %v532
    %v2860 = vunpack.c.l.b16 %v533
    %v2861 = vunpack.c.h.b16 %v533
    %v2862 = vunpack.c.l.b16 %v534
    %v2863 = vunpack.c.h.b16 %v534
    %v2864 = vunpack.c.l.b16 %v535
    %v2865 = vunpack.c.h.b16 %v535
    %v2866 = vunpack.c.l.b16 %v536
    %v2867 = vunpack.c.h.b16 %v536
    %v2868 = vunpack.c.l.b16 %v537
    %v2869 = vunpack.c.h.b16 %v537
    %v2870 = vunpack.c.l.b16 %v538
    %v2871 = vunpack.c.h.b16 %v538
    %v2872 = vunpack.c.l.b16 %v539
    %v2873 = vunpack.c.h.b16 %v539
    %v2874 = vunpack.c.l.b16 %v540
    %v2875 = vunpack.c.h.b16 %v540
    %v2876 = vunpack.c.l.b16 %v541
    %v2877 = vunpack.c.h.b16 %v541
    %v2878 = vunpack.c.l.b16 %v542
    %v2879 = vunpack.c.h.b16 %v542
    %v2880 = vunpack.c.l.b16 %v543
    %v2881 = vunpack.c.h.b16 %v543
    %v2882 = vunpack.c.l.b16 %v544
    %v2883 = vunpack.c.h.b16 %v544
    %v2884 = vunpack.c.l.b16 %v545
    %v2885 = vunpack.c.h.b16 %v545
    %v2886 = vunpack.c.l.b16 %v546
    %v2887 = vunpack.c.h.b16 %v546
    %v2888 = vunpack.c.l.b16 %v547
    %v2889 = vunpack.c.h.b16 %v547
    %v2890 = vunpack.c.l.b16 %v548
    %v2891 = vunpack.c.h.b16 %v548
    %v2892 = vunpack.c.l.b16 %v549
    %v2893 = vunpack.c.h.b16 %v549
    %v2894 = vunpack.c.l.b16 %v550
    %v2895 = vunpack.c.h.b16 %v550
    %v2896 = vunpack.c.l.b16 %v551
    %v2897 = vunpack.c.h.b16 %v551
    %v2898 = vunpack.c.l.b16 %v552
    %v2899 = vunpack.c.h.b16 %v552
    %v2900 = vunpack.c.l.b16 %v553
    %v2901 = vunpack.c.h.b16 %v553
    %v2902 = vunpack.c.l.b16 %v554
    %v2903 = vunpack.c.h.b16 %v554
    %v2904 = vunpack.c.l.b16 %v555
    %v2905 = vunpack.c.h.b16 %v555
    %v2906 = vunpack.c.l.b16 %v556
    %v2907 = vunpack.c.h.b16 %v556
    %v2908 = vunpack.c.l.b16 %v557
    %v2909 = vunpack.c.h.b16 %v557
    %v2910 = vunpack.c.l.b16 %v558
    %v2911 = vunpack.c.h.b16 %v558
    %v2912 = vunpack.c.l.b16 %v559
    %v2913 = vunpack.c.h.b16 %v559
    %v2914 = vunpack.c.l.b16 %v560
    %v2915 = vunpack.c.h.b16 %v560
    %v2916 = vunpack.c.l.b16 %v561
    %v2917 = vunpack.c.h.b16 %v561
    %v2918 = vunpack.c.l.b16 %v562
    %v2919 = vunpack.c.h.b16 %v562
    %v2920 = vunpack.c.l.b16 %v563
    %v2921 = vunpack.c.h.b16 %v563
    %v2922 = vunpack.c.l.b16 %v564
    %v2923 = vunpack.c.h.b16 %v564
    %v2924 = vunpack.c.l.b16 %v565
    %v2925 = vunpack.c.h.b16 %v565
    %v2926 = vunpack.c.l.b16 %v566
    %v2927 = vunpack.c.h.b16 %v566
    %v2928 = vunpack.c.l.b16 %v567
    %v2929 = vunpack.c.h.b16 %v567
    %v2930 = vunpack.c.l.b16 %v568
    %v2931 = vunpack.c.h.b16 %v568
    %v2932 = vunpack.c.l.b16 %v569
    %v2933 = vunpack.c.h.b16 %v569
    %v2934 = vunpack.c.l.b16 %v570
    %v2935 = vunpack.c.h.b16 %v570
    %v2936 = vunpack.c.l.b16 %v571
    %v2937 = vunpack.c.h.b16 %v571
    %v2938 = vunpack.c.l.b16 %v572
    %v2939 = vunpack.c.h.b16 %v572
    %v2940 = vunpack.c.l.b16 %v573
    %v2941 = vunpack.c.h.b16 %v573
    %v2942 = vunpack.c.l.b16 %v574
    %v2943 = vunpack.c.h.b16 %v574
    %v2944 = vunpack.c.l.b16 %v575
    %v2945 = vunpack.c.h.b16 %v575
    %v2946 = vunpack.c.l.b16 %v576
    %v2947 = vunpack.c.h.b16 %v576
    %v2948 = vunpack.c.l.b16 %v577
    %v2949 = vunpack.c.h.b16 %v577
    %v2950 = vunpack.c.l.b16 %v578
    %v2951 = vunpack.c.h.b16 %v578
    %v2952 = vunpack.c.l.b16 %v579
    %v2953 = vunpack.c.h.b16 %v579
    %v2954 = vunpack.c.l.b16 %v580
    %v2955 = vunpack.c.h.b16 %v580
    %v2956 = vunpack.c.l.b16 %v581
    %v2957 = vunpack.c.h.b16 %v581
    %v2958 = vunpack.c.l.b16 %v582
    %v2959 = vunpack.c.h.b16 %v582
    %v2960 = vunpack.c.l.b16 %v583
    %v2961 = vunpack.c.h.b16 %v583
    %v2962 = vunpack.c.l.b16 %v584
    %v2963 = vunpack.c.h.b16 %v584
    %v2964 = vunpack.c.l.b16 %v585
    %v2965 = vunpack.c.h.b16 %v585
    %v2966 = vunpack.c.l.b16 %v586
    %v2967 = vunpack.c.h.b16 %v586
    %v2968 = vunpack.c.l.b16 %v587
    %v2969 = vunpack.c.h.b16 %v587
    %v2970 = vunpack.c.l.b16 %v588
    %v2971 = vunpack.c.h.b16 %v588
    %v2972 = vunpack.c.l.b16 %v589
    %v2973 = vunpack.c.h.b16 %v589
    %v2974 = vunpack.c.l.b16 %v590
    %v2975 = vunpack.c.h.b16 %v590
    %v2976 = vunpack.c.l.b16 %v591
    %v2977 = vunpack.c.h.b16 %v591
    %v2978 = vunpack.c.l.b16 %v592
    %v2979 = vunpack.c.h.b16 %v592
    %v2980 = vunpack.c.l.b16 %v593
    %v2981 = vunpack.c.h.b16 %v593
    %v2982 = vunpack.c.l.b16 %v594
    %v2983 = vunpack.c.h.b16 %v594
    %v2984 = vunpack.c.l.b16 %v595
    %v2985 = vunpack.c.h.b16 %v595
    %v2986 = vunpack.c.l.b16 %v596
    %v2987 = vunpack.c.h.b16 %v596
    %v2988 = vunpack.c.l.b16 %v597
    %v2989 = vunpack.c.h.b16 %v597
    %v2990 = vunpack.c.l.b16 %v598
    %v2991 = vunpack.c.h.b16 %v598
    %v2992 = vunpack.c.l.b16 %v599
    %v2993 = vunpack.c.h.b16 %v599
    %v2994 = vunpack.c.l.b16 %v600
    %v2995 = vunpack.c.h.b16 %v600
    %v2996 = vunpack.c.l.b16 %v601
    %v2997 = vunpack.c.h.b16 %v601
    %v2998 = vunpack.c.l.b16 %v602
    %v2999 = vunpack.c.h.b16 %v602
    %v3000 = vunpack.c.l.b16 %v603
    %v3001 = vunpack.c.h.b16 %v603
    %v3002 = vunpack.c.l.b16 %v604
    %v3003 = vunpack.c.h.b16 %v604
    %v3004 = vunpack.c.l.b16 %v605
    %v3005 = vunpack.c.h.b16 %v605
    %v3006 = vunpack.c.l.b16 %v606
    %v3007 = vunpack.c.h.b16 %v606
    %v3008 = vunpack.c.l.b16 %v607
    %v3009 = vunpack.c.h.b16 %v607
    %v3010 = vunpack.c.l.b16 %v608
    %v3011 = vunpack.c.h.b16 %v608
    %v3012 = vunpack.c.l.b16 %v609
    %v3013 = vunpack.c.h.b16 %v609
    %v3014 = vunpack.c.l.b16 %v610
    %v3015 = vunpack.c.h.b16 %v610
    %v3016 = vunpack.c.l.b16 %v611
    %v3017 = vunpack.c.h.b16 %v611
    %v3018 = vunpack.c.l.b16 %v612
    %v3019 = vunpack.c.h.b16 %v612
    %v3020 = vunpack.c.l.b16 %v613
    %v3021 = vunpack.c.h.b16 %v613
    %v3022 = vunpack.c.l.b16 %v614
    %v3023 = vunpack.c.h.b16 %v614
    %v3024 = vunpack.c.l.b16 %v615
    %v3025 = vunpack.c.h.b16 %v615
    %v3026 = vunpack.c.l.b16 %v616
    %v3027 = vunpack.c.h.b16 %v616
    %v3028 = vunpack.c.l.b16 %v617
    %v3029 = vunpack.c.h.b16 %v617
    %v3030 = vunpack.c.l.b16 %v618
    %v3031 = vunpack.c.h.b16 %v618
    %v3032 = vunpack.c.l.b16 %v619
    %v3033 = vunpack.c.h.b16 %v619
    %v3034 = vunpack.c.l.b16 %v620
    %v3035 = vunpack.c.h.b16 %v620
    %v3036 = vunpack.c.l.b16 %v621
    %v3037 = vunpack.c.h.b16 %v621
    %v3038 = vunpack.c.l.b16 %v622
    %v3039 = vunpack.c.h.b16 %v622
    %v3040 = vunpack.c.l.b16 %v623
    %v3041 = vunpack.c.h.b16 %v623
    %v3042 = vunpack.c.l.b16 %v624
    %v3043 = vunpack.c.h.b16 %v624
    %v3044 = vunpack.c.l.b16 %v625
    %v3045 = vunpack.c.h.b16 %v625
    %v3046 = vunpack.c.l.b16 %v626
    %v3047 = vunpack.c.h.b16 %v626
    %v3048 = vunpack.c.l.b16 %v627
    %v3049 = vunpack.c.h.b16 %v627
    %v3050 = vunpack.c.l.b16 %v628
    %v3051 = vunpack.c.h.b16 %v628
    %v3052 = vunpack.c.l.b16 %v629
    %v3053 = vunpack.c.h.b16 %v629
    %v3054 = vunpack.c.l.b16 %v630
    %v3055 = vunpack.c.h.b16 %v630
    %v3056 = vunpack.c.l.b16 %v631
    %v3057 = vunpack.c.h.b16 %v631
    %v3058 = vunpack.c.l.b16 %v632
    %v3059 = vunpack.c.h.b16 %v632
    %v3060 = vunpack.c.l.b16 %v633
    %v3061 = vunpack.c.h.b16 %v633
    %v3062 = vunpack.c.l.b16 %v634
    %v3063 = vunpack.c.h.b16 %v634
    %v3064 = vunpack.c.l.b16 %v635
    %v3065 = vunpack.c.h.b16 %v635
    %v3066 = vunpack.c.l.b16 %v636
    %v3067 = vunpack.c.h.b16 %v636
    %v3068 = vunpack.c.l.b16 %v637
    %v3069 = vunpack.c.h.b16 %v637
    %v3070 = vunpack.c.l.b16 %v638
    %v3071 = vunpack.c.h.b16 %v638
    %v3072 = vunpack.c.l.b16 %v639
    %v3073 = vunpack.c.h.b16 %v639
    %v3074 = vunpack.c.l.b16 %v640
    %v3075 = vunpack.c.h.b16 %v640
    %v3076 = vunpack.c.l.b16 %v641
    %v3077 = vunpack.c.h.b16 %v641
    %v3078 = vunpack.c.l.b16 %v642
    %v3079 = vunpack.c.h.b16 %v642
    %v3080 = vunpack.c.l.b16 %v643
    %v3081 = vunpack.c.h.b16 %v643
    %v3082 = vunpack.c.l.b16 %v644
    %v3083 = vunpack.c.h.b16 %v644
    %v3084 = vunpack.c.l.b16 %v645
    %v3085 = vunpack.c.h.b16 %v645
    %v3086 = vunpack.c.l.b16 %v646
    %v3087 = vunpack.c.h.b16 %v646
    %v3088 = vunpack.c.l.b16 %v647
    %v3089 = vunpack.c.h.b16 %v647
    %v3090 = vunpack.c.l.b16 %v648
    %v3091 = vunpack.c.h.b16 %v648
    %v3092 = vunpack.c.l.b16 %v649
    %v3093 = vunpack.c.h.b16 %v649
    %v3094 = vunpack.c.l.b16 %v650
    %v3095 = vunpack.c.h.b16 %v650
    %v3096 = vunpack.c.l.b16 %v651
    %v3097 = vunpack.c.h.b16 %v651
    %v3098 = vunpack.c.l.b16 %v652
    %v3099 = vunpack.c.h.b16 %v652
    %v3100 = vunpack.c.l.b16 %v653
    %v3101 = vunpack.c.h.b16 %v653
    %v3102 = vunpack.c.l.b16 %v654
    %v3103 = vunpack.c.h.b16 %v654
    %v3104 = vunpack.c.l.b16 %v655
    %v3105 = vunpack.c.h.b16 %v655
    %v3106 = vunpack.c.l.b16 %v656
    %v3107 = vunpack.c.h.b16 %v656
    %v3108 = vunpack.c.l.b16 %v657
    %v3109 = vunpack.c.h.b16 %v657
    %v3110 = vunpack.c.l.b16 %v658
    %v3111 = vunpack.c.h.b16 %v658
    %v3112 = vunpack.c.l.b16 %v659
    %v3113 = vunpack.c.h.b16 %v659
    %v3114 = vunpack.c.l.b16 %v660
    %v3115 = vunpack.c.h.b16 %v660
    %v3116 = vunpack.c.l.b16 %v661
    %v3117 = vunpack.c.h.b16 %v661
    %v3118 = vunpack.c.l.b16 %v662
    %v3119 = vunpack.c.h.b16 %v662
    %v3120 = vunpack.c.l.b16 %v663
    %v3121 = vunpack.c.h.b16 %v663
    %v3122 = vunpack.c.l.b16 %v664
    %v3123 = vunpack.c.h.b16 %v664
    %v3124 = vunpack.c.l.b16 %v665
    %v3125 = vunpack.c.h.b16 %v665
    %v3126 = vunpack.c.l.b16 %v666
    %v3127 = vunpack.c.h.b16 %v666
    %v3128 = vunpack.c.l.b16 %v667
    %v3129 = vunpack.c.h.b16 %v667
    %v3130 = vunpack.c.l.b16 %v668
    %v3131 = vunpack.c.h.b16 %v668
    %v3132 = vunpack.c.l.b16 %v669
    %v3133 = vunpack.c.h.b16 %v669
    %v3134 = vunpack.c.l.b16 %v670
    %v3135 = vunpack.c.h.b16 %v670
    %v3136 = vunpack.c.l.b16 %v671
    %v3137 = vunpack.c.h.b16 %v671
    %v3138 = vunpack.c.l.b16 %v672
    %v3139 = vunpack.c.h.b16 %v672
    %v3140 = vunpack.c.l.b16 %v673
    %v3141 = vunpack.c.h.b16 %v673
    %v3142 = vunpack.c.l.b16 %v674
    %v3143 = vunpack.c.h.b16 %v674
    %v3144 = vunpack.c.l.b16 %v675
    %v3145 = vunpack.c.h.b16 %v675
    %v3146 = vunpack.c.l.b16 %v676
    %v3147 = vunpack.c.h.b16 %v676
    %v3148 = vunpack.c.l.b16 %v677
    %v3149 = vunpack.c.h.b16 %v677
    %v3150 = vunpack.c.l.b16 %v678
    %v3151 = vunpack.c.h.b16 %v678
    %v3152 = vunpack.c.l.b16 %v679
    %v3153 = vunpack.c.h.b16 %v679
    %v3154 = vunpack.c.l.b16 %v680
    %v3155 = vunpack.c.h.b16 %v680
    %v3156 = vunpack.c.l.b16 %v681
    %v3157 = vunpack.c.h.b16 %v681
    %v3158 = vunpack.c.l.b16 %v682
    %v3159 = vunpack.c.h.b16 %v682
    %v3160 = vunpack.c.l.b16 %v683
    %v3161 = vunpack.c.h.b16 %v683
    %v3162 = vunpack.c.l.b16 %v684
    %v3163 = vunpack.c.h.b16 %v684
    %v3164 = vunpack.c.l.b16 %v685
    %v3165 = vunpack.c.h.b16 %v685
    %v3166 = vunpack.c.l.b16 %v686
    %v3167 = vunpack.c.h.b16 %v686
    %v3168 = vunpack.c.l.b16 %v687
    %v3169 = vunpack.c.h.b16 %v687
    %v3170 = vunpack.c.l.b16 %v688
    %v3171 = vunpack.c.h.b16 %v688
    %v3172 = vunpack.c.l.b16 %v689
    %v3173 = vunpack.c.h.b16 %v689
    %v3174 = vunpack.c.l.b16 %v690
    %v3175 = vunpack.c.h.b16 %v690
    %v3176 = vunpack.c.l.b16 %v691
    %v3177 = vunpack.c.h.b16 %v691
    %v3178 = vunpack.c.l.b16 %v692
    %v3179 = vunpack.c.h.b16 %v692
    %v3180 = vunpack.c.l.b16 %v693
    %v3181 = vunpack.c.h.b16 %v693
    %v3182 = vunpack.c.l.b16 %v694
    %v3183 = vunpack.c.h.b16 %v694
    %v3184 = vunpack.c.l.b16 %v695
    %v3185 = vunpack.c.h.b16 %v695
    %v3186 = vunpack.c.l.b16 %v696
    %v3187 = vunpack.c.h.b16 %v696
    %v3188 = vunpack.c.l.b16 %v697
    %v3189 = vunpack.c.h.b16 %v697
    %v3190 = vunpack.c.l.b16 %v698
    %v3191 = vunpack.c.h.b16 %v698
    %v3192 = vunpack.c.l.b16 %v699
    %v3193 = vunpack.c.h.b16 %v699
    %v3194 = vunpack.c.l.b16 %v700
    %v3195 = vunpack.c.h.b16 %v700
    %v3196 = vunpack.c.l.b16 %v701
    %v3197 = vunpack.c.h.b16 %v701
    %v3198 = vunpack.c.l.b16 %v702
    %v3199 = vunpack.c.h.b16 %v702
    %v3200 = vunpack.c.l.b16 %v703
    %v3201 = vunpack.c.h.b16 %v703
    %v3202 = vunpack.c.l.b16 %v704
    %v3203 = vunpack.c.h.b16 %v704
    %v3204 = vunpack.c.l.b16 %v705
    %v3205 = vunpack.c.h.b16 %v705
    %v3206 = vunpack.c.l.b16 %v706
    %v3207 = vunpack.c.h.b16 %v706
    %v3208 = vunpack.c.l.b16 %v707
    %v3209 = vunpack.c.h.b16 %v707
    %v3210 = vunpack.c.l.b16 %v708
    %v3211 = vunpack.c.h.b16 %v708
    %v3212 = vunpack.c.l.b16 %v709
    %v3213 = vunpack.c.h.b16 %v709
    %v3214 = vunpack.c.l.b16 %v710
    %v3215 = vunpack.c.h.b16 %v710
    %v3216 = vunpack.c.l.b16 %v711
    %v3217 = vunpack.c.h.b16 %v711
    %v3218 = vunpack.c.l.b16 %v712
    %v3219 = vunpack.c.h.b16 %v712
    %v3220 = vunpack.c.l.b16 %v713
    %v3221 = vunpack.c.h.b16 %v713
    %v3222 = vunpack.c.l.b16 %v714
    %v3223 = vunpack.c.h.b16 %v714
    %v3224 = vunpack.c.l.b16 %v715
    %v3225 = vunpack.c.h.b16 %v715
    %v3226 = vunpack.c.l.b16 %v716
    %v3227 = vunpack.c.h.b16 %v716
    %v3228 = vunpack.c.l.b16 %v717
    %v3229 = vunpack.c.h.b16 %v717
    %v3230 = vunpack.c.l.b16 %v718
    %v3231 = vunpack.c.h.b16 %v718
    %v3232 = vunpack.c.l.b16 %v719
    %v3233 = vunpack.c.h.b16 %v719
    %v3234 = vunpack.c.l.b16 %v720
    %v3235 = vunpack.c.h.b16 %v720
    %v3236 = vunpack.c.l.b16 %v721
    %v3237 = vunpack.c.h.b16 %v721
    %v3238 = vunpack.c.l.b16 %v722
    %v3239 = vunpack.c.h.b16 %v722
    %v3240 = vunpack.c.l.b16 %v723
    %v3241 = vunpack.c.h.b16 %v723
    %v3242 = vunpack.c.l.b16 %v724
    %v3243 = vunpack.c.h.b16 %v724
    %v3244 = vunpack.c.l.b16 %v725
    %v3245 = vunpack.c.h.b16 %v725
    %v3246 = vunpack.c.l.b16 %v726
    %v3247 = vunpack.c.h.b16 %v726
    %v3248 = vunpack.c.l.b16 %v727
    %v3249 = vunpack.c.h.b16 %v727
    %v3250 = vunpack.c.l.b16 %v728
    %v3251 = vunpack.c.h.b16 %v728
    %v3252 = vunpack.c.l.b16 %v729
    %v3253 = vunpack.c.h.b16 %v729
    %v3254 = vunpack.c.l.b16 %v730
    %v3255 = vunpack.c.h.b16 %v730
    %v3256 = vunpack.c.l.b16 %v731
    %v3257 = vunpack.c.h.b16 %v731
    %v3258 = vunpack.c.l.b16 %v732
    %v3259 = vunpack.c.h.b16 %v732
    %v3260 = vunpack.c.l.b16 %v733
    %v3261 = vunpack.c.h.b16 %v733
    %v3262 = vunpack.c.l.b16 %v734
    %v3263 = vunpack.c.h.b16 %v734
    %v3264 = vunpack.c.l.b16 %v735
    %v3265 = vunpack.c.h.b16 %v735
    %v3266 = vunpack.c.l.b16 %v736
    %v3267 = vunpack.c.h.b16 %v736
    %v3268 = vunpack.c.l.b16 %v737
    %v3269 = vunpack.c.h.b16 %v737
    %v3270 = vunpack.c.l.b16 %v738
    %v3271 = vunpack.c.h.b16 %v738
    %v3272 = vunpack.c.l.b16 %v739
    %v3273 = vunpack.c.h.b16 %v739
    %v3274 = vunpack.c.l.b16 %v740
    %v3275 = vunpack.c.h.b16 %v740
    %v3276 = vunpack.c.l.b16 %v741
    %v3277 = vunpack.c.h.b16 %v741
    %v3278 = vunpack.c.l.b16 %v742
    %v3279 = vunpack.c.h.b16 %v742
    %v3280 = vunpack.c.l.b16 %v743
    %v3281 = vunpack.c.h.b16 %v743
    %v3282 = vunpack.c.l.b16 %v744
    %v3283 = vunpack.c.h.b16 %v744
    %v3284 = vunpack.c.l.b16 %v745
    %v3285 = vunpack.c.h.b16 %v745
    %v3286 = vunpack.c.l.b16 %v746
    %v3287 = vunpack.c.h.b16 %v746
    %v3288 = vunpack.c.l.b16 %v747
    %v3289 = vunpack.c.h.b16 %v747
    %v3290 = vunpack.c.l.b16 %v748
    %v3291 = vunpack.c.h.b16 %v748
    %v3292 = vunpack.c.l.b16 %v749
    %v3293 = vunpack.c.h.b16 %v749
    %v3294 = vunpack.c.l.b16 %v750
    %v3295 = vunpack.c.h.b16 %v750
    %v3296 = vunpack.c.l.b16 %v751
    %v3297 = vunpack.c.h.b16 %v751
    %v3298 = vunpack.c.l.b16 %v752
    %v3299 = vunpack.c.h.b16 %v752
    %v3300 = vunpack.c.l.b16 %v753
    %v3301 = vunpack.c.h.b16 %v753
    %v3302 = vunpack.c.l.b16 %v754
    %v3303 = vunpack.c.h.b16 %v754
    %v3304 = vunpack.c.l.b16 %v755
    %v3305 = vunpack.c.h.b16 %v755
    %v3306 = vunpack.c.l.b16 %v756
    %v3307 = vunpack.c.h.b16 %v756
    %v3308 = vunpack.c.l.b16 %v757
    %v3309 = vunpack.c.h.b16 %v757
    %v3310 = vunpack.c.l.b16 %v758
    %v3311 = vunpack.c.h.b16 %v758
    %v3312 = vunpack.c.l.b16 %v759
    %v3313 = vunpack.c.h.b16 %v759
    %v3314 = vunpack.c.l.b16 %v760
    %v3315 = vunpack.c.h.b16 %v760
    %v3316 = vunpack.c.l.b16 %v761
    %v3317 = vunpack.c.h.b16 %v761
    %v3318 = vunpack.c.l.b16 %v762
    %v3319 = vunpack.c.h.b16 %v762
    %v3320 = vunpack.c.l.b16 %v763
    %v3321 = vunpack.c.h.b16 %v763
    %v3322 = vunpack.c.l.b16 %v764
    %v3323 = vunpack.c.h.b16 %v764
    %v3324 = vunpack.c.l.b16 %v765
    %v3325 = vunpack.c.h.b16 %v765
    %v3326 = vunpack.c.l.b16 %v766
    %v3327 = vunpack.c.h.b16 %v766
    %v3328 = vunpack.c.l.b16 %v767
    %v3329 = vunpack.c.h.b16 %v767
    %v3330 = vunpack.c.l.b16 %v768
    %v3331 = vunpack.c.h.b16 %v768
    %v3332 = vunpack.c.l.b16 %v769
    %v3333 = vunpack.c.h.b16 %v769
    %v3334 = vunpack.c.l.b16 %v770
    %v3335 = vunpack.c.h.b16 %v770
    %v3336 = vunpack.c.l.b16 %v771
    %v3337 = vunpack.c.h.b16 %v771
    %v3338 = vunpack.c.l.b16 %v772
    %v3339 = vunpack.c.h.b16 %v772
    %v3340 = vunpack.c.l.b16 %v773
    %v3341 = vunpack.c.h.b16 %v773
    %v3342 = vunpack.c.l.b16 %v774
    %v3343 = vunpack.c.h.b16 %v774
    %v3344 = vunpack.c.l.b16 %v775
    %v3345 = vunpack.c.h.b16 %v775
    %v3346 = vunpack.c.l.b16 %v776
    %v3347 = vunpack.c.h.b16 %v776
    %v3348 = vunpack.c.l.b16 %v777
    %v3349 = vunpack.c.h.b16 %v777
    %v3350 = vunpack.c.l.b16 %v778
    %v3351 = vunpack.c.h.b16 %v778
    %v3352 = vunpack.c.l.b16 %v779
    %v3353 = vunpack.c.h.b16 %v779
    %v3354 = vunpack.c.l.b16 %v780
    %v3355 = vunpack.c.h.b16 %v780
    %v3356 = vunpack.c.l.b16 %v781
    %v3357 = vunpack.c.h.b16 %v781
    %v3358 = vunpack.c.l.b16 %v782
    %v3359 = vunpack.c.h.b16 %v782
    %v3360 = vunpack.c.l.b16 %v783
    %v3361 = vunpack.c.h.b16 %v783
    %v3362 = vunpack.c.l.b16 %v784
    %v3363 = vunpack.c.h.b16 %v784
    %v3364 = vunpack.c.l.b16 %v785
    %v3365 = vunpack.c.h.b16 %v785
    %v3366 = vunpack.c.l.b16 %v786
    %v3367 = vunpack.c.h.b16 %v786
    %v3368 = vunpack.c.l.b16 %v787
    %v3369 = vunpack.c.h.b16 %v787
    %v3370 = vunpack.c.l.b16 %v788
    %v3371 = vunpack.c.h.b16 %v788
    %v3372 = vunpack.c.l.b16 %v789
    %v3373 = vunpack.c.h.b16 %v789
    %v3374 = vunpack.c.l.b16 %v790
    %v3375 = vunpack.c.h.b16 %v790
    %v3376 = vunpack.c.l.b16 %v791
    %v3377 = vunpack.c.h.b16 %v791
    %v3378 = vunpack.c.l.b16 %v792
    %v3379 = vunpack.c.h.b16 %v792
    %v3380 = vunpack.c.l.b16 %v793
    %v3381 = vunpack.c.h.b16 %v793
    %v3382 = vunpack.c.l.b16 %v794
    %v3383 = vunpack.c.h.b16 %v794
    %v3384 = vunpack.c.l.b16 %v795
    %v3385 = vunpack.c.h.b16 %v795
    %v3386 = vunpack.c.l.b16 %v796
    %v3387 = vunpack.c.h.b16 %v796
    %v3388 = vunpack.c.l.b16 %v797
    %v3389 = vunpack.c.h.b16 %v797
    %v3390 = vunpack.c.l.b16 %v798
    %v3391 = vunpack.c.h.b16 %v798
    %v3392 = vunpack.c.l.b16 %v799
    %v3393 = vunpack.c.h.b16 %v799
    %v3394 = vunpack.c.l.b16 %v800
    %v3395 = vunpack.c.h.b16 %v800
    %v3396 = vunpack.c.l.b16 %v801
    %v3397 = vunpack.c.h.b16 %v801
    %v3398 = vunpack.c.l.b16 %v802
    %v3399 = vunpack.c.h.b16 %v802
    %v3400 = vunpack.c.l.b16 %v803
    %v3401 = vunpack.c.h.b16 %v803
    %v3402 = vunpack.c.l.b16 %v804
    %v3403 = vunpack.c.h.b16 %v804
    %v3404 = vunpack.c.l.b16 %v805
    %v3405 = vunpack.c.h.b16 %v805
    %v3406 = vunpack.c.l.b16 %v806
    %v3407 = vunpack.c.h.b16 %v806
    %v3408 = vunpack.c.l.b16 %v807
    %v3409 = vunpack.c.h.b16 %v807
    %v3410 = vunpack.c.l.b16 %v808
    %v3411 = vunpack.c.h.b16 %v808
    %v3412 = vunpack.c.l.b16 %v809
    %v3413 = vunpack.c.h.b16 %v809
    %v3414 = vunpack.c.l.b16 %v810
    %v3415 = vunpack.c.h.b16 %v810
    %v3416 = vunpack.c.l.b16 %v811
    %v3417 = vunpack.c.h.b16 %v811
    %v3418 = vunpack.c.l.b16 %v812
    %v3419 = vunpack.c.h.b16 %v812
    %v3420 = vunpack.c.l.b16 %v813
    %v3421 = vunpack.c.h.b16 %v813
    %v3422 = vunpack.c.l.b16 %v814
    %v3423 = vunpack.c.h.b16 %v814
    %v3424 = vunpack.c.l.b16 %v815
    %v3425 = vunpack.c.h.b16 %v815
    %v3426 = vunpack.c.l.b16 %v816
    %v3427 = vunpack.c.h.b16 %v816
    %v3428 = vunpack.c.l.b16 %v817
    %v3429 = vunpack.c.h.b16 %v817
    %v3430 = vunpack.c.l.b16 %v818
    %v3431 = vunpack.c.h.b16 %v818
    %v3432 = vunpack.c.l.b16 %v819
    %v3433 = vunpack.c.h.b16 %v819
    %v3434 = vunpack.c.l.b16 %v820
    %v3435 = vunpack.c.h.b16 %v820
    %v3436 = vunpack.c.l.b16 %v821
    %v3437 = vunpack.c.h.b16 %v821
    %v3438 = vunpack.c.l.b16 %v822
    %v3439 = vunpack.c.h.b16 %v822
    %v3440 = vunpack.c.l.b16 %v823
    %v3441 = vunpack.c.h.b16 %v823
    %v3442 = vunpack.c.l.b16 %v824
    %v3443 = vunpack.c.h.b16 %v824
    %v3444 = vunpack.c.l.b16 %v825
    %v3445 = vunpack.c.h.b16 %v825
    %v3446 = vunpack.c.l.b16 %v826
    %v3447 = vunpack.c.h.b16 %v826
    %v3448 = vunpack.c.l.b16 %v827
    %v3449 = vunpack.c.h.b16 %v827
    %v3450 = vunpack.c.l.b16 %v828
    %v3451 = vunpack.c.h.b16 %v828
    %v3452 = vunpack.c.l.b16 %v829
    %v3453 = vunpack.c.h.b16 %v829
    %v3454 = vunpack.c.l.b16 %v830
    %v3455 = vunpack.c.h.b16 %v830
    %v3456 = vunpack.c.l.b16 %v831
    %v3457 = vunpack.c.h.b16 %v831
    %v3458 = vunpack.c.l.b16 %v832
    %v3459 = vunpack.c.h.b16 %v832
    %v3460 = vunpack.c.l.b16 %v833
    %v3461 = vunpack.c.h.b16 %v833
    %v3462 = vunpack.c.l.b16 %v834
    %v3463 = vunpack.c.h.b16 %v834
    %v3464 = vunpack.c.l.b16 %v835
    %v3465 = vunpack.c.h.b16 %v835
    %v3466 = vunpack.c.l.b16 %v836
    %v3467 = vunpack.c.h.b16 %v836
    %v3468 = vunpack.c.l.b16 %v837
    %v3469 = vunpack.c.h.b16 %v837
    %v3470 = vunpack.c.l.b16 %v838
    %v3471 = vunpack.c.h.b16 %v838
    %v3472 = vunpack.c.l.b16 %v839
    %v3473 = vunpack.c.h.b16 %v839
    %v3474 = vunpack.c.l.b16 %v840
    %v3475 = vunpack.c.h.b16 %v840
    %v3476 = vunpack.c.l.b16 %v841
    %v3477 = vunpack.c.h.b16 %v841
    %v3478 = vunpack.c.l.b16 %v842
    %v3479 = vunpack.c.h.b16 %v842
    %v3480 = vunpack.c.l.b16 %v843
    %v3481 = vunpack.c.h.b16 %v843
    %v3482 = vunpack.c.l.b16 %v844
    %v3483 = vunpack.c.h.b16 %v844
    %v3484 = vunpack.c.l.b16 %v845
    %v3485 = vunpack.c.h.b16 %v845
    %v3486 = vunpack.c.l.b16 %v846
    %v3487 = vunpack.c.h.b16 %v846
    %v3488 = vunpack.c.l.b16 %v847
    %v3489 = vunpack.c.h.b16 %v847
    %v3490 = vunpack.c.l.b16 %v848
    %v3491 = vunpack.c.h.b16 %v848
    %v3492 = vunpack.c.l.b16 %v849
    %v3493 = vunpack.c.h.b16 %v849
    %v3494 = vunpack.c.l.b16 %v850
    %v3495 = vunpack.c.h.b16 %v850
    %v3496 = vunpack.c.l.b16 %v851
    %v3497 = vunpack.c.h.b16 %v851
    %v3498 = vunpack.c.l.b16 %v852
    %v3499 = vunpack.c.h.b16 %v852
    %v3500 = vunpack.c.l.b16 %v853
    %v3501 = vunpack.c.h.b16 %v853
    %v3502 = vunpack.c.l.b16 %v854
    %v3503 = vunpack.c.h.b16 %v854
    %v3504 = vunpack.c.l.b16 %v855
    %v3505 = vunpack.c.h.b16 %v855
    %v3506 = vunpack.c.l.b16 %v856
    %v3507 = vunpack.c.h.b16 %v856
    %v3508 = vunpack.c.l.b16 %v857
    %v3509 = vunpack.c.h.b16 %v857
    %v3510 = vunpack.c.l.b16 %v858
    %v3511 = vunpack.c.h.b16 %v858
    %v3512 = vunpack.c.l.b16 %v859
    %v3513 = vunpack.c.h.b16 %v859
    %v3514 = vunpack.c.l.b16 %v860
    %v3515 = vunpack.c.h.b16 %v860
    %v3516 = vunpack.c.l.b16 %v861
    %v3517 = vunpack.c.h.b16 %v861
    %v3518 = vunpack.c.l.b16 %v862
    %v3519 = vunpack.c.h.b16 %v862
    %v3520 = vunpack.c.l.b16 %v863
    %v3521 = vunpack.c.h.b16 %v863
    %v3522 = vunpack.c.l.b16 %v864
    %v3523 = vunpack.c.h.b16 %v864
    %v3524 = vunpack.c.l.b16 %v865
    %v3525 = vunpack.c.h.b16 %v865
    %v3526 = vunpack.c.l.b16 %v866
    %v3527 = vunpack.c.h.b16 %v866
    %v3528 = vunpack.c.l.b16 %v867
    %v3529 = vunpack.c.h.b16 %v867
    %v3530 = vunpack.c.l.b16 %v868
    %v3531 = vunpack.c.h.b16 %v868
    %v3532 = vunpack.c.l.b16 %v869
    %v3533 = vunpack.c.h.b16 %v869
    %v3534 = vunpack.c.l.b16 %v870
    %v3535 = vunpack.c.h.b16 %v870
    %v3536 = vunpack.c.l.b16 %v871
    %v3537 = vunpack.c.h.b16 %v871
    %v3538 = vunpack.c.l.b16 %v872
    %v3539 = vunpack.c.h.b16 %v872
    %v3540 = vunpack.c.l.b16 %v873
    %v3541 = vunpack.c.h.b16 %v873
    %v3542 = vunpack.c.l.b16 %v874
    %v3543 = vunpack.c.h.b16 %v874
    %v3544 = vunpack.c.l.b16 %v875
    %v3545 = vunpack.c.h.b16 %v875
    %v3546 = vunpack.c.l.b16 %v876
    %v3547 = vunpack.c.h.b16 %v876
    %v3548 = vunpack.c.l.b16 %v877
    %v3549 = vunpack.c.h.b16 %v877
    %v3550 = vunpack.c.l.b16 %v878
    %v3551 = vunpack.c.h.b16 %v878
    %v3552 = vunpack.c.l.b16 %v879
    %v3553 = vunpack.c.h.b16 %v879
    %v3554 = vunpack.c.l.b16 %v880
    %v3555 = vunpack.c.h.b16 %v880
    %v3556 = vunpack.c.l.b16 %v881
    %v3557 = vunpack.c.h.b16 %v881
    %v3558 = vunpack.c.l.b16 %v882
    %v3559 = vunpack.c.h.b16 %v882
    %v3560 = vunpack.c.l.b16 %v883
    %v3561 = vunpack.c.h.b16 %v883
    %v3562 = vunpack.c.l.b16 %v884
    %v3563 = vunpack.c.h.b16 %v884
    %v3564 = vunpack.c.l.b16 %v885
    %v3565 = vunpack.c.h.b16 %v885
    %v3566 = vunpack.c.l.b16 %v886
    %v3567 = vunpack.c.h.b16 %v886
    %v3568 = vunpack.c.l.b16 %v887
    %v3569 = vunpack.c.h.b16 %v887
    %v3570 = vunpack.c.l.b16 %v888
    %v3571 = vunpack.c.h.b16 %v888
    %v3572 = vunpack.c.l.b16 %v889
    %v3573 = vunpack.c.h.b16 %v889
    %v3574 = vunpack.c.l.b16 %v890
    %v3575 = vunpack.c.h.b16 %v890
    %v3576 = vunpack.c.l.b16 %v891
    %v3577 = vunpack.c.h.b16 %v891
    %v3578 = vunpack.c.l.b16 %v892
    %v3579 = vunpack.c.h.b16 %v892
    %v3580 = vunpack.c.l.b16 %v893
    %v3581 = vunpack.c.h.b16 %v893
    %v3582 = vunpack.c.l.b16 %v894
    %v3583 = vunpack.c.h.b16 %v894
    %v3584 = vunpack.c.l.b16 %v895
    %v3585 = vunpack.c.h.b16 %v895
    %v3586 = vunpack.c.l.b16 %v896
    %v3587 = vunpack.c.h.b16 %v896
    %v3588 = vunpack.c.l.b16 %v897
    %v3589 = vunpack.c.h.b16 %v897
    %v3590 = vunpack.c.l.b16 %v898
    %v3591 = vunpack.c.h.b16 %v898
    %v3592 = vunpack.c.l.b16 %v899
    %v3593 = vunpack.c.h.b16 %v899
    %v3594 = vunpack.c.l.b16 %v900
    %v3595 = vunpack.c.h.b16 %v900
    %v3596 = vunpack.c.l.b16 %v901
    %v3597 = vunpack.c.h.b16 %v901
    %v3598 = vunpack.c.l.b16 %v902
    %v3599 = vunpack.c.h.b16 %v902
    %v3600 = vunpack.c.l.b16 %v903
    %v3601 = vunpack.c.h.b16 %v903
    %v3602 = vunpack.c.l.b16 %v904
    %v3603 = vunpack.c.h.b16 %v904
    %v3604 = vunpack.c.l.b16 %v905
    %v3605 = vunpack.c.h.b16 %v905
    %v3606 = vunpack.c.l.b16 %v906
    %v3607 = vunpack.c.h.b16 %v906
    %v3608 = vunpack.c.l.b16 %v907
    %v3609 = vunpack.c.h.b16 %v907
    %v3610 = vunpack.c.l.b16 %v908
    %v3611 = vunpack.c.h.b16 %v908
    %v3612 = vunpack.c.l.b16 %v909
    %v3613 = vunpack.c.h.b16 %v909
    %v3614 = vunpack.c.l.b16 %v910
    %v3615 = vunpack.c.h.b16 %v910
    %v3616 = vunpack.c.l.b16 %v911
    %v3617 = vunpack.c.h.b16 %v911
    %v3618 = vunpack.c.l.b16 %v912
    %v3619 = vunpack.c.h.b16 %v912
    %v3620 = vunpack.c.l.b16 %v913
    %v3621 = vunpack.c.h.b16 %v913
    %v3622 = vunpack.c.l.b16 %v914
    %v3623 = vunpack.c.h.b16 %v914
    %v3624 = vunpack.c.l.b16 %v915
    %v3625 = vunpack.c.h.b16 %v915
    %v3626 = vunpack.c.l.b16 %v916
    %v3627 = vunpack.c.h.b16 %v916
    %v3628 = vunpack.c.l.b16 %v917
    %v3629 = vunpack.c.h.b16 %v917
    %v3630 = vunpack.c.l.b16 %v918
    %v3631 = vunpack.c.h.b16 %v918
    %v3632 = vunpack.c.l.b16 %v919
    %v3633 = vunpack.c.h.b16 %v919
    %v3634 = vunpack.c.l.b16 %v920
    %v3635 = vunpack.c.h.b16 %v920
    %v3636 = vunpack.c.l.b16 %v921
    %v3637 = vunpack.c.h.b16 %v921
    %v3638 = vunpack.c.l.b16 %v922
    %v3639 = vunpack.c.h.b16 %v922
    %v3640 = vunpack.c.l.b16 %v923
    %v3641 = vunpack.c.h.b16 %v923
    %v3642 = vunpack.c.l.b16 %v924
    %v3643 = vunpack.c.h.b16 %v924
    %v3644 = vunpack.c.l.b16 %v925
    %v3645 = vunpack.c.h.b16 %v925
    %v3646 = vunpack.c.l.b16 %v926
    %v3647 = vunpack.c.h.b16 %v926
    %v3648 = vunpack.c.l.b16 %v927
    %v3649 = vunpack.c.h.b16 %v927
    %v3650 = vunpack.c.l.b16 %v928
    %v3651 = vunpack.c.h.b16 %v928
    %v3652 = vunpack.c.l.b16 %v929
    %v3653 = vunpack.c.h.b16 %v929
    %v3654 = vunpack.c.l.b16 %v930
    %v3655 = vunpack.c.h.b16 %v930
    %v3656 = vunpack.c.l.b16 %v931
    %v3657 = vunpack.c.h.b16 %v931
    %v3658 = vunpack.c.l.b16 %v932
    %v3659 = vunpack.c.h.b16 %v932
    %v3660 = vunpack.c.l.b16 %v933
    %v3661 = vunpack.c.h.b16 %v933
    %v3662 = vunpack.c.l.b16 %v934
    %v3663 = vunpack.c.h.b16 %v934
    %v3664 = vunpack.c.l.b16 %v935
    %v3665 = vunpack.c.h.b16 %v935
    %v3666 = vunpack.c.l.b16 %v936
    %v3667 = vunpack.c.h.b16 %v936
    %v3668 = vunpack.c.l.b16 %v937
    %v3669 = vunpack.c.h.b16 %v937
    %v3670 = vunpack.c.l.b16 %v938
    %v3671 = vunpack.c.h.b16 %v938
    %v3672 = vunpack.c.l.b16 %v939
    %v3673 = vunpack.c.h.b16 %v939
    %v3674 = vunpack.c.l.b16 %v940
    %v3675 = vunpack.c.h.b16 %v940
    %v3676 = vunpack.c.l.b16 %v941
    %v3677 = vunpack.c.h.b16 %v941
    %v3678 = vunpack.c.l.b16 %v942
    %v3679 = vunpack.c.h.b16 %v942
    %v3680 = vunpack.c.l.b16 %v943
    %v3681 = vunpack.c.h.b16 %v943
    %v3682 = vunpack.c.l.b16 %v944
    %v3683 = vunpack.c.h.b16 %v944
    %v3684 = vunpack.c.l.b16 %v945
    %v3685 = vunpack.c.h.b16 %v945
    %v3686 = vunpack.c.l.b16 %v946
    %v3687 = vunpack.c.h.b16 %v946
    %v3688 = vunpack.c.l.b16 %v947
    %v3689 = vunpack.c.h.b16 %v947
    %v3690 = vunpack.c.l.b16 %v948
    %v3691 = vunpack.c.h.b16 %v948
    %v3692 = vunpack.c.l.b16 %v949
    %v3693 = vunpack.c.h.b16 %v949
    %v3694 = vunpack.c.l.b16 %v950
    %v3695 = vunpack.c.h.b16 %v950
    %v3696 = vunpack.c.l.b16 %v951
    %v3697 = vunpack.c.h.b16 %v951
    %v3698 = vunpack.c.l.b16 %v952
    %v3699 = vunpack.c.h.b16 %v952
    %v3700 = vunpack.c.l.b16 %v953
    %v3701 = vunpack.c.h.b16 %v953
    %v3702 = vunpack.c.l.b16 %v954
    %v3703 = vunpack.c.h.b16 %v954
    %v3704 = vunpack.c.l.b16 %v955
    %v3705 = vunpack.c.h.b16 %v955
    %v3706 = vunpack.c.l.b16 %v956
    %v3707 = vunpack.c.h.b16 %v956
    %v3708 = vunpack.c.l.b16 %v957
    %v3709 = vunpack.c.h.b16 %v957
    %v3710 = vunpack.c.l.b16 %v958
    %v3711 = vunpack.c.h.b16 %v958
    %v3712 = vunpack.c.l.b16 %v959
    %v3713 = vunpack.c.h.b16 %v959
    %v3714 = vunpack.c.l.b16 %v960
    %v3715 = vunpack.c.h.b16 %v960
    %v3716 = vunpack.c.l.b16 %v961
    %v3717 = vunpack.c.h.b16 %v961
    %v3718 = vunpack.c.l.b16 %v962
    %v3719 = vunpack.c.h.b16 %v962
    %v3720 = vunpack.c.l.b16 %v963
    %v3721 = vunpack.c.h.b16 %v963
    %v3722 = vunpack.c.l.b16 %v964
    %v3723 = vunpack.c.h.b16 %v964
    %v3724 = vunpack.c.l.b16 %v965
    %v3725 = vunpack.c.h.b16 %v965
    %v3726 = vunpack.c.l.b16 %v966
    %v3727 = vunpack.c.h.b16 %v966
    %v3728 = vunpack.c.l.b16 %v967
    %v3729 = vunpack.c.h.b16 %v967
    %v3730 = vunpack.c.l.b16 %v968
    %v3731 = vunpack.c.h.b16 %v968
    %v3732 = vunpack.c.l.b16 %v969
    %v3733 = vunpack.c.h.b16 %v969
    %v3734 = vunpack.c.l.b16 %v970
    %v3735 = vunpack.c.h.b16 %v970
    %v3736 = vunpack.c.l.b16 %v971
    %v3737 = vunpack.c.h.b16 %v971
    %v3738 = vunpack.c.l.b16 %v972
    %v3739 = vunpack.c.h.b16 %v972
    %v3740 = vunpack.c.l.b16 %v973
    %v3741 = vunpack.c.h.b16 %v973
    %v3742 = vunpack.c.l.b16 %v974
    %v3743 = vunpack.c.h.b16 %v974
    %v3744 = vunpack.c.l.b16 %v975
    %v3745 = vunpack.c.h.b16 %v975
    %v3746 = vunpack.c.l.b16 %v976
    %v3747 = vunpack.c.h.b16 %v976
    %v3748 = vunpack.c.l.b16 %v977
    %v3749 = vunpack.c.h.b16 %v977
    %v3750 = vunpack.c.l.b16 %v978
    %v3751 = vunpack.c.h.b16 %v978
    %v3752 = vunpack.c.l.b16 %v979
    %v3753 = vunpack.c.h.b16 %v979
    %v3754 = vunpack.c.l.b16 %v980
    %v3755 = vunpack.c.h.b16 %v980
    %v3756 = vunpack.c.l.b16 %v981
    %v3757 = vunpack.c.h.b16 %v981
    %v3758 = vunpack.c.l.b16 %v982
    %v3759 = vunpack.c.h.b16 %v982
    %v3760 = vunpack.c.l.b16 %v983
    %v3761 = vunpack.c.h.b16 %v983
    %v3762 = vunpack.c.l.b16 %v984
    %v3763 = vunpack.c.h.b16 %v984
    %v3764 = vunpack.c.l.b16 %v985
    %v3765 = vunpack.c.h.b16 %v985
    %v3766 = vunpack.c.l.b16 %v986
    %v3767 = vunpack.c.h.b16 %v986
    %v3768 = vunpack.c.l.b16 %v987
    %v3769 = vunpack.c.h.b16 %v987
    %v3770 = vunpack.c.l.b16 %v988
    %v3771 = vunpack.c.h.b16 %v988
    %v3772 = vunpack.c.l.b16 %v989
    %v3773 = vunpack.c.h.b16 %v989
    %v3774 = vunpack.c.l.b16 %v990
    %v3775 = vunpack.c.h.b16 %v990
    %v3776 = vunpack.c.l.b16 %v991
    %v3777 = vunpack.c.h.b16 %v991
    %v3778 = vunpack.c.l.b16 %v992
    %v3779 = vunpack.c.h.b16 %v992
    %v3780 = vunpack.c.l.b16 %v993
    %v3781 = vunpack.c.h.b16 %v993
    %v3782 = vunpack.c.l.b16 %v994
    %v3783 = vunpack.c.h.b16 %v994
    %v3784 = vunpack.c.l.b16 %v995
    %v3785 = vunpack.c.h.b16 %v995
    %v3786 = vunpack.c.l.b16 %v996
    %v3787 = vunpack.c.h.b16 %v996
    %v3788 = vunpack.c.l.b16 %v997
    %v3789 = vunpack.c.h.b16 %v997
    %v3790 = vunpack.c.l.b16 %v998
    %v3791 = vunpack.c.h.b16 %v998
    %v3792 = vunpack.c.l.b16 %v999
    %v3793 = vunpack.c.h.b16 %v999
    %v3794 = vunpack.c.l.b16 %v1000
    %v3795 = vunpack.c.h.b16 %v1000
    %v3796 = vunpack.c.l.b16 %v1001
    %v3797 = vunpack.c.h.b16 %v1001
    %v3798 = vunpack.c.l.b16 %v1002
    %v3799 = vunpack.c.h.b16 %v1002
    %v3800 = vunpack.c.l.b16 %v1003
    %v3801 = vunpack.c.h.b16 %v1003
    %v3802 = vunpack.c.l.b16 %v1004
    %v3803 = vunpack.c.h.b16 %v1004
    %v3804 = vunpack.c.l.b16 %v1005
    %v3805 = vunpack.c.h.b16 %v1005
    %v3806 = vunpack.c.l.b16 %v1006
    %v3807 = vunpack.c.h.b16 %v1006
    %v3808 = vunpack.c.l.b16 %v1007
    %v3809 = vunpack.c.h.b16 %v1007
    %v3810 = vunpack.c.l.b16 %v1008
    %v3811 = vunpack.c.h.b16 %v1008
    %v3812 = vunpack.c.l.b16 %v1009
    %v3813 = vunpack.c.h.b16 %v1009
    %v3814 = vunpack.c.l.b16 %v1010
    %v3815 = vunpack.c.h.b16 %v1010
    %v3816 = vunpack.c.l.b16 %v1011
    %v3817 = vunpack.c.h.b16 %v1011
    %v3818 = vunpack.c.l.b16 %v1012
    %v3819 = vunpack.c.h.b16 %v1012
    %v3820 = vunpack.c.l.b16 %v1013
    %v3821 = vunpack.c.h.b16 %v1013
    %v3822 = vunpack.c.l.b16 %v1014
    %v3823 = vunpack.c.h.b16 %v1014
    %v3824 = vunpack.c.l.b16 %v1015
    %v3825 = vunpack.c.h.b16 %v1015
    %v3826 = vunpack.c.l.b16 %v1016
    %v3827 = vunpack.c.h.b16 %v1016
    %v3828 = vunpack.c.l.b16 %v1017
    %v3829 = vunpack.c.h.b16 %v1017
    %v3830 = vunpack.c.l.b16 %v1018
    %v3831 = vunpack.c.h.b16 %v1018
    %v3832 = vunpack.c.l.b16 %v1019
    %v3833 = vunpack.c.h.b16 %v1019
    %v3834 = vunpack.c.l.b16 %v1020
    %v3835 = vunpack.c.h.b16 %v1020
    %v3836 = vunpack.c.l.b16 %v1021
    %v3837 = vunpack.c.h.b16 %v1021
    %v3838 = vunpack.c.l.b16 %v1022
    %v3839 = vunpack.c.h.b16 %v1022
    %v3840 = vunpack.c.l.b16 %v1023
    %v3841 = vunpack.c.h.b16 %v1023
    %v3842 = vunpack.c.l.b16 %v1024
    %v3843 = vunpack.c.h.b16 %v1024
    %v3844 = vunpack.c.l.b16 %v1025
    %v3845 = vunpack.c.h.b16 %v1025
    %v3846 = vunpack.c.l.b16 %v1026
    %v3847 = vunpack.c.h.b16 %v1026
    %v3848 = vunpack.c.l.b16 %v1027
    %v3849 = vunpack.c.h.b16 %v1027
    %v3850 = vunpack.c.l.b16 %v1028
    %v3851 = vunpack.c.h.b16 %v1028
    %v3852 = vunpack.c.l.b16 %v1029
    %v3853 = vunpack.c.h.b16 %v1029
    %v3854 = vunpack.c.l.b16 %v1030
    %v3855 = vunpack.c.h.b16 %v1030
    %v3856 = vunpack.c.l.b16 %v1031
    %v3857 = vunpack.c.h.b16 %v1031
    %v3858 = vunpack.c.l.b16 %v1032
    %v3859 = vunpack.c.h.b16 %v1032
    %v3860 = vunpack.c.l.b16 %v1033
    %v3861 = vunpack.c.h.b16 %v1033
    %v3862 = vunpack.c.l.b16 %v1034
    %v3863 = vunpack.c.h.b16 %v1034
    %v3864 = vunpack.c.l.b16 %v1035
    %v3865 = vunpack.c.h.b16 %v1035
    %v3866 = vunpack.c.l.b16 %v1036
    %v3867 = vunpack.c.h.b16 %v1036
    %v3868 = vunpack.c.l.b16 %v1037
    %v3869 = vunpack.c.h.b16 %v1037
    %v3870 = vunpack.c.l.b16 %v1038
    %v3871 = vunpack.c.h.b16 %v1038
    %v3872 = vunpack.c.l.b16 %v1039
    %v3873 = vunpack.c.h.b16 %v1039
    %v3874 = vunpack.c.l.b16 %v1040
    %v3875 = vunpack.c.h.b16 %v1040
    %v3876 = vunpack.c.l.b16 %v1041
    %v3877 = vunpack.c.h.b16 %v1041
    %v3878 = vunpack.c.l.b16 %v1042
    %v3879 = vunpack.c.h.b16 %v1042
    %v3880 = vunpack.c.l.b16 %v1043
    %v3881 = vunpack.c.h.b16 %v1043
    %v3882 = vunpack.c.l.b16 %v1044
    %v3883 = vunpack.c.h.b16 %v1044
    %v3884 = vunpack.c.l.b16 %v1045
    %v3885 = vunpack.c.h.b16 %v1045
    %v3886 = vunpack.c.l.b16 %v1046
    %v3887 = vunpack.c.h.b16 %v1046
    %v3888 = vunpack.c.l.b16 %v1047
    %v3889 = vunpack.c.h.b16 %v1047
    %v3890 = vunpack.c.l.b16 %v1048
    %v3891 = vunpack.c.h.b16 %v1048
    %v3892 = vunpack.c.l.b16 %v1049
    %v3893 = vunpack.c.h.b16 %v1049
    %v3894 = vunpack.c.l.b16 %v1050
    %v3895 = vunpack.c.h.b16 %v1050
    %v3896 = vunpack.c.l.b16 %v1051
    %v3897 = vunpack.c.h.b16 %v1051
    %v3898 = vunpack.c.l.b16 %v1052
    %v3899 = vunpack.c.h.b16 %v1052
    %v3900 = vunpack.c.l.b16 %v1053
    %v3901 = vunpack.c.h.b16 %v1053
    %v3902 = vunpack.c.l.b16 %v1054
    %v3903 = vunpack.c.h.b16 %v1054
    %v3904 = vunpack.c.l.b16 %v1055
    %v3905 = vunpack.c.h.b16 %v1055
    %v3906 = vunpack.c.l.b16 %v1056
    %v3907 = vunpack.c.h.b16 %v1056
    %v3908 = vunpack.c.l.b16 %v1057
    %v3909 = vunpack.c.h.b16 %v1057
    %v3910 = vunpack.c.l.b16 %v1058
    %v3911 = vunpack.c.h.b16 %v1058
    %v3912 = vunpack.c.l.b16 %v1059
    %v3913 = vunpack.c.h.b16 %v1059
    %v3914 = vunpack.c.l.b16 %v1060
    %v3915 = vunpack.c.h.b16 %v1060
    %v3916 = vunpack.c.l.b16 %v1061
    %v3917 = vunpack.c.h.b16 %v1061
    %v3918 = vunpack.c.l.b16 %v1062
    %v3919 = vunpack.c.h.b16 %v1062
    %v3920 = vunpack.c.l.b16 %v1063
    %v3921 = vunpack.c.h.b16 %v1063
    %v3922 = vunpack.c.l.b16 %v1064
    %v3923 = vunpack.c.h.b16 %v1064
    %v3924 = vunpack.c.l.b16 %v1065
    %v3925 = vunpack.c.h.b16 %v1065
    %v3926 = vunpack.c.l.b16 %v1066
    %v3927 = vunpack.c.h.b16 %v1066
    %v3928 = vunpack.c.l.b16 %v1067
    %v3929 = vunpack.c.h.b16 %v1067
    %v3930 = vunpack.c.l.b16 %v1068
    %v3931 = vunpack.c.h.b16 %v1068
    %v3932 = vunpack.c.l.b16 %v1069
    %v3933 = vunpack.c.h.b16 %v1069
    %v3934 = vunpack.c.l.b16 %v1070
    %v3935 = vunpack.c.h.b16 %v1070
    %v3936 = vunpack.c.l.b16 %v1071
    %v3937 = vunpack.c.h.b16 %v1071
    %v3938 = vunpack.c.l.b16 %v1072
    %v3939 = vunpack.c.h.b16 %v1072
    %v3940 = vunpack.c.l.b16 %v1073
    %v3941 = vunpack.c.h.b16 %v1073
    %v3942 = vunpack.c.l.b16 %v1074
    %v3943 = vunpack.c.h.b16 %v1074
    %v3944 = vunpack.c.l.b16 %v1075
    %v3945 = vunpack.c.h.b16 %v1075
    %v3946 = vunpack.c.l.b16 %v1076
    %v3947 = vunpack.c.h.b16 %v1076
    %v3948 = vunpack.c.l.b16 %v1077
    %v3949 = vunpack.c.h.b16 %v1077
    %v3950 = vunpack.c.l.b16 %v1078
    %v3951 = vunpack.c.h.b16 %v1078
    %v3952 = vunpack.c.l.b16 %v1079
    %v3953 = vunpack.c.h.b16 %v1079
    %v3954 = vunpack.c.l.b16 %v1080
    %v3955 = vunpack.c.h.b16 %v1080
    %v3956 = vunpack.c.l.b16 %v1081
    %v3957 = vunpack.c.h.b16 %v1081
    %v3958 = vunpack.c.l.b16 %v1082
    %v3959 = vunpack.c.h.b16 %v1082
    %v3960 = vunpack.c.l.b16 %v1083
    %v3961 = vunpack.c.h.b16 %v1083
    %v3962 = vunpack.c.l.b16 %v1084
    %v3963 = vunpack.c.h.b16 %v1084
    %v3964 = vunpack.c.l.b16 %v1085
    %v3965 = vunpack.c.h.b16 %v1085
    %v3966 = vunpack.c.l.b16 %v1086
    %v3967 = vunpack.c.h.b16 %v1086
    %v3968 = vunpack.c.l.b16 %v1087
    %v3969 = vunpack.c.h.b16 %v1087
    %v3970 = vunpack.c.l.b16 %v1088
    %v3971 = vunpack.c.h.b16 %v1088
    %v3972 = vunpack.c.l.b16 %v1089
    %v3973 = vunpack.c.h.b16 %v1089
    %v3974 = vunpack.c.l.b16 %v1090
    %v3975 = vunpack.c.h.b16 %v1090
    %v3976 = vunpack.c.l.b16 %v1091
    %v3977 = vunpack.c.h.b16 %v1091
    %v3978 = vunpack.c.l.b16 %v1092
    %v3979 = vunpack.c.h.b16 %v1092
    %v3980 = vunpack.c.l.b16 %v1093
    %v3981 = vunpack.c.h.b16 %v1093
    %v3982 = vunpack.c.l.b16 %v1094
    %v3983 = vunpack.c.h.b16 %v1094
    %v3984 = vunpack.c.l.b16 %v1095
    %v3985 = vunpack.c.h.b16 %v1095
    %v3986 = vunpack.c.l.b16 %v1096
    %v3987 = vunpack.c.h.b16 %v1096
    %v3988 = vunpack.c.l.b16 %v1097
    %v3989 = vunpack.c.h.b16 %v1097
    %v3990 = vunpack.c.l.b16 %v1098
    %v3991 = vunpack.c.h.b16 %v1098
    %v3992 = vunpack.c.l.b16 %v1099
    %v3993 = vunpack.c.h.b16 %v1099
    %v3994 = vunpack.c.l.b16 %v1100
    %v3995 = vunpack.c.h.b16 %v1100
    %v3996 = vunpack.c.l.b16 %v1101
    %v3997 = vunpack.c.h.b16 %v1101
    %v3998 = vunpack.c.l.b16 %v1102
    %v3999 = vunpack.c.h.b16 %v1102
    %v4000 = vunpack.c.l.b16 %v1103
    %v4001 = vunpack.c.h.b16 %v1103
    %v4002 = vunpack.c.l.b16 %v1104
    %v4003 = vunpack.c.h.b16 %v1104
    %v4004 = vunpack.c.l.b16 %v1105
    %v4005 = vunpack.c.h.b16 %v1105
    %v4006 = vunpack.c.l.b16 %v1106
    %v4007 = vunpack.c.h.b16 %v1106
    %v4008 = vunpack.c.l.b16 %v1107
    %v4009 = vunpack.c.h.b16 %v1107
    %v4010 = vunpack.c.l.b16 %v1108
    %v4011 = vunpack.c.h.b16 %v1108
    %v4012 = vunpack.c.l.b16 %v1109
    %v4013 = vunpack.c.h.b16 %v1109
    %v4014 = vunpack.c.l.b16 %v1110
    %v4015 = vunpack.c.h.b16 %v1110
    %v4016 = vunpack.c.l.b16 %v1111
    %v4017 = vunpack.c.h.b16 %v1111
    %v4018 = vunpack.c.l.b16 %v1112
    %v4019 = vunpack.c.h.b16 %v1112
    %v4020 = vunpack.c.l.b16 %v1113
    %v4021 = vunpack.c.h.b16 %v1113
    %v4022 = vunpack.c.l.b16 %v1114
    %v4023 = vunpack.c.h.b16 %v1114
    %v4024 = vunpack.c.l.b16 %v1115
    %v4025 = vunpack.c.h.b16 %v1115
    %v4026 = vunpack.c.l.b16 %v1116
    %v4027 = vunpack.c.h.b16 %v1116
    %v4028 = vunpack.c.l.b16 %v1117
    %v4029 = vunpack.c.h.b16 %v1117
    %v4030 = vunpack.c.l.b16 %v1118
    %v4031 = vunpack.c.h.b16 %v1118
    %v4032 = vunpack.c.l.b16 %v1119
    %v4033 = vunpack.c.h.b16 %v1119
    %v4034 = vunpack.c.l.b16 %v1120
    %v4035 = vunpack.c.h.b16 %v1120
    %v4036 = vunpack.c.l.b16 %v1121
    %v4037 = vunpack.c.h.b16 %v1121
    %v4038 = vunpack.c.l.b16 %v1122
    %v4039 = vunpack.c.h.b16 %v1122
    %v4040 = vunpack.c.l.b16 %v1123
    %v4041 = vunpack.c.h.b16 %v1123
    %v4042 = vunpack.c.l.b16 %v1124
    %v4043 = vunpack.c.h.b16 %v1124
    %v4044 = vunpack.c.l.b16 %v1125
    %v4045 = vunpack.c.h.b16 %v1125
    %v4046 = vunpack.c.l.b16 %v1126
    %v4047 = vunpack.c.h.b16 %v1126
    %v4048 = vunpack.c.l.b16 %v1127
    %v4049 = vunpack.c.h.b16 %v1127
    %v4050 = vunpack.c.l.b16 %v1128
    %v4051 = vunpack.c.h.b16 %v1128
    %v4052 = vunpack.c.l.b16 %v1129
    %v4053 = vunpack.c.h.b16 %v1129
    %v4054 = vunpack.c.l.b16 %v1130
    %v4055 = vunpack.c.h.b16 %v1130
    %v4056 = vunpack.c.l.b16 %v1131
    %v4057 = vunpack.c.h.b16 %v1131
    %v4058 = vunpack.c.l.b16 %v1132
    %v4059 = vunpack.c.h.b16 %v1132
    %v4060 = vunpack.c.l.b16 %v1133
    %v4061 = vunpack.c.h.b16 %v1133
    %v4062 = vunpack.c.l.b16 %v1134
    %v4063 = vunpack.c.h.b16 %v1134
    %v4064 = vunpack.c.l.b16 %v1135
    %v4065 = vunpack.c.h.b16 %v1135
    %v4066 = vunpack.c.l.b16 %v1136
    %v4067 = vunpack.c.h.b16 %v1136
    %v4068 = vunpack.c.l.b16 %v1137
    %v4069 = vunpack.c.h.b16 %v1137
    %v4070 = vunpack.c.l.b16 %v1138
    %v4071 = vunpack.c.h.b16 %v1138
    %v4072 = vunpack.c.l.b16 %v1139
    %v4073 = vunpack.c.h.b16 %v1139
    %v4074 = vunpack.c.l.b16 %v1140
    %v4075 = vunpack.c.h.b16 %v1140
    %v4076 = vunpack.c.l.b16 %v1141
    %v4077 = vunpack.c.h.b16 %v1141
    %v4078 = vunpack.c.l.b16 %v1142
    %v4079 = vunpack.c.h.b16 %v1142
    %v4080 = vunpack.c.l.b16 %v1143
    %v4081 = vunpack.c.h.b16 %v1143
    %v4082 = vunpack.c.l.b16 %v1144
    %v4083 = vunpack.c.h.b16 %v1144
    %v4084 = vunpack.c.l.b16 %v1145
    %v4085 = vunpack.c.h.b16 %v1145
    %v4086 = vunpack.c.l.b16 %v1146
    %v4087 = vunpack.c.h.b16 %v1146
    %v4088 = vunpack.c.l.b16 %v1147
    %v4089 = vunpack.c.h.b16 %v1147
    %v4090 = vunpack.c.l.b16 %v1148
    %v4091 = vunpack.c.h.b16 %v1148
    %v4092 = vunpack.c.l.b16 %v1149
    %v4093 = vunpack.c.h.b16 %v1149
    %v4094 = vunpack.c.l.b16 %v1150
    %v4095 = vunpack.c.h.b16 %v1150
    %v4096 = vunpack.c.l.b16 %v1151
    %v4097 = vunpack.c.h.b16 %v1151
    %v4098 = vunpack.c.l.b16 %v1152
    %v4099 = vunpack.c.h.b16 %v1152
    %v4100 = vunpack.c.l.b16 %v1153
    %v4101 = vunpack.c.h.b16 %v1153
    %v4102 = vunpack.c.l.b16 %v1154
    %v4103 = vunpack.c.h.b16 %v1154
    %v4104 = vunpack.c.l.b16 %v1155
    %v4105 = vunpack.c.h.b16 %v1155
    %v4106 = vunpack.c.l.b16 %v1156
    %v4107 = vunpack.c.h.b16 %v1156
    %v4108 = vunpack.c.l.b16 %v1157
    %v4109 = vunpack.c.h.b16 %v1157
    %v4110 = vunpack.c.l.b16 %v1158
    %v4111 = vunpack.c.h.b16 %v1158
    %v4112 = vunpack.c.l.b16 %v1159
    %v4113 = vunpack.c.h.b16 %v1159
    %v4114 = vunpack.c.l.b16 %v1160
    %v4115 = vunpack.c.h.b16 %v1160
    %v4116 = vunpack.c.l.b16 %v1161
    %v4117 = vunpack.c.h.b16 %v1161
    %v4118 = vunpack.c.l.b16 %v1162
    %v4119 = vunpack.c.h.b16 %v1162
    %v4120 = vunpack.c.l.b16 %v1163
    %v4121 = vunpack.c.h.b16 %v1163
    %v4122 = vunpack.c.l.b16 %v1164
    %v4123 = vunpack.c.h.b16 %v1164
    %v4124 = vunpack.c.l.b16 %v1165
    %v4125 = vunpack.c.h.b16 %v1165
    %v4126 = vunpack.c.l.b16 %v1166
    %v4127 = vunpack.c.h.b16 %v1166
    %v4128 = vunpack.c.l.b16 %v1167
    %v4129 = vunpack.c.h.b16 %v1167
    %v4130 = vunpack.c.l.b16 %v1168
    %v4131 = vunpack.c.h.b16 %v1168
    %v4132 = vunpack.c.l.b16 %v1169
    %v4133 = vunpack.c.h.b16 %v1169
    %v4134 = vunpack.c.l.b16 %v1170
    %v4135 = vunpack.c.h.b16 %v1170
    %v4136 = vunpack.c.l.b16 %v1171
    %v4137 = vunpack.c.h.b16 %v1171
    %v4138 = vunpack.c.l.b16 %v1172
    %v4139 = vunpack.c.h.b16 %v1172
    %v4140 = vunpack.c.l.b16 %v1173
    %v4141 = vunpack.c.h.b16 %v1173
    %v4142 = vunpack.c.l.b16 %v1174
    %v4143 = vunpack.c.h.b16 %v1174
    %v4144 = vunpack.c.l.b16 %v1175
    %v4145 = vunpack.c.h.b16 %v1175
    %v4146 = vunpack.c.l.b16 %v1176
    %v4147 = vunpack.c.h.b16 %v1176
    %v4148 = vunpack.c.l.b16 %v1177
    %v4149 = vunpack.c.h.b16 %v1177
    %v4150 = vunpack.c.l.b16 %v1178
    %v4151 = vunpack.c.h.b16 %v1178
    %v4152 = vunpack.c.l.b16 %v1179
    %v4153 = vunpack.c.h.b16 %v1179
    %v4154 = vunpack.c.l.b16 %v1180
    %v4155 = vunpack.c.h.b16 %v1180
    %v4156 = vunpack.c.l.b16 %v1181
    %v4157 = vunpack.c.h.b16 %v1181
    %v4158 = vunpack.c.l.b16 %v1182
    %v4159 = vunpack.c.h.b16 %v1182
    %v4160 = vunpack.c.l.b16 %v1183
    %v4161 = vunpack.c.h.b16 %v1183
    %v4162 = vunpack.c.l.b16 %v1184
    %v4163 = vunpack.c.h.b16 %v1184
    %v4164 = vunpack.c.l.b16 %v1185
    %v4165 = vunpack.c.h.b16 %v1185
    %v4166 = vunpack.c.l.b16 %v1186
    %v4167 = vunpack.c.h.b16 %v1186
    %v4168 = vunpack.c.l.b16 %v1187
    %v4169 = vunpack.c.h.b16 %v1187
    %v4170 = vunpack.c.l.b16 %v1188
    %v4171 = vunpack.c.h.b16 %v1188
    %v4172 = vunpack.c.l.b16 %v1189
    %v4173 = vunpack.c.h.b16 %v1189
    %v4174 = vunpack.c.l.b16 %v1190
    %v4175 = vunpack.c.h.b16 %v1190
    %v4176 = vunpack.c.l.b16 %v1191
    %v4177 = vunpack.c.h.b16 %v1191
    %v4178 = vunpack.c.l.b16 %v1192
    %v4179 = vunpack.c.h.b16 %v1192
    %v4180 = vunpack.c.l.b16 %v1193
    %v4181 = vunpack.c.h.b16 %v1193
    %v4182 = vunpack.c.l.b16 %v1194
    %v4183 = vunpack.c.h.b16 %v1194
    %v4184 = vunpack.c.l.b16 %v1195
    %v4185 = vunpack.c.h.b16 %v1195
    %v4186 = vunpack.c.l.b16 %v1196
    %v4187 = vunpack.c.h.b16 %v1196
    %v4188 = vunpack.c.l.b16 %v1197
    %v4189 = vunpack.c.h.b16 %v1197
    %v4190 = vunpack.c.l.b16 %v1198
    %v4191 = vunpack.c.h.b16 %v1198
    %v4192 = vunpack.c.l.b16 %v1199
    %v4193 = vunpack.c.h.b16 %v1199
    %v4194 = vunpack.c.l.b16 %v1200
    %v4195 = vunpack.c.h.b16 %v1200
    %v4196 = vunpack.c.l.b16 %v1201
    %v4197 = vunpack.c.h.b16 %v1201
    %v4198 = vunpack.c.l.b16 %v1202
    %v4199 = vunpack.c.h.b16 %v1202
    %v4200 = vunpack.c.l.b16 %v1203
    %v4201 = vunpack.c.h.b16 %v1203
    %v4202 = vunpack.c.l.b16 %v1204
    %v4203 = vunpack.c.h.b16 %v1204
    %v4204 = vunpack.c.l.b16 %v1205
    %v4205 = vunpack.c.h.b16 %v1205
    %v4206 = vunpack.c.l.b16 %v1206
    %v4207 = vunpack.c.h.b16 %v1206
    %v4208 = vunpack.c.l.b16 %v1207
    %v4209 = vunpack.c.h.b16 %v1207
    %v4210 = vunpack.c.l.b16 %v1208
    %v4211 = vunpack.c.h.b16 %v1208
    %v4212 = vunpack.c.l.b16 %v1209
    %v4213 = vunpack.c.h.b16 %v1209
    %v4214 = vunpack.c.l.b16 %v1210
    %v4215 = vunpack.c.h.b16 %v1210
    %v4216 = vunpack.c.l.b16 %v1211
    %v4217 = vunpack.c.h.b16 %v1211
    %v4218 = vunpack.c.l.b16 %v1212
    %v4219 = vunpack.c.h.b16 %v1212
    %v4220 = vunpack.c.l.b16 %v1213
    %v4221 = vunpack.c.h.b16 %v1213
    %v4222 = vunpack.c.l.b16 %v1214
    %v4223 = vunpack.c.h.b16 %v1214
    %v4224 = vunpack.c.l.b16 %v1215
    %v4225 = vunpack.c.h.b16 %v1215
    %v4226 = vunpack.c.l.b16 %v1216
    %v4227 = vunpack.c.h.b16 %v1216
    %v4228 = vunpack.c.l.b16 %v1217
    %v4229 = vunpack.c.h.b16 %v1217
    %v4230 = vunpack.c.l.b16 %v1218
    %v4231 = vunpack.c.h.b16 %v1218
    %v4232 = vunpack.c.l.b16 %v1219
    %v4233 = vunpack.c.h.b16 %v1219
    %v4234 = vunpack.c.l.b16 %v1220
    %v4235 = vunpack.c.h.b16 %v1220
    %v4236 = vunpack.c.l.b16 %v1221
    %v4237 = vunpack.c.h.b16 %v1221
    %v4238 = vunpack.c.l.b16 %v1222
    %v4239 = vunpack.c.h.b16 %v1222
    %v4240 = vunpack.c.l.b16 %v1223
    %v4241 = vunpack.c.h.b16 %v1223
    %v4242 = vunpack.c.l.b16 %v1224
    %v4243 = vunpack.c.h.b16 %v1224
    %v4244 = vunpack.c.l.b16 %v1225
    %v4245 = vunpack.c.h.b16 %v1225
    %v4246 = vunpack.c.l.b16 %v1226
    %v4247 = vunpack.c.h.b16 %v1226
    %v4248 = vunpack.c.l.b16 %v1227
    %v4249 = vunpack.c.h.b16 %v1227
    %v4250 = vunpack.c.l.b16 %v1228
    %v4251 = vunpack.c.h.b16 %v1228
    %v4252 = vunpack.c.l.b16 %v1229
    %v4253 = vunpack.c.h.b16 %v1229
    %v4254 = vunpack.c.l.b16 %v1230
    %v4255 = vunpack.c.h.b16 %v1230
    %v4256 = vunpack.c.l.b16 %v1231
    %v4257 = vunpack.c.h.b16 %v1231
    %v4258 = vunpack.c.l.b16 %v1232
    %v4259 = vunpack.c.h.b16 %v1232
    %v4260 = vunpack.c.l.b16 %v1233
    %v4261 = vunpack.c.h.b16 %v1233
    %v4262 = vunpack.c.l.b16 %v1234
    %v4263 = vunpack.c.h.b16 %v1234
    %v4264 = vunpack.c.l.b16 %v1235
    %v4265 = vunpack.c.h.b16 %v1235
    %v4266 = vunpack.c.l.b16 %v1236
    %v4267 = vunpack.c.h.b16 %v1236
    %v4268 = vunpack.c.l.b16 %v1237
    %v4269 = vunpack.c.h.b16 %v1237
    %v4270 = vunpack.c.l.b16 %v1238
    %v4271 = vunpack.c.h.b16 %v1238
    %v4272 = vunpack.c.l.b16 %v1239
    %v4273 = vunpack.c.h.b16 %v1239
    %v4274 = vunpack.c.l.b16 %v1240
    %v4275 = vunpack.c.h.b16 %v1240
    %v4276 = vunpack.c.l.b16 %v1241
    %v4277 = vunpack.c.h.b16 %v1241
    %v4278 = vunpack.c.l.b16 %v1242
    %v4279 = vunpack.c.h.b16 %v1242
    %v4280 = vunpack.c.l.b16 %v1243
    %v4281 = vunpack.c.h.b16 %v1243
    %v4282 = vunpack.c.l.b16 %v1244
    %v4283 = vunpack.c.h.b16 %v1244
    %v4284 = vunpack.c.l.b16 %v1245
    %v4285 = vunpack.c.h.b16 %v1245
    %v4286 = vunpack.c.l.b16 %v1246
    %v4287 = vunpack.c.h.b16 %v1246
    %v4288 = vunpack.c.l.b16 %v1247
    %v4289 = vunpack.c.h.b16 %v1247
    %v4290 = vunpack.c.l.b16 %v1248
    %v4291 = vunpack.c.h.b16 %v1248
    %v4292 = vunpack.c.l.b16 %v1249
    %v4293 = vunpack.c.h.b16 %v1249
    %v4294 = vunpack.c.l.b16 %v1250
    %v4295 = vunpack.c.h.b16 %v1250
    %v4296 = vunpack.c.l.b16 %v1251
    %v4297 = vunpack.c.h.b16 %v1251
    %v4298 = vunpack.c.l.b16 %v1252
    %v4299 = vunpack.c.h.b16 %v1252
    %v4300 = vunpack.c.l.b16 %v1253
    %v4301 = vunpack.c.h.b16 %v1253
    %v4302 = vunpack.c.l.b16 %v1254
    %v4303 = vunpack.c.h.b16 %v1254
    %v4304 = vunpack.c.l.b16 %v1255
    %v4305 = vunpack.c.h.b16 %v1255
    %v4306 = vunpack.c.l.b16 %v1256
    %v4307 = vunpack.c.h.b16 %v1256
    %v4308 = vunpack.c.l.b16 %v1257
    %v4309 = vunpack.c.h.b16 %v1257
    %v4310 = vunpack.c.l.b16 %v1258
    %v4311 = vunpack.c.h.b16 %v1258
    %v4312 = vunpack.c.l.b16 %v1259
    %v4313 = vunpack.c.h.b16 %v1259
    %v4314 = vunpack.c.l.b16 %v1260
    %v4315 = vunpack.c.h.b16 %v1260
    %v4316 = vunpack.c.l.b16 %v1261
    %v4317 = vunpack.c.h.b16 %v1261
    %v4318 = vunpack.c.l.b16 %v1262
    %v4319 = vunpack.c.h.b16 %v1262
    %v4320 = vunpack.c.l.b16 %v1263
    %v4321 = vunpack.c.h.b16 %v1263
    %v4322 = vunpack.c.l.b16 %v1264
    %v4323 = vunpack.c.h.b16 %v1264
    %v4324 = vunpack.c.l.b16 %v1265
    %v4325 = vunpack.c.h.b16 %v1265
    %v4326 = vunpack.c.l.b16 %v1266
    %v4327 = vunpack.c.h.b16 %v1266
    %v4328 = vunpack.c.l.b16 %v1267
    %v4329 = vunpack.c.h.b16 %v1267
    %v4330 = vunpack.c.l.b16 %v1268
    %v4331 = vunpack.c.h.b16 %v1268
    %v4332 = vunpack.c.l.b16 %v1269
    %v4333 = vunpack.c.h.b16 %v1269
    %v4334 = vunpack.c.l.b16 %v1270
    %v4335 = vunpack.c.h.b16 %v1270
    %v4336 = vunpack.c.l.b16 %v1271
    %v4337 = vunpack.c.h.b16 %v1271
    %v4338 = vunpack.c.l.b16 %v1272
    %v4339 = vunpack.c.h.b16 %v1272
    %v4340 = vunpack.c.l.b16 %v1273
    %v4341 = vunpack.c.h.b16 %v1273
    %v4342 = vunpack.c.l.b16 %v1274
    %v4343 = vunpack.c.h.b16 %v1274
    %v4344 = vunpack.c.l.b16 %v1275
    %v4345 = vunpack.c.h.b16 %v1275
    %v4346 = vunpack.c.l.b16 %v1276
    %v4347 = vunpack.c.h.b16 %v1276
    %v4348 = vunpack.c.l.b16 %v1277
    %v4349 = vunpack.c.h.b16 %v1277
    %v4350 = vpack.c.b16 %v2304, %v2302
    %v4351 = vpack.c.b16 %v2305, %v2303
    %v4352 = vpack.c.b16 %v2308, %v2306
    %v4353 = vpack.c.b16 %v2309, %v2307
    %v4354 = vpack.c.b16 %v2312, %v2310
    %v4355 = vpack.c.b16 %v2313, %v2311
    %v4356 = vpack.c.b16 %v2316, %v2314
    %v4357 = vpack.c.b16 %v2317, %v2315
    %v4358 = vpack.c.b16 %v2320, %v2318
    %v4359 = vpack.c.b16 %v2321, %v2319
    %v4360 = vpack.c.b16 %v2324, %v2322
    %v4361 = vpack.c.b16 %v2325, %v2323
    %v4362 = vpack.c.b16 %v2328, %v2326
    %v4363 = vpack.c.b16 %v2329, %v2327
    %v4364 = vpack.c.b16 %v2332, %v2330
    %v4365 = vpack.c.b16 %v2333, %v2331
    %v4366 = vpack.c.b16 %v2336, %v2334
    %v4367 = vpack.c.b16 %v2337, %v2335
    %v4368 = vpack.c.b16 %v2340, %v2338
    %v4369 = vpack.c.b16 %v2341, %v2339
    %v4370 = vpack.c.b16 %v2344, %v2342
    %v4371 = vpack.c.b16 %v2345, %v2343
    %v4372 = vpack.c.b16 %v2348, %v2346
    %v4373 = vpack.c.b16 %v2349, %v2347
    %v4374 = vpack.c.b16 %v2352, %v2350
    %v4375 = vpack.c.b16 %v2353, %v2351
    %v4376 = vpack.c.b16 %v2356, %v2354
    %v4377 = vpack.c.b16 %v2357, %v2355
    %v4378 = vpack.c.b16 %v2360, %v2358
    %v4379 = vpack.c.b16 %v2361, %v2359
    %v4380 = vpack.c.b16 %v2364, %v2362
    %v4381 = vpack.c.b16 %v2365, %v2363
    %v4382 = vpack.c.b16 %v2368, %v2366
    %v4383 = vpack.c.b16 %v2369, %v2367
    %v4384 = vpack.c.b16 %v2372, %v2370
    %v4385 = vpack.c.b16 %v2373, %v2371
    %v4386 = vpack.c.b16 %v2376, %v2374
    %v4387 = vpack.c.b16 %v2377, %v2375
    %v4388 = vpack.c.b16 %v2380, %v2378
    %v4389 = vpack.c.b16 %v2381, %v2379
    %v4390 = vpack.c.b16 %v2384, %v2382
    %v4391 = vpack.c.b16 %v2385, %v2383
    %v4392 = vpack.c.b16 %v2388, %v2386
    %v4393 = vpack.c.b16 %v2389, %v2387
    %v4394 = vpack.c.b16 %v2392, %v2390
    %v4395 = vpack.c.b16 %v2393, %v2391
    %v4396 = vpack.c.b16 %v2396, %v2394
    %v4397 = vpack.c.b16 %v2397, %v2395
    %v4398 = vpack.c.b16 %v2400, %v2398
    %v4399 = vpack.c.b16 %v2401, %v2399
    %v4400 = vpack.c.b16 %v2404, %v2402
    %v4401 = vpack.c.b16 %v2405, %v2403
    %v4402 = vpack.c.b16 %v2408, %v2406
    %v4403 = vpack.c.b16 %v2409, %v2407
    %v4404 = vpack.c.b16 %v2412, %v2410
    %v4405 = vpack.c.b16 %v2413, %v2411
    %v4406 = vpack.c.b16 %v2416, %v2414
    %v4407 = vpack.c.b16 %v2417, %v2415
    %v4408 = vpack.c.b16 %v2420, %v2418
    %v4409 = vpack.c.b16 %v2421, %v2419
    %v4410 = vpack.c.b16 %v2424, %v2422
    %v4411 = vpack.c.b16 %v2425, %v2423
    %v4412 = vpack.c.b16 %v2428, %v2426
    %v4413 = vpack.c.b16 %v2429, %v2427
    %v4414 = vpack.c.b16 %v2432, %v2430
    %v4415 = vpack.c.b16 %v2433, %v2431
    %v4416 = vpack.c.b16 %v2436, %v2434
    %v4417 = vpack.c.b16 %v2437, %v2435
    %v4418 = vpack.c.b16 %v2440, %v2438
    %v4419 = vpack.c.b16 %v2441, %v2439
    %v4420 = vpack.c.b16 %v2444, %v2442
    %v4421 = vpack.c.b16 %v2445, %v2443
    %v4422 = vpack.c.b16 %v2448, %v2446
    %v4423 = vpack.c.b16 %v2449, %v2447
    %v4424 = vpack.c.b16 %v2452, %v2450
    %v4425 = vpack.c.b16 %v2453, %v2451
    %v4426 = vpack.c.b16 %v2456, %v2454
    %v4427 = vpack.c.b16 %v2457, %v2455
    %v4428 = vpack.c.b16 %v2460, %v2458
    %v4429 = vpack.c.b16 %v2461, %v2459
    %v4430 = vpack.c.b16 %v2464, %v2462
    %v4431 = vpack.c.b16 %v2465, %v2463
    %v4432 = vpack.c.b16 %v2468, %v2466
    %v4433 = vpack.c.b16 %v2469, %v2467
    %v4434 = vpack.c.b16 %v2472, %v2470
    %v4435 = vpack.c.b16 %v2473, %v2471
    %v4436 = vpack.c.b16 %v2476, %v2474
    %v4437 = vpack.c.b16 %v2477, %v2475
    %v4438 = vpack.c.b16 %v2480, %v2478
    %v4439 = vpack.c.b16 %v2481, %v2479
    %v4440 = vpack.c.b16 %v2484, %v2482
    %v4441 = vpack.c.b16 %v2485, %v2483
    %v4442 = vpack.c.b16 %v2488, %v2486
    %v4443 = vpack.c.b16 %v2489, %v2487
    %v4444 = vpack.c.b16 %v2492, %v2490
    %v4445 = vpack.c.b16 %v2493, %v2491
    %v4446 = vpack.c.b16 %v2496, %v2494
    %v4447 = vpack.c.b16 %v2497, %v2495
    %v4448 = vpack.c.b16 %v2500, %v2498
    %v4449 = vpack.c.b16 %v2501, %v2499
    %v4450 = vpack.c.b16 %v2504, %v2502
    %v4451 = vpack.c.b16 %v2505, %v2503
    %v4452 = vpack.c.b16 %v2508, %v2506
    %v4453 = vpack.c.b16 %v2509, %v2507
    %v4454 = vpack.c.b16 %v2512, %v2510
    %v4455 = vpack.c.b16 %v2513, %v2511
    %v4456 = vpack.c.b16 %v2516, %v2514
    %v4457 = vpack.c.b16 %v2517, %v2515
    %v4458 = vpack.c.b16 %v2520, %v2518
    %v4459 = vpack.c.b16 %v2521, %v2519
    %v4460 = vpack.c.b16 %v2524, %v2522
    %v4461 = vpack.c.b16 %v2525, %v2523
    %v4462 = vpack.c.b16 %v2528, %v2526
    %v4463 = vpack.c.b16 %v2529, %v2527
    %v4464 = vpack.c.b16 %v2532, %v2530
    %v4465 = vpack.c.b16 %v2533, %v2531
    %v4466 = vpack.c.b16 %v2536, %v2534
    %v4467 = vpack.c.b16 %v2537, %v2535
    %v4468 = vpack.c.b16 %v2540, %v2538
    %v4469 = vpack.c.b16 %v2541, %v2539
    %v4470 = vpack.c.b16 %v2544, %v2542
    %v4471 = vpack.c.b16 %v2545, %v2543
    %v4472 = vpack.c.b16 %v2548, %v2546
    %v4473 = vpack.c.b16 %v2549, %v2547
    %v4474 = vpack.c.b16 %v2552, %v2550
    %v4475 = vpack.c.b16 %v2553, %v2551
    %v4476 = vpack.c.b16 %v2556, %v2554
    %v4477 = vpack.c.b16 %v2557, %v2555
    %v4478 = vpack.c.b16 %v2560, %v2558
    %v4479 = vpack.c.b16 %v2561, %v2559
    %v4480 = vpack.c.b16 %v2564, %v2562
    %v4481 = vpack.c.b16 %v2565, %v2563
    %v4482 = vpack.c.b16 %v2568, %v2566
    %v4483 = vpack.c.b16 %v2569, %v2567
    %v4484 = vpack.c.b16 %v2572, %v2570
    %v4485 = vpack.c.b16 %v2573, %v2571
    %v4486 = vpack.c.b16 %v2576, %v2574
    %v4487 = vpack.c.b16 %v2577, %v2575
    %v4488 = vpack.c.b16 %v2580, %v2578
    %v4489 = vpack.c.b16 %v2581, %v2579
    %v4490 = vpack.c.b16 %v2584, %v2582
    %v4491 = vpack.c.b16 %v2585, %v2583
    %v4492 = vpack.c.b16 %v2588, %v2586
    %v4493 = vpack.c.b16 %v2589, %v2587
    %v4494 = vpack.c.b16 %v2592, %v2590
    %v4495 = vpack.c.b16 %v2593, %v2591
    %v4496 = vpack.c.b16 %v2596, %v2594
    %v4497 = vpack.c.b16 %v2597, %v2595
    %v4498 = vpack.c.b16 %v2600, %v2598
    %v4499 = vpack.c.b16 %v2601, %v2599
    %v4500 = vpack.c.b16 %v2604, %v2602
    %v4501 = vpack.c.b16 %v2605, %v2603
    %v4502 = vpack.c.b16 %v2608, %v2606
    %v4503 = vpack.c.b16 %v2609, %v2607
    %v4504 = vpack.c.b16 %v2612, %v2610
    %v4505 = vpack.c.b16 %v2613, %v2611
    %v4506 = vpack.c.b16 %v2616, %v2614
    %v4507 = vpack.c.b16 %v2617, %v2615
    %v4508 = vpack.c.b16 %v2620, %v2618
    %v4509 = vpack.c.b16 %v2621, %v2619
    %v4510 = vpack.c.b16 %v2624, %v2622
    %v4511 = vpack.c.b16 %v2625, %v2623
    %v4512 = vpack.c.b16 %v2628, %v2626
    %v4513 = vpack.c.b16 %v2629, %v2627
    %v4514 = vpack.c.b16 %v2632, %v2630
    %v4515 = vpack.c.b16 %v2633, %v2631
    %v4516 = vpack.c.b16 %v2636, %v2634
    %v4517 = vpack.c.b16 %v2637, %v2635
    %v4518 = vpack.c.b16 %v2640, %v2638
    %v4519 = vpack.c.b16 %v2641, %v2639
    %v4520 = vpack.c.b16 %v2644, %v2642
    %v4521 = vpack.c.b16 %v2645, %v2643
    %v4522 = vpack.c.b16 %v2648, %v2646
    %v4523 = vpack.c.b16 %v2649, %v2647
    %v4524 = vpack.c.b16 %v2652, %v2650
    %v4525 = vpack.c.b16 %v2653, %v2651
    %v4526 = vpack.c.b16 %v2656, %v2654
    %v4527 = vpack.c.b16 %v2657, %v2655
    %v4528 = vpack.c.b16 %v2660, %v2658
    %v4529 = vpack.c.b16 %v2661, %v2659
    %v4530 = vpack.c.b16 %v2664, %v2662
    %v4531 = vpack.c.b16 %v2665, %v2663
    %v4532 = vpack.c.b16 %v2668, %v2666
    %v4533 = vpack.c.b16 %v2669, %v2667
    %v4534 = vpack.c.b16 %v2672, %v2670
    %v4535 = vpack.c.b16 %v2673, %v2671
    %v4536 = vpack.c.b16 %v2676, %v2674
    %v4537 = vpack.c.b16 %v2677, %v2675
    %v4538 = vpack.c.b16 %v2680, %v2678
    %v4539 = vpack.c.b16 %v2681, %v2679
    %v4540 = vpack.c.b16 %v2684, %v2682
    %v4541 = vpack.c.b16 %v2685, %v2683
    %v4542 = vpack.c.b16 %v2688, %v2686
    %v4543 = vpack.c.b16 %v2689, %v2687
    %v4544 = vpack.c.b16 %v2692, %v2690
    %v4545 = vpack.c.b16 %v2693, %v2691
    %v4546 = vpack.c.b16 %v2696, %v2694
    %v4547 = vpack.c.b16 %v2697, %v2695
    %v4548 = vpack.c.b16 %v2700, %v2698
    %v4549 = vpack.c.b16 %v2701, %v2699
    %v4550 = vpack.c.b16 %v2704, %v2702
    %v4551 = vpack.c.b16 %v2705, %v2703
    %v4552 = vpack.c.b16 %v2708, %v2706
    %v4553 = vpack.c.b16 %v2709, %v2707
    %v4554 = vpack.c.b16 %v2712, %v2710
    %v4555 = vpack.c.b16 %v2713, %v2711
    %v4556 = vpack.c.b16 %v2716, %v2714
    %v4557 = vpack.c.b16 %v2717, %v2715
    %v4558 = vpack.c.b16 %v2720, %v2718
    %v4559 = vpack.c.b16 %v2721, %v2719
    %v4560 = vpack.c.b16 %v2724, %v2722
    %v4561 = vpack.c.b16 %v2725, %v2723
    %v4562 = vpack.c.b16 %v2728, %v2726
    %v4563 = vpack.c.b16 %v2729, %v2727
    %v4564 = vpack.c.b16 %v2732, %v2730
    %v4565 = vpack.c.b16 %v2733, %v2731
    %v4566 = vpack.c.b16 %v2736, %v2734
    %v4567 = vpack.c.b16 %v2737, %v2735
    %v4568 = vpack.c.b16 %v2740, %v2738
    %v4569 = vpack.c.b16 %v2741, %v2739
    %v4570 = vpack.c.b16 %v2744, %v2742
    %v4571 = vpack.c.b16 %v2745, %v2743
    %v4572 = vpack.c.b16 %v2748, %v2746
    %v4573 = vpack.c.b16 %v2749, %v2747
    %v4574 = vpack.c.b16 %v2752, %v2750
    %v4575 = vpack.c.b16 %v2753, %v2751
    %v4576 = vpack.c.b16 %v2756, %v2754
    %v4577 = vpack.c.b16 %v2757, %v2755
    %v4578 = vpack.c.b16 %v2760, %v2758
    %v4579 = vpack.c.b16 %v2761, %v2759
    %v4580 = vpack.c.b16 %v2764, %v2762
    %v4581 = vpack.c.b16 %v2765, %v2763
    %v4582 = vpack.c.b16 %v2768, %v2766
    %v4583 = vpack.c.b16 %v2769, %v2767
    %v4584 = vpack.c.b16 %v2772, %v2770
    %v4585 = vpack.c.b16 %v2773, %v2771
    %v4586 = vpack.c.b16 %v2776, %v2774
    %v4587 = vpack.c.b16 %v2777, %v2775
    %v4588 = vpack.c.b16 %v2780, %v2778
    %v4589 = vpack.c.b16 %v2781, %v2779
    %v4590 = vpack.c.b16 %v2784, %v2782
    %v4591 = vpack.c.b16 %v2785, %v2783
    %v4592 = vpack.c.b16 %v2788, %v2786
    %v4593 = vpack.c.b16 %v2789, %v2787
    %v4594 = vpack.c.b16 %v2792, %v2790
    %v4595 = vpack.c.b16 %v2793, %v2791
    %v4596 = vpack.c.b16 %v2796, %v2794
    %v4597 = vpack.c.b16 %v2797, %v2795
    %v4598 = vpack.c.b16 %v2800, %v2798
    %v4599 = vpack.c.b16 %v2801, %v2799
    %v4600 = vpack.c.b16 %v2804, %v2802
    %v4601 = vpack.c.b16 %v2805, %v2803
    %v4602 = vpack.c.b16 %v2808, %v2806
    %v4603 = vpack.c.b16 %v2809, %v2807
    %v4604 = vpack.c.b16 %v2812, %v2810
    %v4605 = vpack.c.b16 %v2813, %v2811
    %v4606 = vpack.c.b16 %v2816, %v2814
    %v4607 = vpack.c.b16 %v2817, %v2815
    %v4608 = vpack.c.b16 %v2820, %v2818
    %v4609 = vpack.c.b16 %v2821, %v2819
    %v4610 = vpack.c.b16 %v2824, %v2822
    %v4611 = vpack.c.b16 %v2825, %v2823
    %v4612 = vpack.c.b16 %v2828, %v2826
    %v4613 = vpack.c.b16 %v2829, %v2827
    %v4614 = vpack.c.b16 %v2832, %v2830
    %v4615 = vpack.c.b16 %v2833, %v2831
    %v4616 = vpack.c.b16 %v2836, %v2834
    %v4617 = vpack.c.b16 %v2837, %v2835
    %v4618 = vpack.c.b16 %v2840, %v2838
    %v4619 = vpack.c.b16 %v2841, %v2839
    %v4620 = vpack.c.b16 %v2844, %v2842
    %v4621 = vpack.c.b16 %v2845, %v2843
    %v4622 = vpack.c.b16 %v2848, %v2846
    %v4623 = vpack.c.b16 %v2849, %v2847
    %v4624 = vpack.c.b16 %v2852, %v2850
    %v4625 = vpack.c.b16 %v2853, %v2851
    %v4626 = vpack.c.b16 %v2856, %v2854
    %v4627 = vpack.c.b16 %v2857, %v2855
    %v4628 = vpack.c.b16 %v2860, %v2858
    %v4629 = vpack.c.b16 %v2861, %v2859
    %v4630 = vpack.c.b16 %v2864, %v2862
    %v4631 = vpack.c.b16 %v2865, %v2863
    %v4632 = vpack.c.b16 %v2868, %v2866
    %v4633 = vpack.c.b16 %v2869, %v2867
    %v4634 = vpack.c.b16 %v2872, %v2870
    %v4635 = vpack.c.b16 %v2873, %v2871
    %v4636 = vpack.c.b16 %v2876, %v2874
    %v4637 = vpack.c.b16 %v2877, %v2875
    %v4638 = vpack.c.b16 %v2880, %v2878
    %v4639 = vpack.c.b16 %v2881, %v2879
    %v4640 = vpack.c.b16 %v2884, %v2882
    %v4641 = vpack.c.b16 %v2885, %v2883
    %v4642 = vpack.c.b16 %v2888, %v2886
    %v4643 = vpack.c.b16 %v2889, %v2887
    %v4644 = vpack.c.b16 %v2892, %v2890
    %v4645 = vpack.c.b16 %v2893, %v2891
    %v4646 = vpack.c.b16 %v2896, %v2894
    %v4647 = vpack.c.b16 %v2897, %v2895
    %v4648 = vpack.c.b16 %v2900, %v2898
    %v4649 = vpack.c.b16 %v2901, %v2899
    %v4650 = vpack.c.b16 %v2904, %v2902
    %v4651 = vpack.c.b16 %v2905, %v2903
    %v4652 = vpack.c.b16 %v2908, %v2906
    %v4653 = vpack.c.b16 %v2909, %v2907
    %v4654 = vpack.c.b16 %v2912, %v2910
    %v4655 = vpack.c.b16 %v2913, %v2911
    %v4656 = vpack.c.b16 %v2916, %v2914
    %v4657 = vpack.c.b16 %v2917, %v2915
    %v4658 = vpack.c.b16 %v2920, %v2918
    %v4659 = vpack.c.b16 %v2921, %v2919
    %v4660 = vpack.c.b16 %v2924, %v2922
    %v4661 = vpack.c.b16 %v2925, %v2923
    %v4662 = vpack.c.b16 %v2928, %v2926
    %v4663 = vpack.c.b16 %v2929, %v2927
    %v4664 = vpack.c.b16 %v2932, %v2930
    %v4665 = vpack.c.b16 %v2933, %v2931
    %v4666 = vpack.c.b16 %v2936, %v2934
    %v4667 = vpack.c.b16 %v2937, %v2935
    %v4668 = vpack.c.b16 %v2940, %v2938
    %v4669 = vpack.c.b16 %v2941, %v2939
    %v4670 = vpack.c.b16 %v2944, %v2942
    %v4671 = vpack.c.b16 %v2945, %v2943
    %v4672 = vpack.c.b16 %v2948, %v2946
    %v4673 = vpack.c.b16 %v2949, %v2947
    %v4674 = vpack.c.b16 %v2952, %v2950
    %v4675 = vpack.c.b16 %v2953, %v2951
    %v4676 = vpack.c.b16 %v2956, %v2954
    %v4677 = vpack.c.b16 %v2957, %v2955
    %v4678 = vpack.c.b16 %v2960, %v2958
    %v4679 = vpack.c.b16 %v2961, %v2959
    %v4680 = vpack.c.b16 %v2964, %v2962
    %v4681 = vpack.c.b16 %v2965, %v2963
    %v4682 = vpack.c.b16 %v2968, %v2966
    %v4683 = vpack.c.b16 %v2969, %v2967
    %v4684 = vpack.c.b16 %v2972, %v2970
    %v4685 = vpack.c.b16 %v2973, %v2971
    %v4686 = vpack.c.b16 %v2976, %v2974
    %v4687 = vpack.c.b16 %v2977, %v2975
    %v4688 = vpack.c.b16 %v2980, %v2978
    %v4689 = vpack.c.b16 %v2981, %v2979
    %v4690 = vpack.c.b16 %v2984, %v2982
    %v4691 = vpack.c.b16 %v2985, %v2983
    %v4692 = vpack.c.b16 %v2988, %v2986
    %v4693 = vpack.c.b16 %v2989, %v2987
    %v4694 = vpack.c.b16 %v2992, %v2990
    %v4695 = vpack.c.b16 %v2993, %v2991
    %v4696 = vpack.c.b16 %v2996, %v2994
    %v4697 = vpack.c.b16 %v2997, %v2995
    %v4698 = vpack.c.b16 %v3000, %v2998
    %v4699 = vpack.c.b16 %v3001, %v2999
    %v4700 = vpack.c.b16 %v3004, %v3002
    %v4701 = vpack.c.b16 %v3005, %v3003
    %v4702 = vpack.c.b16 %v3008, %v3006
    %v4703 = vpack.c.b16 %v3009, %v3007
    %v4704 = vpack.c.b16 %v3012, %v3010
    %v4705 = vpack.c.b16 %v3013, %v3011
    %v4706 = vpack.c.b16 %v3016, %v3014
    %v4707 = vpack.c.b16 %v3017, %v3015
    %v4708 = vpack.c.b16 %v3020, %v3018
    %v4709 = vpack.c.b16 %v3021, %v3019
    %v4710 = vpack.c.b16 %v3024, %v3022
    %v4711 = vpack.c.b16 %v3025, %v3023
    %v4712 = vpack.c.b16 %v3028, %v3026
    %v4713 = vpack.c.b16 %v3029, %v3027
    %v4714 = vpack.c.b16 %v3032, %v3030
    %v4715 = vpack.c.b16 %v3033, %v3031
    %v4716 = vpack.c.b16 %v3036, %v3034
    %v4717 = vpack.c.b16 %v3037, %v3035
    %v4718 = vpack.c.b16 %v3040, %v3038
    %v4719 = vpack.c.b16 %v3041, %v3039
    %v4720 = vpack.c.b16 %v3044, %v3042
    %v4721 = vpack.c.b16 %v3045, %v3043
    %v4722 = vpack.c.b16 %v3048, %v3046
    %v4723 = vpack.c.b16 %v3049, %v3047
    %v4724 = vpack.c.b16 %v3052, %v3050
    %v4725 = vpack.c.b16 %v3053, %v3051
    %v4726 = vpack.c.b16 %v3056, %v3054
    %v4727 = vpack.c.b16 %v3057, %v3055
    %v4728 = vpack.c.b16 %v3060, %v3058
    %v4729 = vpack.c.b16 %v3061, %v3059
    %v4730 = vpack.c.b16 %v3064, %v3062
    %v4731 = vpack.c.b16 %v3065, %v3063
    %v4732 = vpack.c.b16 %v3068, %v3066
    %v4733 = vpack.c.b16 %v3069, %v3067
    %v4734 = vpack.c.b16 %v3072, %v3070
    %v4735 = vpack.c.b16 %v3073, %v3071
    %v4736 = vpack.c.b16 %v3076, %v3074
    %v4737 = vpack.c.b16 %v3077, %v3075
    %v4738 = vpack.c.b16 %v3080, %v3078
    %v4739 = vpack.c.b16 %v3081, %v3079
    %v4740 = vpack.c.b16 %v3084, %v3082
    %v4741 = vpack.c.b16 %v3085, %v3083
    %v4742 = vpack.c.b16 %v3088, %v3086
    %v4743 = vpack.c.b16 %v3089, %v3087
    %v4744 = vpack.c.b16 %v3092, %v3090
    %v4745 = vpack.c.b16 %v3093, %v3091
    %v4746 = vpack.c.b16 %v3096, %v3094
    %v4747 = vpack.c.b16 %v3097, %v3095
    %v4748 = vpack.c.b16 %v3100, %v3098
    %v4749 = vpack.c.b16 %v3101, %v3099
    %v4750 = vpack.c.b16 %v3104, %v3102
    %v4751 = vpack.c.b16 %v3105, %v3103
    %v4752 = vpack.c.b16 %v3108, %v3106
    %v4753 = vpack.c.b16 %v3109, %v3107
    %v4754 = vpack.c.b16 %v3112, %v3110
    %v4755 = vpack.c.b16 %v3113, %v3111
    %v4756 = vpack.c.b16 %v3116, %v3114
    %v4757 = vpack.c.b16 %v3117, %v3115
    %v4758 = vpack.c.b16 %v3120, %v3118
    %v4759 = vpack.c.b16 %v3121, %v3119
    %v4760 = vpack.c.b16 %v3124, %v3122
    %v4761 = vpack.c.b16 %v3125, %v3123
    %v4762 = vpack.c.b16 %v3128, %v3126
    %v4763 = vpack.c.b16 %v3129, %v3127
    %v4764 = vpack.c.b16 %v3132, %v3130
    %v4765 = vpack.c.b16 %v3133, %v3131
    %v4766 = vpack.c.b16 %v3136, %v3134
    %v4767 = vpack.c.b16 %v3137, %v3135
    %v4768 = vpack.c.b16 %v3140, %v3138
    %v4769 = vpack.c.b16 %v3141, %v3139
    %v4770 = vpack.c.b16 %v3144, %v3142
    %v4771 = vpack.c.b16 %v3145, %v3143
    %v4772 = vpack.c.b16 %v3148, %v3146
    %v4773 = vpack.c.b16 %v3149, %v3147
    %v4774 = vpack.c.b16 %v3152, %v3150
    %v4775 = vpack.c.b16 %v3153, %v3151
    %v4776 = vpack.c.b16 %v3156, %v3154
    %v4777 = vpack.c.b16 %v3157, %v3155
    %v4778 = vpack.c.b16 %v3160, %v3158
    %v4779 = vpack.c.b16 %v3161, %v3159
    %v4780 = vpack.c.b16 %v3164, %v3162
    %v4781 = vpack.c.b16 %v3165, %v3163
    %v4782 = vpack.c.b16 %v3168, %v3166
    %v4783 = vpack.c.b16 %v3169, %v3167
    %v4784 = vpack.c.b16 %v3172, %v3170
    %v4785 = vpack.c.b16 %v3173, %v3171
    %v4786 = vpack.c.b16 %v3176, %v3174
    %v4787 = vpack.c.b16 %v3177, %v3175
    %v4788 = vpack.c.b16 %v3180, %v3178
    %v4789 = vpack.c.b16 %v3181, %v3179
    %v4790 = vpack.c.b16 %v3184, %v3182
    %v4791 = vpack.c.b16 %v3185, %v3183
    %v4792 = vpack.c.b16 %v3188, %v3186
    %v4793 = vpack.c.b16 %v3189, %v3187
    %v4794 = vpack.c.b16 %v3192, %v3190
    %v4795 = vpack.c.b16 %v3193, %v3191
    %v4796 = vpack.c.b16 %v3196, %v3194
    %v4797 = vpack.c.b16 %v3197, %v3195
    %v4798 = vpack.c.b16 %v3200, %v3198
    %v4799 = vpack.c.b16 %v3201, %v3199
    %v4800 = vpack.c.b16 %v3204, %v3202
    %v4801 = vpack.c.b16 %v3205, %v3203
    %v4802 = vpack.c.b16 %v3208, %v3206
    %v4803 = vpack.c.b16 %v3209, %v3207
    %v4804 = vpack.c.b16 %v3212, %v3210
    %v4805 = vpack.c.b16 %v3213, %v3211
    %v4806 = vpack.c.b16 %v3216, %v3214
    %v4807 = vpack.c.b16 %v3217, %v3215
    %v4808 = vpack.c.b16 %v3220, %v3218
    %v4809 = vpack.c.b16 %v3221, %v3219
    %v4810 = vpack.c.b16 %v3224, %v3222
    %v4811 = vpack.c.b16 %v3225, %v3223
    %v4812 = vpack.c.b16 %v3228, %v3226
    %v4813 = vpack.c.b16 %v3229, %v3227
    %v4814 = vpack.c.b16 %v3232, %v3230
    %v4815 = vpack.c.b16 %v3233, %v3231
    %v4816 = vpack.c.b16 %v3236, %v3234
    %v4817 = vpack.c.b16 %v3237, %v3235
    %v4818 = vpack.c.b16 %v3240, %v3238
    %v4819 = vpack.c.b16 %v3241, %v3239
    %v4820 = vpack.c.b16 %v3244, %v3242
    %v4821 = vpack.c.b16 %v3245, %v3243
    %v4822 = vpack.c.b16 %v3248, %v3246
    %v4823 = vpack.c.b16 %v3249, %v3247
    %v4824 = vpack.c.b16 %v3252, %v3250
    %v4825 = vpack.c.b16 %v3253, %v3251
    %v4826 = vpack.c.b16 %v3256, %v3254
    %v4827 = vpack.c.b16 %v3257, %v3255
    %v4828 = vpack.c.b16 %v3260, %v3258
    %v4829 = vpack.c.b16 %v3261, %v3259
    %v4830 = vpack.c.b16 %v3264, %v3262
    %v4831 = vpack.c.b16 %v3265, %v3263
    %v4832 = vpack.c.b16 %v3268, %v3266
    %v4833 = vpack.c.b16 %v3269, %v3267
    %v4834 = vpack.c.b16 %v3272, %v3270
    %v4835 = vpack.c.b16 %v3273, %v3271
    %v4836 = vpack.c.b16 %v3276, %v3274
    %v4837 = vpack.c.b16 %v3277, %v3275
    %v4838 = vpack.c.b16 %v3280, %v3278
    %v4839 = vpack.c.b16 %v3281, %v3279
    %v4840 = vpack.c.b16 %v3284, %v3282
    %v4841 = vpack.c.b16 %v3285, %v3283
    %v4842 = vpack.c.b16 %v3288, %v3286
    %v4843 = vpack.c.b16 %v3289, %v3287
    %v4844 = vpack.c.b16 %v3292, %v3290
    %v4845 = vpack.c.b16 %v3293, %v3291
    %v4846 = vpack.c.b16 %v3296, %v3294
    %v4847 = vpack.c.b16 %v3297, %v3295
    %v4848 = vpack.c.b16 %v3300, %v3298
    %v4849 = vpack.c.b16 %v3301, %v3299
    %v4850 = vpack.c.b16 %v3304, %v3302
    %v4851 = vpack.c.b16 %v3305, %v3303
    %v4852 = vpack.c.b16 %v3308, %v3306
    %v4853 = vpack.c.b16 %v3309, %v3307
    %v4854 = vpack.c.b16 %v3312, %v3310
    %v4855 = vpack.c.b16 %v3313, %v3311
    %v4856 = vpack.c.b16 %v3316, %v3314
    %v4857 = vpack.c.b16 %v3317, %v3315
    %v4858 = vpack.c.b16 %v3320, %v3318
    %v4859 = vpack.c.b16 %v3321, %v3319
    %v4860 = vpack.c.b16 %v3324, %v3322
    %v4861 = vpack.c.b16 %v3325, %v3323
    %v4862 = vpack.c.b16 %v3328, %v3326
    %v4863 = vpack.c.b16 %v3329, %v3327
    %v4864 = vpack.c.b16 %v3332, %v3330
    %v4865 = vpack.c.b16 %v3333, %v3331
    %v4866 = vpack.c.b16 %v3336, %v3334
    %v4867 = vpack.c.b16 %v3337, %v3335
    %v4868 = vpack.c.b16 %v3340, %v3338
    %v4869 = vpack.c.b16 %v3341, %v3339
    %v4870 = vpack.c.b16 %v3344, %v3342
    %v4871 = vpack.c.b16 %v3345, %v3343
    %v4872 = vpack.c.b16 %v3348, %v3346
    %v4873 = vpack.c.b16 %v3349, %v3347
    %v4874 = vpack.c.b16 %v3352, %v3350
    %v4875 = vpack.c.b16 %v3353, %v3351
    %v4876 = vpack.c.b16 %v3356, %v3354
    %v4877 = vpack.c.b16 %v3357, %v3355
    %v4878 = vpack.c.b16 %v3360, %v3358
    %v4879 = vpack.c.b16 %v3361, %v3359
    %v4880 = vpack.c.b16 %v3364, %v3362
    %v4881 = vpack.c.b16 %v3365, %v3363
    %v4882 = vpack.c.b16 %v3368, %v3366
    %v4883 = vpack.c.b16 %v3369, %v3367
    %v4884 = vpack.c.b16 %v3372, %v3370
    %v4885 = vpack.c.b16 %v3373, %v3371
    %v4886 = vpack.c.b16 %v3376, %v3374
    %v4887 = vpack.c.b16 %v3377, %v3375
    %v4888 = vpack.c.b16 %v3380, %v3378
    %v4889 = vpack.c.b16 %v3381, %v3379
    %v4890 = vpack.c.b16 %v3384, %v3382
    %v4891 = vpack.c.b16 %v3385, %v3383
    %v4892 = vpack.c.b16 %v3388, %v3386
    %v4893 = vpack.c.b16 %v3389, %v3387
    %v4894 = vpack.c.b16 %v3392, %v3390
    %v4895 = vpack.c.b16 %v3393, %v3391
    %v4896 = vpack.c.b16 %v3396, %v3394
    %v4897 = vpack.c.b16 %v3397, %v3395
    %v4898 = vpack.c.b16 %v3400, %v3398
    %v4899 = vpack.c.b16 %v3401, %v3399
    %v4900 = vpack.c.b16 %v3404, %v3402
    %v4901 = vpack.c.b16 %v3405, %v3403
    %v4902 = vpack.c.b16 %v3408, %v3406
    %v4903 = vpack.c.b16 %v3409, %v3407
    %v4904 = vpack.c.b16 %v3412, %v3410
    %v4905 = vpack.c.b16 %v3413, %v3411
    %v4906 = vpack.c.b16 %v3416, %v3414
    %v4907 = vpack.c.b16 %v3417, %v3415
    %v4908 = vpack.c.b16 %v3420, %v3418
    %v4909 = vpack.c.b16 %v3421, %v3419
    %v4910 = vpack.c.b16 %v3424, %v3422
    %v4911 = vpack.c.b16 %v3425, %v3423
    %v4912 = vpack.c.b16 %v3428, %v3426
    %v4913 = vpack.c.b16 %v3429, %v3427
    %v4914 = vpack.c.b16 %v3432, %v3430
    %v4915 = vpack.c.b16 %v3433, %v3431
    %v4916 = vpack.c.b16 %v3436, %v3434
    %v4917 = vpack.c.b16 %v3437, %v3435
    %v4918 = vpack.c.b16 %v3440, %v3438
    %v4919 = vpack.c.b16 %v3441, %v3439
    %v4920 = vpack.c.b16 %v3444, %v3442
    %v4921 = vpack.c.b16 %v3445, %v3443
    %v4922 = vpack.c.b16 %v3448, %v3446
    %v4923 = vpack.c.b16 %v3449, %v3447
    %v4924 = vpack.c.b16 %v3452, %v3450
    %v4925 = vpack.c.b16 %v3453, %v3451
    %v4926 = vpack.c.b16 %v3456, %v3454
    %v4927 = vpack.c.b16 %v3457, %v3455
    %v4928 = vpack.c.b16 %v3460, %v3458
    %v4929 = vpack.c.b16 %v3461, %v3459
    %v4930 = vpack.c.b16 %v3464, %v3462
    %v4931 = vpack.c.b16 %v3465, %v3463
    %v4932 = vpack.c.b16 %v3468, %v3466
    %v4933 = vpack.c.b16 %v3469, %v3467
    %v4934 = vpack.c.b16 %v3472, %v3470
    %v4935 = vpack.c.b16 %v3473, %v3471
    %v4936 = vpack.c.b16 %v3476, %v3474
    %v4937 = vpack.c.b16 %v3477, %v3475
    %v4938 = vpack.c.b16 %v3480, %v3478
    %v4939 = vpack.c.b16 %v3481, %v3479
    %v4940 = vpack.c.b16 %v3484, %v3482
    %v4941 = vpack.c.b16 %v3485, %v3483
    %v4942 = vpack.c.b16 %v3488, %v3486
    %v4943 = vpack.c.b16 %v3489, %v3487
    %v4944 = vpack.c.b16 %v3492, %v3490
    %v4945 = vpack.c.b16 %v3493, %v3491
    %v4946 = vpack.c.b16 %v3496, %v3494
    %v4947 = vpack.c.b16 %v3497, %v3495
    %v4948 = vpack.c.b16 %v3500, %v3498
    %v4949 = vpack.c.b16 %v3501, %v3499
    %v4950 = vpack.c.b16 %v3504, %v3502
    %v4951 = vpack.c.b16 %v3505, %v3503
    %v4952 = vpack.c.b16 %v3508, %v3506
    %v4953 = vpack.c.b16 %v3509, %v3507
    %v4954 = vpack.c.b16 %v3512, %v3510
    %v4955 = vpack.c.b16 %v3513, %v3511
    %v4956 = vpack.c.b16 %v3516, %v3514
    %v4957 = vpack.c.b16 %v3517, %v3515
    %v4958 = vpack.c.b16 %v3520, %v3518
    %v4959 = vpack.c.b16 %v3521, %v3519
    %v4960 = vpack.c.b16 %v3524, %v3522
    %v4961 = vpack.c.b16 %v3525, %v3523
    %v4962 = vpack.c.b16 %v3528, %v3526
    %v4963 = vpack.c.b16 %v3529, %v3527
    %v4964 = vpack.c.b16 %v3532, %v3530
    %v4965 = vpack.c.b16 %v3533, %v3531
    %v4966 = vpack.c.b16 %v3536, %v3534
    %v4967 = vpack.c.b16 %v3537, %v3535
    %v4968 = vpack.c.b16 %v3540, %v3538
    %v4969 = vpack.c.b16 %v3541, %v3539
    %v4970 = vpack.c.b16 %v3544, %v3542
    %v4971 = vpack.c.b16 %v3545, %v3543
    %v4972 = vpack.c.b16 %v3548, %v3546
    %v4973 = vpack.c.b16 %v3549, %v3547
    %v4974 = vpack.c.b16 %v3552, %v3550
    %v4975 = vpack.c.b16 %v3553, %v3551
    %v4976 = vpack.c.b16 %v3556, %v3554
    %v4977 = vpack.c.b16 %v3557, %v3555
    %v4978 = vpack.c.b16 %v3560, %v3558
    %v4979 = vpack.c.b16 %v3561, %v3559
    %v4980 = vpack.c.b16 %v3564, %v3562
    %v4981 = vpack.c.b16 %v3565, %v3563
    %v4982 = vpack.c.b16 %v3568, %v3566
    %v4983 = vpack.c.b16 %v3569, %v3567
    %v4984 = vpack.c.b16 %v3572, %v3570
    %v4985 = vpack.c.b16 %v3573, %v3571
    %v4986 = vpack.c.b16 %v3576, %v3574
    %v4987 = vpack.c.b16 %v3577, %v3575
    %v4988 = vpack.c.b16 %v3580, %v3578
    %v4989 = vpack.c.b16 %v3581, %v3579
    %v4990 = vpack.c.b16 %v3584, %v3582
    %v4991 = vpack.c.b16 %v3585, %v3583
    %v4992 = vpack.c.b16 %v3588, %v3586
    %v4993 = vpack.c.b16 %v3589, %v3587
    %v4994 = vpack.c.b16 %v3592, %v3590
    %v4995 = vpack.c.b16 %v3593, %v3591
    %v4996 = vpack.c.b16 %v3596, %v3594
    %v4997 = vpack.c.b16 %v3597, %v3595
    %v4998 = vpack.c.b16 %v3600, %v3598
    %v4999 = vpack.c.b16 %v3601, %v3599
    %v5000 = vpack.c.b16 %v3604, %v3602
    %v5001 = vpack.c.b16 %v3605, %v3603
    %v5002 = vpack.c.b16 %v3608, %v3606
    %v5003 = vpack.c.b16 %v3609, %v3607
    %v5004 = vpack.c.b16 %v3612, %v3610
    %v5005 = vpack.c.b16 %v3613, %v3611
    %v5006 = vpack.c.b16 %v3616, %v3614
    %v5007 = vpack.c.b16 %v3617, %v3615
    %v5008 = vpack.c.b16 %v3620, %v3618
    %v5009 = vpack.c.b16 %v3621, %v3619
    %v5010 = vpack.c.b16 %v3624, %v3622
    %v5011 = vpack.c.b16 %v3625, %v3623
    %v5012 = vpack.c.b16 %v3628, %v3626
    %v5013 = vpack.c.b16 %v3629, %v3627
    %v5014 = vpack.c.b16 %v3632, %v3630
    %v5015 = vpack.c.b16 %v3633, %v3631
    %v5016 = vpack.c.b16 %v3636, %v3634
    %v5017 = vpack.c.b16 %v3637, %v3635
    %v5018 = vpack.c.b16 %v3640, %v3638
    %v5019 = vpack.c.b16 %v3641, %v3639
    %v5020 = vpack.c.b16 %v3644, %v3642
    %v5021 = vpack.c.b16 %v3645, %v3643
    %v5022 = vpack.c.b16 %v3648, %v3646
    %v5023 = vpack.c.b16 %v3649, %v3647
    %v5024 = vpack.c.b16 %v3652, %v3650
    %v5025 = vpack.c.b16 %v3653, %v3651
    %v5026 = vpack.c.b16 %v3656, %v3654
    %v5027 = vpack.c.b16 %v3657, %v3655
    %v5028 = vpack.c.b16 %v3660, %v3658
    %v5029 = vpack.c.b16 %v3661, %v3659
    %v5030 = vpack.c.b16 %v3664, %v3662
    %v5031 = vpack.c.b16 %v3665, %v3663
    %v5032 = vpack.c.b16 %v3668, %v3666
    %v5033 = vpack.c.b16 %v3669, %v3667
    %v5034 = vpack.c.b16 %v3672, %v3670
    %v5035 = vpack.c.b16 %v3673, %v3671
    %v5036 = vpack.c.b16 %v3676, %v3674
    %v5037 = vpack.c.b16 %v3677, %v3675
    %v5038 = vpack.c.b16 %v3680, %v3678
    %v5039 = vpack.c.b16 %v3681, %v3679
    %v5040 = vpack.c.b16 %v3684, %v3682
    %v5041 = vpack.c.b16 %v3685, %v3683
    %v5042 = vpack.c.b16 %v3688, %v3686
    %v5043 = vpack.c.b16 %v3689, %v3687
    %v5044 = vpack.c.b16 %v3692, %v3690
    %v5045 = vpack.c.b16 %v3693, %v3691
    %v5046 = vpack.c.b16 %v3696, %v3694
    %v5047 = vpack.c.b16 %v3697, %v3695
    %v5048 = vpack.c.b16 %v3700, %v3698
    %v5049 = vpack.c.b16 %v3701, %v3699
    %v5050 = vpack.c.b16 %v3704, %v3702
    %v5051 = vpack.c.b16 %v3705, %v3703
    %v5052 = vpack.c.b16 %v3708, %v3706
    %v5053 = vpack.c.b16 %v3709, %v3707
    %v5054 = vpack.c.b16 %v3712, %v3710
    %v5055 = vpack.c.b16 %v3713, %v3711
    %v5056 = vpack.c.b16 %v3716, %v3714
    %v5057 = vpack.c.b16 %v3717, %v3715
    %v5058 = vpack.c.b16 %v3720, %v3718
    %v5059 = vpack.c.b16 %v3721, %v3719
    %v5060 = vpack.c.b16 %v3724, %v3722
    %v5061 = vpack.c.b16 %v3725, %v3723
    %v5062 = vpack.c.b16 %v3728, %v3726
    %v5063 = vpack.c.b16 %v3729, %v3727
    %v5064 = vpack.c.b16 %v3732, %v3730
    %v5065 = vpack.c.b16 %v3733, %v3731
    %v5066 = vpack.c.b16 %v3736, %v3734
    %v5067 = vpack.c.b16 %v3737, %v3735
    %v5068 = vpack.c.b16 %v3740, %v3738
    %v5069 = vpack.c.b16 %v3741, %v3739
    %v5070 = vpack.c.b16 %v3744, %v3742
    %v5071 = vpack.c.b16 %v3745, %v3743
    %v5072 = vpack.c.b16 %v3748, %v3746
    %v5073 = vpack.c.b16 %v3749, %v3747
    %v5074 = vpack.c.b16 %v3752, %v3750
    %v5075 = vpack.c.b16 %v3753, %v3751
    %v5076 = vpack.c.b16 %v3756, %v3754
    %v5077 = vpack.c.b16 %v3757, %v3755
    %v5078 = vpack.c.b16 %v3760, %v3758
    %v5079 = vpack.c.b16 %v3761, %v3759
    %v5080 = vpack.c.b16 %v3764, %v3762
    %v5081 = vpack.c.b16 %v3765, %v3763
    %v5082 = vpack.c.b16 %v3768, %v3766
    %v5083 = vpack.c.b16 %v3769, %v3767
    %v5084 = vpack.c.b16 %v3772, %v3770
    %v5085 = vpack.c.b16 %v3773, %v3771
    %v5086 = vpack.c.b16 %v3776, %v3774
    %v5087 = vpack.c.b16 %v3777, %v3775
    %v5088 = vpack.c.b16 %v3780, %v3778
    %v5089 = vpack.c.b16 %v3781, %v3779
    %v5090 = vpack.c.b16 %v3784, %v3782
    %v5091 = vpack.c.b16 %v3785, %v3783
    %v5092 = vpack.c.b16 %v3788, %v3786
    %v5093 = vpack.c.b16 %v3789, %v3787
    %v5094 = vpack.c.b16 %v3792, %v3790
    %v5095 = vpack.c.b16 %v3793, %v3791
    %v5096 = vpack.c.b16 %v3796, %v3794
    %v5097 = vpack.c.b16 %v3797, %v3795
    %v5098 = vpack.c.b16 %v3800, %v3798
    %v5099 = vpack.c.b16 %v3801, %v3799
    %v5100 = vpack.c.b16 %v3804, %v3802
    %v5101 = vpack.c.b16 %v3805, %v3803
    %v5102 = vpack.c.b16 %v3808, %v3806
    %v5103 = vpack.c.b16 %v3809, %v3807
    %v5104 = vpack.c.b16 %v3812, %v3810
    %v5105 = vpack.c.b16 %v3813, %v3811
    %v5106 = vpack.c.b16 %v3816, %v3814
    %v5107 = vpack.c.b16 %v3817, %v3815
    %v5108 = vpack.c.b16 %v3820, %v3818
    %v5109 = vpack.c.b16 %v3821, %v3819
    %v5110 = vpack.c.b16 %v3824, %v3822
    %v5111 = vpack.c.b16 %v3825, %v3823
    %v5112 = vpack.c.b16 %v3828, %v3826
    %v5113 = vpack.c.b16 %v3829, %v3827
    %v5114 = vpack.c.b16 %v3832, %v3830
    %v5115 = vpack.c.b16 %v3833, %v3831
    %v5116 = vpack.c.b16 %v3836, %v3834
    %v5117 = vpack.c.b16 %v3837, %v3835
    %v5118 = vpack.c.b16 %v3840, %v3838
    %v5119 = vpack.c.b16 %v3841, %v3839
    %v5120 = vpack.c.b16 %v3844, %v3842
    %v5121 = vpack.c.b16 %v3845, %v3843
    %v5122 = vpack.c.b16 %v3848, %v3846
    %v5123 = vpack.c.b16 %v3849, %v3847
    %v5124 = vpack.c.b16 %v3852, %v3850
    %v5125 = vpack.c.b16 %v3853, %v3851
    %v5126 = vpack.c.b16 %v3856, %v3854
    %v5127 = vpack.c.b16 %v3857, %v3855
    %v5128 = vpack.c.b16 %v3860, %v3858
    %v5129 = vpack.c.b16 %v3861, %v3859
    %v5130 = vpack.c.b16 %v3864, %v3862
    %v5131 = vpack.c.b16 %v3865, %v3863
    %v5132 = vpack.c.b16 %v3868, %v3866
    %v5133 = vpack.c.b16 %v3869, %v3867
    %v5134 = vpack.c.b16 %v3872, %v3870
    %v5135 = vpack.c.b16 %v3873, %v3871
    %v5136 = vpack.c.b16 %v3876, %v3874
    %v5137 = vpack.c.b16 %v3877, %v3875
    %v5138 = vpack.c.b16 %v3880, %v3878
    %v5139 = vpack.c.b16 %v3881, %v3879
    %v5140 = vpack.c.b16 %v3884, %v3882
    %v5141 = vpack.c.b16 %v3885, %v3883
    %v5142 = vpack.c.b16 %v3888, %v3886
    %v5143 = vpack.c.b16 %v3889, %v3887
    %v5144 = vpack.c.b16 %v3892, %v3890
    %v5145 = vpack.c.b16 %v3893, %v3891
    %v5146 = vpack.c.b16 %v3896, %v3894
    %v5147 = vpack.c.b16 %v3897, %v3895
    %v5148 = vpack.c.b16 %v3900, %v3898
    %v5149 = vpack.c.b16 %v3901, %v3899
    %v5150 = vpack.c.b16 %v3904, %v3902
    %v5151 = vpack.c.b16 %v3905, %v3903
    %v5152 = vpack.c.b16 %v3908, %v3906
    %v5153 = vpack.c.b16 %v3909, %v3907
    %v5154 = vpack.c.b16 %v3912, %v3910
    %v5155 = vpack.c.b16 %v3913, %v3911
    %v5156 = vpack.c.b16 %v3916, %v3914
    %v5157 = vpack.c.b16 %v3917, %v3915
    %v5158 = vpack.c.b16 %v3920, %v3918
    %v5159 = vpack.c.b16 %v3921, %v3919
    %v5160 = vpack.c.b16 %v3924, %v3922
    %v5161 = vpack.c.b16 %v3925, %v3923
    %v5162 = vpack.c.b16 %v3928, %v3926
    %v5163 = vpack.c.b16 %v3929, %v3927
    %v5164 = vpack.c.b16 %v3932, %v3930
    %v5165 = vpack.c.b16 %v3933, %v3931
    %v5166 = vpack.c.b16 %v3936, %v3934
    %v5167 = vpack.c.b16 %v3937, %v3935
    %v5168 = vpack.c.b16 %v3940, %v3938
    %v5169 = vpack.c.b16 %v3941, %v3939
    %v5170 = vpack.c.b16 %v3944, %v3942
    %v5171 = vpack.c.b16 %v3945, %v3943
    %v5172 = vpack.c.b16 %v3948, %v3946
    %v5173 = vpack.c.b16 %v3949, %v3947
    %v5174 = vpack.c.b16 %v3952, %v3950
    %v5175 = vpack.c.b16 %v3953, %v3951
    %v5176 = vpack.c.b16 %v3956, %v3954
    %v5177 = vpack.c.b16 %v3957, %v3955
    %v5178 = vpack.c.b16 %v3960, %v3958
    %v5179 = vpack.c.b16 %v3961, %v3959
    %v5180 = vpack.c.b16 %v3964, %v3962
    %v5181 = vpack.c.b16 %v3965, %v3963
    %v5182 = vpack.c.b16 %v3968, %v3966
    %v5183 = vpack.c.b16 %v3969, %v3967
    %v5184 = vpack.c.b16 %v3972, %v3970
    %v5185 = vpack.c.b16 %v3973, %v3971
    %v5186 = vpack.c.b16 %v3976, %v3974
    %v5187 = vpack.c.b16 %v3977, %v3975
    %v5188 = vpack.c.b16 %v3980, %v3978
    %v5189 = vpack.c.b16 %v3981, %v3979
    %v5190 = vpack.c.b16 %v3984, %v3982
    %v5191 = vpack.c.b16 %v3985, %v3983
    %v5192 = vpack.c.b16 %v3988, %v3986
    %v5193 = vpack.c.b16 %v3989, %v3987
    %v5194 = vpack.c.b16 %v3992, %v3990
    %v5195 = vpack.c.b16 %v3993, %v3991
    %v5196 = vpack.c.b16 %v3996, %v3994
    %v5197 = vpack.c.b16 %v3997, %v3995
    %v5198 = vpack.c.b16 %v4000, %v3998
    %v5199 = vpack.c.b16 %v4001, %v3999
    %v5200 = vpack.c.b16 %v4004, %v4002
    %v5201 = vpack.c.b16 %v4005, %v4003
    %v5202 = vpack.c.b16 %v4008, %v4006
    %v5203 = vpack.c.b16 %v4009, %v4007
    %v5204 = vpack.c.b16 %v4012, %v4010
    %v5205 = vpack.c.b16 %v4013, %v4011
    %v5206 = vpack.c.b16 %v4016, %v4014
    %v5207 = vpack.c.b16 %v4017, %v4015
    %v5208 = vpack.c.b16 %v4020, %v4018
    %v5209 = vpack.c.b16 %v4021, %v4019
    %v5210 = vpack.c.b16 %v4024, %v4022
    %v5211 = vpack.c.b16 %v4025, %v4023
    %v5212 = vpack.c.b16 %v4028, %v4026
    %v5213 = vpack.c.b16 %v4029, %v4027
    %v5214 = vpack.c.b16 %v4032, %v4030
    %v5215 = vpack.c.b16 %v4033, %v4031
    %v5216 = vpack.c.b16 %v4036, %v4034
    %v5217 = vpack.c.b16 %v4037, %v4035
    %v5218 = vpack.c.b16 %v4040, %v4038
    %v5219 = vpack.c.b16 %v4041, %v4039
    %v5220 = vpack.c.b16 %v4044, %v4042
    %v5221 = vpack.c.b16 %v4045, %v4043
    %v5222 = vpack.c.b16 %v4048, %v4046
    %v5223 = vpack.c.b16 %v4049, %v4047
    %v5224 = vpack.c.b16 %v4052, %v4050
    %v5225 = vpack.c.b16 %v4053, %v4051
    %v5226 = vpack.c.b16 %v4056, %v4054
    %v5227 = vpack.c.b16 %v4057, %v4055
    %v5228 = vpack.c.b16 %v4060, %v4058
    %v5229 = vpack.c.b16 %v4061, %v4059
    %v5230 = vpack.c.b16 %v4064, %v4062
    %v5231 = vpack.c.b16 %v4065, %v4063
    %v5232 = vpack.c.b16 %v4068, %v4066
    %v5233 = vpack.c.b16 %v4069, %v4067
    %v5234 = vpack.c.b16 %v4072, %v4070
    %v5235 = vpack.c.b16 %v4073, %v4071
    %v5236 = vpack.c.b16 %v4076, %v4074
    %v5237 = vpack.c.b16 %v4077, %v4075
    %v5238 = vpack.c.b16 %v4080, %v4078
    %v5239 = vpack.c.b16 %v4081, %v4079
    %v5240 = vpack.c.b16 %v4084, %v4082
    %v5241 = vpack.c.b16 %v4085, %v4083
    %v5242 = vpack.c.b16 %v4088, %v4086
    %v5243 = vpack.c.b16 %v4089, %v4087
    %v5244 = vpack.c.b16 %v4092, %v4090
    %v5245 = vpack.c.b16 %v4093, %v4091
    %v5246 = vpack.c.b16 %v4096, %v4094
    %v5247 = vpack.c.b16 %v4097, %v4095
    %v5248 = vpack.c.b16 %v4100, %v4098
    %v5249 = vpack.c.b16 %v4101, %v4099
    %v5250 = vpack.c.b16 %v4104, %v4102
    %v5251 = vpack.c.b16 %v4105, %v4103
    %v5252 = vpack.c.b16 %v4108, %v4106
    %v5253 = vpack.c.b16 %v4109, %v4107
    %v5254 = vpack.c.b16 %v4112, %v4110
    %v5255 = vpack.c.b16 %v4113, %v4111
    %v5256 = vpack.c.b16 %v4116, %v4114
    %v5257 = vpack.c.b16 %v4117, %v4115
    %v5258 = vpack.c.b16 %v4120, %v4118
    %v5259 = vpack.c.b16 %v4121, %v4119
    %v5260 = vpack.c.b16 %v4124, %v4122
    %v5261 = vpack.c.b16 %v4125, %v4123
    %v5262 = vpack.c.b16 %v4128, %v4126
    %v5263 = vpack.c.b16 %v4129, %v4127
    %v5264 = vpack.c.b16 %v4132, %v4130
    %v5265 = vpack.c.b16 %v4133, %v4131
    %v5266 = vpack.c.b16 %v4136, %v4134
    %v5267 = vpack.c.b16 %v4137, %v4135
    %v5268 = vpack.c.b16 %v4140, %v4138
    %v5269 = vpack.c.b16 %v4141, %v4139
    %v5270 = vpack.c.b16 %v4144, %v4142
    %v5271 = vpack.c.b16 %v4145, %v4143
    %v5272 = vpack.c.b16 %v4148, %v4146
    %v5273 = vpack.c.b16 %v4149, %v4147
    %v5274 = vpack.c.b16 %v4152, %v4150
    %v5275 = vpack.c.b16 %v4153, %v4151
    %v5276 = vpack.c.b16 %v4156, %v4154
    %v5277 = vpack.c.b16 %v4157, %v4155
    %v5278 = vpack.c.b16 %v4160, %v4158
    %v5279 = vpack.c.b16 %v4161, %v4159
    %v5280 = vpack.c.b16 %v4164, %v4162
    %v5281 = vpack.c.b16 %v4165, %v4163
    %v5282 = vpack.c.b16 %v4168, %v4166
    %v5283 = vpack.c.b16 %v4169, %v4167
    %v5284 = vpack.c.b16 %v4172, %v4170
    %v5285 = vpack.c.b16 %v4173, %v4171
    %v5286 = vpack.c.b16 %v4176, %v4174
    %v5287 = vpack.c.b16 %v4177, %v4175
    %v5288 = vpack.c.b16 %v4180, %v4178
    %v5289 = vpack.c.b16 %v4181, %v4179
    %v5290 = vpack.c.b16 %v4184, %v4182
    %v5291 = vpack.c.b16 %v4185, %v4183
    %v5292 = vpack.c.b16 %v4188, %v4186
    %v5293 = vpack.c.b16 %v4189, %v4187
    %v5294 = vpack.c.b16 %v4192, %v4190
    %v5295 = vpack.c.b16 %v4193, %v4191
    %v5296 = vpack.c.b16 %v4196, %v4194
    %v5297 = vpack.c.b16 %v4197, %v4195
    %v5298 = vpack.c.b16 %v4200, %v4198
    %v5299 = vpack.c.b16 %v4201, %v4199
    %v5300 = vpack.c.b16 %v4204, %v4202
    %v5301 = vpack.c.b16 %v4205, %v4203
    %v5302 = vpack.c.b16 %v4208, %v4206
    %v5303 = vpack.c.b16 %v4209, %v4207
    %v5304 = vpack.c.b16 %v4212, %v4210
    %v5305 = vpack.c.b16 %v4213, %v4211
    %v5306 = vpack.c.b16 %v4216, %v4214
    %v5307 = vpack.c.b16 %v4217, %v4215
    %v5308 = vpack.c.b16 %v4220, %v4218
    %v5309 = vpack.c.b16 %v4221, %v4219
    %v5310 = vpack.c.b16 %v4224, %v4222
    %v5311 = vpack.c.b16 %v4225, %v4223
    %v5312 = vpack.c.b16 %v4228, %v4226
    %v5313 = vpack.c.b16 %v4229, %v4227
    %v5314 = vpack.c.b16 %v4232, %v4230
    %v5315 = vpack.c.b16 %v4233, %v4231
    %v5316 = vpack.c.b16 %v4236, %v4234
    %v5317 = vpack.c.b16 %v4237, %v4235
    %v5318 = vpack.c.b16 %v4240, %v4238
    %v5319 = vpack.c.b16 %v4241, %v4239
    %v5320 = vpack.c.b16 %v4244, %v4242
    %v5321 = vpack.c.b16 %v4245, %v4243
    %v5322 = vpack.c.b16 %v4248, %v4246
    %v5323 = vpack.c.b16 %v4249, %v4247
    %v5324 = vpack.c.b16 %v4252, %v4250
    %v5325 = vpack.c.b16 %v4253, %v4251
    %v5326 = vpack.c.b16 %v4256, %v4254
    %v5327 = vpack.c.b16 %v4257, %v4255
    %v5328 = vpack.c.b16 %v4260, %v4258
    %v5329 = vpack.c.b16 %v4261, %v4259
    %v5330 = vpack.c.b16 %v4264, %v4262
    %v5331 = vpack.c.b16 %v4265, %v4263
    %v5332 = vpack.c.b16 %v4268, %v4266
    %v5333 = vpack.c.b16 %v4269, %v4267
    %v5334 = vpack.c.b16 %v4272, %v4270
    %v5335 = vpack.c.b16 %v4273, %v4271
    %v5336 = vpack.c.b16 %v4276, %v4274
    %v5337 = vpack.c.b16 %v4277, %v4275
    %v5338 = vpack.c.b16 %v4280, %v4278
    %v5339 = vpack.c.b16 %v4281, %v4279
    %v5340 = vpack.c.b16 %v4284, %v4282
    %v5341 = vpack.c.b16 %v4285, %v4283
    %v5342 = vpack.c.b16 %v4288, %v4286
    %v5343 = vpack.c.b16 %v4289, %v4287
    %v5344 = vpack.c.b16 %v4292, %v4290
    %v5345 = vpack.c.b16 %v4293, %v4291
    %v5346 = vpack.c.b16 %v4296, %v4294
    %v5347 = vpack.c.b16 %v4297, %v4295
    %v5348 = vpack.c.b16 %v4300, %v4298
    %v5349 = vpack.c.b16 %v4301, %v4299
    %v5350 = vpack.c.b16 %v4304, %v4302
    %v5351 = vpack.c.b16 %v4305, %v4303
    %v5352 = vpack.c.b16 %v4308, %v4306
    %v5353 = vpack.c.b16 %v4309, %v4307
    %v5354 = vpack.c.b16 %v4312, %v4310
    %v5355 = vpack.c.b16 %v4313, %v4311
    %v5356 = vpack.c.b16 %v4316, %v4314
    %v5357 = vpack.c.b16 %v4317, %v4315
    %v5358 = vpack.c.b16 %v4320, %v4318
    %v5359 = vpack.c.b16 %v4321, %v4319
    %v5360 = vpack.c.b16 %v4324, %v4322
    %v5361 = vpack.c.b16 %v4325, %v4323
    %v5362 = vpack.c.b16 %v4328, %v4326
    %v5363 = vpack.c.b16 %v4329, %v4327
    %v5364 = vpack.c.b16 %v4332, %v4330
    %v5365 = vpack.c.b16 %v4333, %v4331
    %v5366 = vpack.c.b16 %v4336, %v4334
    %v5367 = vpack.c.b16 %v4337, %v4335
    %v5368 = vpack.c.b16 %v4340, %v4338
    %v5369 = vpack.c.b16 %v4341, %v4339
    %v5370 = vpack.c.b16 %v4344, %v4342
    %v5371 = vpack.c.b16 %v4345, %v4343
    %v5372 = vpack.c.b16 %v4348, %v4346
    %v5373 = vpack.c.b16 %v4349, %v4347
    %6398 = vmatpush.bf16.msra.mxu0 %v4364
    %6399 = vmatpush.bf16.msra.mxu0 %v4362
    %6400 = vmatpush.bf16.msra.mxu0 %v4360
    %6401 = vmatpush.bf16.msra.mxu0 %v4358
    %6402 = vmatpush.bf16.msra.mxu0 %v4356
    %6403 = vmatpush.bf16.msra.mxu0 %v4354
    %6404 = vmatpush.bf16.msra.mxu0 %v4352
    %6405 = vmatpush.bf16.msra.mxu0 %v4350
    %6406 = vmatmul.bf16.gmra.mxu0 %v190
    %v6407 = vpop.f32.mrf.mxu0
    %v6408 = vadd.f32 0.0, %v6407
    %v6409 = vpop.f32.mrf.mxu0
    %v6410 = vadd.f32 0.0, %v6409
    %6411 = vdwg.mxu0
    %6412 = vmatpush.bf16.msra.mxu0 %v4380
    %6413 = vmatpush.bf16.msra.mxu0 %v4378
    %6414 = vmatpush.bf16.msra.mxu0 %v4376
    %6415 = vmatpush.bf16.msra.mxu0 %v4374
    %6416 = vmatpush.bf16.msra.mxu0 %v4372
    %6417 = vmatpush.bf16.msra.mxu0 %v4370
    %6418 = vmatpush.bf16.msra.mxu0 %v4368
    %6419 = vmatpush.bf16.msra.mxu0 %v4366
    %6420 = vmatmul.bf16.gmra.mxu0 %v191
    %v6421 = vpop.f32.mrf.mxu0
    %v6422 = vadd.f32 %v6408, %v6421
    %v6423 = vpop.f32.mrf.mxu0
    %v6424 = vadd.f32 %v6410, %v6423
    %6425 = vdwg.mxu0
    %6426 = vmatpush.bf16.msra.mxu0 %v4396
    %6427 = vmatpush.bf16.msra.mxu0 %v4394
    %6428 = vmatpush.bf16.msra.mxu0 %v4392
    %6429 = vmatpush.bf16.msra.mxu0 %v4390
    %6430 = vmatpush.bf16.msra.mxu0 %v4388
    %6431 = vmatpush.bf16.msra.mxu0 %v4386
    %6432 = vmatpush.bf16.msra.mxu0 %v4384
    %6433 = vmatpush.bf16.msra.mxu0 %v4382
    %6434 = vmatmul.bf16.gmra.mxu0 %v192
    %v6435 = vpop.f32.mrf.mxu0
    %v6436 = vadd.f32 %v6422, %v6435
    %v6437 = vpop.f32.mrf.mxu0
    %v6438 = vadd.f32 %v6424, %v6437
    %6439 = vdwg.mxu0
    %6440 = vmatpush.bf16.msra.mxu0 %v4412
    %6441 = vmatpush.bf16.msra.mxu0 %v4410
    %6442 = vmatpush.bf16.msra.mxu0 %v4408
    %6443 = vmatpush.bf16.msra.mxu0 %v4406
    %6444 = vmatpush.bf16.msra.mxu0 %v4404
    %6445 = vmatpush.bf16.msra.mxu0 %v4402
    %6446 = vmatpush.bf16.msra.mxu0 %v4400
    %6447 = vmatpush.bf16.msra.mxu0 %v4398
    %6448 = vmatmul.bf16.gmra.mxu0 %v193
    %v6449 = vpop.f32.mrf.mxu0
    %v6450 = vadd.f32 %v6436, %v6449
    %v6451 = vpop.f32.mrf.mxu0
    %v6452 = vadd.f32 %v6438, %v6451
    %6453 = vdwg.mxu0
    %6454 = vmatpush.bf16.msra.mxu0 %v4428
    %6455 = vmatpush.bf16.msra.mxu0 %v4426
    %6456 = vmatpush.bf16.msra.mxu0 %v4424
    %6457 = vmatpush.bf16.msra.mxu0 %v4422
    %6458 = vmatpush.bf16.msra.mxu0 %v4420
    %6459 = vmatpush.bf16.msra.mxu0 %v4418
    %6460 = vmatpush.bf16.msra.mxu0 %v4416
    %6461 = vmatpush.bf16.msra.mxu0 %v4414
    %6462 = vmatmul.bf16.gmra.mxu0 %v194
    %v6463 = vpop.f32.mrf.mxu0
    %v6464 = vadd.f32 %v6450, %v6463
    %v6465 = vpop.f32.mrf.mxu0
    %v6466 = vadd.f32 %v6452, %v6465
    %6467 = vdwg.mxu0
    %6468 = vmatpush.bf16.msra.mxu0 %v4444
    %6469 = vmatpush.bf16.msra.mxu0 %v4442
    %6470 = vmatpush.bf16.msra.mxu0 %v4440
    %6471 = vmatpush.bf16.msra.mxu0 %v4438
    %6472 = vmatpush.bf16.msra.mxu0 %v4436
    %6473 = vmatpush.bf16.msra.mxu0 %v4434
    %6474 = vmatpush.bf16.msra.mxu0 %v4432
    %6475 = vmatpush.bf16.msra.mxu0 %v4430
    %6476 = vmatmul.bf16.gmra.mxu0 %v195
    %v6477 = vpop.f32.mrf.mxu0
    %v6478 = vadd.f32 %v6464, %v6477
    %v6479 = vpop.f32.mrf.mxu0
    %v6480 = vadd.f32 %v6466, %v6479
    %6481 = vdwg.mxu0
    %6482 = vmatpush.bf16.msra.mxu0 %v4460
    %6483 = vmatpush.bf16.msra.mxu0 %v4458
    %6484 = vmatpush.bf16.msra.mxu0 %v4456
    %6485 = vmatpush.bf16.msra.mxu0 %v4454
    %6486 = vmatpush.bf16.msra.mxu0 %v4452
    %6487 = vmatpush.bf16.msra.mxu0 %v4450
    %6488 = vmatpush.bf16.msra.mxu0 %v4448
    %6489 = vmatpush.bf16.msra.mxu0 %v4446
    %6490 = vmatmul.bf16.gmra.mxu0 %v196
    %v6491 = vpop.f32.mrf.mxu0
    %v6492 = vadd.f32 %v6478, %v6491
    %v6493 = vpop.f32.mrf.mxu0
    %v6494 = vadd.f32 %v6480, %v6493
    %6495 = vdwg.mxu0
    %6496 = vmatpush.bf16.msra.mxu0 %v4476
    %6497 = vmatpush.bf16.msra.mxu0 %v4474
    %6498 = vmatpush.bf16.msra.mxu0 %v4472
    %6499 = vmatpush.bf16.msra.mxu0 %v4470
    %6500 = vmatpush.bf16.msra.mxu0 %v4468
    %6501 = vmatpush.bf16.msra.mxu0 %v4466
    %6502 = vmatpush.bf16.msra.mxu0 %v4464
    %6503 = vmatpush.bf16.msra.mxu0 %v4462
    %6504 = vmatmul.bf16.gmra.mxu0 %v197
    %v6505 = vpop.f32.mrf.mxu0
    %v6506 = vadd.f32 %v6492, %v6505
    %v6507 = vpop.f32.mrf.mxu0
    %v6508 = vadd.f32 %v6494, %v6507
    %6509 = vdwg.mxu0
    %6510 = vmatpush.bf16.msra.mxu0 %v4492
    %6511 = vmatpush.bf16.msra.mxu0 %v4490
    %6512 = vmatpush.bf16.msra.mxu0 %v4488
    %6513 = vmatpush.bf16.msra.mxu0 %v4486
    %6514 = vmatpush.bf16.msra.mxu0 %v4484
    %6515 = vmatpush.bf16.msra.mxu0 %v4482
    %6516 = vmatpush.bf16.msra.mxu0 %v4480
    %6517 = vmatpush.bf16.msra.mxu0 %v4478
    %6518 = vmatmul.bf16.gmra.mxu0 %v198
    %v6519 = vpop.f32.mrf.mxu0
    %v6520 = vadd.f32 %v6506, %v6519
    %v6521 = vpop.f32.mrf.mxu0
    %v6522 = vadd.f32 %v6508, %v6521
    %6523 = vdwg.mxu0
    %6524 = vmatpush.bf16.msra.mxu0 %v4508
    %6525 = vmatpush.bf16.msra.mxu0 %v4506
    %6526 = vmatpush.bf16.msra.mxu0 %v4504
    %6527 = vmatpush.bf16.msra.mxu0 %v4502
    %6528 = vmatpush.bf16.msra.mxu0 %v4500
    %6529 = vmatpush.bf16.msra.mxu0 %v4498
    %6530 = vmatpush.bf16.msra.mxu0 %v4496
    %6531 = vmatpush.bf16.msra.mxu0 %v4494
    %6532 = vmatmul.bf16.gmra.mxu0 %v199
    %v6533 = vpop.f32.mrf.mxu0
    %v6534 = vadd.f32 %v6520, %v6533
    %v6535 = vpop.f32.mrf.mxu0
    %v6536 = vadd.f32 %v6522, %v6535
    %6537 = vdwg.mxu0
    %6538 = vmatpush.bf16.msra.mxu0 %v4524
    %6539 = vmatpush.bf16.msra.mxu0 %v4522
    %6540 = vmatpush.bf16.msra.mxu0 %v4520
    %6541 = vmatpush.bf16.msra.mxu0 %v4518
    %6542 = vmatpush.bf16.msra.mxu0 %v4516
    %6543 = vmatpush.bf16.msra.mxu0 %v4514
    %6544 = vmatpush.bf16.msra.mxu0 %v4512
    %6545 = vmatpush.bf16.msra.mxu0 %v4510
    %6546 = vmatmul.bf16.gmra.mxu0 %v200
    %v6547 = vpop.f32.mrf.mxu0
    %v6548 = vadd.f32 %v6534, %v6547
    %v6549 = vpop.f32.mrf.mxu0
    %v6550 = vadd.f32 %v6536, %v6549
    %6551 = vdwg.mxu0
    %6552 = vmatpush.bf16.msra.mxu0 %v4540
    %6553 = vmatpush.bf16.msra.mxu0 %v4538
    %6554 = vmatpush.bf16.msra.mxu0 %v4536
    %6555 = vmatpush.bf16.msra.mxu0 %v4534
    %6556 = vmatpush.bf16.msra.mxu0 %v4532
    %6557 = vmatpush.bf16.msra.mxu0 %v4530
    %6558 = vmatpush.bf16.msra.mxu0 %v4528
    %6559 = vmatpush.bf16.msra.mxu0 %v4526
    %6560 = vmatmul.bf16.gmra.mxu0 %v201
    %v6561 = vpop.f32.mrf.mxu0
    %v6562 = vadd.f32 %v6548, %v6561
    %v6563 = vpop.f32.mrf.mxu0
    %v6564 = vadd.f32 %v6550, %v6563
    %6565 = vdwg.mxu0
    %6566 = vmatpush.bf16.msra.mxu0 %v4556
    %6567 = vmatpush.bf16.msra.mxu0 %v4554
    %6568 = vmatpush.bf16.msra.mxu0 %v4552
    %6569 = vmatpush.bf16.msra.mxu0 %v4550
    %6570 = vmatpush.bf16.msra.mxu0 %v4548
    %6571 = vmatpush.bf16.msra.mxu0 %v4546
    %6572 = vmatpush.bf16.msra.mxu0 %v4544
    %6573 = vmatpush.bf16.msra.mxu0 %v4542
    %6574 = vmatmul.bf16.gmra.mxu0 %v202
    %v6575 = vpop.f32.mrf.mxu0
    %v6576 = vadd.f32 %v6562, %v6575
    %v6577 = vpop.f32.mrf.mxu0
    %v6578 = vadd.f32 %v6564, %v6577
    %6579 = vdwg.mxu0
    %6580 = vmatpush.bf16.msra.mxu0 %v4572
    %6581 = vmatpush.bf16.msra.mxu0 %v4570
    %6582 = vmatpush.bf16.msra.mxu0 %v4568
    %6583 = vmatpush.bf16.msra.mxu0 %v4566
    %6584 = vmatpush.bf16.msra.mxu0 %v4564
    %6585 = vmatpush.bf16.msra.mxu0 %v4562
    %6586 = vmatpush.bf16.msra.mxu0 %v4560
    %6587 = vmatpush.bf16.msra.mxu0 %v4558
    %6588 = vmatmul.bf16.gmra.mxu0 %v203
    %v6589 = vpop.f32.mrf.mxu0
    %v6590 = vadd.f32 %v6576, %v6589
    %v6591 = vpop.f32.mrf.mxu0
    %v6592 = vadd.f32 %v6578, %v6591
    %6593 = vdwg.mxu0
    %6594 = vmatpush.bf16.msra.mxu0 %v4588
    %6595 = vmatpush.bf16.msra.mxu0 %v4586
    %6596 = vmatpush.bf16.msra.mxu0 %v4584
    %6597 = vmatpush.bf16.msra.mxu0 %v4582
    %6598 = vmatpush.bf16.msra.mxu0 %v4580
    %6599 = vmatpush.bf16.msra.mxu0 %v4578
    %6600 = vmatpush.bf16.msra.mxu0 %v4576
    %6601 = vmatpush.bf16.msra.mxu0 %v4574
    %6602 = vmatmul.bf16.gmra.mxu0 %v204
    %v6603 = vpop.f32.mrf.mxu0
    %v6604 = vadd.f32 %v6590, %v6603
    %v6605 = vpop.f32.mrf.mxu0
    %v6606 = vadd.f32 %v6592, %v6605
    %6607 = vdwg.mxu0
    %6608 = vmatpush.bf16.msra.mxu0 %v4604
    %6609 = vmatpush.bf16.msra.mxu0 %v4602
    %6610 = vmatpush.bf16.msra.mxu0 %v4600
    %6611 = vmatpush.bf16.msra.mxu0 %v4598
    %6612 = vmatpush.bf16.msra.mxu0 %v4596
    %6613 = vmatpush.bf16.msra.mxu0 %v4594
    %6614 = vmatpush.bf16.msra.mxu0 %v4592
    %6615 = vmatpush.bf16.msra.mxu0 %v4590
    %6616 = vmatmul.bf16.gmra.mxu0 %v205
    %v6617 = vpop.f32.mrf.mxu0
    %v6618 = vadd.f32 %v6604, %v6617
    %v6619 = vpop.f32.mrf.mxu0
    %v6620 = vadd.f32 %v6606, %v6619
    %6621 = vdwg.mxu0
    %6622 = vmatpush.bf16.msra.mxu0 %v4620
    %6623 = vmatpush.bf16.msra.mxu0 %v4618
    %6624 = vmatpush.bf16.msra.mxu0 %v4616
    %6625 = vmatpush.bf16.msra.mxu0 %v4614
    %6626 = vmatpush.bf16.msra.mxu0 %v4612
    %6627 = vmatpush.bf16.msra.mxu0 %v4610
    %6628 = vmatpush.bf16.msra.mxu0 %v4608
    %6629 = vmatpush.bf16.msra.mxu0 %v4606
    %6630 = vmatmul.bf16.gmra.mxu0 %v206
    %v6631 = vpop.f32.mrf.mxu0
    %v6632 = vadd.f32 %v6618, %v6631
    %v6633 = vpop.f32.mrf.mxu0
    %v6634 = vadd.f32 %v6620, %v6633
    %6635 = vdwg.mxu0
    %6636 = vmatpush.bf16.msra.mxu0 %v4636
    %6637 = vmatpush.bf16.msra.mxu0 %v4634
    %6638 = vmatpush.bf16.msra.mxu0 %v4632
    %6639 = vmatpush.bf16.msra.mxu0 %v4630
    %6640 = vmatpush.bf16.msra.mxu0 %v4628
    %6641 = vmatpush.bf16.msra.mxu0 %v4626
    %6642 = vmatpush.bf16.msra.mxu0 %v4624
    %6643 = vmatpush.bf16.msra.mxu0 %v4622
    %6644 = vmatmul.bf16.gmra.mxu0 %v207
    %v6645 = vpop.f32.mrf.mxu0
    %v6646 = vadd.f32 %v6632, %v6645
    %v6647 = vpop.f32.mrf.mxu0
    %v6648 = vadd.f32 %v6634, %v6647
    %6649 = vdwg.mxu0
    %6650 = vmatpush.bf16.msra.mxu0 %v4652
    %6651 = vmatpush.bf16.msra.mxu0 %v4650
    %6652 = vmatpush.bf16.msra.mxu0 %v4648
    %6653 = vmatpush.bf16.msra.mxu0 %v4646
    %6654 = vmatpush.bf16.msra.mxu0 %v4644
    %6655 = vmatpush.bf16.msra.mxu0 %v4642
    %6656 = vmatpush.bf16.msra.mxu0 %v4640
    %6657 = vmatpush.bf16.msra.mxu0 %v4638
    %6658 = vmatmul.bf16.gmra.mxu0 %v208
    %v6659 = vpop.f32.mrf.mxu0
    %v6660 = vadd.f32 %v6646, %v6659
    %v6661 = vpop.f32.mrf.mxu0
    %v6662 = vadd.f32 %v6648, %v6661
    %6663 = vdwg.mxu0
    %6664 = vmatpush.bf16.msra.mxu0 %v4668
    %6665 = vmatpush.bf16.msra.mxu0 %v4666
    %6666 = vmatpush.bf16.msra.mxu0 %v4664
    %6667 = vmatpush.bf16.msra.mxu0 %v4662
    %6668 = vmatpush.bf16.msra.mxu0 %v4660
    %6669 = vmatpush.bf16.msra.mxu0 %v4658
    %6670 = vmatpush.bf16.msra.mxu0 %v4656
    %6671 = vmatpush.bf16.msra.mxu0 %v4654
    %6672 = vmatmul.bf16.gmra.mxu0 %v209
    %v6673 = vpop.f32.mrf.mxu0
    %v6674 = vadd.f32 %v6660, %v6673
    %v6675 = vpop.f32.mrf.mxu0
    %v6676 = vadd.f32 %v6662, %v6675
    %6677 = vdwg.mxu0
    %6678 = vmatpush.bf16.msra.mxu0 %v4684
    %6679 = vmatpush.bf16.msra.mxu0 %v4682
    %6680 = vmatpush.bf16.msra.mxu0 %v4680
    %6681 = vmatpush.bf16.msra.mxu0 %v4678
    %6682 = vmatpush.bf16.msra.mxu0 %v4676
    %6683 = vmatpush.bf16.msra.mxu0 %v4674
    %6684 = vmatpush.bf16.msra.mxu0 %v4672
    %6685 = vmatpush.bf16.msra.mxu0 %v4670
    %6686 = vmatmul.bf16.gmra.mxu0 %v210
    %v6687 = vpop.f32.mrf.mxu0
    %v6688 = vadd.f32 %v6674, %v6687
    %v6689 = vpop.f32.mrf.mxu0
    %v6690 = vadd.f32 %v6676, %v6689
    %6691 = vdwg.mxu0
    %6692 = vmatpush.bf16.msra.mxu0 %v4700
    %6693 = vmatpush.bf16.msra.mxu0 %v4698
    %6694 = vmatpush.bf16.msra.mxu0 %v4696
    %6695 = vmatpush.bf16.msra.mxu0 %v4694
    %6696 = vmatpush.bf16.msra.mxu0 %v4692
    %6697 = vmatpush.bf16.msra.mxu0 %v4690
    %6698 = vmatpush.bf16.msra.mxu0 %v4688
    %6699 = vmatpush.bf16.msra.mxu0 %v4686
    %6700 = vmatmul.bf16.gmra.mxu0 %v211
    %v6701 = vpop.f32.mrf.mxu0
    %v6702 = vadd.f32 %v6688, %v6701
    %v6703 = vpop.f32.mrf.mxu0
    %v6704 = vadd.f32 %v6690, %v6703
    %6705 = vdwg.mxu0
    %6706 = vmatpush.bf16.msra.mxu0 %v4716
    %6707 = vmatpush.bf16.msra.mxu0 %v4714
    %6708 = vmatpush.bf16.msra.mxu0 %v4712
    %6709 = vmatpush.bf16.msra.mxu0 %v4710
    %6710 = vmatpush.bf16.msra.mxu0 %v4708
    %6711 = vmatpush.bf16.msra.mxu0 %v4706
    %6712 = vmatpush.bf16.msra.mxu0 %v4704
    %6713 = vmatpush.bf16.msra.mxu0 %v4702
    %6714 = vmatmul.bf16.gmra.mxu0 %v212
    %v6715 = vpop.f32.mrf.mxu0
    %v6716 = vadd.f32 %v6702, %v6715
    %v6717 = vpop.f32.mrf.mxu0
    %v6718 = vadd.f32 %v6704, %v6717
    %6719 = vdwg.mxu0
    %6720 = vmatpush.bf16.msra.mxu0 %v4732
    %6721 = vmatpush.bf16.msra.mxu0 %v4730
    %6722 = vmatpush.bf16.msra.mxu0 %v4728
    %6723 = vmatpush.bf16.msra.mxu0 %v4726
    %6724 = vmatpush.bf16.msra.mxu0 %v4724
    %6725 = vmatpush.bf16.msra.mxu0 %v4722
    %6726 = vmatpush.bf16.msra.mxu0 %v4720
    %6727 = vmatpush.bf16.msra.mxu0 %v4718
    %6728 = vmatmul.bf16.gmra.mxu0 %v213
    %v6729 = vpop.f32.mrf.mxu0
    %v6730 = vadd.f32 %v6716, %v6729
    %v6731 = vpop.f32.mrf.mxu0
    %v6732 = vadd.f32 %v6718, %v6731
    %6733 = vdwg.mxu0
    %6734 = vmatpush.bf16.msra.mxu0 %v4748
    %6735 = vmatpush.bf16.msra.mxu0 %v4746
    %6736 = vmatpush.bf16.msra.mxu0 %v4744
    %6737 = vmatpush.bf16.msra.mxu0 %v4742
    %6738 = vmatpush.bf16.msra.mxu0 %v4740
    %6739 = vmatpush.bf16.msra.mxu0 %v4738
    %6740 = vmatpush.bf16.msra.mxu0 %v4736
    %6741 = vmatpush.bf16.msra.mxu0 %v4734
    %6742 = vmatmul.bf16.gmra.mxu0 %v214
    %v6743 = vpop.f32.mrf.mxu0
    %v6744 = vadd.f32 %v6730, %v6743
    %v6745 = vpop.f32.mrf.mxu0
    %v6746 = vadd.f32 %v6732, %v6745
    %6747 = vdwg.mxu0
    %6748 = vmatpush.bf16.msra.mxu0 %v4764
    %6749 = vmatpush.bf16.msra.mxu0 %v4762
    %6750 = vmatpush.bf16.msra.mxu0 %v4760
    %6751 = vmatpush.bf16.msra.mxu0 %v4758
    %6752 = vmatpush.bf16.msra.mxu0 %v4756
    %6753 = vmatpush.bf16.msra.mxu0 %v4754
    %6754 = vmatpush.bf16.msra.mxu0 %v4752
    %6755 = vmatpush.bf16.msra.mxu0 %v4750
    %6756 = vmatmul.bf16.gmra.mxu0 %v215
    %v6757 = vpop.f32.mrf.mxu0
    %v6758 = vadd.f32 %v6744, %v6757
    %v6759 = vpop.f32.mrf.mxu0
    %v6760 = vadd.f32 %v6746, %v6759
    %6761 = vdwg.mxu0
    %6762 = vmatpush.bf16.msra.mxu0 %v4780
    %6763 = vmatpush.bf16.msra.mxu0 %v4778
    %6764 = vmatpush.bf16.msra.mxu0 %v4776
    %6765 = vmatpush.bf16.msra.mxu0 %v4774
    %6766 = vmatpush.bf16.msra.mxu0 %v4772
    %6767 = vmatpush.bf16.msra.mxu0 %v4770
    %6768 = vmatpush.bf16.msra.mxu0 %v4768
    %6769 = vmatpush.bf16.msra.mxu0 %v4766
    %6770 = vmatmul.bf16.gmra.mxu0 %v216
    %v6771 = vpop.f32.mrf.mxu0
    %v6772 = vadd.f32 %v6758, %v6771
    %v6773 = vpop.f32.mrf.mxu0
    %v6774 = vadd.f32 %v6760, %v6773
    %6775 = vdwg.mxu0
    %6776 = vmatpush.bf16.msra.mxu0 %v4796
    %6777 = vmatpush.bf16.msra.mxu0 %v4794
    %6778 = vmatpush.bf16.msra.mxu0 %v4792
    %6779 = vmatpush.bf16.msra.mxu0 %v4790
    %6780 = vmatpush.bf16.msra.mxu0 %v4788
    %6781 = vmatpush.bf16.msra.mxu0 %v4786
    %6782 = vmatpush.bf16.msra.mxu0 %v4784
    %6783 = vmatpush.bf16.msra.mxu0 %v4782
    %6784 = vmatmul.bf16.gmra.mxu0 %v217
    %v6785 = vpop.f32.mrf.mxu0
    %v6786 = vadd.f32 %v6772, %v6785
    %v6787 = vpop.f32.mrf.mxu0
    %v6788 = vadd.f32 %v6774, %v6787
    %6789 = vdwg.mxu0
    %6790 = vmatpush.bf16.msra.mxu0 %v4812
    %6791 = vmatpush.bf16.msra.mxu0 %v4810
    %6792 = vmatpush.bf16.msra.mxu0 %v4808
    %6793 = vmatpush.bf16.msra.mxu0 %v4806
    %6794 = vmatpush.bf16.msra.mxu0 %v4804
    %6795 = vmatpush.bf16.msra.mxu0 %v4802
    %6796 = vmatpush.bf16.msra.mxu0 %v4800
    %6797 = vmatpush.bf16.msra.mxu0 %v4798
    %6798 = vmatmul.bf16.gmra.mxu0 %v218
    %v6799 = vpop.f32.mrf.mxu0
    %v6800 = vadd.f32 %v6786, %v6799
    %v6801 = vpop.f32.mrf.mxu0
    %v6802 = vadd.f32 %v6788, %v6801
    %6803 = vdwg.mxu0
    %6804 = vmatpush.bf16.msra.mxu0 %v4828
    %6805 = vmatpush.bf16.msra.mxu0 %v4826
    %6806 = vmatpush.bf16.msra.mxu0 %v4824
    %6807 = vmatpush.bf16.msra.mxu0 %v4822
    %6808 = vmatpush.bf16.msra.mxu0 %v4820
    %6809 = vmatpush.bf16.msra.mxu0 %v4818
    %6810 = vmatpush.bf16.msra.mxu0 %v4816
    %6811 = vmatpush.bf16.msra.mxu0 %v4814
    %6812 = vmatmul.bf16.gmra.mxu0 %v219
    %v6813 = vpop.f32.mrf.mxu0
    %v6814 = vadd.f32 %v6800, %v6813
    %v6815 = vpop.f32.mrf.mxu0
    %v6816 = vadd.f32 %v6802, %v6815
    %6817 = vdwg.mxu0
    %6818 = vmatpush.bf16.msra.mxu0 %v4844
    %6819 = vmatpush.bf16.msra.mxu0 %v4842
    %6820 = vmatpush.bf16.msra.mxu0 %v4840
    %6821 = vmatpush.bf16.msra.mxu0 %v4838
    %6822 = vmatpush.bf16.msra.mxu0 %v4836
    %6823 = vmatpush.bf16.msra.mxu0 %v4834
    %6824 = vmatpush.bf16.msra.mxu0 %v4832
    %6825 = vmatpush.bf16.msra.mxu0 %v4830
    %6826 = vmatmul.bf16.gmra.mxu0 %v220
    %v6827 = vpop.f32.mrf.mxu0
    %v6828 = vadd.f32 %v6814, %v6827
    %v6829 = vpop.f32.mrf.mxu0
    %v6830 = vadd.f32 %v6816, %v6829
    %6831 = vdwg.mxu0
    %6832 = vmatpush.bf16.msra.mxu0 %v4860
    %6833 = vmatpush.bf16.msra.mxu0 %v4858
    %6834 = vmatpush.bf16.msra.mxu0 %v4856
    %6835 = vmatpush.bf16.msra.mxu0 %v4854
    %6836 = vmatpush.bf16.msra.mxu0 %v4852
    %6837 = vmatpush.bf16.msra.mxu0 %v4850
    %6838 = vmatpush.bf16.msra.mxu0 %v4848
    %6839 = vmatpush.bf16.msra.mxu0 %v4846
    %6840 = vmatmul.bf16.gmra.mxu0 %v221
    %v6841 = vpop.f32.mrf.mxu0
    %v6842 = vadd.f32 %v6828, %v6841
    %v6843 = vpop.f32.mrf.mxu0
    %v6844 = vadd.f32 %v6830, %v6843
    %6845 = vdwg.mxu0
    %6846 = vmatpush.bf16.msra.mxu0 %v4876
    %6847 = vmatpush.bf16.msra.mxu0 %v4874
    %6848 = vmatpush.bf16.msra.mxu0 %v4872
    %6849 = vmatpush.bf16.msra.mxu0 %v4870
    %6850 = vmatpush.bf16.msra.mxu0 %v4868
    %6851 = vmatpush.bf16.msra.mxu0 %v4866
    %6852 = vmatpush.bf16.msra.mxu0 %v4864
    %6853 = vmatpush.bf16.msra.mxu0 %v4862
    %6854 = vmatmul.bf16.gmra.mxu0 %v222
    %v6855 = vpop.f32.mrf.mxu0
    %v6856 = vadd.f32 %v6842, %v6855
    %v6857 = vpop.f32.mrf.mxu0
    %v6858 = vadd.f32 %v6844, %v6857
    %6859 = vdwg.mxu0
    %6860 = vmatpush.bf16.msra.mxu0 %v4892
    %6861 = vmatpush.bf16.msra.mxu0 %v4890
    %6862 = vmatpush.bf16.msra.mxu0 %v4888
    %6863 = vmatpush.bf16.msra.mxu0 %v4886
    %6864 = vmatpush.bf16.msra.mxu0 %v4884
    %6865 = vmatpush.bf16.msra.mxu0 %v4882
    %6866 = vmatpush.bf16.msra.mxu0 %v4880
    %6867 = vmatpush.bf16.msra.mxu0 %v4878
    %6868 = vmatmul.bf16.gmra.mxu0 %v223
    %v6869 = vpop.f32.mrf.mxu0
    %v6870 = vadd.f32 %v6856, %v6869
    %v6871 = vpop.f32.mrf.mxu0
    %v6872 = vadd.f32 %v6858, %v6871
    %6873 = vdwg.mxu0
    %6874 = vmatpush.bf16.msra.mxu0 %v4908
    %6875 = vmatpush.bf16.msra.mxu0 %v4906
    %6876 = vmatpush.bf16.msra.mxu0 %v4904
    %6877 = vmatpush.bf16.msra.mxu0 %v4902
    %6878 = vmatpush.bf16.msra.mxu0 %v4900
    %6879 = vmatpush.bf16.msra.mxu0 %v4898
    %6880 = vmatpush.bf16.msra.mxu0 %v4896
    %6881 = vmatpush.bf16.msra.mxu0 %v4894
    %6882 = vmatmul.bf16.gmra.mxu0 %v224
    %v6883 = vpop.f32.mrf.mxu0
    %v6884 = vadd.f32 %v6870, %v6883
    %v6885 = vpop.f32.mrf.mxu0
    %v6886 = vadd.f32 %v6872, %v6885
    %6887 = vdwg.mxu0
    %6888 = vmatpush.bf16.msra.mxu0 %v4924
    %6889 = vmatpush.bf16.msra.mxu0 %v4922
    %6890 = vmatpush.bf16.msra.mxu0 %v4920
    %6891 = vmatpush.bf16.msra.mxu0 %v4918
    %6892 = vmatpush.bf16.msra.mxu0 %v4916
    %6893 = vmatpush.bf16.msra.mxu0 %v4914
    %6894 = vmatpush.bf16.msra.mxu0 %v4912
    %6895 = vmatpush.bf16.msra.mxu0 %v4910
    %6896 = vmatmul.bf16.gmra.mxu0 %v225
    %v6897 = vpop.f32.mrf.mxu0
    %v6898 = vadd.f32 %v6884, %v6897
    %v6899 = vpop.f32.mrf.mxu0
    %v6900 = vadd.f32 %v6886, %v6899
    %6901 = vdwg.mxu0
    %6902 = vmatpush.bf16.msra.mxu0 %v4940
    %6903 = vmatpush.bf16.msra.mxu0 %v4938
    %6904 = vmatpush.bf16.msra.mxu0 %v4936
    %6905 = vmatpush.bf16.msra.mxu0 %v4934
    %6906 = vmatpush.bf16.msra.mxu0 %v4932
    %6907 = vmatpush.bf16.msra.mxu0 %v4930
    %6908 = vmatpush.bf16.msra.mxu0 %v4928
    %6909 = vmatpush.bf16.msra.mxu0 %v4926
    %6910 = vmatmul.bf16.gmra.mxu0 %v226
    %v6911 = vpop.f32.mrf.mxu0
    %v6912 = vadd.f32 %v6898, %v6911
    %v6913 = vpop.f32.mrf.mxu0
    %v6914 = vadd.f32 %v6900, %v6913
    %6915 = vdwg.mxu0
    %6916 = vmatpush.bf16.msra.mxu0 %v4956
    %6917 = vmatpush.bf16.msra.mxu0 %v4954
    %6918 = vmatpush.bf16.msra.mxu0 %v4952
    %6919 = vmatpush.bf16.msra.mxu0 %v4950
    %6920 = vmatpush.bf16.msra.mxu0 %v4948
    %6921 = vmatpush.bf16.msra.mxu0 %v4946
    %6922 = vmatpush.bf16.msra.mxu0 %v4944
    %6923 = vmatpush.bf16.msra.mxu0 %v4942
    %6924 = vmatmul.bf16.gmra.mxu0 %v227
    %v6925 = vpop.f32.mrf.mxu0
    %v6926 = vadd.f32 %v6912, %v6925
    %v6927 = vpop.f32.mrf.mxu0
    %v6928 = vadd.f32 %v6914, %v6927
    %6929 = vdwg.mxu0
    %6930 = vmatpush.bf16.msra.mxu0 %v4972
    %6931 = vmatpush.bf16.msra.mxu0 %v4970
    %6932 = vmatpush.bf16.msra.mxu0 %v4968
    %6933 = vmatpush.bf16.msra.mxu0 %v4966
    %6934 = vmatpush.bf16.msra.mxu0 %v4964
    %6935 = vmatpush.bf16.msra.mxu0 %v4962
    %6936 = vmatpush.bf16.msra.mxu0 %v4960
    %6937 = vmatpush.bf16.msra.mxu0 %v4958
    %6938 = vmatmul.bf16.gmra.mxu0 %v228
    %v6939 = vpop.f32.mrf.mxu0
    %v6940 = vadd.f32 %v6926, %v6939
    %v6941 = vpop.f32.mrf.mxu0
    %v6942 = vadd.f32 %v6928, %v6941
    %6943 = vdwg.mxu0
    %6944 = vmatpush.bf16.msra.mxu0 %v4988
    %6945 = vmatpush.bf16.msra.mxu0 %v4986
    %6946 = vmatpush.bf16.msra.mxu0 %v4984
    %6947 = vmatpush.bf16.msra.mxu0 %v4982
    %6948 = vmatpush.bf16.msra.mxu0 %v4980
    %6949 = vmatpush.bf16.msra.mxu0 %v4978
    %6950 = vmatpush.bf16.msra.mxu0 %v4976
    %6951 = vmatpush.bf16.msra.mxu0 %v4974
    %6952 = vmatmul.bf16.gmra.mxu0 %v229
    %v6953 = vpop.f32.mrf.mxu0
    %v6954 = vadd.f32 %v6940, %v6953
    %v6955 = vpop.f32.mrf.mxu0
    %v6956 = vadd.f32 %v6942, %v6955
    %6957 = vdwg.mxu0
    %6958 = vmatpush.bf16.msra.mxu0 %v5004
    %6959 = vmatpush.bf16.msra.mxu0 %v5002
    %6960 = vmatpush.bf16.msra.mxu0 %v5000
    %6961 = vmatpush.bf16.msra.mxu0 %v4998
    %6962 = vmatpush.bf16.msra.mxu0 %v4996
    %6963 = vmatpush.bf16.msra.mxu0 %v4994
    %6964 = vmatpush.bf16.msra.mxu0 %v4992
    %6965 = vmatpush.bf16.msra.mxu0 %v4990
    %6966 = vmatmul.bf16.gmra.mxu0 %v230
    %v6967 = vpop.f32.mrf.mxu0
    %v6968 = vadd.f32 %v6954, %v6967
    %v6969 = vpop.f32.mrf.mxu0
    %v6970 = vadd.f32 %v6956, %v6969
    %6971 = vdwg.mxu0
    %6972 = vmatpush.bf16.msra.mxu0 %v5020
    %6973 = vmatpush.bf16.msra.mxu0 %v5018
    %6974 = vmatpush.bf16.msra.mxu0 %v5016
    %6975 = vmatpush.bf16.msra.mxu0 %v5014
    %6976 = vmatpush.bf16.msra.mxu0 %v5012
    %6977 = vmatpush.bf16.msra.mxu0 %v5010
    %6978 = vmatpush.bf16.msra.mxu0 %v5008
    %6979 = vmatpush.bf16.msra.mxu0 %v5006
    %6980 = vmatmul.bf16.gmra.mxu0 %v231
    %v6981 = vpop.f32.mrf.mxu0
    %v6982 = vadd.f32 %v6968, %v6981
    %v6983 = vpop.f32.mrf.mxu0
    %v6984 = vadd.f32 %v6970, %v6983
    %6985 = vdwg.mxu0
    %6986 = vmatpush.bf16.msra.mxu0 %v5036
    %6987 = vmatpush.bf16.msra.mxu0 %v5034
    %6988 = vmatpush.bf16.msra.mxu0 %v5032
    %6989 = vmatpush.bf16.msra.mxu0 %v5030
    %6990 = vmatpush.bf16.msra.mxu0 %v5028
    %6991 = vmatpush.bf16.msra.mxu0 %v5026
    %6992 = vmatpush.bf16.msra.mxu0 %v5024
    %6993 = vmatpush.bf16.msra.mxu0 %v5022
    %6994 = vmatmul.bf16.gmra.mxu0 %v232
    %v6995 = vpop.f32.mrf.mxu0
    %v6996 = vadd.f32 %v6982, %v6995
    %v6997 = vpop.f32.mrf.mxu0
    %v6998 = vadd.f32 %v6984, %v6997
    %6999 = vdwg.mxu0
    %7000 = vmatpush.bf16.msra.mxu0 %v5052
    %7001 = vmatpush.bf16.msra.mxu0 %v5050
    %7002 = vmatpush.bf16.msra.mxu0 %v5048
    %7003 = vmatpush.bf16.msra.mxu0 %v5046
    %7004 = vmatpush.bf16.msra.mxu0 %v5044
    %7005 = vmatpush.bf16.msra.mxu0 %v5042
    %7006 = vmatpush.bf16.msra.mxu0 %v5040
    %7007 = vmatpush.bf16.msra.mxu0 %v5038
    %7008 = vmatmul.bf16.gmra.mxu0 %v233
    %v7009 = vpop.f32.mrf.mxu0
    %v7010 = vadd.f32 %v6996, %v7009
    %v7011 = vpop.f32.mrf.mxu0
    %v7012 = vadd.f32 %v6998, %v7011
    %7013 = vdwg.mxu0
    %7014 = vmatpush.bf16.msra.mxu0 %v5068
    %7015 = vmatpush.bf16.msra.mxu0 %v5066
    %7016 = vmatpush.bf16.msra.mxu0 %v5064
    %7017 = vmatpush.bf16.msra.mxu0 %v5062
    %7018 = vmatpush.bf16.msra.mxu0 %v5060
    %7019 = vmatpush.bf16.msra.mxu0 %v5058
    %7020 = vmatpush.bf16.msra.mxu0 %v5056
    %7021 = vmatpush.bf16.msra.mxu0 %v5054
    %7022 = vmatmul.bf16.gmra.mxu0 %v234
    %v7023 = vpop.f32.mrf.mxu0
    %v7024 = vadd.f32 %v7010, %v7023
    %v7025 = vpop.f32.mrf.mxu0
    %v7026 = vadd.f32 %v7012, %v7025
    %7027 = vdwg.mxu0
    %7028 = vmatpush.bf16.msra.mxu0 %v5084
    %7029 = vmatpush.bf16.msra.mxu0 %v5082
    %7030 = vmatpush.bf16.msra.mxu0 %v5080
    %7031 = vmatpush.bf16.msra.mxu0 %v5078
    %7032 = vmatpush.bf16.msra.mxu0 %v5076
    %7033 = vmatpush.bf16.msra.mxu0 %v5074
    %7034 = vmatpush.bf16.msra.mxu0 %v5072
    %7035 = vmatpush.bf16.msra.mxu0 %v5070
    %7036 = vmatmul.bf16.gmra.mxu0 %v235
    %v7037 = vpop.f32.mrf.mxu0
    %v7038 = vadd.f32 %v7024, %v7037
    %v7039 = vpop.f32.mrf.mxu0
    %v7040 = vadd.f32 %v7026, %v7039
    %7041 = vdwg.mxu0
    %7042 = vmatpush.bf16.msra.mxu0 %v5100
    %7043 = vmatpush.bf16.msra.mxu0 %v5098
    %7044 = vmatpush.bf16.msra.mxu0 %v5096
    %7045 = vmatpush.bf16.msra.mxu0 %v5094
    %7046 = vmatpush.bf16.msra.mxu0 %v5092
    %7047 = vmatpush.bf16.msra.mxu0 %v5090
    %7048 = vmatpush.bf16.msra.mxu0 %v5088
    %7049 = vmatpush.bf16.msra.mxu0 %v5086
    %7050 = vmatmul.bf16.gmra.mxu0 %v236
    %v7051 = vpop.f32.mrf.mxu0
    %v7052 = vadd.f32 %v7038, %v7051
    %v7053 = vpop.f32.mrf.mxu0
    %v7054 = vadd.f32 %v7040, %v7053
    %7055 = vdwg.mxu0
    %7056 = vmatpush.bf16.msra.mxu0 %v5116
    %7057 = vmatpush.bf16.msra.mxu0 %v5114
    %7058 = vmatpush.bf16.msra.mxu0 %v5112
    %7059 = vmatpush.bf16.msra.mxu0 %v5110
    %7060 = vmatpush.bf16.msra.mxu0 %v5108
    %7061 = vmatpush.bf16.msra.mxu0 %v5106
    %7062 = vmatpush.bf16.msra.mxu0 %v5104
    %7063 = vmatpush.bf16.msra.mxu0 %v5102
    %7064 = vmatmul.bf16.gmra.mxu0 %v237
    %v7065 = vpop.f32.mrf.mxu0
    %v7066 = vadd.f32 %v7052, %v7065
    %v7067 = vpop.f32.mrf.mxu0
    %v7068 = vadd.f32 %v7054, %v7067
    %7069 = vdwg.mxu0
    %7070 = vmatpush.bf16.msra.mxu0 %v5132
    %7071 = vmatpush.bf16.msra.mxu0 %v5130
    %7072 = vmatpush.bf16.msra.mxu0 %v5128
    %7073 = vmatpush.bf16.msra.mxu0 %v5126
    %7074 = vmatpush.bf16.msra.mxu0 %v5124
    %7075 = vmatpush.bf16.msra.mxu0 %v5122
    %7076 = vmatpush.bf16.msra.mxu0 %v5120
    %7077 = vmatpush.bf16.msra.mxu0 %v5118
    %7078 = vmatmul.bf16.gmra.mxu0 %v238
    %v7079 = vpop.f32.mrf.mxu0
    %v7080 = vadd.f32 %v7066, %v7079
    %v7081 = vpop.f32.mrf.mxu0
    %v7082 = vadd.f32 %v7068, %v7081
    %7083 = vdwg.mxu0
    %7084 = vmatpush.bf16.msra.mxu0 %v5148
    %7085 = vmatpush.bf16.msra.mxu0 %v5146
    %7086 = vmatpush.bf16.msra.mxu0 %v5144
    %7087 = vmatpush.bf16.msra.mxu0 %v5142
    %7088 = vmatpush.bf16.msra.mxu0 %v5140
    %7089 = vmatpush.bf16.msra.mxu0 %v5138
    %7090 = vmatpush.bf16.msra.mxu0 %v5136
    %7091 = vmatpush.bf16.msra.mxu0 %v5134
    %7092 = vmatmul.bf16.gmra.mxu0 %v239
    %v7093 = vpop.f32.mrf.mxu0
    %v7094 = vadd.f32 %v7080, %v7093
    %v7095 = vpop.f32.mrf.mxu0
    %v7096 = vadd.f32 %v7082, %v7095
    %7097 = vdwg.mxu0
    %7098 = vmatpush.bf16.msra.mxu0 %v5164
    %7099 = vmatpush.bf16.msra.mxu0 %v5162
    %7100 = vmatpush.bf16.msra.mxu0 %v5160
    %7101 = vmatpush.bf16.msra.mxu0 %v5158
    %7102 = vmatpush.bf16.msra.mxu0 %v5156
    %7103 = vmatpush.bf16.msra.mxu0 %v5154
    %7104 = vmatpush.bf16.msra.mxu0 %v5152
    %7105 = vmatpush.bf16.msra.mxu0 %v5150
    %7106 = vmatmul.bf16.gmra.mxu0 %v240
    %v7107 = vpop.f32.mrf.mxu0
    %v7108 = vadd.f32 %v7094, %v7107
    %v7109 = vpop.f32.mrf.mxu0
    %v7110 = vadd.f32 %v7096, %v7109
    %7111 = vdwg.mxu0
    %7112 = vmatpush.bf16.msra.mxu0 %v5180
    %7113 = vmatpush.bf16.msra.mxu0 %v5178
    %7114 = vmatpush.bf16.msra.mxu0 %v5176
    %7115 = vmatpush.bf16.msra.mxu0 %v5174
    %7116 = vmatpush.bf16.msra.mxu0 %v5172
    %7117 = vmatpush.bf16.msra.mxu0 %v5170
    %7118 = vmatpush.bf16.msra.mxu0 %v5168
    %7119 = vmatpush.bf16.msra.mxu0 %v5166
    %7120 = vmatmul.bf16.gmra.mxu0 %v241
    %v7121 = vpop.f32.mrf.mxu0
    %v7122 = vadd.f32 %v7108, %v7121
    %v7123 = vpop.f32.mrf.mxu0
    %v7124 = vadd.f32 %v7110, %v7123
    %7125 = vdwg.mxu0
    %7126 = vmatpush.bf16.msra.mxu0 %v5196
    %7127 = vmatpush.bf16.msra.mxu0 %v5194
    %7128 = vmatpush.bf16.msra.mxu0 %v5192
    %7129 = vmatpush.bf16.msra.mxu0 %v5190
    %7130 = vmatpush.bf16.msra.mxu0 %v5188
    %7131 = vmatpush.bf16.msra.mxu0 %v5186
    %7132 = vmatpush.bf16.msra.mxu0 %v5184
    %7133 = vmatpush.bf16.msra.mxu0 %v5182
    %7134 = vmatmul.bf16.gmra.mxu0 %v242
    %v7135 = vpop.f32.mrf.mxu0
    %v7136 = vadd.f32 %v7122, %v7135
    %v7137 = vpop.f32.mrf.mxu0
    %v7138 = vadd.f32 %v7124, %v7137
    %7139 = vdwg.mxu0
    %7140 = vmatpush.bf16.msra.mxu0 %v5212
    %7141 = vmatpush.bf16.msra.mxu0 %v5210
    %7142 = vmatpush.bf16.msra.mxu0 %v5208
    %7143 = vmatpush.bf16.msra.mxu0 %v5206
    %7144 = vmatpush.bf16.msra.mxu0 %v5204
    %7145 = vmatpush.bf16.msra.mxu0 %v5202
    %7146 = vmatpush.bf16.msra.mxu0 %v5200
    %7147 = vmatpush.bf16.msra.mxu0 %v5198
    %7148 = vmatmul.bf16.gmra.mxu0 %v243
    %v7149 = vpop.f32.mrf.mxu0
    %v7150 = vadd.f32 %v7136, %v7149
    %v7151 = vpop.f32.mrf.mxu0
    %v7152 = vadd.f32 %v7138, %v7151
    %7153 = vdwg.mxu0
    %7154 = vmatpush.bf16.msra.mxu0 %v5228
    %7155 = vmatpush.bf16.msra.mxu0 %v5226
    %7156 = vmatpush.bf16.msra.mxu0 %v5224
    %7157 = vmatpush.bf16.msra.mxu0 %v5222
    %7158 = vmatpush.bf16.msra.mxu0 %v5220
    %7159 = vmatpush.bf16.msra.mxu0 %v5218
    %7160 = vmatpush.bf16.msra.mxu0 %v5216
    %7161 = vmatpush.bf16.msra.mxu0 %v5214
    %7162 = vmatmul.bf16.gmra.mxu0 %v244
    %v7163 = vpop.f32.mrf.mxu0
    %v7164 = vadd.f32 %v7150, %v7163
    %v7165 = vpop.f32.mrf.mxu0
    %v7166 = vadd.f32 %v7152, %v7165
    %7167 = vdwg.mxu0
    %7168 = vmatpush.bf16.msra.mxu0 %v5244
    %7169 = vmatpush.bf16.msra.mxu0 %v5242
    %7170 = vmatpush.bf16.msra.mxu0 %v5240
    %7171 = vmatpush.bf16.msra.mxu0 %v5238
    %7172 = vmatpush.bf16.msra.mxu0 %v5236
    %7173 = vmatpush.bf16.msra.mxu0 %v5234
    %7174 = vmatpush.bf16.msra.mxu0 %v5232
    %7175 = vmatpush.bf16.msra.mxu0 %v5230
    %7176 = vmatmul.bf16.gmra.mxu0 %v245
    %v7177 = vpop.f32.mrf.mxu0
    %v7178 = vadd.f32 %v7164, %v7177
    %v7179 = vpop.f32.mrf.mxu0
    %v7180 = vadd.f32 %v7166, %v7179
    %7181 = vdwg.mxu0
    %7182 = vmatpush.bf16.msra.mxu0 %v5260
    %7183 = vmatpush.bf16.msra.mxu0 %v5258
    %7184 = vmatpush.bf16.msra.mxu0 %v5256
    %7185 = vmatpush.bf16.msra.mxu0 %v5254
    %7186 = vmatpush.bf16.msra.mxu0 %v5252
    %7187 = vmatpush.bf16.msra.mxu0 %v5250
    %7188 = vmatpush.bf16.msra.mxu0 %v5248
    %7189 = vmatpush.bf16.msra.mxu0 %v5246
    %7190 = vmatmul.bf16.gmra.mxu0 %v246
    %v7191 = vpop.f32.mrf.mxu0
    %v7192 = vadd.f32 %v7178, %v7191
    %v7193 = vpop.f32.mrf.mxu0
    %v7194 = vadd.f32 %v7180, %v7193
    %7195 = vdwg.mxu0
    %7196 = vmatpush.bf16.msra.mxu0 %v5276
    %7197 = vmatpush.bf16.msra.mxu0 %v5274
    %7198 = vmatpush.bf16.msra.mxu0 %v5272
    %7199 = vmatpush.bf16.msra.mxu0 %v5270
    %7200 = vmatpush.bf16.msra.mxu0 %v5268
    %7201 = vmatpush.bf16.msra.mxu0 %v5266
    %7202 = vmatpush.bf16.msra.mxu0 %v5264
    %7203 = vmatpush.bf16.msra.mxu0 %v5262
    %7204 = vmatmul.bf16.gmra.mxu0 %v247
    %v7205 = vpop.f32.mrf.mxu0
    %v7206 = vadd.f32 %v7192, %v7205
    %v7207 = vpop.f32.mrf.mxu0
    %v7208 = vadd.f32 %v7194, %v7207
    %7209 = vdwg.mxu0
    %7210 = vmatpush.bf16.msra.mxu0 %v5292
    %7211 = vmatpush.bf16.msra.mxu0 %v5290
    %7212 = vmatpush.bf16.msra.mxu0 %v5288
    %7213 = vmatpush.bf16.msra.mxu0 %v5286
    %7214 = vmatpush.bf16.msra.mxu0 %v5284
    %7215 = vmatpush.bf16.msra.mxu0 %v5282
    %7216 = vmatpush.bf16.msra.mxu0 %v5280
    %7217 = vmatpush.bf16.msra.mxu0 %v5278
    %7218 = vmatmul.bf16.gmra.mxu0 %v248
    %v7219 = vpop.f32.mrf.mxu0
    %v7220 = vadd.f32 %v7206, %v7219
    %v7221 = vpop.f32.mrf.mxu0
    %v7222 = vadd.f32 %v7208, %v7221
    %7223 = vdwg.mxu0
    %7224 = vmatpush.bf16.msra.mxu0 %v5308
    %7225 = vmatpush.bf16.msra.mxu0 %v5306
    %7226 = vmatpush.bf16.msra.mxu0 %v5304
    %7227 = vmatpush.bf16.msra.mxu0 %v5302
    %7228 = vmatpush.bf16.msra.mxu0 %v5300
    %7229 = vmatpush.bf16.msra.mxu0 %v5298
    %7230 = vmatpush.bf16.msra.mxu0 %v5296
    %7231 = vmatpush.bf16.msra.mxu0 %v5294
    %7232 = vmatmul.bf16.gmra.mxu0 %v249
    %v7233 = vpop.f32.mrf.mxu0
    %v7234 = vadd.f32 %v7220, %v7233
    %v7235 = vpop.f32.mrf.mxu0
    %v7236 = vadd.f32 %v7222, %v7235
    %7237 = vdwg.mxu0
    %7238 = vmatpush.bf16.msra.mxu0 %v5324
    %7239 = vmatpush.bf16.msra.mxu0 %v5322
    %7240 = vmatpush.bf16.msra.mxu0 %v5320
    %7241 = vmatpush.bf16.msra.mxu0 %v5318
    %7242 = vmatpush.bf16.msra.mxu0 %v5316
    %7243 = vmatpush.bf16.msra.mxu0 %v5314
    %7244 = vmatpush.bf16.msra.mxu0 %v5312
    %7245 = vmatpush.bf16.msra.mxu0 %v5310
    %7246 = vmatmul.bf16.gmra.mxu0 %v250
    %v7247 = vpop.f32.mrf.mxu0
    %v7248 = vadd.f32 %v7234, %v7247
    %v7249 = vpop.f32.mrf.mxu0
    %v7250 = vadd.f32 %v7236, %v7249
    %7251 = vdwg.mxu0
    %7252 = vmatpush.bf16.msra.mxu0 %v5340
    %7253 = vmatpush.bf16.msra.mxu0 %v5338
    %7254 = vmatpush.bf16.msra.mxu0 %v5336
    %7255 = vmatpush.bf16.msra.mxu0 %v5334
    %7256 = vmatpush.bf16.msra.mxu0 %v5332
    %7257 = vmatpush.bf16.msra.mxu0 %v5330
    %7258 = vmatpush.bf16.msra.mxu0 %v5328
    %7259 = vmatpush.bf16.msra.mxu0 %v5326
    %7260 = vmatmul.bf16.gmra.mxu0 %v251
    %v7261 = vpop.f32.mrf.mxu0
    %v7262 = vadd.f32 %v7248, %v7261
    %v7263 = vpop.f32.mrf.mxu0
    %v7264 = vadd.f32 %v7250, %v7263
    %7265 = vdwg.mxu0
    %7266 = vmatpush.bf16.msra.mxu0 %v5356
    %7267 = vmatpush.bf16.msra.mxu0 %v5354
    %7268 = vmatpush.bf16.msra.mxu0 %v5352
    %7269 = vmatpush.bf16.msra.mxu0 %v5350
    %7270 = vmatpush.bf16.msra.mxu0 %v5348
    %7271 = vmatpush.bf16.msra.mxu0 %v5346
    %7272 = vmatpush.bf16.msra.mxu0 %v5344
    %7273 = vmatpush.bf16.msra.mxu0 %v5342
    %7274 = vmatmul.bf16.gmra.mxu0 %v252
    %v7275 = vpop.f32.mrf.mxu0
    %v7276 = vadd.f32 %v7262, %v7275
    %v7277 = vpop.f32.mrf.mxu0
    %v7278 = vadd.f32 %v7264, %v7277
    %7279 = vdwg.mxu0
    %7280 = vmatpush.bf16.msra.mxu0 %v5372
    %7281 = vmatpush.bf16.msra.mxu0 %v5370
    %7282 = vmatpush.bf16.msra.mxu0 %v5368
    %7283 = vmatpush.bf16.msra.mxu0 %v5366
    %7284 = vmatpush.bf16.msra.mxu0 %v5364
    %7285 = vmatpush.bf16.msra.mxu0 %v5362
    %7286 = vmatpush.bf16.msra.mxu0 %v5360
    %7287 = vmatpush.bf16.msra.mxu0 %v5358
    %7288 = vmatmul.bf16.gmra.mxu0 %v253
    %v7289 = vpop.f32.mrf.mxu0
    %v7290 = vadd.f32 %v7276, %v7289
    %v7291 = vpop.f32.mrf.mxu0
    %v7292 = vadd.f32 %v7278, %v7291
    %7293 = vdwg.mxu0
    %7294 = vmatpush.bf16.msra.mxu0 %v4365
    %7295 = vmatpush.bf16.msra.mxu0 %v4363
    %7296 = vmatpush.bf16.msra.mxu0 %v4361
    %7297 = vmatpush.bf16.msra.mxu0 %v4359
    %7298 = vmatpush.bf16.msra.mxu0 %v4357
    %7299 = vmatpush.bf16.msra.mxu0 %v4355
    %7300 = vmatpush.bf16.msra.mxu0 %v4353
    %7301 = vmatpush.bf16.msra.mxu0 %v4351
    %7302 = vmatmul.bf16.gmra.mxu0 %v190
    %v7303 = vpop.f32.mrf.mxu0
    %v7304 = vadd.f32 0.0, %v7303
    %v7305 = vpop.f32.mrf.mxu0
    %v7306 = vadd.f32 0.0, %v7305
    %7307 = vdwg.mxu0
    %7308 = vmatpush.bf16.msra.mxu0 %v4381
    %7309 = vmatpush.bf16.msra.mxu0 %v4379
    %7310 = vmatpush.bf16.msra.mxu0 %v4377
    %7311 = vmatpush.bf16.msra.mxu0 %v4375
    %7312 = vmatpush.bf16.msra.mxu0 %v4373
    %7313 = vmatpush.bf16.msra.mxu0 %v4371
    %7314 = vmatpush.bf16.msra.mxu0 %v4369
    %7315 = vmatpush.bf16.msra.mxu0 %v4367
    %7316 = vmatmul.bf16.gmra.mxu0 %v191
    %v7317 = vpop.f32.mrf.mxu0
    %v7318 = vadd.f32 %v7304, %v7317
    %v7319 = vpop.f32.mrf.mxu0
    %v7320 = vadd.f32 %v7306, %v7319
    %7321 = vdwg.mxu0
    %7322 = vmatpush.bf16.msra.mxu0 %v4397
    %7323 = vmatpush.bf16.msra.mxu0 %v4395
    %7324 = vmatpush.bf16.msra.mxu0 %v4393
    %7325 = vmatpush.bf16.msra.mxu0 %v4391
    %7326 = vmatpush.bf16.msra.mxu0 %v4389
    %7327 = vmatpush.bf16.msra.mxu0 %v4387
    %7328 = vmatpush.bf16.msra.mxu0 %v4385
    %7329 = vmatpush.bf16.msra.mxu0 %v4383
    %7330 = vmatmul.bf16.gmra.mxu0 %v192
    %v7331 = vpop.f32.mrf.mxu0
    %v7332 = vadd.f32 %v7318, %v7331
    %v7333 = vpop.f32.mrf.mxu0
    %v7334 = vadd.f32 %v7320, %v7333
    %7335 = vdwg.mxu0
    %7336 = vmatpush.bf16.msra.mxu0 %v4413
    %7337 = vmatpush.bf16.msra.mxu0 %v4411
    %7338 = vmatpush.bf16.msra.mxu0 %v4409
    %7339 = vmatpush.bf16.msra.mxu0 %v4407
    %7340 = vmatpush.bf16.msra.mxu0 %v4405
    %7341 = vmatpush.bf16.msra.mxu0 %v4403
    %7342 = vmatpush.bf16.msra.mxu0 %v4401
    %7343 = vmatpush.bf16.msra.mxu0 %v4399
    %7344 = vmatmul.bf16.gmra.mxu0 %v193
    %v7345 = vpop.f32.mrf.mxu0
    %v7346 = vadd.f32 %v7332, %v7345
    %v7347 = vpop.f32.mrf.mxu0
    %v7348 = vadd.f32 %v7334, %v7347
    %7349 = vdwg.mxu0
    %7350 = vmatpush.bf16.msra.mxu0 %v4429
    %7351 = vmatpush.bf16.msra.mxu0 %v4427
    %7352 = vmatpush.bf16.msra.mxu0 %v4425
    %7353 = vmatpush.bf16.msra.mxu0 %v4423
    %7354 = vmatpush.bf16.msra.mxu0 %v4421
    %7355 = vmatpush.bf16.msra.mxu0 %v4419
    %7356 = vmatpush.bf16.msra.mxu0 %v4417
    %7357 = vmatpush.bf16.msra.mxu0 %v4415
    %7358 = vmatmul.bf16.gmra.mxu0 %v194
    %v7359 = vpop.f32.mrf.mxu0
    %v7360 = vadd.f32 %v7346, %v7359
    %v7361 = vpop.f32.mrf.mxu0
    %v7362 = vadd.f32 %v7348, %v7361
    %7363 = vdwg.mxu0
    %7364 = vmatpush.bf16.msra.mxu0 %v4445
    %7365 = vmatpush.bf16.msra.mxu0 %v4443
    %7366 = vmatpush.bf16.msra.mxu0 %v4441
    %7367 = vmatpush.bf16.msra.mxu0 %v4439
    %7368 = vmatpush.bf16.msra.mxu0 %v4437
    %7369 = vmatpush.bf16.msra.mxu0 %v4435
    %7370 = vmatpush.bf16.msra.mxu0 %v4433
    %7371 = vmatpush.bf16.msra.mxu0 %v4431
    %7372 = vmatmul.bf16.gmra.mxu0 %v195
    %v7373 = vpop.f32.mrf.mxu0
    %v7374 = vadd.f32 %v7360, %v7373
    %v7375 = vpop.f32.mrf.mxu0
    %v7376 = vadd.f32 %v7362, %v7375
    %7377 = vdwg.mxu0
    %7378 = vmatpush.bf16.msra.mxu0 %v4461
    %7379 = vmatpush.bf16.msra.mxu0 %v4459
    %7380 = vmatpush.bf16.msra.mxu0 %v4457
    %7381 = vmatpush.bf16.msra.mxu0 %v4455
    %7382 = vmatpush.bf16.msra.mxu0 %v4453
    %7383 = vmatpush.bf16.msra.mxu0 %v4451
    %7384 = vmatpush.bf16.msra.mxu0 %v4449
    %7385 = vmatpush.bf16.msra.mxu0 %v4447
    %7386 = vmatmul.bf16.gmra.mxu0 %v196
    %v7387 = vpop.f32.mrf.mxu0
    %v7388 = vadd.f32 %v7374, %v7387
    %v7389 = vpop.f32.mrf.mxu0
    %v7390 = vadd.f32 %v7376, %v7389
    %7391 = vdwg.mxu0
    %7392 = vmatpush.bf16.msra.mxu0 %v4477
    %7393 = vmatpush.bf16.msra.mxu0 %v4475
    %7394 = vmatpush.bf16.msra.mxu0 %v4473
    %7395 = vmatpush.bf16.msra.mxu0 %v4471
    %7396 = vmatpush.bf16.msra.mxu0 %v4469
    %7397 = vmatpush.bf16.msra.mxu0 %v4467
    %7398 = vmatpush.bf16.msra.mxu0 %v4465
    %7399 = vmatpush.bf16.msra.mxu0 %v4463
    %7400 = vmatmul.bf16.gmra.mxu0 %v197
    %v7401 = vpop.f32.mrf.mxu0
    %v7402 = vadd.f32 %v7388, %v7401
    %v7403 = vpop.f32.mrf.mxu0
    %v7404 = vadd.f32 %v7390, %v7403
    %7405 = vdwg.mxu0
    %7406 = vmatpush.bf16.msra.mxu0 %v4493
    %7407 = vmatpush.bf16.msra.mxu0 %v4491
    %7408 = vmatpush.bf16.msra.mxu0 %v4489
    %7409 = vmatpush.bf16.msra.mxu0 %v4487
    %7410 = vmatpush.bf16.msra.mxu0 %v4485
    %7411 = vmatpush.bf16.msra.mxu0 %v4483
    %7412 = vmatpush.bf16.msra.mxu0 %v4481
    %7413 = vmatpush.bf16.msra.mxu0 %v4479
    %7414 = vmatmul.bf16.gmra.mxu0 %v198
    %v7415 = vpop.f32.mrf.mxu0
    %v7416 = vadd.f32 %v7402, %v7415
    %v7417 = vpop.f32.mrf.mxu0
    %v7418 = vadd.f32 %v7404, %v7417
    %7419 = vdwg.mxu0
    %7420 = vmatpush.bf16.msra.mxu0 %v4509
    %7421 = vmatpush.bf16.msra.mxu0 %v4507
    %7422 = vmatpush.bf16.msra.mxu0 %v4505
    %7423 = vmatpush.bf16.msra.mxu0 %v4503
    %7424 = vmatpush.bf16.msra.mxu0 %v4501
    %7425 = vmatpush.bf16.msra.mxu0 %v4499
    %7426 = vmatpush.bf16.msra.mxu0 %v4497
    %7427 = vmatpush.bf16.msra.mxu0 %v4495
    %7428 = vmatmul.bf16.gmra.mxu0 %v199
    %v7429 = vpop.f32.mrf.mxu0
    %v7430 = vadd.f32 %v7416, %v7429
    %v7431 = vpop.f32.mrf.mxu0
    %v7432 = vadd.f32 %v7418, %v7431
    %7433 = vdwg.mxu0
    %7434 = vmatpush.bf16.msra.mxu0 %v4525
    %7435 = vmatpush.bf16.msra.mxu0 %v4523
    %7436 = vmatpush.bf16.msra.mxu0 %v4521
    %7437 = vmatpush.bf16.msra.mxu0 %v4519
    %7438 = vmatpush.bf16.msra.mxu0 %v4517
    %7439 = vmatpush.bf16.msra.mxu0 %v4515
    %7440 = vmatpush.bf16.msra.mxu0 %v4513
    %7441 = vmatpush.bf16.msra.mxu0 %v4511
    %7442 = vmatmul.bf16.gmra.mxu0 %v200
    %v7443 = vpop.f32.mrf.mxu0
    %v7444 = vadd.f32 %v7430, %v7443
    %v7445 = vpop.f32.mrf.mxu0
    %v7446 = vadd.f32 %v7432, %v7445
    %7447 = vdwg.mxu0
    %7448 = vmatpush.bf16.msra.mxu0 %v4541
    %7449 = vmatpush.bf16.msra.mxu0 %v4539
    %7450 = vmatpush.bf16.msra.mxu0 %v4537
    %7451 = vmatpush.bf16.msra.mxu0 %v4535
    %7452 = vmatpush.bf16.msra.mxu0 %v4533
    %7453 = vmatpush.bf16.msra.mxu0 %v4531
    %7454 = vmatpush.bf16.msra.mxu0 %v4529
    %7455 = vmatpush.bf16.msra.mxu0 %v4527
    %7456 = vmatmul.bf16.gmra.mxu0 %v201
    %v7457 = vpop.f32.mrf.mxu0
    %v7458 = vadd.f32 %v7444, %v7457
    %v7459 = vpop.f32.mrf.mxu0
    %v7460 = vadd.f32 %v7446, %v7459
    %7461 = vdwg.mxu0
    %7462 = vmatpush.bf16.msra.mxu0 %v4557
    %7463 = vmatpush.bf16.msra.mxu0 %v4555
    %7464 = vmatpush.bf16.msra.mxu0 %v4553
    %7465 = vmatpush.bf16.msra.mxu0 %v4551
    %7466 = vmatpush.bf16.msra.mxu0 %v4549
    %7467 = vmatpush.bf16.msra.mxu0 %v4547
    %7468 = vmatpush.bf16.msra.mxu0 %v4545
    %7469 = vmatpush.bf16.msra.mxu0 %v4543
    %7470 = vmatmul.bf16.gmra.mxu0 %v202
    %v7471 = vpop.f32.mrf.mxu0
    %v7472 = vadd.f32 %v7458, %v7471
    %v7473 = vpop.f32.mrf.mxu0
    %v7474 = vadd.f32 %v7460, %v7473
    %7475 = vdwg.mxu0
    %7476 = vmatpush.bf16.msra.mxu0 %v4573
    %7477 = vmatpush.bf16.msra.mxu0 %v4571
    %7478 = vmatpush.bf16.msra.mxu0 %v4569
    %7479 = vmatpush.bf16.msra.mxu0 %v4567
    %7480 = vmatpush.bf16.msra.mxu0 %v4565
    %7481 = vmatpush.bf16.msra.mxu0 %v4563
    %7482 = vmatpush.bf16.msra.mxu0 %v4561
    %7483 = vmatpush.bf16.msra.mxu0 %v4559
    %7484 = vmatmul.bf16.gmra.mxu0 %v203
    %v7485 = vpop.f32.mrf.mxu0
    %v7486 = vadd.f32 %v7472, %v7485
    %v7487 = vpop.f32.mrf.mxu0
    %v7488 = vadd.f32 %v7474, %v7487
    %7489 = vdwg.mxu0
    %7490 = vmatpush.bf16.msra.mxu0 %v4589
    %7491 = vmatpush.bf16.msra.mxu0 %v4587
    %7492 = vmatpush.bf16.msra.mxu0 %v4585
    %7493 = vmatpush.bf16.msra.mxu0 %v4583
    %7494 = vmatpush.bf16.msra.mxu0 %v4581
    %7495 = vmatpush.bf16.msra.mxu0 %v4579
    %7496 = vmatpush.bf16.msra.mxu0 %v4577
    %7497 = vmatpush.bf16.msra.mxu0 %v4575
    %7498 = vmatmul.bf16.gmra.mxu0 %v204
    %v7499 = vpop.f32.mrf.mxu0
    %v7500 = vadd.f32 %v7486, %v7499
    %v7501 = vpop.f32.mrf.mxu0
    %v7502 = vadd.f32 %v7488, %v7501
    %7503 = vdwg.mxu0
    %7504 = vmatpush.bf16.msra.mxu0 %v4605
    %7505 = vmatpush.bf16.msra.mxu0 %v4603
    %7506 = vmatpush.bf16.msra.mxu0 %v4601
    %7507 = vmatpush.bf16.msra.mxu0 %v4599
    %7508 = vmatpush.bf16.msra.mxu0 %v4597
    %7509 = vmatpush.bf16.msra.mxu0 %v4595
    %7510 = vmatpush.bf16.msra.mxu0 %v4593
    %7511 = vmatpush.bf16.msra.mxu0 %v4591
    %7512 = vmatmul.bf16.gmra.mxu0 %v205
    %v7513 = vpop.f32.mrf.mxu0
    %v7514 = vadd.f32 %v7500, %v7513
    %v7515 = vpop.f32.mrf.mxu0
    %v7516 = vadd.f32 %v7502, %v7515
    %7517 = vdwg.mxu0
    %7518 = vmatpush.bf16.msra.mxu0 %v4621
    %7519 = vmatpush.bf16.msra.mxu0 %v4619
    %7520 = vmatpush.bf16.msra.mxu0 %v4617
    %7521 = vmatpush.bf16.msra.mxu0 %v4615
    %7522 = vmatpush.bf16.msra.mxu0 %v4613
    %7523 = vmatpush.bf16.msra.mxu0 %v4611
    %7524 = vmatpush.bf16.msra.mxu0 %v4609
    %7525 = vmatpush.bf16.msra.mxu0 %v4607
    %7526 = vmatmul.bf16.gmra.mxu0 %v206
    %v7527 = vpop.f32.mrf.mxu0
    %v7528 = vadd.f32 %v7514, %v7527
    %v7529 = vpop.f32.mrf.mxu0
    %v7530 = vadd.f32 %v7516, %v7529
    %7531 = vdwg.mxu0
    %7532 = vmatpush.bf16.msra.mxu0 %v4637
    %7533 = vmatpush.bf16.msra.mxu0 %v4635
    %7534 = vmatpush.bf16.msra.mxu0 %v4633
    %7535 = vmatpush.bf16.msra.mxu0 %v4631
    %7536 = vmatpush.bf16.msra.mxu0 %v4629
    %7537 = vmatpush.bf16.msra.mxu0 %v4627
    %7538 = vmatpush.bf16.msra.mxu0 %v4625
    %7539 = vmatpush.bf16.msra.mxu0 %v4623
    %7540 = vmatmul.bf16.gmra.mxu0 %v207
    %v7541 = vpop.f32.mrf.mxu0
    %v7542 = vadd.f32 %v7528, %v7541
    %v7543 = vpop.f32.mrf.mxu0
    %v7544 = vadd.f32 %v7530, %v7543
    %7545 = vdwg.mxu0
    %7546 = vmatpush.bf16.msra.mxu0 %v4653
    %7547 = vmatpush.bf16.msra.mxu0 %v4651
    %7548 = vmatpush.bf16.msra.mxu0 %v4649
    %7549 = vmatpush.bf16.msra.mxu0 %v4647
    %7550 = vmatpush.bf16.msra.mxu0 %v4645
    %7551 = vmatpush.bf16.msra.mxu0 %v4643
    %7552 = vmatpush.bf16.msra.mxu0 %v4641
    %7553 = vmatpush.bf16.msra.mxu0 %v4639
    %7554 = vmatmul.bf16.gmra.mxu0 %v208
    %v7555 = vpop.f32.mrf.mxu0
    %v7556 = vadd.f32 %v7542, %v7555
    %v7557 = vpop.f32.mrf.mxu0
    %v7558 = vadd.f32 %v7544, %v7557
    %7559 = vdwg.mxu0
    %7560 = vmatpush.bf16.msra.mxu0 %v4669
    %7561 = vmatpush.bf16.msra.mxu0 %v4667
    %7562 = vmatpush.bf16.msra.mxu0 %v4665
    %7563 = vmatpush.bf16.msra.mxu0 %v4663
    %7564 = vmatpush.bf16.msra.mxu0 %v4661
    %7565 = vmatpush.bf16.msra.mxu0 %v4659
    %7566 = vmatpush.bf16.msra.mxu0 %v4657
    %7567 = vmatpush.bf16.msra.mxu0 %v4655
    %7568 = vmatmul.bf16.gmra.mxu0 %v209
    %v7569 = vpop.f32.mrf.mxu0
    %v7570 = vadd.f32 %v7556, %v7569
    %v7571 = vpop.f32.mrf.mxu0
    %v7572 = vadd.f32 %v7558, %v7571
    %7573 = vdwg.mxu0
    %7574 = vmatpush.bf16.msra.mxu0 %v4685
    %7575 = vmatpush.bf16.msra.mxu0 %v4683
    %7576 = vmatpush.bf16.msra.mxu0 %v4681
    %7577 = vmatpush.bf16.msra.mxu0 %v4679
    %7578 = vmatpush.bf16.msra.mxu0 %v4677
    %7579 = vmatpush.bf16.msra.mxu0 %v4675
    %7580 = vmatpush.bf16.msra.mxu0 %v4673
    %7581 = vmatpush.bf16.msra.mxu0 %v4671
    %7582 = vmatmul.bf16.gmra.mxu0 %v210
    %v7583 = vpop.f32.mrf.mxu0
    %v7584 = vadd.f32 %v7570, %v7583
    %v7585 = vpop.f32.mrf.mxu0
    %v7586 = vadd.f32 %v7572, %v7585
    %7587 = vdwg.mxu0
    %7588 = vmatpush.bf16.msra.mxu0 %v4701
    %7589 = vmatpush.bf16.msra.mxu0 %v4699
    %7590 = vmatpush.bf16.msra.mxu0 %v4697
    %7591 = vmatpush.bf16.msra.mxu0 %v4695
    %7592 = vmatpush.bf16.msra.mxu0 %v4693
    %7593 = vmatpush.bf16.msra.mxu0 %v4691
    %7594 = vmatpush.bf16.msra.mxu0 %v4689
    %7595 = vmatpush.bf16.msra.mxu0 %v4687
    %7596 = vmatmul.bf16.gmra.mxu0 %v211
    %v7597 = vpop.f32.mrf.mxu0
    %v7598 = vadd.f32 %v7584, %v7597
    %v7599 = vpop.f32.mrf.mxu0
    %v7600 = vadd.f32 %v7586, %v7599
    %7601 = vdwg.mxu0
    %7602 = vmatpush.bf16.msra.mxu0 %v4717
    %7603 = vmatpush.bf16.msra.mxu0 %v4715
    %7604 = vmatpush.bf16.msra.mxu0 %v4713
    %7605 = vmatpush.bf16.msra.mxu0 %v4711
    %7606 = vmatpush.bf16.msra.mxu0 %v4709
    %7607 = vmatpush.bf16.msra.mxu0 %v4707
    %7608 = vmatpush.bf16.msra.mxu0 %v4705
    %7609 = vmatpush.bf16.msra.mxu0 %v4703
    %7610 = vmatmul.bf16.gmra.mxu0 %v212
    %v7611 = vpop.f32.mrf.mxu0
    %v7612 = vadd.f32 %v7598, %v7611
    %v7613 = vpop.f32.mrf.mxu0
    %v7614 = vadd.f32 %v7600, %v7613
    %7615 = vdwg.mxu0
    %7616 = vmatpush.bf16.msra.mxu0 %v4733
    %7617 = vmatpush.bf16.msra.mxu0 %v4731
    %7618 = vmatpush.bf16.msra.mxu0 %v4729
    %7619 = vmatpush.bf16.msra.mxu0 %v4727
    %7620 = vmatpush.bf16.msra.mxu0 %v4725
    %7621 = vmatpush.bf16.msra.mxu0 %v4723
    %7622 = vmatpush.bf16.msra.mxu0 %v4721
    %7623 = vmatpush.bf16.msra.mxu0 %v4719
    %7624 = vmatmul.bf16.gmra.mxu0 %v213
    %v7625 = vpop.f32.mrf.mxu0
    %v7626 = vadd.f32 %v7612, %v7625
    %v7627 = vpop.f32.mrf.mxu0
    %v7628 = vadd.f32 %v7614, %v7627
    %7629 = vdwg.mxu0
    %7630 = vmatpush.bf16.msra.mxu0 %v4749
    %7631 = vmatpush.bf16.msra.mxu0 %v4747
    %7632 = vmatpush.bf16.msra.mxu0 %v4745
    %7633 = vmatpush.bf16.msra.mxu0 %v4743
    %7634 = vmatpush.bf16.msra.mxu0 %v4741
    %7635 = vmatpush.bf16.msra.mxu0 %v4739
    %7636 = vmatpush.bf16.msra.mxu0 %v4737
    %7637 = vmatpush.bf16.msra.mxu0 %v4735
    %7638 = vmatmul.bf16.gmra.mxu0 %v214
    %v7639 = vpop.f32.mrf.mxu0
    %v7640 = vadd.f32 %v7626, %v7639
    %v7641 = vpop.f32.mrf.mxu0
    %v7642 = vadd.f32 %v7628, %v7641
    %7643 = vdwg.mxu0
    %7644 = vmatpush.bf16.msra.mxu0 %v4765
    %7645 = vmatpush.bf16.msra.mxu0 %v4763
    %7646 = vmatpush.bf16.msra.mxu0 %v4761
    %7647 = vmatpush.bf16.msra.mxu0 %v4759
    %7648 = vmatpush.bf16.msra.mxu0 %v4757
    %7649 = vmatpush.bf16.msra.mxu0 %v4755
    %7650 = vmatpush.bf16.msra.mxu0 %v4753
    %7651 = vmatpush.bf16.msra.mxu0 %v4751
    %7652 = vmatmul.bf16.gmra.mxu0 %v215
    %v7653 = vpop.f32.mrf.mxu0
    %v7654 = vadd.f32 %v7640, %v7653
    %v7655 = vpop.f32.mrf.mxu0
    %v7656 = vadd.f32 %v7642, %v7655
    %7657 = vdwg.mxu0
    %7658 = vmatpush.bf16.msra.mxu0 %v4781
    %7659 = vmatpush.bf16.msra.mxu0 %v4779
    %7660 = vmatpush.bf16.msra.mxu0 %v4777
    %7661 = vmatpush.bf16.msra.mxu0 %v4775
    %7662 = vmatpush.bf16.msra.mxu0 %v4773
    %7663 = vmatpush.bf16.msra.mxu0 %v4771
    %7664 = vmatpush.bf16.msra.mxu0 %v4769
    %7665 = vmatpush.bf16.msra.mxu0 %v4767
    %7666 = vmatmul.bf16.gmra.mxu0 %v216
    %v7667 = vpop.f32.mrf.mxu0
    %v7668 = vadd.f32 %v7654, %v7667
    %v7669 = vpop.f32.mrf.mxu0
    %v7670 = vadd.f32 %v7656, %v7669
    %7671 = vdwg.mxu0
    %7672 = vmatpush.bf16.msra.mxu0 %v4797
    %7673 = vmatpush.bf16.msra.mxu0 %v4795
    %7674 = vmatpush.bf16.msra.mxu0 %v4793
    %7675 = vmatpush.bf16.msra.mxu0 %v4791
    %7676 = vmatpush.bf16.msra.mxu0 %v4789
    %7677 = vmatpush.bf16.msra.mxu0 %v4787
    %7678 = vmatpush.bf16.msra.mxu0 %v4785
    %7679 = vmatpush.bf16.msra.mxu0 %v4783
    %7680 = vmatmul.bf16.gmra.mxu0 %v217
    %v7681 = vpop.f32.mrf.mxu0
    %v7682 = vadd.f32 %v7668, %v7681
    %v7683 = vpop.f32.mrf.mxu0
    %v7684 = vadd.f32 %v7670, %v7683
    %7685 = vdwg.mxu0
    %7686 = vmatpush.bf16.msra.mxu0 %v4813
    %7687 = vmatpush.bf16.msra.mxu0 %v4811
    %7688 = vmatpush.bf16.msra.mxu0 %v4809
    %7689 = vmatpush.bf16.msra.mxu0 %v4807
    %7690 = vmatpush.bf16.msra.mxu0 %v4805
    %7691 = vmatpush.bf16.msra.mxu0 %v4803
    %7692 = vmatpush.bf16.msra.mxu0 %v4801
    %7693 = vmatpush.bf16.msra.mxu0 %v4799
    %7694 = vmatmul.bf16.gmra.mxu0 %v218
    %v7695 = vpop.f32.mrf.mxu0
    %v7696 = vadd.f32 %v7682, %v7695
    %v7697 = vpop.f32.mrf.mxu0
    %v7698 = vadd.f32 %v7684, %v7697
    %7699 = vdwg.mxu0
    %7700 = vmatpush.bf16.msra.mxu0 %v4829
    %7701 = vmatpush.bf16.msra.mxu0 %v4827
    %7702 = vmatpush.bf16.msra.mxu0 %v4825
    %7703 = vmatpush.bf16.msra.mxu0 %v4823
    %7704 = vmatpush.bf16.msra.mxu0 %v4821
    %7705 = vmatpush.bf16.msra.mxu0 %v4819
    %7706 = vmatpush.bf16.msra.mxu0 %v4817
    %7707 = vmatpush.bf16.msra.mxu0 %v4815
    %7708 = vmatmul.bf16.gmra.mxu0 %v219
    %v7709 = vpop.f32.mrf.mxu0
    %v7710 = vadd.f32 %v7696, %v7709
    %v7711 = vpop.f32.mrf.mxu0
    %v7712 = vadd.f32 %v7698, %v7711
    %7713 = vdwg.mxu0
    %7714 = vmatpush.bf16.msra.mxu0 %v4845
    %7715 = vmatpush.bf16.msra.mxu0 %v4843
    %7716 = vmatpush.bf16.msra.mxu0 %v4841
    %7717 = vmatpush.bf16.msra.mxu0 %v4839
    %7718 = vmatpush.bf16.msra.mxu0 %v4837
    %7719 = vmatpush.bf16.msra.mxu0 %v4835
    %7720 = vmatpush.bf16.msra.mxu0 %v4833
    %7721 = vmatpush.bf16.msra.mxu0 %v4831
    %7722 = vmatmul.bf16.gmra.mxu0 %v220
    %v7723 = vpop.f32.mrf.mxu0
    %v7724 = vadd.f32 %v7710, %v7723
    %v7725 = vpop.f32.mrf.mxu0
    %v7726 = vadd.f32 %v7712, %v7725
    %7727 = vdwg.mxu0
    %7728 = vmatpush.bf16.msra.mxu0 %v4861
    %7729 = vmatpush.bf16.msra.mxu0 %v4859
    %7730 = vmatpush.bf16.msra.mxu0 %v4857
    %7731 = vmatpush.bf16.msra.mxu0 %v4855
    %7732 = vmatpush.bf16.msra.mxu0 %v4853
    %7733 = vmatpush.bf16.msra.mxu0 %v4851
    %7734 = vmatpush.bf16.msra.mxu0 %v4849
    %7735 = vmatpush.bf16.msra.mxu0 %v4847
    %7736 = vmatmul.bf16.gmra.mxu0 %v221
    %v7737 = vpop.f32.mrf.mxu0
    %v7738 = vadd.f32 %v7724, %v7737
    %v7739 = vpop.f32.mrf.mxu0
    %v7740 = vadd.f32 %v7726, %v7739
    %7741 = vdwg.mxu0
    %7742 = vmatpush.bf16.msra.mxu0 %v4877
    %7743 = vmatpush.bf16.msra.mxu0 %v4875
    %7744 = vmatpush.bf16.msra.mxu0 %v4873
    %7745 = vmatpush.bf16.msra.mxu0 %v4871
    %7746 = vmatpush.bf16.msra.mxu0 %v4869
    %7747 = vmatpush.bf16.msra.mxu0 %v4867
    %7748 = vmatpush.bf16.msra.mxu0 %v4865
    %7749 = vmatpush.bf16.msra.mxu0 %v4863
    %7750 = vmatmul.bf16.gmra.mxu0 %v222
    %v7751 = vpop.f32.mrf.mxu0
    %v7752 = vadd.f32 %v7738, %v7751
    %v7753 = vpop.f32.mrf.mxu0
    %v7754 = vadd.f32 %v7740, %v7753
    %7755 = vdwg.mxu0
    %7756 = vmatpush.bf16.msra.mxu0 %v4893
    %7757 = vmatpush.bf16.msra.mxu0 %v4891
    %7758 = vmatpush.bf16.msra.mxu0 %v4889
    %7759 = vmatpush.bf16.msra.mxu0 %v4887
    %7760 = vmatpush.bf16.msra.mxu0 %v4885
    %7761 = vmatpush.bf16.msra.mxu0 %v4883
    %7762 = vmatpush.bf16.msra.mxu0 %v4881
    %7763 = vmatpush.bf16.msra.mxu0 %v4879
    %7764 = vmatmul.bf16.gmra.mxu0 %v223
    %v7765 = vpop.f32.mrf.mxu0
    %v7766 = vadd.f32 %v7752, %v7765
    %v7767 = vpop.f32.mrf.mxu0
    %v7768 = vadd.f32 %v7754, %v7767
    %7769 = vdwg.mxu0
    %7770 = vmatpush.bf16.msra.mxu0 %v4909
    %7771 = vmatpush.bf16.msra.mxu0 %v4907
    %7772 = vmatpush.bf16.msra.mxu0 %v4905
    %7773 = vmatpush.bf16.msra.mxu0 %v4903
    %7774 = vmatpush.bf16.msra.mxu0 %v4901
    %7775 = vmatpush.bf16.msra.mxu0 %v4899
    %7776 = vmatpush.bf16.msra.mxu0 %v4897
    %7777 = vmatpush.bf16.msra.mxu0 %v4895
    %7778 = vmatmul.bf16.gmra.mxu0 %v224
    %v7779 = vpop.f32.mrf.mxu0
    %v7780 = vadd.f32 %v7766, %v7779
    %v7781 = vpop.f32.mrf.mxu0
    %v7782 = vadd.f32 %v7768, %v7781
    %7783 = vdwg.mxu0
    %7784 = vmatpush.bf16.msra.mxu0 %v4925
    %7785 = vmatpush.bf16.msra.mxu0 %v4923
    %7786 = vmatpush.bf16.msra.mxu0 %v4921
    %7787 = vmatpush.bf16.msra.mxu0 %v4919
    %7788 = vmatpush.bf16.msra.mxu0 %v4917
    %7789 = vmatpush.bf16.msra.mxu0 %v4915
    %7790 = vmatpush.bf16.msra.mxu0 %v4913
    %7791 = vmatpush.bf16.msra.mxu0 %v4911
    %7792 = vmatmul.bf16.gmra.mxu0 %v225
    %v7793 = vpop.f32.mrf.mxu0
    %v7794 = vadd.f32 %v7780, %v7793
    %v7795 = vpop.f32.mrf.mxu0
    %v7796 = vadd.f32 %v7782, %v7795
    %7797 = vdwg.mxu0
    %7798 = vmatpush.bf16.msra.mxu0 %v4941
    %7799 = vmatpush.bf16.msra.mxu0 %v4939
    %7800 = vmatpush.bf16.msra.mxu0 %v4937
    %7801 = vmatpush.bf16.msra.mxu0 %v4935
    %7802 = vmatpush.bf16.msra.mxu0 %v4933
    %7803 = vmatpush.bf16.msra.mxu0 %v4931
    %7804 = vmatpush.bf16.msra.mxu0 %v4929
    %7805 = vmatpush.bf16.msra.mxu0 %v4927
    %7806 = vmatmul.bf16.gmra.mxu0 %v226
    %v7807 = vpop.f32.mrf.mxu0
    %v7808 = vadd.f32 %v7794, %v7807
    %v7809 = vpop.f32.mrf.mxu0
    %v7810 = vadd.f32 %v7796, %v7809
    %7811 = vdwg.mxu0
    %7812 = vmatpush.bf16.msra.mxu0 %v4957
    %7813 = vmatpush.bf16.msra.mxu0 %v4955
    %7814 = vmatpush.bf16.msra.mxu0 %v4953
    %7815 = vmatpush.bf16.msra.mxu0 %v4951
    %7816 = vmatpush.bf16.msra.mxu0 %v4949
    %7817 = vmatpush.bf16.msra.mxu0 %v4947
    %7818 = vmatpush.bf16.msra.mxu0 %v4945
    %7819 = vmatpush.bf16.msra.mxu0 %v4943
    %7820 = vmatmul.bf16.gmra.mxu0 %v227
    %v7821 = vpop.f32.mrf.mxu0
    %v7822 = vadd.f32 %v7808, %v7821
    %v7823 = vpop.f32.mrf.mxu0
    %v7824 = vadd.f32 %v7810, %v7823
    %7825 = vdwg.mxu0
    %7826 = vmatpush.bf16.msra.mxu0 %v4973
    %7827 = vmatpush.bf16.msra.mxu0 %v4971
    %7828 = vmatpush.bf16.msra.mxu0 %v4969
    %7829 = vmatpush.bf16.msra.mxu0 %v4967
    %7830 = vmatpush.bf16.msra.mxu0 %v4965
    %7831 = vmatpush.bf16.msra.mxu0 %v4963
    %7832 = vmatpush.bf16.msra.mxu0 %v4961
    %7833 = vmatpush.bf16.msra.mxu0 %v4959
    %7834 = vmatmul.bf16.gmra.mxu0 %v228
    %v7835 = vpop.f32.mrf.mxu0
    %v7836 = vadd.f32 %v7822, %v7835
    %v7837 = vpop.f32.mrf.mxu0
    %v7838 = vadd.f32 %v7824, %v7837
    %7839 = vdwg.mxu0
    %7840 = vmatpush.bf16.msra.mxu0 %v4989
    %7841 = vmatpush.bf16.msra.mxu0 %v4987
    %7842 = vmatpush.bf16.msra.mxu0 %v4985
    %7843 = vmatpush.bf16.msra.mxu0 %v4983
    %7844 = vmatpush.bf16.msra.mxu0 %v4981
    %7845 = vmatpush.bf16.msra.mxu0 %v4979
    %7846 = vmatpush.bf16.msra.mxu0 %v4977
    %7847 = vmatpush.bf16.msra.mxu0 %v4975
    %7848 = vmatmul.bf16.gmra.mxu0 %v229
    %v7849 = vpop.f32.mrf.mxu0
    %v7850 = vadd.f32 %v7836, %v7849
    %v7851 = vpop.f32.mrf.mxu0
    %v7852 = vadd.f32 %v7838, %v7851
    %7853 = vdwg.mxu0
    %7854 = vmatpush.bf16.msra.mxu0 %v5005
    %7855 = vmatpush.bf16.msra.mxu0 %v5003
    %7856 = vmatpush.bf16.msra.mxu0 %v5001
    %7857 = vmatpush.bf16.msra.mxu0 %v4999
    %7858 = vmatpush.bf16.msra.mxu0 %v4997
    %7859 = vmatpush.bf16.msra.mxu0 %v4995
    %7860 = vmatpush.bf16.msra.mxu0 %v4993
    %7861 = vmatpush.bf16.msra.mxu0 %v4991
    %7862 = vmatmul.bf16.gmra.mxu0 %v230
    %v7863 = vpop.f32.mrf.mxu0
    %v7864 = vadd.f32 %v7850, %v7863
    %v7865 = vpop.f32.mrf.mxu0
    %v7866 = vadd.f32 %v7852, %v7865
    %7867 = vdwg.mxu0
    %7868 = vmatpush.bf16.msra.mxu0 %v5021
    %7869 = vmatpush.bf16.msra.mxu0 %v5019
    %7870 = vmatpush.bf16.msra.mxu0 %v5017
    %7871 = vmatpush.bf16.msra.mxu0 %v5015
    %7872 = vmatpush.bf16.msra.mxu0 %v5013
    %7873 = vmatpush.bf16.msra.mxu0 %v5011
    %7874 = vmatpush.bf16.msra.mxu0 %v5009
    %7875 = vmatpush.bf16.msra.mxu0 %v5007
    %7876 = vmatmul.bf16.gmra.mxu0 %v231
    %v7877 = vpop.f32.mrf.mxu0
    %v7878 = vadd.f32 %v7864, %v7877
    %v7879 = vpop.f32.mrf.mxu0
    %v7880 = vadd.f32 %v7866, %v7879
    %7881 = vdwg.mxu0
    %7882 = vmatpush.bf16.msra.mxu0 %v5037
    %7883 = vmatpush.bf16.msra.mxu0 %v5035
    %7884 = vmatpush.bf16.msra.mxu0 %v5033
    %7885 = vmatpush.bf16.msra.mxu0 %v5031
    %7886 = vmatpush.bf16.msra.mxu0 %v5029
    %7887 = vmatpush.bf16.msra.mxu0 %v5027
    %7888 = vmatpush.bf16.msra.mxu0 %v5025
    %7889 = vmatpush.bf16.msra.mxu0 %v5023
    %7890 = vmatmul.bf16.gmra.mxu0 %v232
    %v7891 = vpop.f32.mrf.mxu0
    %v7892 = vadd.f32 %v7878, %v7891
    %v7893 = vpop.f32.mrf.mxu0
    %v7894 = vadd.f32 %v7880, %v7893
    %7895 = vdwg.mxu0
    %7896 = vmatpush.bf16.msra.mxu0 %v5053
    %7897 = vmatpush.bf16.msra.mxu0 %v5051
    %7898 = vmatpush.bf16.msra.mxu0 %v5049
    %7899 = vmatpush.bf16.msra.mxu0 %v5047
    %7900 = vmatpush.bf16.msra.mxu0 %v5045
    %7901 = vmatpush.bf16.msra.mxu0 %v5043
    %7902 = vmatpush.bf16.msra.mxu0 %v5041
    %7903 = vmatpush.bf16.msra.mxu0 %v5039
    %7904 = vmatmul.bf16.gmra.mxu0 %v233
    %v7905 = vpop.f32.mrf.mxu0
    %v7906 = vadd.f32 %v7892, %v7905
    %v7907 = vpop.f32.mrf.mxu0
    %v7908 = vadd.f32 %v7894, %v7907
    %7909 = vdwg.mxu0
    %7910 = vmatpush.bf16.msra.mxu0 %v5069
    %7911 = vmatpush.bf16.msra.mxu0 %v5067
    %7912 = vmatpush.bf16.msra.mxu0 %v5065
    %7913 = vmatpush.bf16.msra.mxu0 %v5063
    %7914 = vmatpush.bf16.msra.mxu0 %v5061
    %7915 = vmatpush.bf16.msra.mxu0 %v5059
    %7916 = vmatpush.bf16.msra.mxu0 %v5057
    %7917 = vmatpush.bf16.msra.mxu0 %v5055
    %7918 = vmatmul.bf16.gmra.mxu0 %v234
    %v7919 = vpop.f32.mrf.mxu0
    %v7920 = vadd.f32 %v7906, %v7919
    %v7921 = vpop.f32.mrf.mxu0
    %v7922 = vadd.f32 %v7908, %v7921
    %7923 = vdwg.mxu0
    %7924 = vmatpush.bf16.msra.mxu0 %v5085
    %7925 = vmatpush.bf16.msra.mxu0 %v5083
    %7926 = vmatpush.bf16.msra.mxu0 %v5081
    %7927 = vmatpush.bf16.msra.mxu0 %v5079
    %7928 = vmatpush.bf16.msra.mxu0 %v5077
    %7929 = vmatpush.bf16.msra.mxu0 %v5075
    %7930 = vmatpush.bf16.msra.mxu0 %v5073
    %7931 = vmatpush.bf16.msra.mxu0 %v5071
    %7932 = vmatmul.bf16.gmra.mxu0 %v235
    %v7933 = vpop.f32.mrf.mxu0
    %v7934 = vadd.f32 %v7920, %v7933
    %v7935 = vpop.f32.mrf.mxu0
    %v7936 = vadd.f32 %v7922, %v7935
    %7937 = vdwg.mxu0
    %7938 = vmatpush.bf16.msra.mxu0 %v5101
    %7939 = vmatpush.bf16.msra.mxu0 %v5099
    %7940 = vmatpush.bf16.msra.mxu0 %v5097
    %7941 = vmatpush.bf16.msra.mxu0 %v5095
    %7942 = vmatpush.bf16.msra.mxu0 %v5093
    %7943 = vmatpush.bf16.msra.mxu0 %v5091
    %7944 = vmatpush.bf16.msra.mxu0 %v5089
    %7945 = vmatpush.bf16.msra.mxu0 %v5087
    %7946 = vmatmul.bf16.gmra.mxu0 %v236
    %v7947 = vpop.f32.mrf.mxu0
    %v7948 = vadd.f32 %v7934, %v7947
    %v7949 = vpop.f32.mrf.mxu0
    %v7950 = vadd.f32 %v7936, %v7949
    %7951 = vdwg.mxu0
    %7952 = vmatpush.bf16.msra.mxu0 %v5117
    %7953 = vmatpush.bf16.msra.mxu0 %v5115
    %7954 = vmatpush.bf16.msra.mxu0 %v5113
    %7955 = vmatpush.bf16.msra.mxu0 %v5111
    %7956 = vmatpush.bf16.msra.mxu0 %v5109
    %7957 = vmatpush.bf16.msra.mxu0 %v5107
    %7958 = vmatpush.bf16.msra.mxu0 %v5105
    %7959 = vmatpush.bf16.msra.mxu0 %v5103
    %7960 = vmatmul.bf16.gmra.mxu0 %v237
    %v7961 = vpop.f32.mrf.mxu0
    %v7962 = vadd.f32 %v7948, %v7961
    %v7963 = vpop.f32.mrf.mxu0
    %v7964 = vadd.f32 %v7950, %v7963
    %7965 = vdwg.mxu0
    %7966 = vmatpush.bf16.msra.mxu0 %v5133
    %7967 = vmatpush.bf16.msra.mxu0 %v5131
    %7968 = vmatpush.bf16.msra.mxu0 %v5129
    %7969 = vmatpush.bf16.msra.mxu0 %v5127
    %7970 = vmatpush.bf16.msra.mxu0 %v5125
    %7971 = vmatpush.bf16.msra.mxu0 %v5123
    %7972 = vmatpush.bf16.msra.mxu0 %v5121
    %7973 = vmatpush.bf16.msra.mxu0 %v5119
    %7974 = vmatmul.bf16.gmra.mxu0 %v238
    %v7975 = vpop.f32.mrf.mxu0
    %v7976 = vadd.f32 %v7962, %v7975
    %v7977 = vpop.f32.mrf.mxu0
    %v7978 = vadd.f32 %v7964, %v7977
    %7979 = vdwg.mxu0
    %7980 = vmatpush.bf16.msra.mxu0 %v5149
    %7981 = vmatpush.bf16.msra.mxu0 %v5147
    %7982 = vmatpush.bf16.msra.mxu0 %v5145
    %7983 = vmatpush.bf16.msra.mxu0 %v5143
    %7984 = vmatpush.bf16.msra.mxu0 %v5141
    %7985 = vmatpush.bf16.msra.mxu0 %v5139
    %7986 = vmatpush.bf16.msra.mxu0 %v5137
    %7987 = vmatpush.bf16.msra.mxu0 %v5135
    %7988 = vmatmul.bf16.gmra.mxu0 %v239
    %v7989 = vpop.f32.mrf.mxu0
    %v7990 = vadd.f32 %v7976, %v7989
    %v7991 = vpop.f32.mrf.mxu0
    %v7992 = vadd.f32 %v7978, %v7991
    %7993 = vdwg.mxu0
    %7994 = vmatpush.bf16.msra.mxu0 %v5165
    %7995 = vmatpush.bf16.msra.mxu0 %v5163
    %7996 = vmatpush.bf16.msra.mxu0 %v5161
    %7997 = vmatpush.bf16.msra.mxu0 %v5159
    %7998 = vmatpush.bf16.msra.mxu0 %v5157
    %7999 = vmatpush.bf16.msra.mxu0 %v5155
    %8000 = vmatpush.bf16.msra.mxu0 %v5153
    %8001 = vmatpush.bf16.msra.mxu0 %v5151
    %8002 = vmatmul.bf16.gmra.mxu0 %v240
    %v8003 = vpop.f32.mrf.mxu0
    %v8004 = vadd.f32 %v7990, %v8003
    %v8005 = vpop.f32.mrf.mxu0
    %v8006 = vadd.f32 %v7992, %v8005
    %8007 = vdwg.mxu0
    %8008 = vmatpush.bf16.msra.mxu0 %v5181
    %8009 = vmatpush.bf16.msra.mxu0 %v5179
    %8010 = vmatpush.bf16.msra.mxu0 %v5177
    %8011 = vmatpush.bf16.msra.mxu0 %v5175
    %8012 = vmatpush.bf16.msra.mxu0 %v5173
    %8013 = vmatpush.bf16.msra.mxu0 %v5171
    %8014 = vmatpush.bf16.msra.mxu0 %v5169
    %8015 = vmatpush.bf16.msra.mxu0 %v5167
    %8016 = vmatmul.bf16.gmra.mxu0 %v241
    %v8017 = vpop.f32.mrf.mxu0
    %v8018 = vadd.f32 %v8004, %v8017
    %v8019 = vpop.f32.mrf.mxu0
    %v8020 = vadd.f32 %v8006, %v8019
    %8021 = vdwg.mxu0
    %8022 = vmatpush.bf16.msra.mxu0 %v5197
    %8023 = vmatpush.bf16.msra.mxu0 %v5195
    %8024 = vmatpush.bf16.msra.mxu0 %v5193
    %8025 = vmatpush.bf16.msra.mxu0 %v5191
    %8026 = vmatpush.bf16.msra.mxu0 %v5189
    %8027 = vmatpush.bf16.msra.mxu0 %v5187
    %8028 = vmatpush.bf16.msra.mxu0 %v5185
    %8029 = vmatpush.bf16.msra.mxu0 %v5183
    %8030 = vmatmul.bf16.gmra.mxu0 %v242
    %v8031 = vpop.f32.mrf.mxu0
    %v8032 = vadd.f32 %v8018, %v8031
    %v8033 = vpop.f32.mrf.mxu0
    %v8034 = vadd.f32 %v8020, %v8033
    %8035 = vdwg.mxu0
    %8036 = vmatpush.bf16.msra.mxu0 %v5213
    %8037 = vmatpush.bf16.msra.mxu0 %v5211
    %8038 = vmatpush.bf16.msra.mxu0 %v5209
    %8039 = vmatpush.bf16.msra.mxu0 %v5207
    %8040 = vmatpush.bf16.msra.mxu0 %v5205
    %8041 = vmatpush.bf16.msra.mxu0 %v5203
    %8042 = vmatpush.bf16.msra.mxu0 %v5201
    %8043 = vmatpush.bf16.msra.mxu0 %v5199
    %8044 = vmatmul.bf16.gmra.mxu0 %v243
    %v8045 = vpop.f32.mrf.mxu0
    %v8046 = vadd.f32 %v8032, %v8045
    %v8047 = vpop.f32.mrf.mxu0
    %v8048 = vadd.f32 %v8034, %v8047
    %8049 = vdwg.mxu0
    %8050 = vmatpush.bf16.msra.mxu0 %v5229
    %8051 = vmatpush.bf16.msra.mxu0 %v5227
    %8052 = vmatpush.bf16.msra.mxu0 %v5225
    %8053 = vmatpush.bf16.msra.mxu0 %v5223
    %8054 = vmatpush.bf16.msra.mxu0 %v5221
    %8055 = vmatpush.bf16.msra.mxu0 %v5219
    %8056 = vmatpush.bf16.msra.mxu0 %v5217
    %8057 = vmatpush.bf16.msra.mxu0 %v5215
    %8058 = vmatmul.bf16.gmra.mxu0 %v244
    %v8059 = vpop.f32.mrf.mxu0
    %v8060 = vadd.f32 %v8046, %v8059
    %v8061 = vpop.f32.mrf.mxu0
    %v8062 = vadd.f32 %v8048, %v8061
    %8063 = vdwg.mxu0
    %8064 = vmatpush.bf16.msra.mxu0 %v5245
    %8065 = vmatpush.bf16.msra.mxu0 %v5243
    %8066 = vmatpush.bf16.msra.mxu0 %v5241
    %8067 = vmatpush.bf16.msra.mxu0 %v5239
    %8068 = vmatpush.bf16.msra.mxu0 %v5237
    %8069 = vmatpush.bf16.msra.mxu0 %v5235
    %8070 = vmatpush.bf16.msra.mxu0 %v5233
    %8071 = vmatpush.bf16.msra.mxu0 %v5231
    %8072 = vmatmul.bf16.gmra.mxu0 %v245
    %v8073 = vpop.f32.mrf.mxu0
    %v8074 = vadd.f32 %v8060, %v8073
    %v8075 = vpop.f32.mrf.mxu0
    %v8076 = vadd.f32 %v8062, %v8075
    %8077 = vdwg.mxu0
    %8078 = vmatpush.bf16.msra.mxu0 %v5261
    %8079 = vmatpush.bf16.msra.mxu0 %v5259
    %8080 = vmatpush.bf16.msra.mxu0 %v5257
    %8081 = vmatpush.bf16.msra.mxu0 %v5255
    %8082 = vmatpush.bf16.msra.mxu0 %v5253
    %8083 = vmatpush.bf16.msra.mxu0 %v5251
    %8084 = vmatpush.bf16.msra.mxu0 %v5249
    %8085 = vmatpush.bf16.msra.mxu0 %v5247
    %8086 = vmatmul.bf16.gmra.mxu0 %v246
    %v8087 = vpop.f32.mrf.mxu0
    %v8088 = vadd.f32 %v8074, %v8087
    %v8089 = vpop.f32.mrf.mxu0
    %v8090 = vadd.f32 %v8076, %v8089
    %8091 = vdwg.mxu0
    %8092 = vmatpush.bf16.msra.mxu0 %v5277
    %8093 = vmatpush.bf16.msra.mxu0 %v5275
    %8094 = vmatpush.bf16.msra.mxu0 %v5273
    %8095 = vmatpush.bf16.msra.mxu0 %v5271
    %8096 = vmatpush.bf16.msra.mxu0 %v5269
    %8097 = vmatpush.bf16.msra.mxu0 %v5267
    %8098 = vmatpush.bf16.msra.mxu0 %v5265
    %8099 = vmatpush.bf16.msra.mxu0 %v5263
    %8100 = vmatmul.bf16.gmra.mxu0 %v247
    %v8101 = vpop.f32.mrf.mxu0
    %v8102 = vadd.f32 %v8088, %v8101
    %v8103 = vpop.f32.mrf.mxu0
    %v8104 = vadd.f32 %v8090, %v8103
    %8105 = vdwg.mxu0
    %8106 = vmatpush.bf16.msra.mxu0 %v5293
    %8107 = vmatpush.bf16.msra.mxu0 %v5291
    %8108 = vmatpush.bf16.msra.mxu0 %v5289
    %8109 = vmatpush.bf16.msra.mxu0 %v5287
    %8110 = vmatpush.bf16.msra.mxu0 %v5285
    %8111 = vmatpush.bf16.msra.mxu0 %v5283
    %8112 = vmatpush.bf16.msra.mxu0 %v5281
    %8113 = vmatpush.bf16.msra.mxu0 %v5279
    %8114 = vmatmul.bf16.gmra.mxu0 %v248
    %v8115 = vpop.f32.mrf.mxu0
    %v8116 = vadd.f32 %v8102, %v8115
    %v8117 = vpop.f32.mrf.mxu0
    %v8118 = vadd.f32 %v8104, %v8117
    %8119 = vdwg.mxu0
    %8120 = vmatpush.bf16.msra.mxu0 %v5309
    %8121 = vmatpush.bf16.msra.mxu0 %v5307
    %8122 = vmatpush.bf16.msra.mxu0 %v5305
    %8123 = vmatpush.bf16.msra.mxu0 %v5303
    %8124 = vmatpush.bf16.msra.mxu0 %v5301
    %8125 = vmatpush.bf16.msra.mxu0 %v5299
    %8126 = vmatpush.bf16.msra.mxu0 %v5297
    %8127 = vmatpush.bf16.msra.mxu0 %v5295
    %8128 = vmatmul.bf16.gmra.mxu0 %v249
    %v8129 = vpop.f32.mrf.mxu0
    %v8130 = vadd.f32 %v8116, %v8129
    %v8131 = vpop.f32.mrf.mxu0
    %v8132 = vadd.f32 %v8118, %v8131
    %8133 = vdwg.mxu0
    %8134 = vmatpush.bf16.msra.mxu0 %v5325
    %8135 = vmatpush.bf16.msra.mxu0 %v5323
    %8136 = vmatpush.bf16.msra.mxu0 %v5321
    %8137 = vmatpush.bf16.msra.mxu0 %v5319
    %8138 = vmatpush.bf16.msra.mxu0 %v5317
    %8139 = vmatpush.bf16.msra.mxu0 %v5315
    %8140 = vmatpush.bf16.msra.mxu0 %v5313
    %8141 = vmatpush.bf16.msra.mxu0 %v5311
    %8142 = vmatmul.bf16.gmra.mxu0 %v250
    %v8143 = vpop.f32.mrf.mxu0
    %v8144 = vadd.f32 %v8130, %v8143
    %v8145 = vpop.f32.mrf.mxu0
    %v8146 = vadd.f32 %v8132, %v8145
    %8147 = vdwg.mxu0
    %8148 = vmatpush.bf16.msra.mxu0 %v5341
    %8149 = vmatpush.bf16.msra.mxu0 %v5339
    %8150 = vmatpush.bf16.msra.mxu0 %v5337
    %8151 = vmatpush.bf16.msra.mxu0 %v5335
    %8152 = vmatpush.bf16.msra.mxu0 %v5333
    %8153 = vmatpush.bf16.msra.mxu0 %v5331
    %8154 = vmatpush.bf16.msra.mxu0 %v5329
    %8155 = vmatpush.bf16.msra.mxu0 %v5327
    %8156 = vmatmul.bf16.gmra.mxu0 %v251
    %v8157 = vpop.f32.mrf.mxu0
    %v8158 = vadd.f32 %v8144, %v8157
    %v8159 = vpop.f32.mrf.mxu0
    %v8160 = vadd.f32 %v8146, %v8159
    %8161 = vdwg.mxu0
    %8162 = vmatpush.bf16.msra.mxu0 %v5357
    %8163 = vmatpush.bf16.msra.mxu0 %v5355
    %8164 = vmatpush.bf16.msra.mxu0 %v5353
    %8165 = vmatpush.bf16.msra.mxu0 %v5351
    %8166 = vmatpush.bf16.msra.mxu0 %v5349
    %8167 = vmatpush.bf16.msra.mxu0 %v5347
    %8168 = vmatpush.bf16.msra.mxu0 %v5345
    %8169 = vmatpush.bf16.msra.mxu0 %v5343
    %8170 = vmatmul.bf16.gmra.mxu0 %v252
    %v8171 = vpop.f32.mrf.mxu0
    %v8172 = vadd.f32 %v8158, %v8171
    %v8173 = vpop.f32.mrf.mxu0
    %v8174 = vadd.f32 %v8160, %v8173
    %8175 = vdwg.mxu0
    %8176 = vmatpush.bf16.msra.mxu0 %v5373
    %8177 = vmatpush.bf16.msra.mxu0 %v5371
    %8178 = vmatpush.bf16.msra.mxu0 %v5369
    %8179 = vmatpush.bf16.msra.mxu0 %v5367
    %8180 = vmatpush.bf16.msra.mxu0 %v5365
    %8181 = vmatpush.bf16.msra.mxu0 %v5363
    %8182 = vmatpush.bf16.msra.mxu0 %v5361
    %8183 = vmatpush.bf16.msra.mxu0 %v5359
    %8184 = vmatmul.bf16.gmra.mxu0 %v253
    %v8185 = vpop.f32.mrf.mxu0
    %v8186 = vadd.f32 %v8172, %v8185
    %v8187 = vpop.f32.mrf.mxu0
    %v8188 = vadd.f32 %v8174, %v8187
    %8189 = vdwg.mxu0
    %v8190 = vpack.c.bf16 %v7292, %v7290
    %v8191 = vpack.c.bf16 %v8188, %v8186
    %v8192 = vld [vmem:[#allocation4] sm:$0xff]
    %v8193 = vld [vmem:[#allocation4 + $0x8] sm:$0xff]
    %v8194 = vld [vmem:[#allocation4 + $0x10] sm:$0xff]
    %v8195 = vld [vmem:[#allocation4 + $0x18] sm:$0xff]
    %v8196 = vld [vmem:[#allocation4 + $0x20] sm:$0xff]
    %v8197 = vld [vmem:[#allocation4 + $0x28] sm:$0xff]
    %v8198 = vld [vmem:[#allocation4 + $0x30] sm:$0xff]
    %v8199 = vld [vmem:[#allocation4 + $0x38] sm:$0xff]
    %v8200 = vld [vmem:[#allocation4 + $0x40] sm:$0xff]
    %v8201 = vld [vmem:[#allocation4 + $0x48] sm:$0xff]
    %v8202 = vld [vmem:[#allocation4 + $0x50] sm:$0xff]
    %v8203 = vld [vmem:[#allocation4 + $0x58] sm:$0xff]
    %v8204 = vld [vmem:[#allocation4 + $0x60] sm:$0xff]
    %v8205 = vld [vmem:[#allocation4 + $0x68] sm:$0xff]
    %v8206 = vld [vmem:[#allocation4 + $0x70] sm:$0xff]
    %v8207 = vld [vmem:[#allocation4 + $0x78] sm:$0xff]
    %v8208 = vld [vmem:[#allocation4 + $0x80] sm:$0xff]
    %v8209 = vld [vmem:[#allocation4 + $0x88] sm:$0xff]
    %v8210 = vld [vmem:[#allocation4 + $0x90] sm:$0xff]
    %v8211 = vld [vmem:[#allocation4 + $0x98] sm:$0xff]
    %v8212 = vld [vmem:[#allocation4 + $0xa0] sm:$0xff]
    %v8213 = vld [vmem:[#allocation4 + $0xa8] sm:$0xff]
    %v8214 = vld [vmem:[#allocation4 + $0xb0] sm:$0xff]
    %v8215 = vld [vmem:[#allocation4 + $0xb8] sm:$0xff]
    %v8216 = vld [vmem:[#allocation4 + $0xc0] sm:$0xff]
    %v8217 = vld [vmem:[#allocation4 + $0xc8] sm:$0xff]
    %v8218 = vld [vmem:[#allocation4 + $0xd0] sm:$0xff]
    %v8219 = vld [vmem:[#allocation4 + $0xd8] sm:$0xff]
    %v8220 = vld [vmem:[#allocation4 + $0xe0] sm:$0xff]
    %v8221 = vld [vmem:[#allocation4 + $0xe8] sm:$0xff]
    %v8222 = vld [vmem:[#allocation4 + $0xf0] sm:$0xff]
    %v8223 = vld [vmem:[#allocation4 + $0xf8] sm:$0xff]
    %v8224 = vld [vmem:[#allocation4 + $0x100] sm:$0xff]
    %v8225 = vld [vmem:[#allocation4 + $0x108] sm:$0xff]
    %v8226 = vld [vmem:[#allocation4 + $0x110] sm:$0xff]
    %v8227 = vld [vmem:[#allocation4 + $0x118] sm:$0xff]
    %v8228 = vld [vmem:[#allocation4 + $0x120] sm:$0xff]
    %v8229 = vld [vmem:[#allocation4 + $0x128] sm:$0xff]
    %v8230 = vld [vmem:[#allocation4 + $0x130] sm:$0xff]
    %v8231 = vld [vmem:[#allocation4 + $0x138] sm:$0xff]
    %v8232 = vld [vmem:[#allocation4 + $0x140] sm:$0xff]
    %v8233 = vld [vmem:[#allocation4 + $0x148] sm:$0xff]
    %v8234 = vld [vmem:[#allocation4 + $0x150] sm:$0xff]
    %v8235 = vld [vmem:[#allocation4 + $0x158] sm:$0xff]
    %v8236 = vld [vmem:[#allocation4 + $0x160] sm:$0xff]
    %v8237 = vld [vmem:[#allocation4 + $0x168] sm:$0xff]
    %v8238 = vld [vmem:[#allocation4 + $0x170] sm:$0xff]
    %v8239 = vld [vmem:[#allocation4 + $0x178] sm:$0xff]
    %v8240 = vld [vmem:[#allocation4 + $0x180] sm:$0xff]
    %v8241 = vld [vmem:[#allocation4 + $0x188] sm:$0xff]
    %v8242 = vld [vmem:[#allocation4 + $0x190] sm:$0xff]
    %v8243 = vld [vmem:[#allocation4 + $0x198] sm:$0xff]
    %v8244 = vld [vmem:[#allocation4 + $0x1a0] sm:$0xff]
    %v8245 = vld [vmem:[#allocation4 + $0x1a8] sm:$0xff]
    %v8246 = vld [vmem:[#allocation4 + $0x1b0] sm:$0xff]
    %v8247 = vld [vmem:[#allocation4 + $0x1b8] sm:$0xff]
    %v8248 = vld [vmem:[#allocation4 + $0x1c0] sm:$0xff]
    %v8249 = vld [vmem:[#allocation4 + $0x1c8] sm:$0xff]
    %v8250 = vld [vmem:[#allocation4 + $0x1d0] sm:$0xff]
    %v8251 = vld [vmem:[#allocation4 + $0x1d8] sm:$0xff]
    %v8252 = vld [vmem:[#allocation4 + $0x1e0] sm:$0xff]
    %v8253 = vld [vmem:[#allocation4 + $0x1e8] sm:$0xff]
    %v8254 = vld [vmem:[#allocation4 + $0x1f0] sm:$0xff]
    %v8255 = vld [vmem:[#allocation4 + $0x1f8] sm:$0xff]
    %v8256 = vld [vmem:[#allocation4 + $0x200] sm:$0xff]
    %v8257 = vld [vmem:[#allocation4 + $0x208] sm:$0xff]
    %v8258 = vld [vmem:[#allocation4 + $0x210] sm:$0xff]
    %v8259 = vld [vmem:[#allocation4 + $0x218] sm:$0xff]
    %v8260 = vld [vmem:[#allocation4 + $0x220] sm:$0xff]
    %v8261 = vld [vmem:[#allocation4 + $0x228] sm:$0xff]
    %v8262 = vld [vmem:[#allocation4 + $0x230] sm:$0xff]
    %v8263 = vld [vmem:[#allocation4 + $0x238] sm:$0xff]
    %v8264 = vld [vmem:[#allocation4 + $0x240] sm:$0xff]
    %v8265 = vld [vmem:[#allocation4 + $0x248] sm:$0xff]
    %v8266 = vld [vmem:[#allocation4 + $0x250] sm:$0xff]
    %v8267 = vld [vmem:[#allocation4 + $0x258] sm:$0xff]
    %v8268 = vld [vmem:[#allocation4 + $0x260] sm:$0xff]
    %v8269 = vld [vmem:[#allocation4 + $0x268] sm:$0xff]
    %v8270 = vld [vmem:[#allocation4 + $0x270] sm:$0xff]
    %v8271 = vld [vmem:[#allocation4 + $0x278] sm:$0xff]
    %v8272 = vld [vmem:[#allocation4 + $0x280] sm:$0xff]
    %v8273 = vld [vmem:[#allocation4 + $0x288] sm:$0xff]
    %v8274 = vld [vmem:[#allocation4 + $0x290] sm:$0xff]
    %v8275 = vld [vmem:[#allocation4 + $0x298] sm:$0xff]
    %v8276 = vld [vmem:[#allocation4 + $0x2a0] sm:$0xff]
    %v8277 = vld [vmem:[#allocation4 + $0x2a8] sm:$0xff]
    %v8278 = vld [vmem:[#allocation4 + $0x2b0] sm:$0xff]
    %v8279 = vld [vmem:[#allocation4 + $0x2b8] sm:$0xff]
    %v8280 = vld [vmem:[#allocation4 + $0x2c0] sm:$0xff]
    %v8281 = vld [vmem:[#allocation4 + $0x2c8] sm:$0xff]
    %v8282 = vld [vmem:[#allocation4 + $0x2d0] sm:$0xff]
    %v8283 = vld [vmem:[#allocation4 + $0x2d8] sm:$0xff]
    %v8284 = vld [vmem:[#allocation4 + $0x2e0] sm:$0xff]
    %v8285 = vld [vmem:[#allocation4 + $0x2e8] sm:$0xff]
    %v8286 = vld [vmem:[#allocation4 + $0x2f0] sm:$0xff]
    %v8287 = vld [vmem:[#allocation4 + $0x2f8] sm:$0xff]
    %v8288 = vld [vmem:[#allocation6] sm:$0x3f]
    %v8290 = vperm.slane %v8288, 0
    %v8291 = vperm.slane %v8288, 1
    %v8292 = vperm.slane %v8288, 2
    %v8293 = vperm.slane %v8288, 3
    %v8294 = vperm.slane %v8288, 4
    %v8295 = vperm.slane %v8288, 5
    %v8398 = vunpack.c.l.b16 %v8192
    %v8399 = vunpack.c.h.b16 %v8192
    %v8400 = vunpack.c.l.b16 %v8193
    %v8401 = vunpack.c.h.b16 %v8193
    %v8402 = vunpack.c.l.b16 %v8194
    %v8403 = vunpack.c.h.b16 %v8194
    %v8404 = vunpack.c.l.b16 %v8195
    %v8405 = vunpack.c.h.b16 %v8195
    %v8406 = vunpack.c.l.b16 %v8196
    %v8407 = vunpack.c.h.b16 %v8196
    %v8408 = vunpack.c.l.b16 %v8197
    %v8409 = vunpack.c.h.b16 %v8197
    %v8410 = vunpack.c.l.b16 %v8198
    %v8411 = vunpack.c.h.b16 %v8198
    %v8412 = vunpack.c.l.b16 %v8199
    %v8413 = vunpack.c.h.b16 %v8199
    %v8414 = vunpack.c.l.b16 %v8200
    %v8415 = vunpack.c.h.b16 %v8200
    %v8416 = vunpack.c.l.b16 %v8201
    %v8417 = vunpack.c.h.b16 %v8201
    %v8418 = vunpack.c.l.b16 %v8202
    %v8419 = vunpack.c.h.b16 %v8202
    %v8420 = vunpack.c.l.b16 %v8203
    %v8421 = vunpack.c.h.b16 %v8203
    %v8422 = vunpack.c.l.b16 %v8204
    %v8423 = vunpack.c.h.b16 %v8204
    %v8424 = vunpack.c.l.b16 %v8205
    %v8425 = vunpack.c.h.b16 %v8205
    %v8426 = vunpack.c.l.b16 %v8206
    %v8427 = vunpack.c.h.b16 %v8206
    %v8428 = vunpack.c.l.b16 %v8207
    %v8429 = vunpack.c.h.b16 %v8207
    %v8430 = vunpack.c.l.b16 %v8208
    %v8431 = vunpack.c.h.b16 %v8208
    %v8432 = vunpack.c.l.b16 %v8209
    %v8433 = vunpack.c.h.b16 %v8209
    %v8434 = vunpack.c.l.b16 %v8210
    %v8435 = vunpack.c.h.b16 %v8210
    %v8436 = vunpack.c.l.b16 %v8211
    %v8437 = vunpack.c.h.b16 %v8211
    %v8438 = vunpack.c.l.b16 %v8212
    %v8439 = vunpack.c.h.b16 %v8212
    %v8440 = vunpack.c.l.b16 %v8213
    %v8441 = vunpack.c.h.b16 %v8213
    %v8442 = vunpack.c.l.b16 %v8214
    %v8443 = vunpack.c.h.b16 %v8214
    %v8444 = vunpack.c.l.b16 %v8215
    %v8445 = vunpack.c.h.b16 %v8215
    %v8446 = vunpack.c.l.b16 %v8216
    %v8447 = vunpack.c.h.b16 %v8216
    %v8448 = vunpack.c.l.b16 %v8217
    %v8449 = vunpack.c.h.b16 %v8217
    %v8450 = vunpack.c.l.b16 %v8218
    %v8451 = vunpack.c.h.b16 %v8218
    %v8452 = vunpack.c.l.b16 %v8219
    %v8453 = vunpack.c.h.b16 %v8219
    %v8454 = vunpack.c.l.b16 %v8220
    %v8455 = vunpack.c.h.b16 %v8220
    %v8456 = vunpack.c.l.b16 %v8221
    %v8457 = vunpack.c.h.b16 %v8221
    %v8458 = vunpack.c.l.b16 %v8222
    %v8459 = vunpack.c.h.b16 %v8222
    %v8460 = vunpack.c.l.b16 %v8223
    %v8461 = vunpack.c.h.b16 %v8223
    %v8462 = vunpack.c.l.b16 %v8224
    %v8463 = vunpack.c.h.b16 %v8224
    %v8464 = vunpack.c.l.b16 %v8225
    %v8465 = vunpack.c.h.b16 %v8225
    %v8466 = vunpack.c.l.b16 %v8226
    %v8467 = vunpack.c.h.b16 %v8226
    %v8468 = vunpack.c.l.b16 %v8227
    %v8469 = vunpack.c.h.b16 %v8227
    %v8470 = vunpack.c.l.b16 %v8228
    %v8471 = vunpack.c.h.b16 %v8228
    %v8472 = vunpack.c.l.b16 %v8229
    %v8473 = vunpack.c.h.b16 %v8229
    %v8474 = vunpack.c.l.b16 %v8230
    %v8475 = vunpack.c.h.b16 %v8230
    %v8476 = vunpack.c.l.b16 %v8231
    %v8477 = vunpack.c.h.b16 %v8231
    %v8478 = vunpack.c.l.b16 %v8232
    %v8479 = vunpack.c.h.b16 %v8232
    %v8480 = vunpack.c.l.b16 %v8233
    %v8481 = vunpack.c.h.b16 %v8233
    %v8482 = vunpack.c.l.b16 %v8234
    %v8483 = vunpack.c.h.b16 %v8234
    %v8484 = vunpack.c.l.b16 %v8235
    %v8485 = vunpack.c.h.b16 %v8235
    %v8486 = vunpack.c.l.b16 %v8236
    %v8487 = vunpack.c.h.b16 %v8236
    %v8488 = vunpack.c.l.b16 %v8237
    %v8489 = vunpack.c.h.b16 %v8237
    %v8490 = vunpack.c.l.b16 %v8238
    %v8491 = vunpack.c.h.b16 %v8238
    %v8492 = vunpack.c.l.b16 %v8239
    %v8493 = vunpack.c.h.b16 %v8239
    %v8494 = vunpack.c.l.b16 %v8240
    %v8495 = vunpack.c.h.b16 %v8240
    %v8496 = vunpack.c.l.b16 %v8241
    %v8497 = vunpack.c.h.b16 %v8241
    %v8498 = vunpack.c.l.b16 %v8242
    %v8499 = vunpack.c.h.b16 %v8242
    %v8500 = vunpack.c.l.b16 %v8243
    %v8501 = vunpack.c.h.b16 %v8243
    %v8502 = vunpack.c.l.b16 %v8244
    %v8503 = vunpack.c.h.b16 %v8244
    %v8504 = vunpack.c.l.b16 %v8245
    %v8505 = vunpack.c.h.b16 %v8245
    %v8506 = vunpack.c.l.b16 %v8246
    %v8507 = vunpack.c.h.b16 %v8246
    %v8508 = vunpack.c.l.b16 %v8247
    %v8509 = vunpack.c.h.b16 %v8247
    %v8510 = vunpack.c.l.b16 %v8248
    %v8511 = vunpack.c.h.b16 %v8248
    %v8512 = vunpack.c.l.b16 %v8249
    %v8513 = vunpack.c.h.b16 %v8249
    %v8514 = vunpack.c.l.b16 %v8250
    %v8515 = vunpack.c.h.b16 %v8250
    %v8516 = vunpack.c.l.b16 %v8251
    %v8517 = vunpack.c.h.b16 %v8251
    %v8518 = vunpack.c.l.b16 %v8252
    %v8519 = vunpack.c.h.b16 %v8252
    %v8520 = vunpack.c.l.b16 %v8253
    %v8521 = vunpack.c.h.b16 %v8253
    %v8522 = vunpack.c.l.b16 %v8254
    %v8523 = vunpack.c.h.b16 %v8254
    %v8524 = vunpack.c.l.b16 %v8255
    %v8525 = vunpack.c.h.b16 %v8255
    %v8526 = vunpack.c.l.b16 %v8256
    %v8527 = vunpack.c.h.b16 %v8256
    %v8528 = vunpack.c.l.b16 %v8257
    %v8529 = vunpack.c.h.b16 %v8257
    %v8530 = vunpack.c.l.b16 %v8258
    %v8531 = vunpack.c.h.b16 %v8258
    %v8532 = vunpack.c.l.b16 %v8259
    %v8533 = vunpack.c.h.b16 %v8259
    %v8534 = vunpack.c.l.b16 %v8260
    %v8535 = vunpack.c.h.b16 %v8260
    %v8536 = vunpack.c.l.b16 %v8261
    %v8537 = vunpack.c.h.b16 %v8261
    %v8538 = vunpack.c.l.b16 %v8262
    %v8539 = vunpack.c.h.b16 %v8262
    %v8540 = vunpack.c.l.b16 %v8263
    %v8541 = vunpack.c.h.b16 %v8263
    %v8542 = vunpack.c.l.b16 %v8264
    %v8543 = vunpack.c.h.b16 %v8264
    %v8544 = vunpack.c.l.b16 %v8265
    %v8545 = vunpack.c.h.b16 %v8265
    %v8546 = vunpack.c.l.b16 %v8266
    %v8547 = vunpack.c.h.b16 %v8266
    %v8548 = vunpack.c.l.b16 %v8267
    %v8549 = vunpack.c.h.b16 %v8267
    %v8550 = vunpack.c.l.b16 %v8268
    %v8551 = vunpack.c.h.b16 %v8268
    %v8552 = vunpack.c.l.b16 %v8269
    %v8553 = vunpack.c.h.b16 %v8269
    %v8554 = vunpack.c.l.b16 %v8270
    %v8555 = vunpack.c.h.b16 %v8270
    %v8556 = vunpack.c.l.b16 %v8271
    %v8557 = vunpack.c.h.b16 %v8271
    %v8558 = vunpack.c.l.b16 %v8272
    %v8559 = vunpack.c.h.b16 %v8272
    %v8560 = vunpack.c.l.b16 %v8273
    %v8561 = vunpack.c.h.b16 %v8273
    %v8562 = vunpack.c.l.b16 %v8274
    %v8563 = vunpack.c.h.b16 %v8274
    %v8564 = vunpack.c.l.b16 %v8275
    %v8565 = vunpack.c.h.b16 %v8275
    %v8566 = vunpack.c.l.b16 %v8276
    %v8567 = vunpack.c.h.b16 %v8276
    %v8568 = vunpack.c.l.b16 %v8277
    %v8569 = vunpack.c.h.b16 %v8277
    %v8570 = vunpack.c.l.b16 %v8278
    %v8571 = vunpack.c.h.b16 %v8278
    %v8572 = vunpack.c.l.b16 %v8279
    %v8573 = vunpack.c.h.b16 %v8279
    %v8574 = vunpack.c.l.b16 %v8280
    %v8575 = vunpack.c.h.b16 %v8280
    %v8576 = vunpack.c.l.b16 %v8281
    %v8577 = vunpack.c.h.b16 %v8281
    %v8578 = vunpack.c.l.b16 %v8282
    %v8579 = vunpack.c.h.b16 %v8282
    %v8580 = vunpack.c.l.b16 %v8283
    %v8581 = vunpack.c.h.b16 %v8283
    %v8582 = vunpack.c.l.b16 %v8284
    %v8583 = vunpack.c.h.b16 %v8284
    %v8584 = vunpack.c.l.b16 %v8285
    %v8585 = vunpack.c.h.b16 %v8285
    %v8586 = vunpack.c.l.b16 %v8286
    %v8587 = vunpack.c.h.b16 %v8286
    %v8588 = vunpack.c.l.b16 %v8287
    %v8589 = vunpack.c.h.b16 %v8287
    %v8590 = vpack.c.b16 %v8404, %v8398
    %v8591 = vpack.c.b16 %v8405, %v8399
    %v8592 = vpack.c.b16 %v8406, %v8400
    %v8593 = vpack.c.b16 %v8407, %v8401
    %v8594 = vpack.c.b16 %v8408, %v8402
    %v8595 = vpack.c.b16 %v8409, %v8403
    %v8596 = vpack.c.b16 %v8416, %v8410
    %v8597 = vpack.c.b16 %v8417, %v8411
    %v8598 = vpack.c.b16 %v8418, %v8412
    %v8599 = vpack.c.b16 %v8419, %v8413
    %v8600 = vpack.c.b16 %v8420, %v8414
    %v8601 = vpack.c.b16 %v8421, %v8415
    %v8602 = vpack.c.b16 %v8428, %v8422
    %v8603 = vpack.c.b16 %v8429, %v8423
    %v8604 = vpack.c.b16 %v8430, %v8424
    %v8605 = vpack.c.b16 %v8431, %v8425
    %v8606 = vpack.c.b16 %v8432, %v8426
    %v8607 = vpack.c.b16 %v8433, %v8427
    %v8608 = vpack.c.b16 %v8440, %v8434
    %v8609 = vpack.c.b16 %v8441, %v8435
    %v8610 = vpack.c.b16 %v8442, %v8436
    %v8611 = vpack.c.b16 %v8443, %v8437
    %v8612 = vpack.c.b16 %v8444, %v8438
    %v8613 = vpack.c.b16 %v8445, %v8439
    %v8614 = vpack.c.b16 %v8452, %v8446
    %v8615 = vpack.c.b16 %v8453, %v8447
    %v8616 = vpack.c.b16 %v8454, %v8448
    %v8617 = vpack.c.b16 %v8455, %v8449
    %v8618 = vpack.c.b16 %v8456, %v8450
    %v8619 = vpack.c.b16 %v8457, %v8451
    %v8620 = vpack.c.b16 %v8464, %v8458
    %v8621 = vpack.c.b16 %v8465, %v8459
    %v8622 = vpack.c.b16 %v8466, %v8460
    %v8623 = vpack.c.b16 %v8467, %v8461
    %v8624 = vpack.c.b16 %v8468, %v8462
    %v8625 = vpack.c.b16 %v8469, %v8463
    %v8626 = vpack.c.b16 %v8476, %v8470
    %v8627 = vpack.c.b16 %v8477, %v8471
    %v8628 = vpack.c.b16 %v8478, %v8472
    %v8629 = vpack.c.b16 %v8479, %v8473
    %v8630 = vpack.c.b16 %v8480, %v8474
    %v8631 = vpack.c.b16 %v8481, %v8475
    %v8632 = vpack.c.b16 %v8488, %v8482
    %v8633 = vpack.c.b16 %v8489, %v8483
    %v8634 = vpack.c.b16 %v8490, %v8484
    %v8635 = vpack.c.b16 %v8491, %v8485
    %v8636 = vpack.c.b16 %v8492, %v8486
    %v8637 = vpack.c.b16 %v8493, %v8487
    %v8638 = vpack.c.b16 %v8500, %v8494
    %v8639 = vpack.c.b16 %v8501, %v8495
    %v8640 = vpack.c.b16 %v8502, %v8496
    %v8641 = vpack.c.b16 %v8503, %v8497
    %v8642 = vpack.c.b16 %v8504, %v8498
    %v8643 = vpack.c.b16 %v8505, %v8499
    %v8644 = vpack.c.b16 %v8512, %v8506
    %v8645 = vpack.c.b16 %v8513, %v8507
    %v8646 = vpack.c.b16 %v8514, %v8508
    %v8647 = vpack.c.b16 %v8515, %v8509
    %v8648 = vpack.c.b16 %v8516, %v8510
    %v8649 = vpack.c.b16 %v8517, %v8511
    %v8650 = vpack.c.b16 %v8524, %v8518
    %v8651 = vpack.c.b16 %v8525, %v8519
    %v8652 = vpack.c.b16 %v8526, %v8520
    %v8653 = vpack.c.b16 %v8527, %v8521
    %v8654 = vpack.c.b16 %v8528, %v8522
    %v8655 = vpack.c.b16 %v8529, %v8523
    %v8656 = vpack.c.b16 %v8536, %v8530
    %v8657 = vpack.c.b16 %v8537, %v8531
    %v8658 = vpack.c.b16 %v8538, %v8532
    %v8659 = vpack.c.b16 %v8539, %v8533
    %v8660 = vpack.c.b16 %v8540, %v8534
    %v8661 = vpack.c.b16 %v8541, %v8535
    %v8662 = vpack.c.b16 %v8548, %v8542
    %v8663 = vpack.c.b16 %v8549, %v8543
    %v8664 = vpack.c.b16 %v8550, %v8544
    %v8665 = vpack.c.b16 %v8551, %v8545
    %v8666 = vpack.c.b16 %v8552, %v8546
    %v8667 = vpack.c.b16 %v8553, %v8547
    %v8668 = vpack.c.b16 %v8560, %v8554
    %v8669 = vpack.c.b16 %v8561, %v8555
    %v8670 = vpack.c.b16 %v8562, %v8556
    %v8671 = vpack.c.b16 %v8563, %v8557
    %v8672 = vpack.c.b16 %v8564, %v8558
    %v8673 = vpack.c.b16 %v8565, %v8559
    %v8674 = vpack.c.b16 %v8572, %v8566
    %v8675 = vpack.c.b16 %v8573, %v8567
    %v8676 = vpack.c.b16 %v8574, %v8568
    %v8677 = vpack.c.b16 %v8575, %v8569
    %v8678 = vpack.c.b16 %v8576, %v8570
    %v8679 = vpack.c.b16 %v8577, %v8571
    %v8680 = vpack.c.b16 %v8584, %v8578
    %v8681 = vpack.c.b16 %v8585, %v8579
    %v8682 = vpack.c.b16 %v8586, %v8580
    %v8683 = vpack.c.b16 %v8587, %v8581
    %v8684 = vpack.c.b16 %v8588, %v8582
    %v8685 = vpack.c.b16 %v8589, %v8583
    %8782 = vmatpush.bf16.msra.mxu0 %v8632
    %8783 = vmatpush.bf16.msra.mxu0 %v8626
    %8784 = vmatpush.bf16.msra.mxu0 %v8620
    %8785 = vmatpush.bf16.msra.mxu0 %v8614
    %8786 = vmatpush.bf16.msra.mxu0 %v8608
    %8787 = vmatpush.bf16.msra.mxu0 %v8602
    %8788 = vmatpush.bf16.msra.mxu0 %v8596
    %8789 = vmatpush.bf16.msra.mxu0 %v8590
    %8790 = vmatmul.bf16.gmra.mxu0 %v8190
    %v8791 = vpop.f32.mrf.mxu0
    %v8792 = vadd.f32 %v8290, %v8791
    %v8793 = vpop.f32.mrf.mxu0
    %v8794 = vadd.f32 %v8290, %v8793
    %8795 = vdwg.mxu0
    %8796 = vmatpush.bf16.msra.mxu0 %v8680
    %8797 = vmatpush.bf16.msra.mxu0 %v8674
    %8798 = vmatpush.bf16.msra.mxu0 %v8668
    %8799 = vmatpush.bf16.msra.mxu0 %v8662
    %8800 = vmatpush.bf16.msra.mxu0 %v8656
    %8801 = vmatpush.bf16.msra.mxu0 %v8650
    %8802 = vmatpush.bf16.msra.mxu0 %v8644
    %8803 = vmatpush.bf16.msra.mxu0 %v8638
    %8804 = vmatmul.bf16.gmra.mxu0 %v8191
    %v8805 = vpop.f32.mrf.mxu0
    %v8806 = vadd.f32 %v8792, %v8805
    %v8807 = vpop.f32.mrf.mxu0
    %v8808 = vadd.f32 %v8794, %v8807
    %8809 = vdwg.mxu0
    %8810 = vmatpush.bf16.msra.mxu0 %v8633
    %8811 = vmatpush.bf16.msra.mxu0 %v8627
    %8812 = vmatpush.bf16.msra.mxu0 %v8621
    %8813 = vmatpush.bf16.msra.mxu0 %v8615
    %8814 = vmatpush.bf16.msra.mxu0 %v8609
    %8815 = vmatpush.bf16.msra.mxu0 %v8603
    %8816 = vmatpush.bf16.msra.mxu0 %v8597
    %8817 = vmatpush.bf16.msra.mxu0 %v8591
    %8818 = vmatmul.bf16.gmra.mxu0 %v8190
    %v8819 = vpop.f32.mrf.mxu0
    %v8820 = vadd.f32 %v8291, %v8819
    %v8821 = vpop.f32.mrf.mxu0
    %v8822 = vadd.f32 %v8291, %v8821
    %8823 = vdwg.mxu0
    %8824 = vmatpush.bf16.msra.mxu0 %v8681
    %8825 = vmatpush.bf16.msra.mxu0 %v8675
    %8826 = vmatpush.bf16.msra.mxu0 %v8669
    %8827 = vmatpush.bf16.msra.mxu0 %v8663
    %8828 = vmatpush.bf16.msra.mxu0 %v8657
    %8829 = vmatpush.bf16.msra.mxu0 %v8651
    %8830 = vmatpush.bf16.msra.mxu0 %v8645
    %8831 = vmatpush.bf16.msra.mxu0 %v8639
    %8832 = vmatmul.bf16.gmra.mxu0 %v8191
    %v8833 = vpop.f32.mrf.mxu0
    %v8834 = vadd.f32 %v8820, %v8833
    %v8835 = vpop.f32.mrf.mxu0
    %v8836 = vadd.f32 %v8822, %v8835
    %8837 = vdwg.mxu0
    %8838 = vmatpush.bf16.msra.mxu0 %v8634
    %8839 = vmatpush.bf16.msra.mxu0 %v8628
    %8840 = vmatpush.bf16.msra.mxu0 %v8622
    %8841 = vmatpush.bf16.msra.mxu0 %v8616
    %8842 = vmatpush.bf16.msra.mxu0 %v8610
    %8843 = vmatpush.bf16.msra.mxu0 %v8604
    %8844 = vmatpush.bf16.msra.mxu0 %v8598
    %8845 = vmatpush.bf16.msra.mxu0 %v8592
    %8846 = vmatmul.bf16.gmra.mxu0 %v8190
    %v8847 = vpop.f32.mrf.mxu0
    %v8848 = vadd.f32 %v8292, %v8847
    %v8849 = vpop.f32.mrf.mxu0
    %v8850 = vadd.f32 %v8292, %v8849
    %8851 = vdwg.mxu0
    %8852 = vmatpush.bf16.msra.mxu0 %v8682
    %8853 = vmatpush.bf16.msra.mxu0 %v8676
    %8854 = vmatpush.bf16.msra.mxu0 %v8670
    %8855 = vmatpush.bf16.msra.mxu0 %v8664
    %8856 = vmatpush.bf16.msra.mxu0 %v8658
    %8857 = vmatpush.bf16.msra.mxu0 %v8652
    %8858 = vmatpush.bf16.msra.mxu0 %v8646
    %8859 = vmatpush.bf16.msra.mxu0 %v8640
    %8860 = vmatmul.bf16.gmra.mxu0 %v8191
    %v8861 = vpop.f32.mrf.mxu0
    %v8862 = vadd.f32 %v8848, %v8861
    %v8863 = vpop.f32.mrf.mxu0
    %v8864 = vadd.f32 %v8850, %v8863
    %8865 = vdwg.mxu0
    %8866 = vmatpush.bf16.msra.mxu0 %v8635
    %8867 = vmatpush.bf16.msra.mxu0 %v8629
    %8868 = vmatpush.bf16.msra.mxu0 %v8623
    %8869 = vmatpush.bf16.msra.mxu0 %v8617
    %8870 = vmatpush.bf16.msra.mxu0 %v8611
    %8871 = vmatpush.bf16.msra.mxu0 %v8605
    %8872 = vmatpush.bf16.msra.mxu0 %v8599
    %8873 = vmatpush.bf16.msra.mxu0 %v8593
    %8874 = vmatmul.bf16.gmra.mxu0 %v8190
    %v8875 = vpop.f32.mrf.mxu0
    %v8876 = vadd.f32 %v8293, %v8875
    %v8877 = vpop.f32.mrf.mxu0
    %v8878 = vadd.f32 %v8293, %v8877
    %8879 = vdwg.mxu0
    %8880 = vmatpush.bf16.msra.mxu0 %v8683
    %8881 = vmatpush.bf16.msra.mxu0 %v8677
    %8882 = vmatpush.bf16.msra.mxu0 %v8671
    %8883 = vmatpush.bf16.msra.mxu0 %v8665
    %8884 = vmatpush.bf16.msra.mxu0 %v8659
    %8885 = vmatpush.bf16.msra.mxu0 %v8653
    %8886 = vmatpush.bf16.msra.mxu0 %v8647
    %8887 = vmatpush.bf16.msra.mxu0 %v8641
    %8888 = vmatmul.bf16.gmra.mxu0 %v8191
    %v8889 = vpop.f32.mrf.mxu0
    %v8890 = vadd.f32 %v8876, %v8889
    %v8891 = vpop.f32.mrf.mxu0
    %v8892 = vadd.f32 %v8878, %v8891
    %8893 = vdwg.mxu0
    %8894 = vmatpush.bf16.msra.mxu0 %v8636
    %8895 = vmatpush.bf16.msra.mxu0 %v8630
    %8896 = vmatpush.bf16.msra.mxu0 %v8624
    %8897 = vmatpush.bf16.msra.mxu0 %v8618
    %8898 = vmatpush.bf16.msra.mxu0 %v8612
    %8899 = vmatpush.bf16.msra.mxu0 %v8606
    %8900 = vmatpush.bf16.msra.mxu0 %v8600
    %8901 = vmatpush.bf16.msra.mxu0 %v8594
    %8902 = vmatmul.bf16.gmra.mxu0 %v8190
    %v8903 = vpop.f32.mrf.mxu0
    %v8904 = vadd.f32 %v8294, %v8903
    %v8905 = vpop.f32.mrf.mxu0
    %v8906 = vadd.f32 %v8294, %v8905
    %8907 = vdwg.mxu0
    %8908 = vmatpush.bf16.msra.mxu0 %v8684
    %8909 = vmatpush.bf16.msra.mxu0 %v8678
    %8910 = vmatpush.bf16.msra.mxu0 %v8672
    %8911 = vmatpush.bf16.msra.mxu0 %v8666
    %8912 = vmatpush.bf16.msra.mxu0 %v8660
    %8913 = vmatpush.bf16.msra.mxu0 %v8654
    %8914 = vmatpush.bf16.msra.mxu0 %v8648
    %8915 = vmatpush.bf16.msra.mxu0 %v8642
    %8916 = vmatmul.bf16.gmra.mxu0 %v8191
    %v8917 = vpop.f32.mrf.mxu0
    %v8918 = vadd.f32 %v8904, %v8917
    %v8919 = vpop.f32.mrf.mxu0
    %v8920 = vadd.f32 %v8906, %v8919
    %8921 = vdwg.mxu0
    %8922 = vmatpush.bf16.msra.mxu0 %v8637
    %8923 = vmatpush.bf16.msra.mxu0 %v8631
    %8924 = vmatpush.bf16.msra.mxu0 %v8625
    %8925 = vmatpush.bf16.msra.mxu0 %v8619
    %8926 = vmatpush.bf16.msra.mxu0 %v8613
    %8927 = vmatpush.bf16.msra.mxu0 %v8607
    %8928 = vmatpush.bf16.msra.mxu0 %v8601
    %8929 = vmatpush.bf16.msra.mxu0 %v8595
    %8930 = vmatmul.bf16.gmra.mxu0 %v8190
    %v8931 = vpop.f32.mrf.mxu0
    %v8932 = vadd.f32 %v8295, %v8931
    %v8933 = vpop.f32.mrf.mxu0
    %v8934 = vadd.f32 %v8295, %v8933
    %8935 = vdwg.mxu0
    %8936 = vmatpush.bf16.msra.mxu0 %v8685
    %8937 = vmatpush.bf16.msra.mxu0 %v8679
    %8938 = vmatpush.bf16.msra.mxu0 %v8673
    %8939 = vmatpush.bf16.msra.mxu0 %v8667
    %8940 = vmatpush.bf16.msra.mxu0 %v8661
    %8941 = vmatpush.bf16.msra.mxu0 %v8655
    %8942 = vmatpush.bf16.msra.mxu0 %v8649
    %8943 = vmatpush.bf16.msra.mxu0 %v8643
    %8944 = vmatmul.bf16.gmra.mxu0 %v8191
    %v8945 = vpop.f32.mrf.mxu0
    %v8946 = vadd.f32 %v8932, %v8945
    %v8947 = vpop.f32.mrf.mxu0
    %v8948 = vadd.f32 %v8934, %v8947
    %8949 = vdwg.mxu0
    %8950 = vst [vmem:[%s4] sm:$0xff] %v8806
    %8951 = vst [vmem:[%s4 + $0x8] sm:$0xff] %v8834
    %8952 = vst [vmem:[%s4 + $0x10] sm:$0xff] %v8862
    %8953 = vst [vmem:[%s4 + $0x18] sm:$0xff] %v8890
    %8954 = vst [vmem:[%s4 + $0x20] sm:$0xff] %v8918
    %8955 = vst [vmem:[%s4 + $0x28] sm:$0xff] %v8946
    %8956 = vst [vmem:[%s4 + $0x30] sm:$0xff] %v8808
    %8957 = vst [vmem:[%s4 + $0x38] sm:$0xff] %v8836
    %8958 = vst [vmem:[%s4 + $0x40] sm:$0xff] %v8864
    %8959 = vst [vmem:[%s4 + $0x48] sm:$0xff] %v8892
    %8960 = vst [vmem:[%s4 + $0x50] sm:$0xff] %v8920
    %8961 = vst [vmem:[%s4 + $0x58] sm:$0xff] %v8948
    // Predicated region
    $region30: #{forward.1} parent=1 // pred_check
      _
    $region31: #{forward.1} parent=1 // pred_check_branch
      %8963 = sbr.rel (0) target = $region33
    $region32: #{forward.1} parent=1 // pred_region
      _
    $region33: #{forward.1} parent=1 // pred_fallthru
      _
    // Predicated region
    $region34: #{forward.1} parent=1 // pred_check
      _
    $region35: #{forward.1} parent=1 // pred_check_branch
      %8965 = sbr.rel (0) target = $region37
    $region36: #{forward.1} parent=1 // pred_region
      _
    $region37: #{forward.1} parent=1 // pred_fallthru
      _
    %8966 = vsyncpa [#allocation3], 1
    %8967 = vsyncpa [#allocation5], 1

</llo_original>
